<compile_context>
chip_gen: v6e
topology: v6e:2x2x1
jax: 0.10.0
libtpu: 0.0.40
codegen_flags: <defaults>
</compile_context>

<pallas_src>
import functools

import jax
import jax.numpy as jnp
from jax import lax
from jax.experimental import pallas as pl
from jax.experimental.pallas import tpu as pltpu

LANE = 128  # padded hidden width for layers 2/3 and the fc output


def _vmem_spec():
    # Whole array resident in VMEM (entire working set is ~1.8 MB).
    return pl.BlockSpec(memory_space=pltpu.MemorySpace.VMEM)


# --------------------------------------------------------------------------- #
# Fused Pallas kernel: 3x LSTM (wavefront, fully unrolled) + FC head
# --------------------------------------------------------------------------- #
def _lstm_step(xg_t, h, c, u, H):
    """One LSTM step.

    xg_t : (B, 4H) f32 pre-projected input gates (+bias, BN folded).
    u    : (H, 4H) bf16 recurrent weights (g-gate columns pre-doubled).
    Gate/cell math stays f32; only the dot operands are bf16.
    """
    gates = xg_t + jnp.dot(h.astype(jnp.bfloat16), u,
                           preferred_element_type=jnp.float32)
    # Single EUP push over the whole contiguous (B, 4H) slab; tanh for the g
    # gate is recovered as 2*sigmoid(2x)-1 (the x2 lives in the weights).
    s = jax.nn.sigmoid(gates)
    i = s[:, 0 * H:1 * H]
    f = s[:, 1 * H:2 * H]
    g = 2.0 * s[:, 2 * H:3 * H] - 1.0
    o = s[:, 3 * H:4 * H]
    c = f * c + i * g
    h = o * jnp.tanh(c)
    return h, c


def fused_stacked_rnn_kernel(
    x_ref,                       # (T*B, F)   f32 time-major input
    w1_ref, b1_ref, u1_ref,      # layer 1: (F,4H1) bf16, (1,4H1) f32, (H1,4H1) bf16
    w2_ref, b2_ref, u2_ref,      # layer 2 (bn1 folded, lane-padded to HP)
    w3_ref, b3_ref, u3_ref,      # layer 3 (bn2 folded, lane-padded to HP)
    wfc_ref, bfc_ref,            # fc head (bn3 folded, padded): (HP,NP) bf16, (1,NP) f32
    out_ref,                     # (B, NP)   f32
    *, B, T, H1, HP,
):
    # Layer-1 input projection for all T steps in one batched MXU pass (K=1008).
    xg1 = jnp.dot(x_ref[...].astype(jnp.bfloat16), w1_ref[...],
                  preferred_element_type=jnp.float32) + b1_ref[...]

    u1 = u1_ref[...]
    w2, b2, u2 = w2_ref[...], b2_ref[...], u2_ref[...]
    w3, b3, u3 = w3_ref[...], b3_ref[...], u3_ref[...]

    zeros = lambda H: jnp.zeros((B, H), jnp.float32)
    h1, c1 = zeros(H1), zeros(H1)
    h2, c2 = zeros(HP), zeros(HP)
    h3, c3 = zeros(HP), zeros(HP)

    # Fully unrolled wavefront over T steps: three partially-independent
    # recurrence chains in one basic block (no scratch stores, no hidden
    # sequences materialized).  Per-step projections for layers 2/3 are free
    # MXU-wise since M=B already wastes >98% of the MXU rows.
    for t in range(T):
        h1, c1 = _lstm_step(xg1[t * B:(t + 1) * B, :], h1, c1, u1, H1)
        xg2 = jnp.dot(h1.astype(jnp.bfloat16), w2,
                      preferred_element_type=jnp.float32) + b2
        h2, c2 = _lstm_step(xg2, h2, c2, u2, HP)
        xg3 = jnp.dot(h2.astype(jnp.bfloat16), w3,
                      preferred_element_type=jnp.float32) + b3
        h3, c3 = _lstm_step(xg3, h3, c3, u3, HP)

    # FC head (bn3 folded in, output lane-padded to NP=128 for a dense store).
    out_ref[...] = jnp.dot(h3.astype(jnp.bfloat16), wfc_ref[...],
                           preferred_element_type=jnp.float32) + bfc_ref[...]


def stacked_rnn_forward(x, fp, n_classes):
    """x: (B, T, F) batch-first. fp: folded/padded/bf16 params (fold_params)."""
    B, T, F = x.shape
    H1 = fp["u1"].shape[0]
    HP = fp["u2"].shape[0]
    NP = fp["wfc"].shape[1]

    # Single host-side layout change: time-major rows (t*B + b).
    x_tm = jnp.transpose(x, (1, 0, 2)).reshape(T * B, F)

    kernel = functools.partial(fused_stacked_rnn_kernel, B=B, T=T, H1=H1, HP=HP)
    out_padded = pl.pallas_call(
        kernel,
        out_shape=jax.ShapeDtypeStruct((B, NP), jnp.float32),
        in_specs=[_vmem_spec()] * 12,
        out_specs=_vmem_spec(),
    )(
        x_tm,
        fp["w1"], fp["b1"], fp["u1"],
        fp["w2"], fp["b2"], fp["u2"],
        fp["w3"], fp["b3"], fp["u3"],
        fp["wfc"], fp["bfc"],
    )
    return out_padded[:, :n_classes]


# --------------------------------------------------------------------------- #
# One-time parameter prep: transpose, fold eval-mode BN into the next layer's
# input projection, double the g-gate columns (tanh via sigmoid), zero-pad the
# 64/32-wide layers to 128 lanes, cast weight matrices to bf16.
# --------------------------------------------------------------------------- #
def fold_params(params, n_classes, eps=1e-5):
    def bn_fold(gamma, beta, mean, var):
        scale = gamma / jnp.sqrt(var + eps)
        shift = beta - mean * scale
        return scale, shift

    def double_g(m, H):
        # tanh(x) = 2*sigmoid(2x) - 1: fold the x2 into the g-gate columns.
        return jnp.concatenate(
            [m[..., :2 * H], 2.0 * m[..., 2 * H:3 * H], m[..., 3 * H:]], axis=-1)

    def pad_gate_cols(m, H, HP):
        # (..., 4H) -> (..., 4*HP): zero-pad each gate block to HP lanes.
        if H == HP:
            return m
        pad = [(0, 0)] * (m.ndim - 1) + [(0, HP - H)]
        return jnp.concatenate(
            [jnp.pad(m[..., k * H:(k + 1) * H], pad) for k in range(4)], axis=-1)

    def pad_rows(m, rp):
        r = m.shape[0]
        return m if r == rp else jnp.pad(m, [(0, rp - r)] + [(0, 0)] * (m.ndim - 1))

    def lstm_mats(p, H, hp, in_pad=None, scale=None, shift=None):
        w_ih, w_hh, b_ih, b_hh = p
        w = w_ih.T                                 # (in, 4H)
        b = b_ih + b_hh                            # (4H,)
        u = w_hh.T                                 # (H, 4H)
        if scale is not None:                      # fold preceding eval-mode BN
            b = b + shift @ w
            w = scale[:, None] * w
        w, b, u = double_g(w, H), double_g(b, H), double_g(u, H)
        w, b, u = (pad_gate_cols(w, H, hp), pad_gate_cols(b, H, hp),
                   pad_gate_cols(u, H, hp))
        if in_pad is not None:
            w = pad_rows(w, in_pad)
        u = pad_rows(u, hp)
        return (w.astype(jnp.bfloat16),            # MXU operand -> bf16
                b[None, :].astype(jnp.float32),    # added to f32 accumulator
                u.astype(jnp.bfloat16))

    w1, b1, u1 = lstm_mats(params["rnn1"], 128, 128)
    s1, sh1 = bn_fold(*params["bn1"])
    w2, b2, u2 = lstm_mats(params["rnn2"], 64, LANE, in_pad=None, scale=s1, shift=sh1)
    s2, sh2 = bn_fold(*params["bn2"])
    w3, b3, u3 = lstm_mats(params["rnn3"], 32, LANE, in_pad=LANE, scale=s2, shift=sh2)
    s3, sh3 = bn_fold(*params["bn3"])

    w_fc, b_fc = params["fc"]
    wfc = s3[:, None] * w_fc.T                               # (32, n_cls)
    bfc = b_fc + sh3 @ w_fc.T                                # (n_cls,)
    wfc = jnp.pad(wfc, [(0, LANE - wfc.shape[0]), (0, LANE - n_classes)])
    bfc = jnp.pad(bfc, [(0, LANE - n_classes)])

    return dict(w1=w1, b1=b1, u1=u1, w2=w2, b2=b2, u2=u2, w3=w3, b3=b3, u3=u3,
                wfc=wfc.astype(jnp.bfloat16),
                bfc=bfc[None, :].astype(jnp.float32))


# --------------------------------------------------------------------------- #
# Deterministic parameter init (PyTorch-style LSTM init; non-trivial BN stats
# so the BN-fold path is actually exercised by the check).
# --------------------------------------------------------------------------- #
def init_params(key, n_classes=4):
    def lstm_params(k, in_size, hidden):
        bound = 1.0 / jnp.sqrt(jnp.float32(hidden))
        ks = jax.random.split(k, 4)
        w_ih = jax.random.uniform(ks[0], (4 * hidden, in_size), jnp.float32, -bound, bound)
        w_hh = jax.random.uniform(ks[1], (4 * hidden, hidden), jnp.float32, -bound, bound)
        b_ih = jax.random.uniform(ks[2], (4 * hidden,), jnp.float32, -bound, bound)
        b_hh = jax.random.uniform(ks[3], (4 * hidden,), jnp.float32, -bound, bound)
        return (w_ih, w_hh, b_ih, b_hh)

    def bn_params(k, c):
        ks = jax.random.split(k, 4)
        return (
            jax.random.uniform(ks[0], (c,), jnp.float32, 0.8, 1.2),   # gamma
            0.1 * jax.random.normal(ks[1], (c,), jnp.float32),        # beta
            0.1 * jax.random.normal(ks[2], (c,), jnp.float32),        # running_mean
            jax.random.uniform(ks[3], (c,), jnp.float32, 0.8, 1.2),   # running_var
        )

    ks = jax.random.split(key, 8)
    fb = 1.0 / jnp.sqrt(jnp.float32(32))
    return {
        "rnn1": lstm_params(ks[0], 1008, 128),
        "bn1": bn_params(ks[1], 128),
        "rnn2": lstm_params(ks[2], 128, 64),
        "bn2": bn_params(ks[3], 64),
        "rnn3": lstm_params(ks[4], 64, 32),
        "bn3": bn_params(ks[5], 32),
        "fc": (
            jax.random.uniform(ks[6], (n_classes, 32), jnp.float32, -fb, fb),
            jax.random.uniform(ks[7], (n_classes,), jnp.float32, -fb, fb),
        ),
    }


# --------------------------------------------------------------------------- #
# Pure-JAX f32 reference (unfused, unfolded) — sanity check for kernel + folds
# --------------------------------------------------------------------------- #
def _ref_lstm_layer(x, w_ih, w_hh, b_ih, b_hh):
    B, T, _ = x.shape
    H = w_hh.shape[1]
    xg = x @ w_ih.T + (b_ih + b_hh)  # (B, T, 4H)

    def step(carry, xg_t):
        h, c = carry
        gates = xg_t + h @ w_hh.T
        i = jax.nn.sigmoid(gates[:, 0 * H:1 * H])
        f = jax.nn.sigmoid(gates[:, 1 * H:2 * H])
        g = jnp.tanh(gates[:, 2 * H:3 * H])
        o = jax.nn.sigmoid(gates[:, 3 * H:4 * H])
        c = f * c + i * g
        h = o * jnp.tanh(c)
        return (h, c), h

    (_, _), hs = lax.scan(step, (jnp.zeros((B, H)), jnp.zeros((B, H))),
                          xg.transpose(1, 0, 2))
    return hs.transpose(1, 0, 2)


def _ref_forward(x, params):
    def bn(x, g, b, m, v, eps=1e-5):
        return (x - m) / jnp.sqrt(v + eps) * g + b

    out = _ref_lstm_layer(x, *params["rnn1"]); out = bn(out, *params["bn1"])
    out = _ref_lstm_layer(out, *params["rnn2"]); out = bn(out, *params["bn2"])
    out = _ref_lstm_layer(out, *params["rnn3"]); out = bn(out, *params["bn3"])
    w_fc, b_fc = params["fc"]
    return out[:, -1, :] @ w_fc.T + b_fc


# --------------------------------------------------------------------------- #
if __name__ == "__main__":
    key = jax.random.PRNGKey(0)
    kp, kx = jax.random.split(key)
    n_classes = 4
    B, T, F = 2, 8, 1008  # input_size fixed to 1008 by the module

    params = init_params(kp, n_classes=n_classes)
    x = jax.random.normal(kx, (B, T, F), jnp.float32)

    fp = fold_params(params, n_classes)          # one-time host-side prep
    fwd = jax.jit(functools.partial(stacked_rnn_forward, n_classes=n_classes))

    logits = jax.block_until_ready(fwd(x, fp))
    assert logits.shape == (B, n_classes)

    ref = jax.block_until_ready(_ref_forward(x, params))
    max_err = float(jnp.max(jnp.abs(logits - ref)))
    # Tolerance loosened vs. the pure-f32 version: kernel weights are bf16
    # (K=1008 accumulation) and the reference itself runs at default TPU
    # matmul precision.
    assert max_err < 5e-2, f"mismatch vs reference: max_err={max_err}"

    print("KERNEL_OK")
</pallas_src>

<mosaic_0001>
module attributes {stable_mosaic.version = 11 : i64} {
  func.func @fused_stacked_rnn_kernel(%arg0: memref<16x1008xf32, #tpu.memory_space<vmem>>, %arg1: memref<1008x512xbf16, #tpu.memory_space<vmem>>, %arg2: memref<1x512xf32, #tpu.memory_space<vmem>>, %arg3: memref<128x512xbf16, #tpu.memory_space<vmem>>, %arg4: memref<128x512xbf16, #tpu.memory_space<vmem>>, %arg5: memref<1x512xf32, #tpu.memory_space<vmem>>, %arg6: memref<128x512xbf16, #tpu.memory_space<vmem>>, %arg7: memref<128x512xbf16, #tpu.memory_space<vmem>>, %arg8: memref<1x512xf32, #tpu.memory_space<vmem>>, %arg9: memref<128x512xbf16, #tpu.memory_space<vmem>>, %arg10: memref<128x128xbf16, #tpu.memory_space<vmem>>, %arg11: memref<1x128xf32, #tpu.memory_space<vmem>>, %arg12: memref<2x128xf32, #tpu.memory_space<vmem>>) attributes {dimension_semantics = [], scalar_prefetch = 0 : i64, scratch_operands = 0 : i64, tpu.core_type = #tpu.core_type<tc>} {
    %c0 = arith.constant 0 : index
    %c0_0 = arith.constant 0 : index
    %0 = vector.load %arg0[%c0, %c0_0] : memref<16x1008xf32, #tpu.memory_space<vmem>>, vector<16x1008xf32>
    %1 = arith.truncf %0 : vector<16x1008xf32> to vector<16x1008xbf16>
    %c0_1 = arith.constant 0 : index
    %c0_2 = arith.constant 0 : index
    %2 = vector.load %arg1[%c0_1, %c0_2] : memref<1008x512xbf16, #tpu.memory_space<vmem>>, vector<1008x512xbf16>
    %cst = arith.constant dense<0.000000e+00> : vector<16x512xf32>
    %3 = tpu.matmul %1, %2, %cst {dimension_numbers = #tpu.dot_dimension_numbers<[1], [0], [0], [1], [0, 0, 1, 1], [], []>} : vector<16x1008xbf16>, vector<1008x512xbf16>, vector<16x512xf32> -> vector<16x512xf32>
    %c0_3 = arith.constant 0 : index
    %c0_4 = arith.constant 0 : index
    %4 = vector.load %arg2[%c0_3, %c0_4] : memref<1x512xf32, #tpu.memory_space<vmem>>, vector<1x512xf32>
    %5 = vector.broadcast %4 : vector<1x512xf32> to vector<16x512xf32>
    %6 = arith.addf %3, %5 : vector<16x512xf32>
    %c0_5 = arith.constant 0 : index
    %c0_6 = arith.constant 0 : index
    %7 = vector.load %arg3[%c0_5, %c0_6] : memref<128x512xbf16, #tpu.memory_space<vmem>>, vector<128x512xbf16>
    %c0_7 = arith.constant 0 : index
    %c0_8 = arith.constant 0 : index
    %8 = vector.load %arg4[%c0_7, %c0_8] : memref<128x512xbf16, #tpu.memory_space<vmem>>, vector<128x512xbf16>
    %c0_9 = arith.constant 0 : index
    %c0_10 = arith.constant 0 : index
    %9 = vector.load %arg5[%c0_9, %c0_10] : memref<1x512xf32, #tpu.memory_space<vmem>>, vector<1x512xf32>
    %c0_11 = arith.constant 0 : index
    %c0_12 = arith.constant 0 : index
    %10 = vector.load %arg6[%c0_11, %c0_12] : memref<128x512xbf16, #tpu.memory_space<vmem>>, vector<128x512xbf16>
    %c0_13 = arith.constant 0 : index
    %c0_14 = arith.constant 0 : index
    %11 = vector.load %arg7[%c0_13, %c0_14] : memref<128x512xbf16, #tpu.memory_space<vmem>>, vector<128x512xbf16>
    %c0_15 = arith.constant 0 : index
    %c0_16 = arith.constant 0 : index
    %12 = vector.load %arg8[%c0_15, %c0_16] : memref<1x512xf32, #tpu.memory_space<vmem>>, vector<1x512xf32>
    %c0_17 = arith.constant 0 : index
    %c0_18 = arith.constant 0 : index
    %13 = vector.load %arg9[%c0_17, %c0_18] : memref<128x512xbf16, #tpu.memory_space<vmem>>, vector<128x512xbf16>
    %cst_19 = arith.constant 0.000000e+00 : f32
    %14 = vector.broadcast %cst_19 : f32 to vector<2x128xf32>
    %cst_20 = arith.constant 0.000000e+00 : f32
    %15 = vector.broadcast %cst_20 : f32 to vector<2x128xf32>
    %cst_21 = arith.constant 0.000000e+00 : f32
    %16 = vector.broadcast %cst_21 : f32 to vector<2x128xf32>
    %cst_22 = arith.constant 0.000000e+00 : f32
    %17 = vector.broadcast %cst_22 : f32 to vector<2x128xf32>
    %cst_23 = arith.constant 0.000000e+00 : f32
    %18 = vector.broadcast %cst_23 : f32 to vector<2x128xf32>
    %cst_24 = arith.constant 0.000000e+00 : f32
    %19 = vector.broadcast %cst_24 : f32 to vector<2x128xf32>
    %20 = vector.extract_strided_slice %6 {offsets = [0, 0], sizes = [2, 512], strides = [1, 1]} : vector<16x512xf32> to vector<2x512xf32>
    %21 = arith.truncf %14 : vector<2x128xf32> to vector<2x128xbf16>
    %cst_25 = arith.constant dense<0.000000e+00> : vector<2x512xf32>
    %22 = tpu.matmul %21, %7, %cst_25 {dimension_numbers = #tpu.dot_dimension_numbers<[1], [0], [0], [1], [0, 0, 1, 1], [], []>} : vector<2x128xbf16>, vector<128x512xbf16>, vector<2x512xf32> -> vector<2x512xf32>
    %23 = arith.addf %20, %22 : vector<2x512xf32>
    %24 = arith.negf %23 : vector<2x512xf32>
    %25 = math.exp %24 : vector<2x512xf32>
    %cst_26 = arith.constant 1.000000e+00 : f32
    %26 = vector.broadcast %cst_26 : f32 to vector<2x512xf32>
    %27 = arith.addf %26, %25 : vector<2x512xf32>
    %28 = arith.divf %26, %27 : vector<2x512xf32>
    %29 = vector.extract_strided_slice %28 {offsets = [0, 0], sizes = [2, 128], strides = [1, 1]} : vector<2x512xf32> to vector<2x128xf32>
    %30 = vector.extract_strided_slice %28 {offsets = [0, 128], sizes = [2, 128], strides = [1, 1]} : vector<2x512xf32> to vector<2x128xf32>
    %31 = vector.extract_strided_slice %28 {offsets = [0, 256], sizes = [2, 128], strides = [1, 1]} : vector<2x512xf32> to vector<2x128xf32>
    %cst_27 = arith.constant 2.000000e+00 : f32
    %32 = vector.broadcast %cst_27 : f32 to vector<2x128xf32>
    %33 = arith.mulf %32, %31 : vector<2x128xf32>
    %cst_28 = arith.constant 1.000000e+00 : f32
    %34 = vector.broadcast %cst_28 : f32 to vector<2x128xf32>
    %35 = arith.subf %33, %34 : vector<2x128xf32>
    %36 = vector.extract_strided_slice %28 {offsets = [0, 384], sizes = [2, 128], strides = [1, 1]} : vector<2x512xf32> to vector<2x128xf32>
    %37 = arith.mulf %30, %15 : vector<2x128xf32>
    %38 = arith.mulf %29, %35 : vector<2x128xf32>
    %39 = arith.addf %37, %38 : vector<2x128xf32>
    %40 = math.tanh %39 : vector<2x128xf32>
    %41 = arith.mulf %36, %40 : vector<2x128xf32>
    %42 = arith.truncf %41 : vector<2x128xf32> to vector<2x128xbf16>
    %cst_29 = arith.constant dense<0.000000e+00> : vector<2x512xf32>
    %43 = tpu.matmul %42, %8, %cst_29 {dimension_numbers = #tpu.dot_dimension_numbers<[1], [0], [0], [1], [0, 0, 1, 1], [], []>} : vector<2x128xbf16>, vector<128x512xbf16>, vector<2x512xf32> -> vector<2x512xf32>
    %44 = vector.broadcast %9 : vector<1x512xf32> to vector<2x512xf32>
    %45 = arith.addf %43, %44 : vector<2x512xf32>
    %46 = arith.truncf %16 : vector<2x128xf32> to vector<2x128xbf16>
    %cst_30 = arith.constant dense<0.000000e+00> : vector<2x512xf32>
    %47 = tpu.matmul %46, %10, %cst_30 {dimension_numbers = #tpu.dot_dimension_numbers<[1], [0], [0], [1], [0, 0, 1, 1], [], []>} : vector<2x128xbf16>, vector<128x512xbf16>, vector<2x512xf32> -> vector<2x512xf32>
    %48 = arith.addf %45, %47 : vector<2x512xf32>
    %49 = arith.negf %48 : vector<2x512xf32>
    %50 = math.exp %49 : vector<2x512xf32>
    %cst_31 = arith.constant 1.000000e+00 : f32
    %51 = vector.broadcast %cst_31 : f32 to vector<2x512xf32>
    %52 = arith.addf %51, %50 : vector<2x512xf32>
    %53 = arith.divf %51, %52 : vector<2x512xf32>
    %54 = vector.extract_strided_slice %53 {offsets = [0, 0], sizes = [2, 128], strides = [1, 1]} : vector<2x512xf32> to vector<2x128xf32>
    %55 = vector.extract_strided_slice %53 {offsets = [0, 128], sizes = [2, 128], strides = [1, 1]} : vector<2x512xf32> to vector<2x128xf32>
    %56 = vector.extract_strided_slice %53 {offsets = [0, 256], sizes = [2, 128], strides = [1, 1]} : vector<2x512xf32> to vector<2x128xf32>
    %cst_32 = arith.constant 2.000000e+00 : f32
    %57 = vector.broadcast %cst_32 : f32 to vector<2x128xf32>
    %58 = arith.mulf %57, %56 : vector<2x128xf32>
    %cst_33 = arith.constant 1.000000e+00 : f32
    %59 = vector.broadcast %cst_33 : f32 to vector<2x128xf32>
    %60 = arith.subf %58, %59 : vector<2x128xf32>
    %61 = vector.extract_strided_slice %53 {offsets = [0, 384], sizes = [2, 128], strides = [1, 1]} : vector<2x512xf32> to vector<2x128xf32>
    %62 = arith.mulf %55, %17 : vector<2x128xf32>
    %63 = arith.mulf %54, %60 : vector<2x128xf32>
    %64 = arith.addf %62, %63 : vector<2x128xf32>
    %65 = math.tanh %64 : vector<2x128xf32>
    %66 = arith.mulf %61, %65 : vector<2x128xf32>
    %67 = arith.truncf %66 : vector<2x128xf32> to vector<2x128xbf16>
    %cst_34 = arith.constant dense<0.000000e+00> : vector<2x512xf32>
    %68 = tpu.matmul %67, %11, %cst_34 {dimension_numbers = #tpu.dot_dimension_numbers<[1], [0], [0], [1], [0, 0, 1, 1], [], []>} : vector<2x128xbf16>, vector<128x512xbf16>, vector<2x512xf32> -> vector<2x512xf32>
    %69 = vector.broadcast %12 : vector<1x512xf32> to vector<2x512xf32>
    %70 = arith.addf %68, %69 : vector<2x512xf32>
    %71 = arith.truncf %18 : vector<2x128xf32> to vector<2x128xbf16>
    %cst_35 = arith.constant dense<0.000000e+00> : vector<2x512xf32>
    %72 = tpu.matmul %71, %13, %cst_35 {dimension_numbers = #tpu.dot_dimension_numbers<[1], [0], [0], [1], [0, 0, 1, 1], [], []>} : vector<2x128xbf16>, vector<128x512xbf16>, vector<2x512xf32> -> vector<2x512xf32>
    %73 = arith.addf %70, %72 : vector<2x512xf32>
    %74 = arith.negf %73 : vector<2x512xf32>
    %75 = math.exp %74 : vector<2x512xf32>
    %cst_36 = arith.constant 1.000000e+00 : f32
    %76 = vector.broadcast %cst_36 : f32 to vector<2x512xf32>
    %77 = arith.addf %76, %75 : vector<2x512xf32>
    %78 = arith.divf %76, %77 : vector<2x512xf32>
    %79 = vector.extract_strided_slice %78 {offsets = [0, 0], sizes = [2, 128], strides = [1, 1]} : vector<2x512xf32> to vector<2x128xf32>
    %80 = vector.extract_strided_slice %78 {offsets = [0, 128], sizes = [2, 128], strides = [1, 1]} : vector<2x512xf32> to vector<2x128xf32>
    %81 = vector.extract_strided_slice %78 {offsets = [0, 256], sizes = [2, 128], strides = [1, 1]} : vector<2x512xf32> to vector<2x128xf32>
    %cst_37 = arith.constant 2.000000e+00 : f32
    %82 = vector.broadcast %cst_37 : f32 to vector<2x128xf32>
    %83 = arith.mulf %82, %81 : vector<2x128xf32>
    %cst_38 = arith.constant 1.000000e+00 : f32
    %84 = vector.broadcast %cst_38 : f32 to vector<2x128xf32>
    %85 = arith.subf %83, %84 : vector<2x128xf32>
    %86 = vector.extract_strided_slice %78 {offsets = [0, 384], sizes = [2, 128], strides = [1, 1]} : vector<2x512xf32> to vector<2x128xf32>
    %87 = arith.mulf %80, %19 : vector<2x128xf32>
    %88 = arith.mulf %79, %85 : vector<2x128xf32>
    %89 = arith.addf %87, %88 : vector<2x128xf32>
    %90 = math.tanh %89 : vector<2x128xf32>
    %91 = arith.mulf %86, %90 : vector<2x128xf32>
    %92 = vector.extract_strided_slice %6 {offsets = [2, 0], sizes = [2, 512], strides = [1, 1]} : vector<16x512xf32> to vector<2x512xf32>
    %93 = arith.truncf %41 : vector<2x128xf32> to vector<2x128xbf16>
    %cst_39 = arith.constant dense<0.000000e+00> : vector<2x512xf32>
    %94 = tpu.matmul %93, %7, %cst_39 {dimension_numbers = #tpu.dot_dimension_numbers<[1], [0], [0], [1], [0, 0, 1, 1], [], []>} : vector<2x128xbf16>, vector<128x512xbf16>, vector<2x512xf32> -> vector<2x512xf32>
    %95 = arith.addf %92, %94 : vector<2x512xf32>
    %96 = arith.negf %95 : vector<2x512xf32>
    %97 = math.exp %96 : vector<2x512xf32>
    %cst_40 = arith.constant 1.000000e+00 : f32
    %98 = vector.broadcast %cst_40 : f32 to vector<2x512xf32>
    %99 = arith.addf %98, %97 : vector<2x512xf32>
    %100 = arith.divf %98, %99 : vector<2x512xf32>
    %101 = vector.extract_strided_slice %100 {offsets = [0, 0], sizes = [2, 128], strides = [1, 1]} : vector<2x512xf32> to vector<2x128xf32>
    %102 = vector.extract_strided_slice %100 {offsets = [0, 128], sizes = [2, 128], strides = [1, 1]} : vector<2x512xf32> to vector<2x128xf32>
    %103 = vector.extract_strided_slice %100 {offsets = [0, 256], sizes = [2, 128], strides = [1, 1]} : vector<2x512xf32> to vector<2x128xf32>
    %cst_41 = arith.constant 2.000000e+00 : f32
    %104 = vector.broadcast %cst_41 : f32 to vector<2x128xf32>
    %105 = arith.mulf %104, %103 : vector<2x128xf32>
    %cst_42 = arith.constant 1.000000e+00 : f32
    %106 = vector.broadcast %cst_42 : f32 to vector<2x128xf32>
    %107 = arith.subf %105, %106 : vector<2x128xf32>
    %108 = vector.extract_strided_slice %100 {offsets = [0, 384], sizes = [2, 128], strides = [1, 1]} : vector<2x512xf32> to vector<2x128xf32>
    %109 = arith.mulf %102, %39 : vector<2x128xf32>
    %110 = arith.mulf %101, %107 : vector<2x128xf32>
    %111 = arith.addf %109, %110 : vector<2x128xf32>
    %112 = math.tanh %111 : vector<2x128xf32>
    %113 = arith.mulf %108, %112 : vector<2x128xf32>
    %114 = arith.truncf %113 : vector<2x128xf32> to vector<2x128xbf16>
    %cst_43 = arith.constant dense<0.000000e+00> : vector<2x512xf32>
    %115 = tpu.matmul %114, %8, %cst_43 {dimension_numbers = #tpu.dot_dimension_numbers<[1], [0], [0], [1], [0, 0, 1, 1], [], []>} : vector<2x128xbf16>, vector<128x512xbf16>, vector<2x512xf32> -> vector<2x512xf32>
    %116 = vector.broadcast %9 : vector<1x512xf32> to vector<2x512xf32>
    %117 = arith.addf %115, %116 : vector<2x512xf32>
    %118 = arith.truncf %66 : vector<2x128xf32> to vector<2x128xbf16>
    %cst_44 = arith.constant dense<0.000000e+00> : vector<2x512xf32>
    %119 = tpu.matmul %118, %10, %cst_44 {dimension_numbers = #tpu.dot_dimension_numbers<[1], [0], [0], [1], [0, 0, 1, 1], [], []>} : vector<2x128xbf16>, vector<128x512xbf16>, vector<2x512xf32> -> vector<2x512xf32>
    %120 = arith.addf %117, %119 : vector<2x512xf32>
    %121 = arith.negf %120 : vector<2x512xf32>
    %122 = math.exp %121 : vector<2x512xf32>
    %cst_45 = arith.constant 1.000000e+00 : f32
    %123 = vector.broadcast %cst_45 : f32 to vector<2x512xf32>
    %124 = arith.addf %123, %122 : vector<2x512xf32>
    %125 = arith.divf %123, %124 : vector<2x512xf32>
    %126 = vector.extract_strided_slice %125 {offsets = [0, 0], sizes = [2, 128], strides = [1, 1]} : vector<2x512xf32> to vector<2x128xf32>
    %127 = vector.extract_strided_slice %125 {offsets = [0, 128], sizes = [2, 128], strides = [1, 1]} : vector<2x512xf32> to vector<2x128xf32>
    %128 = vector.extract_strided_slice %125 {offsets = [0, 256], sizes = [2, 128], strides = [1, 1]} : vector<2x512xf32> to vector<2x128xf32>
    %cst_46 = arith.constant 2.000000e+00 : f32
    %129 = vector.broadcast %cst_46 : f32 to vector<2x128xf32>
    %130 = arith.mulf %129, %128 : vector<2x128xf32>
    %cst_47 = arith.constant 1.000000e+00 : f32
    %131 = vector.broadcast %cst_47 : f32 to vector<2x128xf32>
    %132 = arith.subf %130, %131 : vector<2x128xf32>
    %133 = vector.extract_strided_slice %125 {offsets = [0, 384], sizes = [2, 128], strides = [1, 1]} : vector<2x512xf32> to vector<2x128xf32>
    %134 = arith.mulf %127, %64 : vector<2x128xf32>
    %135 = arith.mulf %126, %132 : vector<2x128xf32>
    %136 = arith.addf %134, %135 : vector<2x128xf32>
    %137 = math.tanh %136 : vector<2x128xf32>
    %138 = arith.mulf %133, %137 : vector<2x128xf32>
    %139 = arith.truncf %138 : vector<2x128xf32> to vector<2x128xbf16>
    %cst_48 = arith.constant dense<0.000000e+00> : vector<2x512xf32>
    %140 = tpu.matmul %139, %11, %cst_48 {dimension_numbers = #tpu.dot_dimension_numbers<[1], [0], [0], [1], [0, 0, 1, 1], [], []>} : vector<2x128xbf16>, vector<128x512xbf16>, vector<2x512xf32> -> vector<2x512xf32>
    %141 = vector.broadcast %12 : vector<1x512xf32> to vector<2x512xf32>
    %142 = arith.addf %140, %141 : vector<2x512xf32>
    %143 = arith.truncf %91 : vector<2x128xf32> to vector<2x128xbf16>
    %cst_49 = arith.constant dense<0.000000e+00> : vector<2x512xf32>
    %144 = tpu.matmul %143, %13, %cst_49 {dimension_numbers = #tpu.dot_dimension_numbers<[1], [0], [0], [1], [0, 0, 1, 1], [], []>} : vector<2x128xbf16>, vector<128x512xbf16>, vector<2x512xf32> -> vector<2x512xf32>
    %145 = arith.addf %142, %144 : vector<2x512xf32>
    %146 = arith.negf %145 : vector<2x512xf32>
    %147 = math.exp %146 : vector<2x512xf32>
    %cst_50 = arith.constant 1.000000e+00 : f32
    %148 = vector.broadcast %cst_50 : f32 to vector<2x512xf32>
    %149 = arith.addf %148, %147 : vector<2x512xf32>
    %150 = arith.divf %148, %149 : vector<2x512xf32>
    %151 = vector.extract_strided_slice %150 {offsets = [0, 0], sizes = [2, 128], strides = [1, 1]} : vector<2x512xf32> to vector<2x128xf32>
    %152 = vector.extract_strided_slice %150 {offsets = [0, 128], sizes = [2, 128], strides = [1, 1]} : vector<2x512xf32> to vector<2x128xf32>
    %153 = vector.extract_strided_slice %150 {offsets = [0, 256], sizes = [2, 128], strides = [1, 1]} : vector<2x512xf32> to vector<2x128xf32>
    %cst_51 = arith.constant 2.000000e+00 : f32
    %154 = vector.broadcast %cst_51 : f32 to vector<2x128xf32>
    %155 = arith.mulf %154, %153 : vector<2x128xf32>
    %cst_52 = arith.constant 1.000000e+00 : f32
    %156 = vector.broadcast %cst_52 : f32 to vector<2x128xf32>
    %157 = arith.subf %155, %156 : vector<2x128xf32>
    %158 = vector.extract_strided_slice %150 {offsets = [0, 384], sizes = [2, 128], strides = [1, 1]} : vector<2x512xf32> to vector<2x128xf32>
    %159 = arith.mulf %152, %89 : vector<2x128xf32>
    %160 = arith.mulf %151, %157 : vector<2x128xf32>
    %161 = arith.addf %159, %160 : vector<2x128xf32>
    %162 = math.tanh %161 : vector<2x128xf32>
    %163 = arith.mulf %158, %162 : vector<2x128xf32>
    %164 = vector.extract_strided_slice %6 {offsets = [4, 0], sizes = [2, 512], strides = [1, 1]} : vector<16x512xf32> to vector<2x512xf32>
    %165 = arith.truncf %113 : vector<2x128xf32> to vector<2x128xbf16>
    %cst_53 = arith.constant dense<0.000000e+00> : vector<2x512xf32>
    %166 = tpu.matmul %165, %7, %cst_53 {dimension_numbers = #tpu.dot_dimension_numbers<[1], [0], [0], [1], [0, 0, 1, 1], [], []>} : vector<2x128xbf16>, vector<128x512xbf16>, vector<2x512xf32> -> vector<2x512xf32>
    %167 = arith.addf %164, %166 : vector<2x512xf32>
    %168 = arith.negf %167 : vector<2x512xf32>
    %169 = math.exp %168 : vector<2x512xf32>
    %cst_54 = arith.constant 1.000000e+00 : f32
    %170 = vector.broadcast %cst_54 : f32 to vector<2x512xf32>
    %171 = arith.addf %170, %169 : vector<2x512xf32>
    %172 = arith.divf %170, %171 : vector<2x512xf32>
    %173 = vector.extract_strided_slice %172 {offsets = [0, 0], sizes = [2, 128], strides = [1, 1]} : vector<2x512xf32> to vector<2x128xf32>
    %174 = vector.extract_strided_slice %172 {offsets = [0, 128], sizes = [2, 128], strides = [1, 1]} : vector<2x512xf32> to vector<2x128xf32>
    %175 = vector.extract_strided_slice %172 {offsets = [0, 256], sizes = [2, 128], strides = [1, 1]} : vector<2x512xf32> to vector<2x128xf32>
    %cst_55 = arith.constant 2.000000e+00 : f32
    %176 = vector.broadcast %cst_55 : f32 to vector<2x128xf32>
    %177 = arith.mulf %176, %175 : vector<2x128xf32>
    %cst_56 = arith.constant 1.000000e+00 : f32
    %178 = vector.broadcast %cst_56 : f32 to vector<2x128xf32>
    %179 = arith.subf %177, %178 : vector<2x128xf32>
    %180 = vector.extract_strided_slice %172 {offsets = [0, 384], sizes = [2, 128], strides = [1, 1]} : vector<2x512xf32> to vector<2x128xf32>
    %181 = arith.mulf %174, %111 : vector<2x128xf32>
    %182 = arith.mulf %173, %179 : vector<2x128xf32>
    %183 = arith.addf %181, %182 : vector<2x128xf32>
    %184 = math.tanh %183 : vector<2x128xf32>
    %185 = arith.mulf %180, %184 : vector<2x128xf32>
    %186 = arith.truncf %185 : vector<2x128xf32> to vector<2x128xbf16>
    %cst_57 = arith.constant dense<0.000000e+00> : vector<2x512xf32>
    %187 = tpu.matmul %186, %8, %cst_57 {dimension_numbers = #tpu.dot_dimension_numbers<[1], [0], [0], [1], [0, 0, 1, 1], [], []>} : vector<2x128xbf16>, vector<128x512xbf16>, vector<2x512xf32> -> vector<2x512xf32>
    %188 = vector.broadcast %9 : vector<1x512xf32> to vector<2x512xf32>
    %189 = arith.addf %187, %188 : vector<2x512xf32>
    %190 = arith.truncf %138 : vector<2x128xf32> to vector<2x128xbf16>
    %cst_58 = arith.constant dense<0.000000e+00> : vector<2x512xf32>
    %191 = tpu.matmul %190, %10, %cst_58 {dimension_numbers = #tpu.dot_dimension_numbers<[1], [0], [0], [1], [0, 0, 1, 1], [], []>} : vector<2x128xbf16>, vector<128x512xbf16>, vector<2x512xf32> -> vector<2x512xf32>
    %192 = arith.addf %189, %191 : vector<2x512xf32>
    %193 = arith.negf %192 : vector<2x512xf32>
    %194 = math.exp %193 : vector<2x512xf32>
    %cst_59 = arith.constant 1.000000e+00 : f32
    %195 = vector.broadcast %cst_59 : f32 to vector<2x512xf32>
    %196 = arith.addf %195, %194 : vector<2x512xf32>
    %197 = arith.divf %195, %196 : vector<2x512xf32>
    %198 = vector.extract_strided_slice %197 {offsets = [0, 0], sizes = [2, 128], strides = [1, 1]} : vector<2x512xf32> to vector<2x128xf32>
    %199 = vector.extract_strided_slice %197 {offsets = [0, 128], sizes = [2, 128], strides = [1, 1]} : vector<2x512xf32> to vector<2x128xf32>
    %200 = vector.extract_strided_slice %197 {offsets = [0, 256], sizes = [2, 128], strides = [1, 1]} : vector<2x512xf32> to vector<2x128xf32>
    %cst_60 = arith.constant 2.000000e+00 : f32
    %201 = vector.broadcast %cst_60 : f32 to vector<2x128xf32>
    %202 = arith.mulf %201, %200 : vector<2x128xf32>
    %cst_61 = arith.constant 1.000000e+00 : f32
    %203 = vector.broadcast %cst_61 : f32 to vector<2x128xf32>
    %204 = arith.subf %202, %203 : vector<2x128xf32>
    %205 = vector.extract_strided_slice %197 {offsets = [0, 384], sizes = [2, 128], strides = [1, 1]} : vector<2x512xf32> to vector<2x128xf32>
    %206 = arith.mulf %199, %136 : vector<2x128xf32>
    %207 = arith.mulf %198, %204 : vector<2x128xf32>
    %208 = arith.addf %206, %207 : vector<2x128xf32>
    %209 = math.tanh %208 : vector<2x128xf32>
    %210 = arith.mulf %205, %209 : vector<2x128xf32>
    %211 = arith.truncf %210 : vector<2x128xf32> to vector<2x128xbf16>
    %cst_62 = arith.constant dense<0.000000e+00> : vector<2x512xf32>
    %212 = tpu.matmul %211, %11, %cst_62 {dimension_numbers = #tpu.dot_dimension_numbers<[1], [0], [0], [1], [0, 0, 1, 1], [], []>} : vector<2x128xbf16>, vector<128x512xbf16>, vector<2x512xf32> -> vector<2x512xf32>
    %213 = vector.broadcast %12 : vector<1x512xf32> to vector<2x512xf32>
    %214 = arith.addf %212, %213 : vector<2x512xf32>
    %215 = arith.truncf %163 : vector<2x128xf32> to vector<2x128xbf16>
    %cst_63 = arith.constant dense<0.000000e+00> : vector<2x512xf32>
    %216 = tpu.matmul %215, %13, %cst_63 {dimension_numbers = #tpu.dot_dimension_numbers<[1], [0], [0], [1], [0, 0, 1, 1], [], []>} : vector<2x128xbf16>, vector<128x512xbf16>, vector<2x512xf32> -> vector<2x512xf32>
    %217 = arith.addf %214, %216 : vector<2x512xf32>
    %218 = arith.negf %217 : vector<2x512xf32>
    %219 = math.exp %218 : vector<2x512xf32>
    %cst_64 = arith.constant 1.000000e+00 : f32
    %220 = vector.broadcast %cst_64 : f32 to vector<2x512xf32>
    %221 = arith.addf %220, %219 : vector<2x512xf32>
    %222 = arith.divf %220, %221 : vector<2x512xf32>
    %223 = vector.extract_strided_slice %222 {offsets = [0, 0], sizes = [2, 128], strides = [1, 1]} : vector<2x512xf32> to vector<2x128xf32>
    %224 = vector.extract_strided_slice %222 {offsets = [0, 128], sizes = [2, 128], strides = [1, 1]} : vector<2x512xf32> to vector<2x128xf32>
    %225 = vector.extract_strided_slice %222 {offsets = [0, 256], sizes = [2, 128], strides = [1, 1]} : vector<2x512xf32> to vector<2x128xf32>
    %cst_65 = arith.constant 2.000000e+00 : f32
    %226 = vector.broadcast %cst_65 : f32 to vector<2x128xf32>
    %227 = arith.mulf %226, %225 : vector<2x128xf32>
    %cst_66 = arith.constant 1.000000e+00 : f32
    %228 = vector.broadcast %cst_66 : f32 to vector<2x128xf32>
    %229 = arith.subf %227, %228 : vector<2x128xf32>
    %230 = vector.extract_strided_slice %222 {offsets = [0, 384], sizes = [2, 128], strides = [1, 1]} : vector<2x512xf32> to vector<2x128xf32>
    %231 = arith.mulf %224, %161 : vector<2x128xf32>
    %232 = arith.mulf %223, %229 : vector<2x128xf32>
    %233 = arith.addf %231, %232 : vector<2x128xf32>
    %234 = math.tanh %233 : vector<2x128xf32>
    %235 = arith.mulf %230, %234 : vector<2x128xf32>
    %236 = vector.extract_strided_slice %6 {offsets = [6, 0], sizes = [2, 512], strides = [1, 1]} : vector<16x512xf32> to vector<2x512xf32>
    %237 = arith.truncf %185 : vector<2x128xf32> to vector<2x128xbf16>
    %cst_67 = arith.constant dense<0.000000e+00> : vector<2x512xf32>
    %238 = tpu.matmul %237, %7, %cst_67 {dimension_numbers = #tpu.dot_dimension_numbers<[1], [0], [0], [1], [0, 0, 1, 1], [], []>} : vector<2x128xbf16>, vector<128x512xbf16>, vector<2x512xf32> -> vector<2x512xf32>
    %239 = arith.addf %236, %238 : vector<2x512xf32>
    %240 = arith.negf %239 : vector<2x512xf32>
    %241 = math.exp %240 : vector<2x512xf32>
    %cst_68 = arith.constant 1.000000e+00 : f32
    %242 = vector.broadcast %cst_68 : f32 to vector<2x512xf32>
    %243 = arith.addf %242, %241 : vector<2x512xf32>
    %244 = arith.divf %242, %243 : vector<2x512xf32>
    %245 = vector.extract_strided_slice %244 {offsets = [0, 0], sizes = [2, 128], strides = [1, 1]} : vector<2x512xf32> to vector<2x128xf32>
    %246 = vector.extract_strided_slice %244 {offsets = [0, 128], sizes = [2, 128], strides = [1, 1]} : vector<2x512xf32> to vector<2x128xf32>
    %247 = vector.extract_strided_slice %244 {offsets = [0, 256], sizes = [2, 128], strides = [1, 1]} : vector<2x512xf32> to vector<2x128xf32>
    %cst_69 = arith.constant 2.000000e+00 : f32
    %248 = vector.broadcast %cst_69 : f32 to vector<2x128xf32>
    %249 = arith.mulf %248, %247 : vector<2x128xf32>
    %cst_70 = arith.constant 1.000000e+00 : f32
    %250 = vector.broadcast %cst_70 : f32 to vector<2x128xf32>
    %251 = arith.subf %249, %250 : vector<2x128xf32>
    %252 = vector.extract_strided_slice %244 {offsets = [0, 384], sizes = [2, 128], strides = [1, 1]} : vector<2x512xf32> to vector<2x128xf32>
    %253 = arith.mulf %246, %183 : vector<2x128xf32>
    %254 = arith.mulf %245, %251 : vector<2x128xf32>
    %255 = arith.addf %253, %254 : vector<2x128xf32>
    %256 = math.tanh %255 : vector<2x128xf32>
    %257 = arith.mulf %252, %256 : vector<2x128xf32>
    %258 = arith.truncf %257 : vector<2x128xf32> to vector<2x128xbf16>
    %cst_71 = arith.constant dense<0.000000e+00> : vector<2x512xf32>
    %259 = tpu.matmul %258, %8, %cst_71 {dimension_numbers = #tpu.dot_dimension_numbers<[1], [0], [0], [1], [0, 0, 1, 1], [], []>} : vector<2x128xbf16>, vector<128x512xbf16>, vector<2x512xf32> -> vector<2x512xf32>
    %260 = vector.broadcast %9 : vector<1x512xf32> to vector<2x512xf32>
    %261 = arith.addf %259, %260 : vector<2x512xf32>
    %262 = arith.truncf %210 : vector<2x128xf32> to vector<2x128xbf16>
    %cst_72 = arith.constant dense<0.000000e+00> : vector<2x512xf32>
    %263 = tpu.matmul %262, %10, %cst_72 {dimension_numbers = #tpu.dot_dimension_numbers<[1], [0], [0], [1], [0, 0, 1, 1], [], []>} : vector<2x128xbf16>, vector<128x512xbf16>, vector<2x512xf32> -> vector<2x512xf32>
    %264 = arith.addf %261, %263 : vector<2x512xf32>
    %265 = arith.negf %264 : vector<2x512xf32>
    %266 = math.exp %265 : vector<2x512xf32>
    %cst_73 = arith.constant 1.000000e+00 : f32
    %267 = vector.broadcast %cst_73 : f32 to vector<2x512xf32>
    %268 = arith.addf %267, %266 : vector<2x512xf32>
    %269 = arith.divf %267, %268 : vector<2x512xf32>
    %270 = vector.extract_strided_slice %269 {offsets = [0, 0], sizes = [2, 128], strides = [1, 1]} : vector<2x512xf32> to vector<2x128xf32>
    %271 = vector.extract_strided_slice %269 {offsets = [0, 128], sizes = [2, 128], strides = [1, 1]} : vector<2x512xf32> to vector<2x128xf32>
    %272 = vector.extract_strided_slice %269 {offsets = [0, 256], sizes = [2, 128], strides = [1, 1]} : vector<2x512xf32> to vector<2x128xf32>
    %cst_74 = arith.constant 2.000000e+00 : f32
    %273 = vector.broadcast %cst_74 : f32 to vector<2x128xf32>
    %274 = arith.mulf %273, %272 : vector<2x128xf32>
    %cst_75 = arith.constant 1.000000e+00 : f32
    %275 = vector.broadcast %cst_75 : f32 to vector<2x128xf32>
    %276 = arith.subf %274, %275 : vector<2x128xf32>
    %277 = vector.extract_strided_slice %269 {offsets = [0, 384], sizes = [2, 128], strides = [1, 1]} : vector<2x512xf32> to vector<2x128xf32>
    %278 = arith.mulf %271, %208 : vector<2x128xf32>
    %279 = arith.mulf %270, %276 : vector<2x128xf32>
    %280 = arith.addf %278, %279 : vector<2x128xf32>
    %281 = math.tanh %280 : vector<2x128xf32>
    %282 = arith.mulf %277, %281 : vector<2x128xf32>
    %283 = arith.truncf %282 : vector<2x128xf32> to vector<2x128xbf16>
    %cst_76 = arith.constant dense<0.000000e+00> : vector<2x512xf32>
    %284 = tpu.matmul %283, %11, %cst_76 {dimension_numbers = #tpu.dot_dimension_numbers<[1], [0], [0], [1], [0, 0, 1, 1], [], []>} : vector<2x128xbf16>, vector<128x512xbf16>, vector<2x512xf32> -> vector<2x512xf32>
    %285 = vector.broadcast %12 : vector<1x512xf32> to vector<2x512xf32>
    %286 = arith.addf %284, %285 : vector<2x512xf32>
    %287 = arith.truncf %235 : vector<2x128xf32> to vector<2x128xbf16>
    %cst_77 = arith.constant dense<0.000000e+00> : vector<2x512xf32>
    %288 = tpu.matmul %287, %13, %cst_77 {dimension_numbers = #tpu.dot_dimension_numbers<[1], [0], [0], [1], [0, 0, 1, 1], [], []>} : vector<2x128xbf16>, vector<128x512xbf16>, vector<2x512xf32> -> vector<2x512xf32>
    %289 = arith.addf %286, %288 : vector<2x512xf32>
    %290 = arith.negf %289 : vector<2x512xf32>
    %291 = math.exp %290 : vector<2x512xf32>
    %cst_78 = arith.constant 1.000000e+00 : f32
    %292 = vector.broadcast %cst_78 : f32 to vector<2x512xf32>
    %293 = arith.addf %292, %291 : vector<2x512xf32>
    %294 = arith.divf %292, %293 : vector<2x512xf32>
    %295 = vector.extract_strided_slice %294 {offsets = [0, 0], sizes = [2, 128], strides = [1, 1]} : vector<2x512xf32> to vector<2x128xf32>
    %296 = vector.extract_strided_slice %294 {offsets = [0, 128], sizes = [2, 128], strides = [1, 1]} : vector<2x512xf32> to vector<2x128xf32>
    %297 = vector.extract_strided_slice %294 {offsets = [0, 256], sizes = [2, 128], strides = [1, 1]} : vector<2x512xf32> to vector<2x128xf32>
    %cst_79 = arith.constant 2.000000e+00 : f32
    %298 = vector.broadcast %cst_79 : f32 to vector<2x128xf32>
    %299 = arith.mulf %298, %297 : vector<2x128xf32>
    %cst_80 = arith.constant 1.000000e+00 : f32
    %300 = vector.broadcast %cst_80 : f32 to vector<2x128xf32>
    %301 = arith.subf %299, %300 : vector<2x128xf32>
    %302 = vector.extract_strided_slice %294 {offsets = [0, 384], sizes = [2, 128], strides = [1, 1]} : vector<2x512xf32> to vector<2x128xf32>
    %303 = arith.mulf %296, %233 : vector<2x128xf32>
    %304 = arith.mulf %295, %301 : vector<2x128xf32>
    %305 = arith.addf %303, %304 : vector<2x128xf32>
    %306 = math.tanh %305 : vector<2x128xf32>
    %307 = arith.mulf %302, %306 : vector<2x128xf32>
    %308 = vector.extract_strided_slice %6 {offsets = [8, 0], sizes = [2, 512], strides = [1, 1]} : vector<16x512xf32> to vector<2x512xf32>
    %309 = arith.truncf %257 : vector<2x128xf32> to vector<2x128xbf16>
    %cst_81 = arith.constant dense<0.000000e+00> : vector<2x512xf32>
    %310 = tpu.matmul %309, %7, %cst_81 {dimension_numbers = #tpu.dot_dimension_numbers<[1], [0], [0], [1], [0, 0, 1, 1], [], []>} : vector<2x128xbf16>, vector<128x512xbf16>, vector<2x512xf32> -> vector<2x512xf32>
    %311 = arith.addf %308, %310 : vector<2x512xf32>
    %312 = arith.negf %311 : vector<2x512xf32>
    %313 = math.exp %312 : vector<2x512xf32>
    %cst_82 = arith.constant 1.000000e+00 : f32
    %314 = vector.broadcast %cst_82 : f32 to vector<2x512xf32>
    %315 = arith.addf %314, %313 : vector<2x512xf32>
    %316 = arith.divf %314, %315 : vector<2x512xf32>
    %317 = vector.extract_strided_slice %316 {offsets = [0, 0], sizes = [2, 128], strides = [1, 1]} : vector<2x512xf32> to vector<2x128xf32>
    %318 = vector.extract_strided_slice %316 {offsets = [0, 128], sizes = [2, 128], strides = [1, 1]} : vector<2x512xf32> to vector<2x128xf32>
    %319 = vector.extract_strided_slice %316 {offsets = [0, 256], sizes = [2, 128], strides = [1, 1]} : vector<2x512xf32> to vector<2x128xf32>
    %cst_83 = arith.constant 2.000000e+00 : f32
    %320 = vector.broadcast %cst_83 : f32 to vector<2x128xf32>
    %321 = arith.mulf %320, %319 : vector<2x128xf32>
    %cst_84 = arith.constant 1.000000e+00 : f32
    %322 = vector.broadcast %cst_84 : f32 to vector<2x128xf32>
    %323 = arith.subf %321, %322 : vector<2x128xf32>
    %324 = vector.extract_strided_slice %316 {offsets = [0, 384], sizes = [2, 128], strides = [1, 1]} : vector<2x512xf32> to vector<2x128xf32>
    %325 = arith.mulf %318, %255 : vector<2x128xf32>
    %326 = arith.mulf %317, %323 : vector<2x128xf32>
    %327 = arith.addf %325, %326 : vector<2x128xf32>
    %328 = math.tanh %327 : vector<2x128xf32>
    %329 = arith.mulf %324, %328 : vector<2x128xf32>
    %330 = arith.truncf %329 : vector<2x128xf32> to vector<2x128xbf16>
    %cst_85 = arith.constant dense<0.000000e+00> : vector<2x512xf32>
    %331 = tpu.matmul %330, %8, %cst_85 {dimension_numbers = #tpu.dot_dimension_numbers<[1], [0], [0], [1], [0, 0, 1, 1], [], []>} : vector<2x128xbf16>, vector<128x512xbf16>, vector<2x512xf32> -> vector<2x512xf32>
    %332 = vector.broadcast %9 : vector<1x512xf32> to vector<2x512xf32>
    %333 = arith.addf %331, %332 : vector<2x512xf32>
    %334 = arith.truncf %282 : vector<2x128xf32> to vector<2x128xbf16>
    %cst_86 = arith.constant dense<0.000000e+00> : vector<2x512xf32>
    %335 = tpu.matmul %334, %10, %cst_86 {dimension_numbers = #tpu.dot_dimension_numbers<[1], [0], [0], [1], [0, 0, 1, 1], [], []>} : vector<2x128xbf16>, vector<128x512xbf16>, vector<2x512xf32> -> vector<2x512xf32>
    %336 = arith.addf %333, %335 : vector<2x512xf32>
    %337 = arith.negf %336 : vector<2x512xf32>
    %338 = math.exp %337 : vector<2x512xf32>
    %cst_87 = arith.constant 1.000000e+00 : f32
    %339 = vector.broadcast %cst_87 : f32 to vector<2x512xf32>
    %340 = arith.addf %339, %338 : vector<2x512xf32>
    %341 = arith.divf %339, %340 : vector<2x512xf32>
    %342 = vector.extract_strided_slice %341 {offsets = [0, 0], sizes = [2, 128], strides = [1, 1]} : vector<2x512xf32> to vector<2x128xf32>
    %343 = vector.extract_strided_slice %341 {offsets = [0, 128], sizes = [2, 128], strides = [1, 1]} : vector<2x512xf32> to vector<2x128xf32>
    %344 = vector.extract_strided_slice %341 {offsets = [0, 256], sizes = [2, 128], strides = [1, 1]} : vector<2x512xf32> to vector<2x128xf32>
    %cst_88 = arith.constant 2.000000e+00 : f32
    %345 = vector.broadcast %cst_88 : f32 to vector<2x128xf32>
    %346 = arith.mulf %345, %344 : vector<2x128xf32>
    %cst_89 = arith.constant 1.000000e+00 : f32
    %347 = vector.broadcast %cst_89 : f32 to vector<2x128xf32>
    %348 = arith.subf %346, %347 : vector<2x128xf32>
    %349 = vector.extract_strided_slice %341 {offsets = [0, 384], sizes = [2, 128], strides = [1, 1]} : vector<2x512xf32> to vector<2x128xf32>
    %350 = arith.mulf %343, %280 : vector<2x128xf32>
    %351 = arith.mulf %342, %348 : vector<2x128xf32>
    %352 = arith.addf %350, %351 : vector<2x128xf32>
    %353 = math.tanh %352 : vector<2x128xf32>
    %354 = arith.mulf %349, %353 : vector<2x128xf32>
    %355 = arith.truncf %354 : vector<2x128xf32> to vector<2x128xbf16>
    %cst_90 = arith.constant dense<0.000000e+00> : vector<2x512xf32>
    %356 = tpu.matmul %355, %11, %cst_90 {dimension_numbers = #tpu.dot_dimension_numbers<[1], [0], [0], [1], [0, 0, 1, 1], [], []>} : vector<2x128xbf16>, vector<128x512xbf16>, vector<2x512xf32> -> vector<2x512xf32>
    %357 = vector.broadcast %12 : vector<1x512xf32> to vector<2x512xf32>
    %358 = arith.addf %356, %357 : vector<2x512xf32>
    %359 = arith.truncf %307 : vector<2x128xf32> to vector<2x128xbf16>
    %cst_91 = arith.constant dense<0.000000e+00> : vector<2x512xf32>
    %360 = tpu.matmul %359, %13, %cst_91 {dimension_numbers = #tpu.dot_dimension_numbers<[1], [0], [0], [1], [0, 0, 1, 1], [], []>} : vector<2x128xbf16>, vector<128x512xbf16>, vector<2x512xf32> -> vector<2x512xf32>
    %361 = arith.addf %358, %360 : vector<2x512xf32>
    %362 = arith.negf %361 : vector<2x512xf32>
    %363 = math.exp %362 : vector<2x512xf32>
    %cst_92 = arith.constant 1.000000e+00 : f32
    %364 = vector.broadcast %cst_92 : f32 to vector<2x512xf32>
    %365 = arith.addf %364, %363 : vector<2x512xf32>
    %366 = arith.divf %364, %365 : vector<2x512xf32>
    %367 = vector.extract_strided_slice %366 {offsets = [0, 0], sizes = [2, 128], strides = [1, 1]} : vector<2x512xf32> to vector<2x128xf32>
    %368 = vector.extract_strided_slice %366 {offsets = [0, 128], sizes = [2, 128], strides = [1, 1]} : vector<2x512xf32> to vector<2x128xf32>
    %369 = vector.extract_strided_slice %366 {offsets = [0, 256], sizes = [2, 128], strides = [1, 1]} : vector<2x512xf32> to vector<2x128xf32>
    %cst_93 = arith.constant 2.000000e+00 : f32
    %370 = vector.broadcast %cst_93 : f32 to vector<2x128xf32>
    %371 = arith.mulf %370, %369 : vector<2x128xf32>
    %cst_94 = arith.constant 1.000000e+00 : f32
    %372 = vector.broadcast %cst_94 : f32 to vector<2x128xf32>
    %373 = arith.subf %371, %372 : vector<2x128xf32>
    %374 = vector.extract_strided_slice %366 {offsets = [0, 384], sizes = [2, 128], strides = [1, 1]} : vector<2x512xf32> to vector<2x128xf32>
    %375 = arith.mulf %368, %305 : vector<2x128xf32>
    %376 = arith.mulf %367, %373 : vector<2x128xf32>
    %377 = arith.addf %375, %376 : vector<2x128xf32>
    %378 = math.tanh %377 : vector<2x128xf32>
    %379 = arith.mulf %374, %378 : vector<2x128xf32>
    %380 = vector.extract_strided_slice %6 {offsets = [10, 0], sizes = [2, 512], strides = [1, 1]} : vector<16x512xf32> to vector<2x512xf32>
    %381 = arith.truncf %329 : vector<2x128xf32> to vector<2x128xbf16>
    %cst_95 = arith.constant dense<0.000000e+00> : vector<2x512xf32>
    %382 = tpu.matmul %381, %7, %cst_95 {dimension_numbers = #tpu.dot_dimension_numbers<[1], [0], [0], [1], [0, 0, 1, 1], [], []>} : vector<2x128xbf16>, vector<128x512xbf16>, vector<2x512xf32> -> vector<2x512xf32>
    %383 = arith.addf %380, %382 : vector<2x512xf32>
    %384 = arith.negf %383 : vector<2x512xf32>
    %385 = math.exp %384 : vector<2x512xf32>
    %cst_96 = arith.constant 1.000000e+00 : f32
    %386 = vector.broadcast %cst_96 : f32 to vector<2x512xf32>
    %387 = arith.addf %386, %385 : vector<2x512xf32>
    %388 = arith.divf %386, %387 : vector<2x512xf32>
    %389 = vector.extract_strided_slice %388 {offsets = [0, 0], sizes = [2, 128], strides = [1, 1]} : vector<2x512xf32> to vector<2x128xf32>
    %390 = vector.extract_strided_slice %388 {offsets = [0, 128], sizes = [2, 128], strides = [1, 1]} : vector<2x512xf32> to vector<2x128xf32>
    %391 = vector.extract_strided_slice %388 {offsets = [0, 256], sizes = [2, 128], strides = [1, 1]} : vector<2x512xf32> to vector<2x128xf32>
    %cst_97 = arith.constant 2.000000e+00 : f32
    %392 = vector.broadcast %cst_97 : f32 to vector<2x128xf32>
    %393 = arith.mulf %392, %391 : vector<2x128xf32>
    %cst_98 = arith.constant 1.000000e+00 : f32
    %394 = vector.broadcast %cst_98 : f32 to vector<2x128xf32>
    %395 = arith.subf %393, %394 : vector<2x128xf32>
    %396 = vector.extract_strided_slice %388 {offsets = [0, 384], sizes = [2, 128], strides = [1, 1]} : vector<2x512xf32> to vector<2x128xf32>
    %397 = arith.mulf %390, %327 : vector<2x128xf32>
    %398 = arith.mulf %389, %395 : vector<2x128xf32>
    %399 = arith.addf %397, %398 : vector<2x128xf32>
    %400 = math.tanh %399 : vector<2x128xf32>
    %401 = arith.mulf %396, %400 : vector<2x128xf32>
    %402 = arith.truncf %401 : vector<2x128xf32> to vector<2x128xbf16>
    %cst_99 = arith.constant dense<0.000000e+00> : vector<2x512xf32>
    %403 = tpu.matmul %402, %8, %cst_99 {dimension_numbers = #tpu.dot_dimension_numbers<[1], [0], [0], [1], [0, 0, 1, 1], [], []>} : vector<2x128xbf16>, vector<128x512xbf16>, vector<2x512xf32> -> vector<2x512xf32>
    %404 = vector.broadcast %9 : vector<1x512xf32> to vector<2x512xf32>
    %405 = arith.addf %403, %404 : vector<2x512xf32>
    %406 = arith.truncf %354 : vector<2x128xf32> to vector<2x128xbf16>
    %cst_100 = arith.constant dense<0.000000e+00> : vector<2x512xf32>
    %407 = tpu.matmul %406, %10, %cst_100 {dimension_numbers = #tpu.dot_dimension_numbers<[1], [0], [0], [1], [0, 0, 1, 1], [], []>} : vector<2x128xbf16>, vector<128x512xbf16>, vector<2x512xf32> -> vector<2x512xf32>
    %408 = arith.addf %405, %407 : vector<2x512xf32>
    %409 = arith.negf %408 : vector<2x512xf32>
    %410 = math.exp %409 : vector<2x512xf32>
    %cst_101 = arith.constant 1.000000e+00 : f32
    %411 = vector.broadcast %cst_101 : f32 to vector<2x512xf32>
    %412 = arith.addf %411, %410 : vector<2x512xf32>
    %413 = arith.divf %411, %412 : vector<2x512xf32>
    %414 = vector.extract_strided_slice %413 {offsets = [0, 0], sizes = [2, 128], strides = [1, 1]} : vector<2x512xf32> to vector<2x128xf32>
    %415 = vector.extract_strided_slice %413 {offsets = [0, 128], sizes = [2, 128], strides = [1, 1]} : vector<2x512xf32> to vector<2x128xf32>
    %416 = vector.extract_strided_slice %413 {offsets = [0, 256], sizes = [2, 128], strides = [1, 1]} : vector<2x512xf32> to vector<2x128xf32>
    %cst_102 = arith.constant 2.000000e+00 : f32
    %417 = vector.broadcast %cst_102 : f32 to vector<2x128xf32>
    %418 = arith.mulf %417, %416 : vector<2x128xf32>
    %cst_103 = arith.constant 1.000000e+00 : f32
    %419 = vector.broadcast %cst_103 : f32 to vector<2x128xf32>
    %420 = arith.subf %418, %419 : vector<2x128xf32>
    %421 = vector.extract_strided_slice %413 {offsets = [0, 384], sizes = [2, 128], strides = [1, 1]} : vector<2x512xf32> to vector<2x128xf32>
    %422 = arith.mulf %415, %352 : vector<2x128xf32>
    %423 = arith.mulf %414, %420 : vector<2x128xf32>
    %424 = arith.addf %422, %423 : vector<2x128xf32>
    %425 = math.tanh %424 : vector<2x128xf32>
    %426 = arith.mulf %421, %425 : vector<2x128xf32>
    %427 = arith.truncf %426 : vector<2x128xf32> to vector<2x128xbf16>
    %cst_104 = arith.constant dense<0.000000e+00> : vector<2x512xf32>
    %428 = tpu.matmul %427, %11, %cst_104 {dimension_numbers = #tpu.dot_dimension_numbers<[1], [0], [0], [1], [0, 0, 1, 1], [], []>} : vector<2x128xbf16>, vector<128x512xbf16>, vector<2x512xf32> -> vector<2x512xf32>
    %429 = vector.broadcast %12 : vector<1x512xf32> to vector<2x512xf32>
    %430 = arith.addf %428, %429 : vector<2x512xf32>
    %431 = arith.truncf %379 : vector<2x128xf32> to vector<2x128xbf16>
    %cst_105 = arith.constant dense<0.000000e+00> : vector<2x512xf32>
    %432 = tpu.matmul %431, %13, %cst_105 {dimension_numbers = #tpu.dot_dimension_numbers<[1], [0], [0], [1], [0, 0, 1, 1], [], []>} : vector<2x128xbf16>, vector<128x512xbf16>, vector<2x512xf32> -> vector<2x512xf32>
    %433 = arith.addf %430, %432 : vector<2x512xf32>
    %434 = arith.negf %433 : vector<2x512xf32>
    %435 = math.exp %434 : vector<2x512xf32>
    %cst_106 = arith.constant 1.000000e+00 : f32
    %436 = vector.broadcast %cst_106 : f32 to vector<2x512xf32>
    %437 = arith.addf %436, %435 : vector<2x512xf32>
    %438 = arith.divf %436, %437 : vector<2x512xf32>
    %439 = vector.extract_strided_slice %438 {offsets = [0, 0], sizes = [2, 128], strides = [1, 1]} : vector<2x512xf32> to vector<2x128xf32>
    %440 = vector.extract_strided_slice %438 {offsets = [0, 128], sizes = [2, 128], strides = [1, 1]} : vector<2x512xf32> to vector<2x128xf32>
    %441 = vector.extract_strided_slice %438 {offsets = [0, 256], sizes = [2, 128], strides = [1, 1]} : vector<2x512xf32> to vector<2x128xf32>
    %cst_107 = arith.constant 2.000000e+00 : f32
    %442 = vector.broadcast %cst_107 : f32 to vector<2x128xf32>
    %443 = arith.mulf %442, %441 : vector<2x128xf32>
    %cst_108 = arith.constant 1.000000e+00 : f32
    %444 = vector.broadcast %cst_108 : f32 to vector<2x128xf32>
    %445 = arith.subf %443, %444 : vector<2x128xf32>
    %446 = vector.extract_strided_slice %438 {offsets = [0, 384], sizes = [2, 128], strides = [1, 1]} : vector<2x512xf32> to vector<2x128xf32>
    %447 = arith.mulf %440, %377 : vector<2x128xf32>
    %448 = arith.mulf %439, %445 : vector<2x128xf32>
    %449 = arith.addf %447, %448 : vector<2x128xf32>
    %450 = math.tanh %449 : vector<2x128xf32>
    %451 = arith.mulf %446, %450 : vector<2x128xf32>
    %452 = vector.extract_strided_slice %6 {offsets = [12, 0], sizes = [2, 512], strides = [1, 1]} : vector<16x512xf32> to vector<2x512xf32>
    %453 = arith.truncf %401 : vector<2x128xf32> to vector<2x128xbf16>
    %cst_109 = arith.constant dense<0.000000e+00> : vector<2x512xf32>
    %454 = tpu.matmul %453, %7, %cst_109 {dimension_numbers = #tpu.dot_dimension_numbers<[1], [0], [0], [1], [0, 0, 1, 1], [], []>} : vector<2x128xbf16>, vector<128x512xbf16>, vector<2x512xf32> -> vector<2x512xf32>
    %455 = arith.addf %452, %454 : vector<2x512xf32>
    %456 = arith.negf %455 : vector<2x512xf32>
    %457 = math.exp %456 : vector<2x512xf32>
    %cst_110 = arith.constant 1.000000e+00 : f32
    %458 = vector.broadcast %cst_110 : f32 to vector<2x512xf32>
    %459 = arith.addf %458, %457 : vector<2x512xf32>
    %460 = arith.divf %458, %459 : vector<2x512xf32>
    %461 = vector.extract_strided_slice %460 {offsets = [0, 0], sizes = [2, 128], strides = [1, 1]} : vector<2x512xf32> to vector<2x128xf32>
    %462 = vector.extract_strided_slice %460 {offsets = [0, 128], sizes = [2, 128], strides = [1, 1]} : vector<2x512xf32> to vector<2x128xf32>
    %463 = vector.extract_strided_slice %460 {offsets = [0, 256], sizes = [2, 128], strides = [1, 1]} : vector<2x512xf32> to vector<2x128xf32>
    %cst_111 = arith.constant 2.000000e+00 : f32
    %464 = vector.broadcast %cst_111 : f32 to vector<2x128xf32>
    %465 = arith.mulf %464, %463 : vector<2x128xf32>
    %cst_112 = arith.constant 1.000000e+00 : f32
    %466 = vector.broadcast %cst_112 : f32 to vector<2x128xf32>
    %467 = arith.subf %465, %466 : vector<2x128xf32>
    %468 = vector.extract_strided_slice %460 {offsets = [0, 384], sizes = [2, 128], strides = [1, 1]} : vector<2x512xf32> to vector<2x128xf32>
    %469 = arith.mulf %462, %399 : vector<2x128xf32>
    %470 = arith.mulf %461, %467 : vector<2x128xf32>
    %471 = arith.addf %469, %470 : vector<2x128xf32>
    %472 = math.tanh %471 : vector<2x128xf32>
    %473 = arith.mulf %468, %472 : vector<2x128xf32>
    %474 = arith.truncf %473 : vector<2x128xf32> to vector<2x128xbf16>
    %cst_113 = arith.constant dense<0.000000e+00> : vector<2x512xf32>
    %475 = tpu.matmul %474, %8, %cst_113 {dimension_numbers = #tpu.dot_dimension_numbers<[1], [0], [0], [1], [0, 0, 1, 1], [], []>} : vector<2x128xbf16>, vector<128x512xbf16>, vector<2x512xf32> -> vector<2x512xf32>
    %476 = vector.broadcast %9 : vector<1x512xf32> to vector<2x512xf32>
    %477 = arith.addf %475, %476 : vector<2x512xf32>
    %478 = arith.truncf %426 : vector<2x128xf32> to vector<2x128xbf16>
    %cst_114 = arith.constant dense<0.000000e+00> : vector<2x512xf32>
    %479 = tpu.matmul %478, %10, %cst_114 {dimension_numbers = #tpu.dot_dimension_numbers<[1], [0], [0], [1], [0, 0, 1, 1], [], []>} : vector<2x128xbf16>, vector<128x512xbf16>, vector<2x512xf32> -> vector<2x512xf32>
    %480 = arith.addf %477, %479 : vector<2x512xf32>
    %481 = arith.negf %480 : vector<2x512xf32>
    %482 = math.exp %481 : vector<2x512xf32>
    %cst_115 = arith.constant 1.000000e+00 : f32
    %483 = vector.broadcast %cst_115 : f32 to vector<2x512xf32>
    %484 = arith.addf %483, %482 : vector<2x512xf32>
    %485 = arith.divf %483, %484 : vector<2x512xf32>
    %486 = vector.extract_strided_slice %485 {offsets = [0, 0], sizes = [2, 128], strides = [1, 1]} : vector<2x512xf32> to vector<2x128xf32>
    %487 = vector.extract_strided_slice %485 {offsets = [0, 128], sizes = [2, 128], strides = [1, 1]} : vector<2x512xf32> to vector<2x128xf32>
    %488 = vector.extract_strided_slice %485 {offsets = [0, 256], sizes = [2, 128], strides = [1, 1]} : vector<2x512xf32> to vector<2x128xf32>
    %cst_116 = arith.constant 2.000000e+00 : f32
    %489 = vector.broadcast %cst_116 : f32 to vector<2x128xf32>
    %490 = arith.mulf %489, %488 : vector<2x128xf32>
    %cst_117 = arith.constant 1.000000e+00 : f32
    %491 = vector.broadcast %cst_117 : f32 to vector<2x128xf32>
    %492 = arith.subf %490, %491 : vector<2x128xf32>
    %493 = vector.extract_strided_slice %485 {offsets = [0, 384], sizes = [2, 128], strides = [1, 1]} : vector<2x512xf32> to vector<2x128xf32>
    %494 = arith.mulf %487, %424 : vector<2x128xf32>
    %495 = arith.mulf %486, %492 : vector<2x128xf32>
    %496 = arith.addf %494, %495 : vector<2x128xf32>
    %497 = math.tanh %496 : vector<2x128xf32>
    %498 = arith.mulf %493, %497 : vector<2x128xf32>
    %499 = arith.truncf %498 : vector<2x128xf32> to vector<2x128xbf16>
    %cst_118 = arith.constant dense<0.000000e+00> : vector<2x512xf32>
    %500 = tpu.matmul %499, %11, %cst_118 {dimension_numbers = #tpu.dot_dimension_numbers<[1], [0], [0], [1], [0, 0, 1, 1], [], []>} : vector<2x128xbf16>, vector<128x512xbf16>, vector<2x512xf32> -> vector<2x512xf32>
    %501 = vector.broadcast %12 : vector<1x512xf32> to vector<2x512xf32>
    %502 = arith.addf %500, %501 : vector<2x512xf32>
    %503 = arith.truncf %451 : vector<2x128xf32> to vector<2x128xbf16>
    %cst_119 = arith.constant dense<0.000000e+00> : vector<2x512xf32>
    %504 = tpu.matmul %503, %13, %cst_119 {dimension_numbers = #tpu.dot_dimension_numbers<[1], [0], [0], [1], [0, 0, 1, 1], [], []>} : vector<2x128xbf16>, vector<128x512xbf16>, vector<2x512xf32> -> vector<2x512xf32>
    %505 = arith.addf %502, %504 : vector<2x512xf32>
    %506 = arith.negf %505 : vector<2x512xf32>
    %507 = math.exp %506 : vector<2x512xf32>
    %cst_120 = arith.constant 1.000000e+00 : f32
    %508 = vector.broadcast %cst_120 : f32 to vector<2x512xf32>
    %509 = arith.addf %508, %507 : vector<2x512xf32>
    %510 = arith.divf %508, %509 : vector<2x512xf32>
    %511 = vector.extract_strided_slice %510 {offsets = [0, 0], sizes = [2, 128], strides = [1, 1]} : vector<2x512xf32> to vector<2x128xf32>
    %512 = vector.extract_strided_slice %510 {offsets = [0, 128], sizes = [2, 128], strides = [1, 1]} : vector<2x512xf32> to vector<2x128xf32>
    %513 = vector.extract_strided_slice %510 {offsets = [0, 256], sizes = [2, 128], strides = [1, 1]} : vector<2x512xf32> to vector<2x128xf32>
    %cst_121 = arith.constant 2.000000e+00 : f32
    %514 = vector.broadcast %cst_121 : f32 to vector<2x128xf32>
    %515 = arith.mulf %514, %513 : vector<2x128xf32>
    %cst_122 = arith.constant 1.000000e+00 : f32
    %516 = vector.broadcast %cst_122 : f32 to vector<2x128xf32>
    %517 = arith.subf %515, %516 : vector<2x128xf32>
    %518 = vector.extract_strided_slice %510 {offsets = [0, 384], sizes = [2, 128], strides = [1, 1]} : vector<2x512xf32> to vector<2x128xf32>
    %519 = arith.mulf %512, %449 : vector<2x128xf32>
    %520 = arith.mulf %511, %517 : vector<2x128xf32>
    %521 = arith.addf %519, %520 : vector<2x128xf32>
    %522 = math.tanh %521 : vector<2x128xf32>
    %523 = arith.mulf %518, %522 : vector<2x128xf32>
    %524 = vector.extract_strided_slice %6 {offsets = [14, 0], sizes = [2, 512], strides = [1, 1]} : vector<16x512xf32> to vector<2x512xf32>
    %525 = arith.truncf %473 : vector<2x128xf32> to vector<2x128xbf16>
    %cst_123 = arith.constant dense<0.000000e+00> : vector<2x512xf32>
    %526 = tpu.matmul %525, %7, %cst_123 {dimension_numbers = #tpu.dot_dimension_numbers<[1], [0], [0], [1], [0, 0, 1, 1], [], []>} : vector<2x128xbf16>, vector<128x512xbf16>, vector<2x512xf32> -> vector<2x512xf32>
    %527 = arith.addf %524, %526 : vector<2x512xf32>
    %528 = arith.negf %527 : vector<2x512xf32>
    %529 = math.exp %528 : vector<2x512xf32>
    %cst_124 = arith.constant 1.000000e+00 : f32
    %530 = vector.broadcast %cst_124 : f32 to vector<2x512xf32>
    %531 = arith.addf %530, %529 : vector<2x512xf32>
    %532 = arith.divf %530, %531 : vector<2x512xf32>
    %533 = vector.extract_strided_slice %532 {offsets = [0, 0], sizes = [2, 128], strides = [1, 1]} : vector<2x512xf32> to vector<2x128xf32>
    %534 = vector.extract_strided_slice %532 {offsets = [0, 128], sizes = [2, 128], strides = [1, 1]} : vector<2x512xf32> to vector<2x128xf32>
    %535 = vector.extract_strided_slice %532 {offsets = [0, 256], sizes = [2, 128], strides = [1, 1]} : vector<2x512xf32> to vector<2x128xf32>
    %cst_125 = arith.constant 2.000000e+00 : f32
    %536 = vector.broadcast %cst_125 : f32 to vector<2x128xf32>
    %537 = arith.mulf %536, %535 : vector<2x128xf32>
    %cst_126 = arith.constant 1.000000e+00 : f32
    %538 = vector.broadcast %cst_126 : f32 to vector<2x128xf32>
    %539 = arith.subf %537, %538 : vector<2x128xf32>
    %540 = vector.extract_strided_slice %532 {offsets = [0, 384], sizes = [2, 128], strides = [1, 1]} : vector<2x512xf32> to vector<2x128xf32>
    %541 = arith.mulf %534, %471 : vector<2x128xf32>
    %542 = arith.mulf %533, %539 : vector<2x128xf32>
    %543 = arith.addf %541, %542 : vector<2x128xf32>
    %544 = math.tanh %543 : vector<2x128xf32>
    %545 = arith.mulf %540, %544 : vector<2x128xf32>
    %546 = arith.truncf %545 : vector<2x128xf32> to vector<2x128xbf16>
    %cst_127 = arith.constant dense<0.000000e+00> : vector<2x512xf32>
    %547 = tpu.matmul %546, %8, %cst_127 {dimension_numbers = #tpu.dot_dimension_numbers<[1], [0], [0], [1], [0, 0, 1, 1], [], []>} : vector<2x128xbf16>, vector<128x512xbf16>, vector<2x512xf32> -> vector<2x512xf32>
    %548 = vector.broadcast %9 : vector<1x512xf32> to vector<2x512xf32>
    %549 = arith.addf %547, %548 : vector<2x512xf32>
    %550 = arith.truncf %498 : vector<2x128xf32> to vector<2x128xbf16>
    %cst_128 = arith.constant dense<0.000000e+00> : vector<2x512xf32>
    %551 = tpu.matmul %550, %10, %cst_128 {dimension_numbers = #tpu.dot_dimension_numbers<[1], [0], [0], [1], [0, 0, 1, 1], [], []>} : vector<2x128xbf16>, vector<128x512xbf16>, vector<2x512xf32> -> vector<2x512xf32>
    %552 = arith.addf %549, %551 : vector<2x512xf32>
    %553 = arith.negf %552 : vector<2x512xf32>
    %554 = math.exp %553 : vector<2x512xf32>
    %cst_129 = arith.constant 1.000000e+00 : f32
    %555 = vector.broadcast %cst_129 : f32 to vector<2x512xf32>
    %556 = arith.addf %555, %554 : vector<2x512xf32>
    %557 = arith.divf %555, %556 : vector<2x512xf32>
    %558 = vector.extract_strided_slice %557 {offsets = [0, 0], sizes = [2, 128], strides = [1, 1]} : vector<2x512xf32> to vector<2x128xf32>
    %559 = vector.extract_strided_slice %557 {offsets = [0, 128], sizes = [2, 128], strides = [1, 1]} : vector<2x512xf32> to vector<2x128xf32>
    %560 = vector.extract_strided_slice %557 {offsets = [0, 256], sizes = [2, 128], strides = [1, 1]} : vector<2x512xf32> to vector<2x128xf32>
    %cst_130 = arith.constant 2.000000e+00 : f32
    %561 = vector.broadcast %cst_130 : f32 to vector<2x128xf32>
    %562 = arith.mulf %561, %560 : vector<2x128xf32>
    %cst_131 = arith.constant 1.000000e+00 : f32
    %563 = vector.broadcast %cst_131 : f32 to vector<2x128xf32>
    %564 = arith.subf %562, %563 : vector<2x128xf32>
    %565 = vector.extract_strided_slice %557 {offsets = [0, 384], sizes = [2, 128], strides = [1, 1]} : vector<2x512xf32> to vector<2x128xf32>
    %566 = arith.mulf %559, %496 : vector<2x128xf32>
    %567 = arith.mulf %558, %564 : vector<2x128xf32>
    %568 = arith.addf %566, %567 : vector<2x128xf32>
    %569 = math.tanh %568 : vector<2x128xf32>
    %570 = arith.mulf %565, %569 : vector<2x128xf32>
    %571 = arith.truncf %570 : vector<2x128xf32> to vector<2x128xbf16>
    %cst_132 = arith.constant dense<0.000000e+00> : vector<2x512xf32>
    %572 = tpu.matmul %571, %11, %cst_132 {dimension_numbers = #tpu.dot_dimension_numbers<[1], [0], [0], [1], [0, 0, 1, 1], [], []>} : vector<2x128xbf16>, vector<128x512xbf16>, vector<2x512xf32> -> vector<2x512xf32>
    %573 = vector.broadcast %12 : vector<1x512xf32> to vector<2x512xf32>
    %574 = arith.addf %572, %573 : vector<2x512xf32>
    %575 = arith.truncf %523 : vector<2x128xf32> to vector<2x128xbf16>
    %cst_133 = arith.constant dense<0.000000e+00> : vector<2x512xf32>
    %576 = tpu.matmul %575, %13, %cst_133 {dimension_numbers = #tpu.dot_dimension_numbers<[1], [0], [0], [1], [0, 0, 1, 1], [], []>} : vector<2x128xbf16>, vector<128x512xbf16>, vector<2x512xf32> -> vector<2x512xf32>
    %577 = arith.addf %574, %576 : vector<2x512xf32>
    %578 = arith.negf %577 : vector<2x512xf32>
    %579 = math.exp %578 : vector<2x512xf32>
    %cst_134 = arith.constant 1.000000e+00 : f32
    %580 = vector.broadcast %cst_134 : f32 to vector<2x512xf32>
    %581 = arith.addf %580, %579 : vector<2x512xf32>
    %582 = arith.divf %580, %581 : vector<2x512xf32>
    %583 = vector.extract_strided_slice %582 {offsets = [0, 0], sizes = [2, 128], strides = [1, 1]} : vector<2x512xf32> to vector<2x128xf32>
    %584 = vector.extract_strided_slice %582 {offsets = [0, 128], sizes = [2, 128], strides = [1, 1]} : vector<2x512xf32> to vector<2x128xf32>
    %585 = vector.extract_strided_slice %582 {offsets = [0, 256], sizes = [2, 128], strides = [1, 1]} : vector<2x512xf32> to vector<2x128xf32>
    %cst_135 = arith.constant 2.000000e+00 : f32
    %586 = vector.broadcast %cst_135 : f32 to vector<2x128xf32>
    %587 = arith.mulf %586, %585 : vector<2x128xf32>
    %cst_136 = arith.constant 1.000000e+00 : f32
    %588 = vector.broadcast %cst_136 : f32 to vector<2x128xf32>
    %589 = arith.subf %587, %588 : vector<2x128xf32>
    %590 = vector.extract_strided_slice %582 {offsets = [0, 384], sizes = [2, 128], strides = [1, 1]} : vector<2x512xf32> to vector<2x128xf32>
    %591 = arith.mulf %584, %521 : vector<2x128xf32>
    %592 = arith.mulf %583, %589 : vector<2x128xf32>
    %593 = arith.addf %591, %592 : vector<2x128xf32>
    %594 = math.tanh %593 : vector<2x128xf32>
    %595 = arith.mulf %590, %594 : vector<2x128xf32>
    %596 = arith.truncf %595 : vector<2x128xf32> to vector<2x128xbf16>
    %c0_137 = arith.constant 0 : index
    %c0_138 = arith.constant 0 : index
    %597 = vector.load %arg10[%c0_137, %c0_138] : memref<128x128xbf16, #tpu.memory_space<vmem>>, vector<128x128xbf16>
    %cst_139 = arith.constant dense<0.000000e+00> : vector<2x128xf32>
    %598 = tpu.matmul %596, %597, %cst_139 {dimension_numbers = #tpu.dot_dimension_numbers<[1], [0], [0], [1], [0, 0, 1, 1], [], []>} : vector<2x128xbf16>, vector<128x128xbf16>, vector<2x128xf32> -> vector<2x128xf32>
    %c0_140 = arith.constant 0 : index
    %c0_141 = arith.constant 0 : index
    %599 = vector.load %arg11[%c0_140, %c0_141] : memref<1x128xf32, #tpu.memory_space<vmem>>, vector<1x128xf32>
    %600 = vector.broadcast %599 : vector<1x128xf32> to vector<2x128xf32>
    %601 = arith.addf %598, %600 : vector<2x128xf32>
    %c0_142 = arith.constant 0 : index
    %c0_143 = arith.constant 0 : index
    %602 = vector.load %arg12[%c0_142, %c0_143] : memref<2x128xf32, #tpu.memory_space<vmem>>, vector<2x128xf32>
    tpu.vector_store %arg12[%c0_142, %c0_143], %601 {strides = array<i32>} : memref<2x128xf32, #tpu.memory_space<vmem>>, vector<2x128xf32>,
    return
  }
}

</mosaic_0001>

<llo_original>
// kernel: stacked_rnn_forward.1
$region0: #{stacked_rnn_forward.1}
  #allocation0 [shape = 'u32[]', space=smem, size = 0x4, offset = 0x4, fixed_abs, tag = 'smem constant byte address 0x4 - core index']
  #allocation1 [shape = 'u32[144,128]{1,0:T(1,128)}', space=vmem, size = 0x12000, scoped, tag = 'internal scratch']
  %s0 = inlined_call_operand.vmem [shape: f32[16,1008], index: 0, kind: input, shape index: {}]
  %s1 = inlined_call_operand.hbm [shape: bf16[1008,512], index: 1, kind: input, shape index: {}]
  %s2 = inlined_call_operand.hbm [shape: f32[1,512], index: 2, kind: input, shape index: {}]
  %s3 = inlined_call_operand.vmem [shape: bf16[128,512], index: 3, kind: input, shape index: {}]
  %s4 = inlined_call_operand.vmem [shape: bf16[128,512], index: 4, kind: input, shape index: {}]
  %s5 = inlined_call_operand.vmem [shape: f32[1,512], index: 5, kind: input, shape index: {}]
  %s6 = inlined_call_operand.hbm [shape: bf16[128,512], index: 6, kind: input, shape index: {}]
  %s7 = inlined_call_operand.hbm [shape: bf16[128,512], index: 7, kind: input, shape index: {}]
  %s8 = inlined_call_operand.hbm [shape: f32[1,512], index: 8, kind: input, shape index: {}]
  %s9 = inlined_call_operand.hbm [shape: bf16[128,512], index: 9, kind: input, shape index: {}]
  %s10 = inlined_call_operand.hbm [shape: bf16[128,128], index: 10, kind: input, shape index: {}]
  %s11 = inlined_call_operand.vmem [shape: f32[1,128], index: 11, kind: input, shape index: {}]
  %s12 = inlined_call_operand.hbm [shape: f32[2,128], index: 12, kind: output, shape index: {}]
  %s13 = sld [smem:[#allocation0]]
  $region86: #{stacked_rnn_forward.1} parent=0
    _
  %s15 = ssub.s32 1, %s13
  %s16 = scalar_select 0, %s15, %s13
  $region1: #{stacked_rnn_forward.1} parent=0
    #allocation2 [shape = 'u8[1032192]{0}', space=vmem, size = 0xfc000, scoped, tag = 'input window, operand 1, single buffered']
    #allocation3 [shape = 's32[1]{0}', space=sflag, size = 0x4, scoped, tag = 'scoped memory for stacked_rnn_forward.1']
    #allocation4 [shape = 's32[1]{0}', space=sflag, size = 0x4, scoped, tag = 'scoped memory for stacked_rnn_forward.1']
    #allocation5 [shape = 'u8[2048]{0}', space=vmem, size = 0x800, scoped, tag = 'input window, operand 2, single buffered']
    #allocation6 [shape = 's32[1]{0}', space=sflag, size = 0x4, scoped, tag = 'scoped memory for stacked_rnn_forward.1']
    #allocation7 [shape = 'u8[131072]{0}', space=vmem, size = 0x20000, scoped, tag = 'input window, operand 6, single buffered']
    #allocation8 [shape = 'u8[131072]{0}', space=vmem, size = 0x20000, scoped, tag = 'input window, operand 7, single buffered']
    #allocation9 [shape = 's32[1]{0}', space=sflag, size = 0x4, scoped, tag = 'scoped memory for stacked_rnn_forward.1']
    #allocation10 [shape = 'u8[2048]{0}', space=vmem, size = 0x800, scoped, tag = 'input window, operand 8, single buffered']
    #allocation11 [shape = 'u8[131072]{0}', space=vmem, size = 0x20000, scoped, tag = 'input window, operand 9, single buffered']
    #allocation12 [shape = 's32[1]{0}', space=sflag, size = 0x4, scoped, tag = 'scoped memory for stacked_rnn_forward.1']
    #allocation13 [shape = 'u8[32768]{0}', space=vmem, size = 0x8000, scoped, tag = 'input window, operand 10, single buffered']
    #allocation14 [shape = 'u8[1024]{0}', space=vmem, size = 0x400, scoped, tag = 'output window, operand 0, single buffered']
    %17 = vsyncpa [#allocation3], 0
    %18 = vsyncpa [#allocation6], 0
    %19 = vsyncpa [#allocation9], 0
    %20 = vsyncpa [#allocation12], 0
    %21 = vsyncpa [#allocation4], 0
    // Predicated region
    $region2: #{stacked_rnn_forward.1} parent=1 // pred_check
      _
    $region3: #{stacked_rnn_forward.1} parent=1 // pred_check_branch
      %23 = sbr.rel (0) target = $region5
    $region4: #{stacked_rnn_forward.1} parent=1 // pred_region
      _
    $region5: #{stacked_rnn_forward.1} parent=1 // pred_fallthru
      _
    // Predicated region
    $region6: #{stacked_rnn_forward.1} parent=1 // pred_check
      _
    $region7: #{stacked_rnn_forward.1} parent=1 // pred_check_branch
      %25 = sbr.rel (0) target = $region9
    $region8: #{stacked_rnn_forward.1} parent=1 // pred_region
      %s27 = ssub.s32 32256, 32256
      %28 = vsyncadd [#allocation3], %s27
      %s29 = sshll.u32 [#allocation2], 4
      %s30 = int_to_ptr.vmem [resolvable:$true] %s29
      %35 = dma.hbm_to_vmem [thread:$0]  %s1, 32256, %s30, [#allocation3], 256, 256, 16
    $region9: #{stacked_rnn_forward.1} parent=1 // pred_fallthru
      _
    // Predicated region
    $region10: #{stacked_rnn_forward.1} parent=1 // pred_check
      _
    $region11: #{stacked_rnn_forward.1} parent=1 // pred_check_branch
      %37 = sbr.rel (0) target = $region13
    $region12: #{stacked_rnn_forward.1} parent=1 // pred_region
      %s39 = ssub.s32 64, 64
      %40 = vsyncadd [#allocation6], %s39
      %s42 = sshll.u32 [#allocation5], 4
      %s43 = int_to_ptr.vmem [resolvable:$true] %s42
      %45 = dma.hbm_to_vmem [thread:$0]  %s2, 64, %s43, [#allocation6]
    $region13: #{stacked_rnn_forward.1} parent=1 // pred_fallthru
      _
    // Predicated region
    $region14: #{stacked_rnn_forward.1} parent=1 // pred_check
      _
    $region15: #{stacked_rnn_forward.1} parent=1 // pred_check_branch
      %47 = sbr.rel (0) target = $region17
    $region16: #{stacked_rnn_forward.1} parent=1 // pred_region
      _
    $region17: #{stacked_rnn_forward.1} parent=1 // pred_fallthru
      _
    // Predicated region
    $region18: #{stacked_rnn_forward.1} parent=1 // pred_check
      _
    $region19: #{stacked_rnn_forward.1} parent=1 // pred_check_branch
      %49 = sbr.rel (0) target = $region21
    $region20: #{stacked_rnn_forward.1} parent=1 // pred_region
      _
    $region21: #{stacked_rnn_forward.1} parent=1 // pred_fallthru
      _
    // Predicated region
    $region22: #{stacked_rnn_forward.1} parent=1 // pred_check
      _
    $region23: #{stacked_rnn_forward.1} parent=1 // pred_check_branch
      %51 = sbr.rel (0) target = $region25
    $region24: #{stacked_rnn_forward.1} parent=1 // pred_region
      _
    $region25: #{stacked_rnn_forward.1} parent=1 // pred_fallthru
      _
    // Predicated region
    $region26: #{stacked_rnn_forward.1} parent=1 // pred_check
      _
    $region27: #{stacked_rnn_forward.1} parent=1 // pred_check_branch
      %53 = sbr.rel (0) target = $region29
    $region28: #{stacked_rnn_forward.1} parent=1 // pred_region
      %s55 = ssub.s32 4096, 4096
      %56 = vsyncadd [#allocation6], %s55
      %s57 = sshll.u32 [#allocation7], 4
      %s58 = int_to_ptr.vmem [resolvable:$true] %s57
      %63 = dma.hbm_to_vmem [thread:$0]  %s6, 4096, %s58, [#allocation6], 256, 256, 16
    $region29: #{stacked_rnn_forward.1} parent=1 // pred_fallthru
      _
    // Predicated region
    $region30: #{stacked_rnn_forward.1} parent=1 // pred_check
      _
    $region31: #{stacked_rnn_forward.1} parent=1 // pred_check_branch
      %65 = sbr.rel (0) target = $region33
    $region32: #{stacked_rnn_forward.1} parent=1 // pred_region
      %s67 = ssub.s32 4096, 4096
      %68 = vsyncadd [#allocation9], %s67
      %s69 = sshll.u32 [#allocation8], 4
      %s70 = int_to_ptr.vmem [resolvable:$true] %s69
      %75 = dma.hbm_to_vmem [thread:$0]  %s7, 4096, %s70, [#allocation9], 256, 256, 16
    $region33: #{stacked_rnn_forward.1} parent=1 // pred_fallthru
      _
    // Predicated region
    $region34: #{stacked_rnn_forward.1} parent=1 // pred_check
      _
    $region35: #{stacked_rnn_forward.1} parent=1 // pred_check_branch
      %77 = sbr.rel (0) target = $region37
    $region36: #{stacked_rnn_forward.1} parent=1 // pred_region
      %s79 = ssub.s32 64, 64
      %80 = vsyncadd [#allocation9], %s79
      %s82 = sshll.u32 [#allocation10], 4
      %s83 = int_to_ptr.vmem [resolvable:$true] %s82
      %85 = dma.hbm_to_vmem [thread:$0]  %s8, 64, %s83, [#allocation9]
    $region37: #{stacked_rnn_forward.1} parent=1 // pred_fallthru
      _
    // Predicated region
    $region38: #{stacked_rnn_forward.1} parent=1 // pred_check
      _
    $region39: #{stacked_rnn_forward.1} parent=1 // pred_check_branch
      %87 = sbr.rel (0) target = $region41
    $region40: #{stacked_rnn_forward.1} parent=1 // pred_region
      %s89 = ssub.s32 4096, 4096
      %90 = vsyncadd [#allocation12], %s89
      %s91 = sshll.u32 [#allocation11], 4
      %s92 = int_to_ptr.vmem [resolvable:$true] %s91
      %97 = dma.hbm_to_vmem [thread:$0]  %s9, 4096, %s92, [#allocation12], 256, 256, 16
    $region41: #{stacked_rnn_forward.1} parent=1 // pred_fallthru
      _
    // Predicated region
    $region42: #{stacked_rnn_forward.1} parent=1 // pred_check
      _
    $region43: #{stacked_rnn_forward.1} parent=1 // pred_check_branch
      %99 = sbr.rel (0) target = $region45
    $region44: #{stacked_rnn_forward.1} parent=1 // pred_region
      %s101 = ssub.s32 1024, 1024
      %102 = vsyncadd [#allocation12], %s101
      %s103 = sshll.u32 [#allocation13], 4
      %s104 = int_to_ptr.vmem [resolvable:$true] %s103
      %109 = dma.hbm_to_vmem [thread:$0]  %s10, 1024, %s104, [#allocation12], 64, 64, 4
    $region45: #{stacked_rnn_forward.1} parent=1 // pred_fallthru
      _
    // Predicated region
    $region46: #{stacked_rnn_forward.1} parent=1 // pred_check
      _
    $region47: #{stacked_rnn_forward.1} parent=1 // pred_check_branch
      %111 = sbr.rel (0) target = $region49
    $region48: #{stacked_rnn_forward.1} parent=1 // pred_region
      _
    $region49: #{stacked_rnn_forward.1} parent=1 // pred_fallthru
      _
    // Predicated region
    $region50: #{stacked_rnn_forward.1} parent=1 // pred_check
      _
    $region51: #{stacked_rnn_forward.1} parent=1 // pred_check_branch
      %113 = sbr.rel (0) target = $region53
    $region52: #{stacked_rnn_forward.1} parent=1 // pred_region
      %114 = dma.done [#allocation3], 32256
    $region53: #{stacked_rnn_forward.1} parent=1 // pred_fallthru
      _
    // Predicated region
    $region54: #{stacked_rnn_forward.1} parent=1 // pred_check
      _
    $region55: #{stacked_rnn_forward.1} parent=1 // pred_check_branch
      %116 = sbr.rel (0) target = $region57
    $region56: #{stacked_rnn_forward.1} parent=1 // pred_region
      %117 = dma.done [#allocation6], 64
    $region57: #{stacked_rnn_forward.1} parent=1 // pred_fallthru
      _
    // Predicated region
    $region58: #{stacked_rnn_forward.1} parent=1 // pred_check
      _
    $region59: #{stacked_rnn_forward.1} parent=1 // pred_check_branch
      %119 = sbr.rel (0) target = $region61
    $region60: #{stacked_rnn_forward.1} parent=1 // pred_region
      %120 = dma.done [#allocation6], 4096
    $region61: #{stacked_rnn_forward.1} parent=1 // pred_fallthru
      _
    // Predicated region
    $region62: #{stacked_rnn_forward.1} parent=1 // pred_check
      _
    $region63: #{stacked_rnn_forward.1} parent=1 // pred_check_branch
      %122 = sbr.rel (0) target = $region65
    $region64: #{stacked_rnn_forward.1} parent=1 // pred_region
      %123 = dma.done [#allocation9], 4096
    $region65: #{stacked_rnn_forward.1} parent=1 // pred_fallthru
      _
    // Predicated region
    $region66: #{stacked_rnn_forward.1} parent=1 // pred_check
      _
    $region67: #{stacked_rnn_forward.1} parent=1 // pred_check_branch
      %125 = sbr.rel (0) target = $region69
    $region68: #{stacked_rnn_forward.1} parent=1 // pred_region
      %126 = dma.done [#allocation9], 64
    $region69: #{stacked_rnn_forward.1} parent=1 // pred_fallthru
      _
    // Predicated region
    $region70: #{stacked_rnn_forward.1} parent=1 // pred_check
      _
    $region71: #{stacked_rnn_forward.1} parent=1 // pred_check_branch
      %128 = sbr.rel (0) target = $region73
    $region72: #{stacked_rnn_forward.1} parent=1 // pred_region
      %129 = dma.done [#allocation12], 4096
    $region73: #{stacked_rnn_forward.1} parent=1 // pred_fallthru
      _
    // Predicated region
    $region74: #{stacked_rnn_forward.1} parent=1 // pred_check
      _
    $region75: #{stacked_rnn_forward.1} parent=1 // pred_check_branch
      %131 = sbr.rel (0) target = $region77
    $region76: #{stacked_rnn_forward.1} parent=1 // pred_region
      %132 = dma.done [#allocation12], 1024
    $region77: #{stacked_rnn_forward.1} parent=1 // pred_fallthru
      _
    %v134 = vld [vmem:[%s0] sm:$0xff]
    %v135 = vld [vmem:[%s0 + $0x8] sm:$0xff]
    %v136 = vld [vmem:[%s0 + $0x10] sm:$0xff]
    %v137 = vld [vmem:[%s0 + $0x18] sm:$0xff]
    %v138 = vld [vmem:[%s0 + $0x20] sm:$0xff]
    %v139 = vld [vmem:[%s0 + $0x28] sm:$0xff]
    %v140 = vld [vmem:[%s0 + $0x30] sm:$0xff]
    %v141 = vld [vmem:[%s0 + $0x38] sm:$0xff]
    %v142 = vld [vmem:[%s0 + $0x40] sm:$0xff]
    %v143 = vld [vmem:[%s0 + $0x48] sm:$0xff]
    %v144 = vld [vmem:[%s0 + $0x50] sm:$0xff]
    %v145 = vld [vmem:[%s0 + $0x58] sm:$0xff]
    %v146 = vld [vmem:[%s0 + $0x60] sm:$0xff]
    %v147 = vld [vmem:[%s0 + $0x68] sm:$0xff]
    %v148 = vld [vmem:[%s0 + $0x70] sm:$0xff]
    %v149 = vld [vmem:[%s0 + $0x78] sm:$0xff]
    %v150 = vpack.c.bf16 %v142, %v134
    %v151 = vpack.c.bf16 %v143, %v135
    %v152 = vpack.c.bf16 %v144, %v136
    %v153 = vpack.c.bf16 %v145, %v137
    %v154 = vpack.c.bf16 %v146, %v138
    %v155 = vpack.c.bf16 %v147, %v139
    %v156 = vpack.c.bf16 %v148, %v140
    %v157 = vpack.c.bf16 %v149, %v141
    %v158 = vld [vmem:[#allocation2] sm:$0xff]
    %v159 = vld [vmem:[#allocation2 + $0x8] sm:$0xff]
    %v160 = vld [vmem:[#allocation2 + $0x10] sm:$0xff]
    %v161 = vld [vmem:[#allocation2 + $0x18] sm:$0xff]
    %v162 = vld [vmem:[#allocation2 + $0x20] sm:$0xff]
    %v163 = vld [vmem:[#allocation2 + $0x28] sm:$0xff]
    %v164 = vld [vmem:[#allocation2 + $0x30] sm:$0xff]
    %v165 = vld [vmem:[#allocation2 + $0x38] sm:$0xff]
    %v166 = vld [vmem:[#allocation2 + $0x40] sm:$0xff]
    %v167 = vld [vmem:[#allocation2 + $0x48] sm:$0xff]
    %v168 = vld [vmem:[#allocation2 + $0x50] sm:$0xff]
    %v169 = vld [vmem:[#allocation2 + $0x58] sm:$0xff]
    %v170 = vld [vmem:[#allocation2 + $0x60] sm:$0xff]
    %v171 = vld [vmem:[#allocation2 + $0x68] sm:$0xff]
    %v172 = vld [vmem:[#allocation2 + $0x70] sm:$0xff]
    %v173 = vld [vmem:[#allocation2 + $0x78] sm:$0xff]
    %v174 = vld [vmem:[#allocation2 + $0x80] sm:$0xff]
    %v175 = vld [vmem:[#allocation2 + $0x88] sm:$0xff]
    %v176 = vld [vmem:[#allocation2 + $0x90] sm:$0xff]
    %v177 = vld [vmem:[#allocation2 + $0x98] sm:$0xff]
    %v178 = vld [vmem:[#allocation2 + $0xa0] sm:$0xff]
    %v179 = vld [vmem:[#allocation2 + $0xa8] sm:$0xff]
    %v180 = vld [vmem:[#allocation2 + $0xb0] sm:$0xff]
    %v181 = vld [vmem:[#allocation2 + $0xb8] sm:$0xff]
    %v182 = vld [vmem:[#allocation2 + $0xc0] sm:$0xff]
    %v183 = vld [vmem:[#allocation2 + $0xc8] sm:$0xff]
    %v184 = vld [vmem:[#allocation2 + $0xd0] sm:$0xff]
    %v185 = vld [vmem:[#allocation2 + $0xd8] sm:$0xff]
    %v186 = vld [vmem:[#allocation2 + $0xe0] sm:$0xff]
    %v187 = vld [vmem:[#allocation2 + $0xe8] sm:$0xff]
    %v188 = vld [vmem:[#allocation2 + $0xf0] sm:$0xff]
    %v189 = vld [vmem:[#allocation2 + $0xf8] sm:$0xff]
    %v190 = vld [vmem:[#allocation2 + $0x100] sm:$0xff]
    %v191 = vld [vmem:[#allocation2 + $0x108] sm:$0xff]
    %v192 = vld [vmem:[#allocation2 + $0x110] sm:$0xff]
    %v193 = vld [vmem:[#allocation2 + $0x118] sm:$0xff]
    %v194 = vld [vmem:[#allocation2 + $0x120] sm:$0xff]
    %v195 = vld [vmem:[#allocation2 + $0x128] sm:$0xff]
    %v196 = vld [vmem:[#allocation2 + $0x130] sm:$0xff]
    %v197 = vld [vmem:[#allocation2 + $0x138] sm:$0xff]
    %v198 = vld [vmem:[#allocation2 + $0x140] sm:$0xff]
    %v199 = vld [vmem:[#allocation2 + $0x148] sm:$0xff]
    %v200 = vld [vmem:[#allocation2 + $0x150] sm:$0xff]
    %v201 = vld [vmem:[#allocation2 + $0x158] sm:$0xff]
    %v202 = vld [vmem:[#allocation2 + $0x160] sm:$0xff]
    %v203 = vld [vmem:[#allocation2 + $0x168] sm:$0xff]
    %v204 = vld [vmem:[#allocation2 + $0x170] sm:$0xff]
    %v205 = vld [vmem:[#allocation2 + $0x178] sm:$0xff]
    %v206 = vld [vmem:[#allocation2 + $0x180] sm:$0xff]
    %v207 = vld [vmem:[#allocation2 + $0x188] sm:$0xff]
    %v208 = vld [vmem:[#allocation2 + $0x190] sm:$0xff]
    %v209 = vld [vmem:[#allocation2 + $0x198] sm:$0xff]
    %v210 = vld [vmem:[#allocation2 + $0x1a0] sm:$0xff]
    %v211 = vld [vmem:[#allocation2 + $0x1a8] sm:$0xff]
    %v212 = vld [vmem:[#allocation2 + $0x1b0] sm:$0xff]
    %v213 = vld [vmem:[#allocation2 + $0x1b8] sm:$0xff]
    %v214 = vld [vmem:[#allocation2 + $0x1c0] sm:$0xff]
    %v215 = vld [vmem:[#allocation2 + $0x1c8] sm:$0xff]
    %v216 = vld [vmem:[#allocation2 + $0x1d0] sm:$0xff]
    %v217 = vld [vmem:[#allocation2 + $0x1d8] sm:$0xff]
    %v218 = vld [vmem:[#allocation2 + $0x1e0] sm:$0xff]
    %v219 = vld [vmem:[#allocation2 + $0x1e8] sm:$0xff]
    %v220 = vld [vmem:[#allocation2 + $0x1f0] sm:$0xff]
    %v221 = vld [vmem:[#allocation2 + $0x1f8] sm:$0xff]
    %v222 = vld [vmem:[#allocation2 + $0x200] sm:$0xff]
    %v223 = vld [vmem:[#allocation2 + $0x208] sm:$0xff]
    %v224 = vld [vmem:[#allocation2 + $0x210] sm:$0xff]
    %v225 = vld [vmem:[#allocation2 + $0x218] sm:$0xff]
    %v226 = vld [vmem:[#allocation2 + $0x220] sm:$0xff]
    %v227 = vld [vmem:[#allocation2 + $0x228] sm:$0xff]
    %v228 = vld [vmem:[#allocation2 + $0x230] sm:$0xff]
    %v229 = vld [vmem:[#allocation2 + $0x238] sm:$0xff]
    %v230 = vld [vmem:[#allocation2 + $0x240] sm:$0xff]
    %v231 = vld [vmem:[#allocation2 + $0x248] sm:$0xff]
    %v232 = vld [vmem:[#allocation2 + $0x250] sm:$0xff]
    %v233 = vld [vmem:[#allocation2 + $0x258] sm:$0xff]
    %v234 = vld [vmem:[#allocation2 + $0x260] sm:$0xff]
    %v235 = vld [vmem:[#allocation2 + $0x268] sm:$0xff]
    %v236 = vld [vmem:[#allocation2 + $0x270] sm:$0xff]
    %v237 = vld [vmem:[#allocation2 + $0x278] sm:$0xff]
    %v238 = vld [vmem:[#allocation2 + $0x280] sm:$0xff]
    %v239 = vld [vmem:[#allocation2 + $0x288] sm:$0xff]
    %v240 = vld [vmem:[#allocation2 + $0x290] sm:$0xff]
    %v241 = vld [vmem:[#allocation2 + $0x298] sm:$0xff]
    %v242 = vld [vmem:[#allocation2 + $0x2a0] sm:$0xff]
    %v243 = vld [vmem:[#allocation2 + $0x2a8] sm:$0xff]
    %v244 = vld [vmem:[#allocation2 + $0x2b0] sm:$0xff]
    %v245 = vld [vmem:[#allocation2 + $0x2b8] sm:$0xff]
    %v246 = vld [vmem:[#allocation2 + $0x2c0] sm:$0xff]
    %v247 = vld [vmem:[#allocation2 + $0x2c8] sm:$0xff]
    %v248 = vld [vmem:[#allocation2 + $0x2d0] sm:$0xff]
    %v249 = vld [vmem:[#allocation2 + $0x2d8] sm:$0xff]
    %v250 = vld [vmem:[#allocation2 + $0x2e0] sm:$0xff]
    %v251 = vld [vmem:[#allocation2 + $0x2e8] sm:$0xff]
    %v252 = vld [vmem:[#allocation2 + $0x2f0] sm:$0xff]
    %v253 = vld [vmem:[#allocation2 + $0x2f8] sm:$0xff]
    %v254 = vld [vmem:[#allocation2 + $0x300] sm:$0xff]
    %v255 = vld [vmem:[#allocation2 + $0x308] sm:$0xff]
    %v256 = vld [vmem:[#allocation2 + $0x310] sm:$0xff]
    %v257 = vld [vmem:[#allocation2 + $0x318] sm:$0xff]
    %v258 = vld [vmem:[#allocation2 + $0x320] sm:$0xff]
    %v259 = vld [vmem:[#allocation2 + $0x328] sm:$0xff]
    %v260 = vld [vmem:[#allocation2 + $0x330] sm:$0xff]
    %v261 = vld [vmem:[#allocation2 + $0x338] sm:$0xff]
    %v262 = vld [vmem:[#allocation2 + $0x340] sm:$0xff]
    %v263 = vld [vmem:[#allocation2 + $0x348] sm:$0xff]
    %v264 = vld [vmem:[#allocation2 + $0x350] sm:$0xff]
    %v265 = vld [vmem:[#allocation2 + $0x358] sm:$0xff]
    %v266 = vld [vmem:[#allocation2 + $0x360] sm:$0xff]
    %v267 = vld [vmem:[#allocation2 + $0x368] sm:$0xff]
    %v268 = vld [vmem:[#allocation2 + $0x370] sm:$0xff]
    %v269 = vld [vmem:[#allocation2 + $0x378] sm:$0xff]
    %v270 = vld [vmem:[#allocation2 + $0x380] sm:$0xff]
    %v271 = vld [vmem:[#allocation2 + $0x388] sm:$0xff]
    %v272 = vld [vmem:[#allocation2 + $0x390] sm:$0xff]
    %v273 = vld [vmem:[#allocation2 + $0x398] sm:$0xff]
    %v274 = vld [vmem:[#allocation2 + $0x3a0] sm:$0xff]
    %v275 = vld [vmem:[#allocation2 + $0x3a8] sm:$0xff]
    %v276 = vld [vmem:[#allocation2 + $0x3b0] sm:$0xff]
    %v277 = vld [vmem:[#allocation2 + $0x3b8] sm:$0xff]
    %v278 = vld [vmem:[#allocation2 + $0x3c0] sm:$0xff]
    %v279 = vld [vmem:[#allocation2 + $0x3c8] sm:$0xff]
    %v280 = vld [vmem:[#allocation2 + $0x3d0] sm:$0xff]
    %v281 = vld [vmem:[#allocation2 + $0x3d8] sm:$0xff]
    %v282 = vld [vmem:[#allocation2 + $0x3e0] sm:$0xff]
    %v283 = vld [vmem:[#allocation2 + $0x3e8] sm:$0xff]
    %v284 = vld [vmem:[#allocation2 + $0x3f0] sm:$0xff]
    %v285 = vld [vmem:[#allocation2 + $0x3f8] sm:$0xff]
    %v286 = vld [vmem:[#allocation2 + $0x400] sm:$0xff]
    %v287 = vld [vmem:[#allocation2 + $0x408] sm:$0xff]
    %v288 = vld [vmem:[#allocation2 + $0x410] sm:$0xff]
    %v289 = vld [vmem:[#allocation2 + $0x418] sm:$0xff]
    %v290 = vld [vmem:[#allocation2 + $0x420] sm:$0xff]
    %v291 = vld [vmem:[#allocation2 + $0x428] sm:$0xff]
    %v292 = vld [vmem:[#allocation2 + $0x430] sm:$0xff]
    %v293 = vld [vmem:[#allocation2 + $0x438] sm:$0xff]
    %v294 = vld [vmem:[#allocation2 + $0x440] sm:$0xff]
    %v295 = vld [vmem:[#allocation2 + $0x448] sm:$0xff]
    %v296 = vld [vmem:[#allocation2 + $0x450] sm:$0xff]
    %v297 = vld [vmem:[#allocation2 + $0x458] sm:$0xff]
    %v298 = vld [vmem:[#allocation2 + $0x460] sm:$0xff]
    %v299 = vld [vmem:[#allocation2 + $0x468] sm:$0xff]
    %v300 = vld [vmem:[#allocation2 + $0x470] sm:$0xff]
    %v301 = vld [vmem:[#allocation2 + $0x478] sm:$0xff]
    %v302 = vld [vmem:[#allocation2 + $0x480] sm:$0xff]
    %v303 = vld [vmem:[#allocation2 + $0x488] sm:$0xff]
    %v304 = vld [vmem:[#allocation2 + $0x490] sm:$0xff]
    %v305 = vld [vmem:[#allocation2 + $0x498] sm:$0xff]
    %v306 = vld [vmem:[#allocation2 + $0x4a0] sm:$0xff]
    %v307 = vld [vmem:[#allocation2 + $0x4a8] sm:$0xff]
    %v308 = vld [vmem:[#allocation2 + $0x4b0] sm:$0xff]
    %v309 = vld [vmem:[#allocation2 + $0x4b8] sm:$0xff]
    %v310 = vld [vmem:[#allocation2 + $0x4c0] sm:$0xff]
    %v311 = vld [vmem:[#allocation2 + $0x4c8] sm:$0xff]
    %v312 = vld [vmem:[#allocation2 + $0x4d0] sm:$0xff]
    %v313 = vld [vmem:[#allocation2 + $0x4d8] sm:$0xff]
    %v314 = vld [vmem:[#allocation2 + $0x4e0] sm:$0xff]
    %v315 = vld [vmem:[#allocation2 + $0x4e8] sm:$0xff]
    %v316 = vld [vmem:[#allocation2 + $0x4f0] sm:$0xff]
    %v317 = vld [vmem:[#allocation2 + $0x4f8] sm:$0xff]
    %v318 = vld [vmem:[#allocation2 + $0x500] sm:$0xff]
    %v319 = vld [vmem:[#allocation2 + $0x508] sm:$0xff]
    %v320 = vld [vmem:[#allocation2 + $0x510] sm:$0xff]
    %v321 = vld [vmem:[#allocation2 + $0x518] sm:$0xff]
    %v322 = vld [vmem:[#allocation2 + $0x520] sm:$0xff]
    %v323 = vld [vmem:[#allocation2 + $0x528] sm:$0xff]
    %v324 = vld [vmem:[#allocation2 + $0x530] sm:$0xff]
    %v325 = vld [vmem:[#allocation2 + $0x538] sm:$0xff]
    %v326 = vld [vmem:[#allocation2 + $0x540] sm:$0xff]
    %v327 = vld [vmem:[#allocation2 + $0x548] sm:$0xff]
    %v328 = vld [vmem:[#allocation2 + $0x550] sm:$0xff]
    %v329 = vld [vmem:[#allocation2 + $0x558] sm:$0xff]
    %v330 = vld [vmem:[#allocation2 + $0x560] sm:$0xff]
    %v331 = vld [vmem:[#allocation2 + $0x568] sm:$0xff]
    %v332 = vld [vmem:[#allocation2 + $0x570] sm:$0xff]
    %v333 = vld [vmem:[#allocation2 + $0x578] sm:$0xff]
    %v334 = vld [vmem:[#allocation2 + $0x580] sm:$0xff]
    %v335 = vld [vmem:[#allocation2 + $0x588] sm:$0xff]
    %v336 = vld [vmem:[#allocation2 + $0x590] sm:$0xff]
    %v337 = vld [vmem:[#allocation2 + $0x598] sm:$0xff]
    %v338 = vld [vmem:[#allocation2 + $0x5a0] sm:$0xff]
    %v339 = vld [vmem:[#allocation2 + $0x5a8] sm:$0xff]
    %v340 = vld [vmem:[#allocation2 + $0x5b0] sm:$0xff]
    %v341 = vld [vmem:[#allocation2 + $0x5b8] sm:$0xff]
    %v342 = vld [vmem:[#allocation2 + $0x5c0] sm:$0xff]
    %v343 = vld [vmem:[#allocation2 + $0x5c8] sm:$0xff]
    %v344 = vld [vmem:[#allocation2 + $0x5d0] sm:$0xff]
    %v345 = vld [vmem:[#allocation2 + $0x5d8] sm:$0xff]
    %v346 = vld [vmem:[#allocation2 + $0x5e0] sm:$0xff]
    %v347 = vld [vmem:[#allocation2 + $0x5e8] sm:$0xff]
    %v348 = vld [vmem:[#allocation2 + $0x5f0] sm:$0xff]
    %v349 = vld [vmem:[#allocation2 + $0x5f8] sm:$0xff]
    %v350 = vld [vmem:[#allocation2 + $0x600] sm:$0xff]
    %v351 = vld [vmem:[#allocation2 + $0x608] sm:$0xff]
    %v352 = vld [vmem:[#allocation2 + $0x610] sm:$0xff]
    %v353 = vld [vmem:[#allocation2 + $0x618] sm:$0xff]
    %v354 = vld [vmem:[#allocation2 + $0x620] sm:$0xff]
    %v355 = vld [vmem:[#allocation2 + $0x628] sm:$0xff]
    %v356 = vld [vmem:[#allocation2 + $0x630] sm:$0xff]
    %v357 = vld [vmem:[#allocation2 + $0x638] sm:$0xff]
    %v358 = vld [vmem:[#allocation2 + $0x640] sm:$0xff]
    %v359 = vld [vmem:[#allocation2 + $0x648] sm:$0xff]
    %v360 = vld [vmem:[#allocation2 + $0x650] sm:$0xff]
    %v361 = vld [vmem:[#allocation2 + $0x658] sm:$0xff]
    %v362 = vld [vmem:[#allocation2 + $0x660] sm:$0xff]
    %v363 = vld [vmem:[#allocation2 + $0x668] sm:$0xff]
    %v364 = vld [vmem:[#allocation2 + $0x670] sm:$0xff]
    %v365 = vld [vmem:[#allocation2 + $0x678] sm:$0xff]
    %v366 = vld [vmem:[#allocation2 + $0x680] sm:$0xff]
    %v367 = vld [vmem:[#allocation2 + $0x688] sm:$0xff]
    %v368 = vld [vmem:[#allocation2 + $0x690] sm:$0xff]
    %v369 = vld [vmem:[#allocation2 + $0x698] sm:$0xff]
    %v370 = vld [vmem:[#allocation2 + $0x6a0] sm:$0xff]
    %v371 = vld [vmem:[#allocation2 + $0x6a8] sm:$0xff]
    %v372 = vld [vmem:[#allocation2 + $0x6b0] sm:$0xff]
    %v373 = vld [vmem:[#allocation2 + $0x6b8] sm:$0xff]
    %v374 = vld [vmem:[#allocation2 + $0x6c0] sm:$0xff]
    %v375 = vld [vmem:[#allocation2 + $0x6c8] sm:$0xff]
    %v376 = vld [vmem:[#allocation2 + $0x6d0] sm:$0xff]
    %v377 = vld [vmem:[#allocation2 + $0x6d8] sm:$0xff]
    %v378 = vld [vmem:[#allocation2 + $0x6e0] sm:$0xff]
    %v379 = vld [vmem:[#allocation2 + $0x6e8] sm:$0xff]
    %v380 = vld [vmem:[#allocation2 + $0x6f0] sm:$0xff]
    %v381 = vld [vmem:[#allocation2 + $0x6f8] sm:$0xff]
    %v382 = vld [vmem:[#allocation2 + $0x700] sm:$0xff]
    %v383 = vld [vmem:[#allocation2 + $0x708] sm:$0xff]
    %v384 = vld [vmem:[#allocation2 + $0x710] sm:$0xff]
    %v385 = vld [vmem:[#allocation2 + $0x718] sm:$0xff]
    %v386 = vld [vmem:[#allocation2 + $0x720] sm:$0xff]
    %v387 = vld [vmem:[#allocation2 + $0x728] sm:$0xff]
    %v388 = vld [vmem:[#allocation2 + $0x730] sm:$0xff]
    %v389 = vld [vmem:[#allocation2 + $0x738] sm:$0xff]
    %v390 = vld [vmem:[#allocation2 + $0x740] sm:$0xff]
    %v391 = vld [vmem:[#allocation2 + $0x748] sm:$0xff]
    %v392 = vld [vmem:[#allocation2 + $0x750] sm:$0xff]
    %v393 = vld [vmem:[#allocation2 + $0x758] sm:$0xff]
    %v394 = vld [vmem:[#allocation2 + $0x760] sm:$0xff]
    %v395 = vld [vmem:[#allocation2 + $0x768] sm:$0xff]
    %v396 = vld [vmem:[#allocation2 + $0x770] sm:$0xff]
    %v397 = vld [vmem:[#allocation2 + $0x778] sm:$0xff]
    %v398 = vld [vmem:[#allocation2 + $0x780] sm:$0xff]
    %v399 = vld [vmem:[#allocation2 + $0x788] sm:$0xff]
    %v400 = vld [vmem:[#allocation2 + $0x790] sm:$0xff]
    %v401 = vld [vmem:[#allocation2 + $0x798] sm:$0xff]
    %v402 = vld [vmem:[#allocation2 + $0x7a0] sm:$0xff]
    %v403 = vld [vmem:[#allocation2 + $0x7a8] sm:$0xff]
    %v404 = vld [vmem:[#allocation2 + $0x7b0] sm:$0xff]
    %v405 = vld [vmem:[#allocation2 + $0x7b8] sm:$0xff]
    %v406 = vld [vmem:[#allocation2 + $0x7c0] sm:$0xff]
    %v407 = vld [vmem:[#allocation2 + $0x7c8] sm:$0xff]
    %v408 = vld [vmem:[#allocation2 + $0x7d0] sm:$0xff]
    %v409 = vld [vmem:[#allocation2 + $0x7d8] sm:$0xff]
    %v410 = vld [vmem:[#allocation5] sm:$0xf]
    %v412 = vlaneseq
    %v413 = vshrl.u32 %v412, 7
    %v414 = vsub.s32 0, %v413
    %v415 = vrot.slane %v410, %v414
    %v416 = vlaneseq
    %v417 = vshrl.u32 %v416, 7
    %v418 = vsub.s32 1, %v417
    %v419 = vrot.slane %v410, %v418
    %v420 = vlaneseq
    %v421 = vshrl.u32 %v420, 7
    %v422 = vsub.s32 2, %v421
    %v423 = vrot.slane %v410, %v422
    %v424 = vlaneseq
    %v425 = vshrl.u32 %v424, 7
    %v426 = vsub.s32 3, %v425
    %v427 = vrot.slane %v410, %v426
    %v684 = vunpack.c.l.b16 %v158
    %v685 = vunpack.c.h.b16 %v158
    %v686 = vunpack.c.l.b16 %v159
    %v687 = vunpack.c.h.b16 %v159
    %v688 = vunpack.c.l.b16 %v160
    %v689 = vunpack.c.h.b16 %v160
    %v690 = vunpack.c.l.b16 %v161
    %v691 = vunpack.c.h.b16 %v161
    %v692 = vunpack.c.l.b16 %v162
    %v693 = vunpack.c.h.b16 %v162
    %v694 = vunpack.c.l.b16 %v163
    %v695 = vunpack.c.h.b16 %v163
    %v696 = vunpack.c.l.b16 %v164
    %v697 = vunpack.c.h.b16 %v164
    %v698 = vunpack.c.l.b16 %v165
    %v699 = vunpack.c.h.b16 %v165
    %v700 = vunpack.c.l.b16 %v166
    %v701 = vunpack.c.h.b16 %v166
    %v702 = vunpack.c.l.b16 %v167
    %v703 = vunpack.c.h.b16 %v167
    %v704 = vunpack.c.l.b16 %v168
    %v705 = vunpack.c.h.b16 %v168
    %v706 = vunpack.c.l.b16 %v169
    %v707 = vunpack.c.h.b16 %v169
    %v708 = vunpack.c.l.b16 %v170
    %v709 = vunpack.c.h.b16 %v170
    %v710 = vunpack.c.l.b16 %v171
    %v711 = vunpack.c.h.b16 %v171
    %v712 = vunpack.c.l.b16 %v172
    %v713 = vunpack.c.h.b16 %v172
    %v714 = vunpack.c.l.b16 %v173
    %v715 = vunpack.c.h.b16 %v173
    %v716 = vunpack.c.l.b16 %v174
    %v717 = vunpack.c.h.b16 %v174
    %v718 = vunpack.c.l.b16 %v175
    %v719 = vunpack.c.h.b16 %v175
    %v720 = vunpack.c.l.b16 %v176
    %v721 = vunpack.c.h.b16 %v176
    %v722 = vunpack.c.l.b16 %v177
    %v723 = vunpack.c.h.b16 %v177
    %v724 = vunpack.c.l.b16 %v178
    %v725 = vunpack.c.h.b16 %v178
    %v726 = vunpack.c.l.b16 %v179
    %v727 = vunpack.c.h.b16 %v179
    %v728 = vunpack.c.l.b16 %v180
    %v729 = vunpack.c.h.b16 %v180
    %v730 = vunpack.c.l.b16 %v181
    %v731 = vunpack.c.h.b16 %v181
    %v732 = vunpack.c.l.b16 %v182
    %v733 = vunpack.c.h.b16 %v182
    %v734 = vunpack.c.l.b16 %v183
    %v735 = vunpack.c.h.b16 %v183
    %v736 = vunpack.c.l.b16 %v184
    %v737 = vunpack.c.h.b16 %v184
    %v738 = vunpack.c.l.b16 %v185
    %v739 = vunpack.c.h.b16 %v185
    %v740 = vunpack.c.l.b16 %v186
    %v741 = vunpack.c.h.b16 %v186
    %v742 = vunpack.c.l.b16 %v187
    %v743 = vunpack.c.h.b16 %v187
    %v744 = vunpack.c.l.b16 %v188
    %v745 = vunpack.c.h.b16 %v188
    %v746 = vunpack.c.l.b16 %v189
    %v747 = vunpack.c.h.b16 %v189
    %v748 = vunpack.c.l.b16 %v190
    %v749 = vunpack.c.h.b16 %v190
    %v750 = vunpack.c.l.b16 %v191
    %v751 = vunpack.c.h.b16 %v191
    %v752 = vunpack.c.l.b16 %v192
    %v753 = vunpack.c.h.b16 %v192
    %v754 = vunpack.c.l.b16 %v193
    %v755 = vunpack.c.h.b16 %v193
    %v756 = vunpack.c.l.b16 %v194
    %v757 = vunpack.c.h.b16 %v194
    %v758 = vunpack.c.l.b16 %v195
    %v759 = vunpack.c.h.b16 %v195
    %v760 = vunpack.c.l.b16 %v196
    %v761 = vunpack.c.h.b16 %v196
    %v762 = vunpack.c.l.b16 %v197
    %v763 = vunpack.c.h.b16 %v197
    %v764 = vunpack.c.l.b16 %v198
    %v765 = vunpack.c.h.b16 %v198
    %v766 = vunpack.c.l.b16 %v199
    %v767 = vunpack.c.h.b16 %v199
    %v768 = vunpack.c.l.b16 %v200
    %v769 = vunpack.c.h.b16 %v200
    %v770 = vunpack.c.l.b16 %v201
    %v771 = vunpack.c.h.b16 %v201
    %v772 = vunpack.c.l.b16 %v202
    %v773 = vunpack.c.h.b16 %v202
    %v774 = vunpack.c.l.b16 %v203
    %v775 = vunpack.c.h.b16 %v203
    %v776 = vunpack.c.l.b16 %v204
    %v777 = vunpack.c.h.b16 %v204
    %v778 = vunpack.c.l.b16 %v205
    %v779 = vunpack.c.h.b16 %v205
    %v780 = vunpack.c.l.b16 %v206
    %v781 = vunpack.c.h.b16 %v206
    %v782 = vunpack.c.l.b16 %v207
    %v783 = vunpack.c.h.b16 %v207
    %v784 = vunpack.c.l.b16 %v208
    %v785 = vunpack.c.h.b16 %v208
    %v786 = vunpack.c.l.b16 %v209
    %v787 = vunpack.c.h.b16 %v209
    %v788 = vunpack.c.l.b16 %v210
    %v789 = vunpack.c.h.b16 %v210
    %v790 = vunpack.c.l.b16 %v211
    %v791 = vunpack.c.h.b16 %v211
    %v792 = vunpack.c.l.b16 %v212
    %v793 = vunpack.c.h.b16 %v212
    %v794 = vunpack.c.l.b16 %v213
    %v795 = vunpack.c.h.b16 %v213
    %v796 = vunpack.c.l.b16 %v214
    %v797 = vunpack.c.h.b16 %v214
    %v798 = vunpack.c.l.b16 %v215
    %v799 = vunpack.c.h.b16 %v215
    %v800 = vunpack.c.l.b16 %v216
    %v801 = vunpack.c.h.b16 %v216
    %v802 = vunpack.c.l.b16 %v217
    %v803 = vunpack.c.h.b16 %v217
    %v804 = vunpack.c.l.b16 %v218
    %v805 = vunpack.c.h.b16 %v218
    %v806 = vunpack.c.l.b16 %v219
    %v807 = vunpack.c.h.b16 %v219
    %v808 = vunpack.c.l.b16 %v220
    %v809 = vunpack.c.h.b16 %v220
    %v810 = vunpack.c.l.b16 %v221
    %v811 = vunpack.c.h.b16 %v221
    %v812 = vunpack.c.l.b16 %v222
    %v813 = vunpack.c.h.b16 %v222
    %v814 = vunpack.c.l.b16 %v223
    %v815 = vunpack.c.h.b16 %v223
    %v816 = vunpack.c.l.b16 %v224
    %v817 = vunpack.c.h.b16 %v224
    %v818 = vunpack.c.l.b16 %v225
    %v819 = vunpack.c.h.b16 %v225
    %v820 = vunpack.c.l.b16 %v226
    %v821 = vunpack.c.h.b16 %v226
    %v822 = vunpack.c.l.b16 %v227
    %v823 = vunpack.c.h.b16 %v227
    %v824 = vunpack.c.l.b16 %v228
    %v825 = vunpack.c.h.b16 %v228
    %v826 = vunpack.c.l.b16 %v229
    %v827 = vunpack.c.h.b16 %v229
    %v828 = vunpack.c.l.b16 %v230
    %v829 = vunpack.c.h.b16 %v230
    %v830 = vunpack.c.l.b16 %v231
    %v831 = vunpack.c.h.b16 %v231
    %v832 = vunpack.c.l.b16 %v232
    %v833 = vunpack.c.h.b16 %v232
    %v834 = vunpack.c.l.b16 %v233
    %v835 = vunpack.c.h.b16 %v233
    %v836 = vunpack.c.l.b16 %v234
    %v837 = vunpack.c.h.b16 %v234
    %v838 = vunpack.c.l.b16 %v235
    %v839 = vunpack.c.h.b16 %v235
    %v840 = vunpack.c.l.b16 %v236
    %v841 = vunpack.c.h.b16 %v236
    %v842 = vunpack.c.l.b16 %v237
    %v843 = vunpack.c.h.b16 %v237
    %v844 = vunpack.c.l.b16 %v238
    %v845 = vunpack.c.h.b16 %v238
    %v846 = vunpack.c.l.b16 %v239
    %v847 = vunpack.c.h.b16 %v239
    %v848 = vunpack.c.l.b16 %v240
    %v849 = vunpack.c.h.b16 %v240
    %v850 = vunpack.c.l.b16 %v241
    %v851 = vunpack.c.h.b16 %v241
    %v852 = vunpack.c.l.b16 %v242
    %v853 = vunpack.c.h.b16 %v242
    %v854 = vunpack.c.l.b16 %v243
    %v855 = vunpack.c.h.b16 %v243
    %v856 = vunpack.c.l.b16 %v244
    %v857 = vunpack.c.h.b16 %v244
    %v858 = vunpack.c.l.b16 %v245
    %v859 = vunpack.c.h.b16 %v245
    %v860 = vunpack.c.l.b16 %v246
    %v861 = vunpack.c.h.b16 %v246
    %v862 = vunpack.c.l.b16 %v247
    %v863 = vunpack.c.h.b16 %v247
    %v864 = vunpack.c.l.b16 %v248
    %v865 = vunpack.c.h.b16 %v248
    %v866 = vunpack.c.l.b16 %v249
    %v867 = vunpack.c.h.b16 %v249
    %v868 = vunpack.c.l.b16 %v250
    %v869 = vunpack.c.h.b16 %v250
    %v870 = vunpack.c.l.b16 %v251
    %v871 = vunpack.c.h.b16 %v251
    %v872 = vunpack.c.l.b16 %v252
    %v873 = vunpack.c.h.b16 %v252
    %v874 = vunpack.c.l.b16 %v253
    %v875 = vunpack.c.h.b16 %v253
    %v876 = vunpack.c.l.b16 %v254
    %v877 = vunpack.c.h.b16 %v254
    %v878 = vunpack.c.l.b16 %v255
    %v879 = vunpack.c.h.b16 %v255
    %v880 = vunpack.c.l.b16 %v256
    %v881 = vunpack.c.h.b16 %v256
    %v882 = vunpack.c.l.b16 %v257
    %v883 = vunpack.c.h.b16 %v257
    %v884 = vunpack.c.l.b16 %v258
    %v885 = vunpack.c.h.b16 %v258
    %v886 = vunpack.c.l.b16 %v259
    %v887 = vunpack.c.h.b16 %v259
    %v888 = vunpack.c.l.b16 %v260
    %v889 = vunpack.c.h.b16 %v260
    %v890 = vunpack.c.l.b16 %v261
    %v891 = vunpack.c.h.b16 %v261
    %v892 = vunpack.c.l.b16 %v262
    %v893 = vunpack.c.h.b16 %v262
    %v894 = vunpack.c.l.b16 %v263
    %v895 = vunpack.c.h.b16 %v263
    %v896 = vunpack.c.l.b16 %v264
    %v897 = vunpack.c.h.b16 %v264
    %v898 = vunpack.c.l.b16 %v265
    %v899 = vunpack.c.h.b16 %v265
    %v900 = vunpack.c.l.b16 %v266
    %v901 = vunpack.c.h.b16 %v266
    %v902 = vunpack.c.l.b16 %v267
    %v903 = vunpack.c.h.b16 %v267
    %v904 = vunpack.c.l.b16 %v268
    %v905 = vunpack.c.h.b16 %v268
    %v906 = vunpack.c.l.b16 %v269
    %v907 = vunpack.c.h.b16 %v269
    %v908 = vunpack.c.l.b16 %v270
    %v909 = vunpack.c.h.b16 %v270
    %v910 = vunpack.c.l.b16 %v271
    %v911 = vunpack.c.h.b16 %v271
    %v912 = vunpack.c.l.b16 %v272
    %v913 = vunpack.c.h.b16 %v272
    %v914 = vunpack.c.l.b16 %v273
    %v915 = vunpack.c.h.b16 %v273
    %v916 = vunpack.c.l.b16 %v274
    %v917 = vunpack.c.h.b16 %v274
    %v918 = vunpack.c.l.b16 %v275
    %v919 = vunpack.c.h.b16 %v275
    %v920 = vunpack.c.l.b16 %v276
    %v921 = vunpack.c.h.b16 %v276
    %v922 = vunpack.c.l.b16 %v277
    %v923 = vunpack.c.h.b16 %v277
    %v924 = vunpack.c.l.b16 %v278
    %v925 = vunpack.c.h.b16 %v278
    %v926 = vunpack.c.l.b16 %v279
    %v927 = vunpack.c.h.b16 %v279
    %v928 = vunpack.c.l.b16 %v280
    %v929 = vunpack.c.h.b16 %v280
    %v930 = vunpack.c.l.b16 %v281
    %v931 = vunpack.c.h.b16 %v281
    %v932 = vunpack.c.l.b16 %v282
    %v933 = vunpack.c.h.b16 %v282
    %v934 = vunpack.c.l.b16 %v283
    %v935 = vunpack.c.h.b16 %v283
    %v936 = vunpack.c.l.b16 %v284
    %v937 = vunpack.c.h.b16 %v284
    %v938 = vunpack.c.l.b16 %v285
    %v939 = vunpack.c.h.b16 %v285
    %v940 = vunpack.c.l.b16 %v286
    %v941 = vunpack.c.h.b16 %v286
    %v942 = vunpack.c.l.b16 %v287
    %v943 = vunpack.c.h.b16 %v287
    %v944 = vunpack.c.l.b16 %v288
    %v945 = vunpack.c.h.b16 %v288
    %v946 = vunpack.c.l.b16 %v289
    %v947 = vunpack.c.h.b16 %v289
    %v948 = vunpack.c.l.b16 %v290
    %v949 = vunpack.c.h.b16 %v290
    %v950 = vunpack.c.l.b16 %v291
    %v951 = vunpack.c.h.b16 %v291
    %v952 = vunpack.c.l.b16 %v292
    %v953 = vunpack.c.h.b16 %v292
    %v954 = vunpack.c.l.b16 %v293
    %v955 = vunpack.c.h.b16 %v293
    %v956 = vunpack.c.l.b16 %v294
    %v957 = vunpack.c.h.b16 %v294
    %v958 = vunpack.c.l.b16 %v295
    %v959 = vunpack.c.h.b16 %v295
    %v960 = vunpack.c.l.b16 %v296
    %v961 = vunpack.c.h.b16 %v296
    %v962 = vunpack.c.l.b16 %v297
    %v963 = vunpack.c.h.b16 %v297
    %v964 = vunpack.c.l.b16 %v298
    %v965 = vunpack.c.h.b16 %v298
    %v966 = vunpack.c.l.b16 %v299
    %v967 = vunpack.c.h.b16 %v299
    %v968 = vunpack.c.l.b16 %v300
    %v969 = vunpack.c.h.b16 %v300
    %v970 = vunpack.c.l.b16 %v301
    %v971 = vunpack.c.h.b16 %v301
    %v972 = vunpack.c.l.b16 %v302
    %v973 = vunpack.c.h.b16 %v302
    %v974 = vunpack.c.l.b16 %v303
    %v975 = vunpack.c.h.b16 %v303
    %v976 = vunpack.c.l.b16 %v304
    %v977 = vunpack.c.h.b16 %v304
    %v978 = vunpack.c.l.b16 %v305
    %v979 = vunpack.c.h.b16 %v305
    %v980 = vunpack.c.l.b16 %v306
    %v981 = vunpack.c.h.b16 %v306
    %v982 = vunpack.c.l.b16 %v307
    %v983 = vunpack.c.h.b16 %v307
    %v984 = vunpack.c.l.b16 %v308
    %v985 = vunpack.c.h.b16 %v308
    %v986 = vunpack.c.l.b16 %v309
    %v987 = vunpack.c.h.b16 %v309
    %v988 = vunpack.c.l.b16 %v310
    %v989 = vunpack.c.h.b16 %v310
    %v990 = vunpack.c.l.b16 %v311
    %v991 = vunpack.c.h.b16 %v311
    %v992 = vunpack.c.l.b16 %v312
    %v993 = vunpack.c.h.b16 %v312
    %v994 = vunpack.c.l.b16 %v313
    %v995 = vunpack.c.h.b16 %v313
    %v996 = vunpack.c.l.b16 %v314
    %v997 = vunpack.c.h.b16 %v314
    %v998 = vunpack.c.l.b16 %v315
    %v999 = vunpack.c.h.b16 %v315
    %v1000 = vunpack.c.l.b16 %v316
    %v1001 = vunpack.c.h.b16 %v316
    %v1002 = vunpack.c.l.b16 %v317
    %v1003 = vunpack.c.h.b16 %v317
    %v1004 = vunpack.c.l.b16 %v318
    %v1005 = vunpack.c.h.b16 %v318
    %v1006 = vunpack.c.l.b16 %v319
    %v1007 = vunpack.c.h.b16 %v319
    %v1008 = vunpack.c.l.b16 %v320
    %v1009 = vunpack.c.h.b16 %v320
    %v1010 = vunpack.c.l.b16 %v321
    %v1011 = vunpack.c.h.b16 %v321
    %v1012 = vunpack.c.l.b16 %v322
    %v1013 = vunpack.c.h.b16 %v322
    %v1014 = vunpack.c.l.b16 %v323
    %v1015 = vunpack.c.h.b16 %v323
    %v1016 = vunpack.c.l.b16 %v324
    %v1017 = vunpack.c.h.b16 %v324
    %v1018 = vunpack.c.l.b16 %v325
    %v1019 = vunpack.c.h.b16 %v325
    %v1020 = vunpack.c.l.b16 %v326
    %v1021 = vunpack.c.h.b16 %v326
    %v1022 = vunpack.c.l.b16 %v327
    %v1023 = vunpack.c.h.b16 %v327
    %v1024 = vunpack.c.l.b16 %v328
    %v1025 = vunpack.c.h.b16 %v328
    %v1026 = vunpack.c.l.b16 %v329
    %v1027 = vunpack.c.h.b16 %v329
    %v1028 = vunpack.c.l.b16 %v330
    %v1029 = vunpack.c.h.b16 %v330
    %v1030 = vunpack.c.l.b16 %v331
    %v1031 = vunpack.c.h.b16 %v331
    %v1032 = vunpack.c.l.b16 %v332
    %v1033 = vunpack.c.h.b16 %v332
    %v1034 = vunpack.c.l.b16 %v333
    %v1035 = vunpack.c.h.b16 %v333
    %v1036 = vunpack.c.l.b16 %v334
    %v1037 = vunpack.c.h.b16 %v334
    %v1038 = vunpack.c.l.b16 %v335
    %v1039 = vunpack.c.h.b16 %v335
    %v1040 = vunpack.c.l.b16 %v336
    %v1041 = vunpack.c.h.b16 %v336
    %v1042 = vunpack.c.l.b16 %v337
    %v1043 = vunpack.c.h.b16 %v337
    %v1044 = vunpack.c.l.b16 %v338
    %v1045 = vunpack.c.h.b16 %v338
    %v1046 = vunpack.c.l.b16 %v339
    %v1047 = vunpack.c.h.b16 %v339
    %v1048 = vunpack.c.l.b16 %v340
    %v1049 = vunpack.c.h.b16 %v340
    %v1050 = vunpack.c.l.b16 %v341
    %v1051 = vunpack.c.h.b16 %v341
    %v1052 = vunpack.c.l.b16 %v342
    %v1053 = vunpack.c.h.b16 %v342
    %v1054 = vunpack.c.l.b16 %v343
    %v1055 = vunpack.c.h.b16 %v343
    %v1056 = vunpack.c.l.b16 %v344
    %v1057 = vunpack.c.h.b16 %v344
    %v1058 = vunpack.c.l.b16 %v345
    %v1059 = vunpack.c.h.b16 %v345
    %v1060 = vunpack.c.l.b16 %v346
    %v1061 = vunpack.c.h.b16 %v346
    %v1062 = vunpack.c.l.b16 %v347
    %v1063 = vunpack.c.h.b16 %v347
    %v1064 = vunpack.c.l.b16 %v348
    %v1065 = vunpack.c.h.b16 %v348
    %v1066 = vunpack.c.l.b16 %v349
    %v1067 = vunpack.c.h.b16 %v349
    %v1068 = vunpack.c.l.b16 %v350
    %v1069 = vunpack.c.h.b16 %v350
    %v1070 = vunpack.c.l.b16 %v351
    %v1071 = vunpack.c.h.b16 %v351
    %v1072 = vunpack.c.l.b16 %v352
    %v1073 = vunpack.c.h.b16 %v352
    %v1074 = vunpack.c.l.b16 %v353
    %v1075 = vunpack.c.h.b16 %v353
    %v1076 = vunpack.c.l.b16 %v354
    %v1077 = vunpack.c.h.b16 %v354
    %v1078 = vunpack.c.l.b16 %v355
    %v1079 = vunpack.c.h.b16 %v355
    %v1080 = vunpack.c.l.b16 %v356
    %v1081 = vunpack.c.h.b16 %v356
    %v1082 = vunpack.c.l.b16 %v357
    %v1083 = vunpack.c.h.b16 %v357
    %v1084 = vunpack.c.l.b16 %v358
    %v1085 = vunpack.c.h.b16 %v358
    %v1086 = vunpack.c.l.b16 %v359
    %v1087 = vunpack.c.h.b16 %v359
    %v1088 = vunpack.c.l.b16 %v360
    %v1089 = vunpack.c.h.b16 %v360
    %v1090 = vunpack.c.l.b16 %v361
    %v1091 = vunpack.c.h.b16 %v361
    %v1092 = vunpack.c.l.b16 %v362
    %v1093 = vunpack.c.h.b16 %v362
    %v1094 = vunpack.c.l.b16 %v363
    %v1095 = vunpack.c.h.b16 %v363
    %v1096 = vunpack.c.l.b16 %v364
    %v1097 = vunpack.c.h.b16 %v364
    %v1098 = vunpack.c.l.b16 %v365
    %v1099 = vunpack.c.h.b16 %v365
    %v1100 = vunpack.c.l.b16 %v366
    %v1101 = vunpack.c.h.b16 %v366
    %v1102 = vunpack.c.l.b16 %v367
    %v1103 = vunpack.c.h.b16 %v367
    %v1104 = vunpack.c.l.b16 %v368
    %v1105 = vunpack.c.h.b16 %v368
    %v1106 = vunpack.c.l.b16 %v369
    %v1107 = vunpack.c.h.b16 %v369
    %v1108 = vunpack.c.l.b16 %v370
    %v1109 = vunpack.c.h.b16 %v370
    %v1110 = vunpack.c.l.b16 %v371
    %v1111 = vunpack.c.h.b16 %v371
    %v1112 = vunpack.c.l.b16 %v372
    %v1113 = vunpack.c.h.b16 %v372
    %v1114 = vunpack.c.l.b16 %v373
    %v1115 = vunpack.c.h.b16 %v373
    %v1116 = vunpack.c.l.b16 %v374
    %v1117 = vunpack.c.h.b16 %v374
    %v1118 = vunpack.c.l.b16 %v375
    %v1119 = vunpack.c.h.b16 %v375
    %v1120 = vunpack.c.l.b16 %v376
    %v1121 = vunpack.c.h.b16 %v376
    %v1122 = vunpack.c.l.b16 %v377
    %v1123 = vunpack.c.h.b16 %v377
    %v1124 = vunpack.c.l.b16 %v378
    %v1125 = vunpack.c.h.b16 %v378
    %v1126 = vunpack.c.l.b16 %v379
    %v1127 = vunpack.c.h.b16 %v379
    %v1128 = vunpack.c.l.b16 %v380
    %v1129 = vunpack.c.h.b16 %v380
    %v1130 = vunpack.c.l.b16 %v381
    %v1131 = vunpack.c.h.b16 %v381
    %v1132 = vunpack.c.l.b16 %v382
    %v1133 = vunpack.c.h.b16 %v382
    %v1134 = vunpack.c.l.b16 %v383
    %v1135 = vunpack.c.h.b16 %v383
    %v1136 = vunpack.c.l.b16 %v384
    %v1137 = vunpack.c.h.b16 %v384
    %v1138 = vunpack.c.l.b16 %v385
    %v1139 = vunpack.c.h.b16 %v385
    %v1140 = vunpack.c.l.b16 %v386
    %v1141 = vunpack.c.h.b16 %v386
    %v1142 = vunpack.c.l.b16 %v387
    %v1143 = vunpack.c.h.b16 %v387
    %v1144 = vunpack.c.l.b16 %v388
    %v1145 = vunpack.c.h.b16 %v388
    %v1146 = vunpack.c.l.b16 %v389
    %v1147 = vunpack.c.h.b16 %v389
    %v1148 = vunpack.c.l.b16 %v390
    %v1149 = vunpack.c.h.b16 %v390
    %v1150 = vunpack.c.l.b16 %v391
    %v1151 = vunpack.c.h.b16 %v391
    %v1152 = vunpack.c.l.b16 %v392
    %v1153 = vunpack.c.h.b16 %v392
    %v1154 = vunpack.c.l.b16 %v393
    %v1155 = vunpack.c.h.b16 %v393
    %v1156 = vunpack.c.l.b16 %v394
    %v1157 = vunpack.c.h.b16 %v394
    %v1158 = vunpack.c.l.b16 %v395
    %v1159 = vunpack.c.h.b16 %v395
    %v1160 = vunpack.c.l.b16 %v396
    %v1161 = vunpack.c.h.b16 %v396
    %v1162 = vunpack.c.l.b16 %v397
    %v1163 = vunpack.c.h.b16 %v397
    %v1164 = vunpack.c.l.b16 %v398
    %v1165 = vunpack.c.h.b16 %v398
    %v1166 = vunpack.c.l.b16 %v399
    %v1167 = vunpack.c.h.b16 %v399
    %v1168 = vunpack.c.l.b16 %v400
    %v1169 = vunpack.c.h.b16 %v400
    %v1170 = vunpack.c.l.b16 %v401
    %v1171 = vunpack.c.h.b16 %v401
    %v1172 = vunpack.c.l.b16 %v402
    %v1173 = vunpack.c.h.b16 %v402
    %v1174 = vunpack.c.l.b16 %v403
    %v1175 = vunpack.c.h.b16 %v403
    %v1176 = vunpack.c.l.b16 %v404
    %v1177 = vunpack.c.h.b16 %v404
    %v1178 = vunpack.c.l.b16 %v405
    %v1179 = vunpack.c.h.b16 %v405
    %v1180 = vunpack.c.l.b16 %v406
    %v1181 = vunpack.c.h.b16 %v406
    %v1182 = vunpack.c.l.b16 %v407
    %v1183 = vunpack.c.h.b16 %v407
    %v1184 = vunpack.c.l.b16 %v408
    %v1185 = vunpack.c.h.b16 %v408
    %v1186 = vunpack.c.l.b16 %v409
    %v1187 = vunpack.c.h.b16 %v409
    %v1188 = vpack.c.b16 %v688, %v684
    %v1189 = vpack.c.b16 %v689, %v685
    %v1190 = vpack.c.b16 %v690, %v686
    %v1191 = vpack.c.b16 %v691, %v687
    %v1192 = vpack.c.b16 %v696, %v692
    %v1193 = vpack.c.b16 %v697, %v693
    %v1194 = vpack.c.b16 %v698, %v694
    %v1195 = vpack.c.b16 %v699, %v695
    %v1196 = vpack.c.b16 %v704, %v700
    %v1197 = vpack.c.b16 %v705, %v701
    %v1198 = vpack.c.b16 %v706, %v702
    %v1199 = vpack.c.b16 %v707, %v703
    %v1200 = vpack.c.b16 %v712, %v708
    %v1201 = vpack.c.b16 %v713, %v709
    %v1202 = vpack.c.b16 %v714, %v710
    %v1203 = vpack.c.b16 %v715, %v711
    %v1204 = vpack.c.b16 %v720, %v716
    %v1205 = vpack.c.b16 %v721, %v717
    %v1206 = vpack.c.b16 %v722, %v718
    %v1207 = vpack.c.b16 %v723, %v719
    %v1208 = vpack.c.b16 %v728, %v724
    %v1209 = vpack.c.b16 %v729, %v725
    %v1210 = vpack.c.b16 %v730, %v726
    %v1211 = vpack.c.b16 %v731, %v727
    %v1212 = vpack.c.b16 %v736, %v732
    %v1213 = vpack.c.b16 %v737, %v733
    %v1214 = vpack.c.b16 %v738, %v734
    %v1215 = vpack.c.b16 %v739, %v735
    %v1216 = vpack.c.b16 %v744, %v740
    %v1217 = vpack.c.b16 %v745, %v741
    %v1218 = vpack.c.b16 %v746, %v742
    %v1219 = vpack.c.b16 %v747, %v743
    %v1220 = vpack.c.b16 %v752, %v748
    %v1221 = vpack.c.b16 %v753, %v749
    %v1222 = vpack.c.b16 %v754, %v750
    %v1223 = vpack.c.b16 %v755, %v751
    %v1224 = vpack.c.b16 %v760, %v756
    %v1225 = vpack.c.b16 %v761, %v757
    %v1226 = vpack.c.b16 %v762, %v758
    %v1227 = vpack.c.b16 %v763, %v759
    %v1228 = vpack.c.b16 %v768, %v764
    %v1229 = vpack.c.b16 %v769, %v765
    %v1230 = vpack.c.b16 %v770, %v766
    %v1231 = vpack.c.b16 %v771, %v767
    %v1232 = vpack.c.b16 %v776, %v772
    %v1233 = vpack.c.b16 %v777, %v773
    %v1234 = vpack.c.b16 %v778, %v774
    %v1235 = vpack.c.b16 %v779, %v775
    %v1236 = vpack.c.b16 %v784, %v780
    %v1237 = vpack.c.b16 %v785, %v781
    %v1238 = vpack.c.b16 %v786, %v782
    %v1239 = vpack.c.b16 %v787, %v783
    %v1240 = vpack.c.b16 %v792, %v788
    %v1241 = vpack.c.b16 %v793, %v789
    %v1242 = vpack.c.b16 %v794, %v790
    %v1243 = vpack.c.b16 %v795, %v791
    %v1244 = vpack.c.b16 %v800, %v796
    %v1245 = vpack.c.b16 %v801, %v797
    %v1246 = vpack.c.b16 %v802, %v798
    %v1247 = vpack.c.b16 %v803, %v799
    %v1248 = vpack.c.b16 %v808, %v804
    %v1249 = vpack.c.b16 %v809, %v805
    %v1250 = vpack.c.b16 %v810, %v806
    %v1251 = vpack.c.b16 %v811, %v807
    %v1252 = vpack.c.b16 %v816, %v812
    %v1253 = vpack.c.b16 %v817, %v813
    %v1254 = vpack.c.b16 %v818, %v814
    %v1255 = vpack.c.b16 %v819, %v815
    %v1256 = vpack.c.b16 %v824, %v820
    %v1257 = vpack.c.b16 %v825, %v821
    %v1258 = vpack.c.b16 %v826, %v822
    %v1259 = vpack.c.b16 %v827, %v823
    %v1260 = vpack.c.b16 %v832, %v828
    %v1261 = vpack.c.b16 %v833, %v829
    %v1262 = vpack.c.b16 %v834, %v830
    %v1263 = vpack.c.b16 %v835, %v831
    %v1264 = vpack.c.b16 %v840, %v836
    %v1265 = vpack.c.b16 %v841, %v837
    %v1266 = vpack.c.b16 %v842, %v838
    %v1267 = vpack.c.b16 %v843, %v839
    %v1268 = vpack.c.b16 %v848, %v844
    %v1269 = vpack.c.b16 %v849, %v845
    %v1270 = vpack.c.b16 %v850, %v846
    %v1271 = vpack.c.b16 %v851, %v847
    %v1272 = vpack.c.b16 %v856, %v852
    %v1273 = vpack.c.b16 %v857, %v853
    %v1274 = vpack.c.b16 %v858, %v854
    %v1275 = vpack.c.b16 %v859, %v855
    %v1276 = vpack.c.b16 %v864, %v860
    %v1277 = vpack.c.b16 %v865, %v861
    %v1278 = vpack.c.b16 %v866, %v862
    %v1279 = vpack.c.b16 %v867, %v863
    %v1280 = vpack.c.b16 %v872, %v868
    %v1281 = vpack.c.b16 %v873, %v869
    %v1282 = vpack.c.b16 %v874, %v870
    %v1283 = vpack.c.b16 %v875, %v871
    %v1284 = vpack.c.b16 %v880, %v876
    %v1285 = vpack.c.b16 %v881, %v877
    %v1286 = vpack.c.b16 %v882, %v878
    %v1287 = vpack.c.b16 %v883, %v879
    %v1288 = vpack.c.b16 %v888, %v884
    %v1289 = vpack.c.b16 %v889, %v885
    %v1290 = vpack.c.b16 %v890, %v886
    %v1291 = vpack.c.b16 %v891, %v887
    %v1292 = vpack.c.b16 %v896, %v892
    %v1293 = vpack.c.b16 %v897, %v893
    %v1294 = vpack.c.b16 %v898, %v894
    %v1295 = vpack.c.b16 %v899, %v895
    %v1296 = vpack.c.b16 %v904, %v900
    %v1297 = vpack.c.b16 %v905, %v901
    %v1298 = vpack.c.b16 %v906, %v902
    %v1299 = vpack.c.b16 %v907, %v903
    %v1300 = vpack.c.b16 %v912, %v908
    %v1301 = vpack.c.b16 %v913, %v909
    %v1302 = vpack.c.b16 %v914, %v910
    %v1303 = vpack.c.b16 %v915, %v911
    %v1304 = vpack.c.b16 %v920, %v916
    %v1305 = vpack.c.b16 %v921, %v917
    %v1306 = vpack.c.b16 %v922, %v918
    %v1307 = vpack.c.b16 %v923, %v919
    %v1308 = vpack.c.b16 %v928, %v924
    %v1309 = vpack.c.b16 %v929, %v925
    %v1310 = vpack.c.b16 %v930, %v926
    %v1311 = vpack.c.b16 %v931, %v927
    %v1312 = vpack.c.b16 %v936, %v932
    %v1313 = vpack.c.b16 %v937, %v933
    %v1314 = vpack.c.b16 %v938, %v934
    %v1315 = vpack.c.b16 %v939, %v935
    %v1316 = vpack.c.b16 %v944, %v940
    %v1317 = vpack.c.b16 %v945, %v941
    %v1318 = vpack.c.b16 %v946, %v942
    %v1319 = vpack.c.b16 %v947, %v943
    %v1320 = vpack.c.b16 %v952, %v948
    %v1321 = vpack.c.b16 %v953, %v949
    %v1322 = vpack.c.b16 %v954, %v950
    %v1323 = vpack.c.b16 %v955, %v951
    %v1324 = vpack.c.b16 %v960, %v956
    %v1325 = vpack.c.b16 %v961, %v957
    %v1326 = vpack.c.b16 %v962, %v958
    %v1327 = vpack.c.b16 %v963, %v959
    %v1328 = vpack.c.b16 %v968, %v964
    %v1329 = vpack.c.b16 %v969, %v965
    %v1330 = vpack.c.b16 %v970, %v966
    %v1331 = vpack.c.b16 %v971, %v967
    %v1332 = vpack.c.b16 %v976, %v972
    %v1333 = vpack.c.b16 %v977, %v973
    %v1334 = vpack.c.b16 %v978, %v974
    %v1335 = vpack.c.b16 %v979, %v975
    %v1336 = vpack.c.b16 %v984, %v980
    %v1337 = vpack.c.b16 %v985, %v981
    %v1338 = vpack.c.b16 %v986, %v982
    %v1339 = vpack.c.b16 %v987, %v983
    %v1340 = vpack.c.b16 %v992, %v988
    %v1341 = vpack.c.b16 %v993, %v989
    %v1342 = vpack.c.b16 %v994, %v990
    %v1343 = vpack.c.b16 %v995, %v991
    %v1344 = vpack.c.b16 %v1000, %v996
    %v1345 = vpack.c.b16 %v1001, %v997
    %v1346 = vpack.c.b16 %v1002, %v998
    %v1347 = vpack.c.b16 %v1003, %v999
    %v1348 = vpack.c.b16 %v1008, %v1004
    %v1349 = vpack.c.b16 %v1009, %v1005
    %v1350 = vpack.c.b16 %v1010, %v1006
    %v1351 = vpack.c.b16 %v1011, %v1007
    %v1352 = vpack.c.b16 %v1016, %v1012
    %v1353 = vpack.c.b16 %v1017, %v1013
    %v1354 = vpack.c.b16 %v1018, %v1014
    %v1355 = vpack.c.b16 %v1019, %v1015
    %v1356 = vpack.c.b16 %v1024, %v1020
    %v1357 = vpack.c.b16 %v1025, %v1021
    %v1358 = vpack.c.b16 %v1026, %v1022
    %v1359 = vpack.c.b16 %v1027, %v1023
    %v1360 = vpack.c.b16 %v1032, %v1028
    %v1361 = vpack.c.b16 %v1033, %v1029
    %v1362 = vpack.c.b16 %v1034, %v1030
    %v1363 = vpack.c.b16 %v1035, %v1031
    %v1364 = vpack.c.b16 %v1040, %v1036
    %v1365 = vpack.c.b16 %v1041, %v1037
    %v1366 = vpack.c.b16 %v1042, %v1038
    %v1367 = vpack.c.b16 %v1043, %v1039
    %v1368 = vpack.c.b16 %v1048, %v1044
    %v1369 = vpack.c.b16 %v1049, %v1045
    %v1370 = vpack.c.b16 %v1050, %v1046
    %v1371 = vpack.c.b16 %v1051, %v1047
    %v1372 = vpack.c.b16 %v1056, %v1052
    %v1373 = vpack.c.b16 %v1057, %v1053
    %v1374 = vpack.c.b16 %v1058, %v1054
    %v1375 = vpack.c.b16 %v1059, %v1055
    %v1376 = vpack.c.b16 %v1064, %v1060
    %v1377 = vpack.c.b16 %v1065, %v1061
    %v1378 = vpack.c.b16 %v1066, %v1062
    %v1379 = vpack.c.b16 %v1067, %v1063
    %v1380 = vpack.c.b16 %v1072, %v1068
    %v1381 = vpack.c.b16 %v1073, %v1069
    %v1382 = vpack.c.b16 %v1074, %v1070
    %v1383 = vpack.c.b16 %v1075, %v1071
    %v1384 = vpack.c.b16 %v1080, %v1076
    %v1385 = vpack.c.b16 %v1081, %v1077
    %v1386 = vpack.c.b16 %v1082, %v1078
    %v1387 = vpack.c.b16 %v1083, %v1079
    %v1388 = vpack.c.b16 %v1088, %v1084
    %v1389 = vpack.c.b16 %v1089, %v1085
    %v1390 = vpack.c.b16 %v1090, %v1086
    %v1391 = vpack.c.b16 %v1091, %v1087
    %v1392 = vpack.c.b16 %v1096, %v1092
    %v1393 = vpack.c.b16 %v1097, %v1093
    %v1394 = vpack.c.b16 %v1098, %v1094
    %v1395 = vpack.c.b16 %v1099, %v1095
    %v1396 = vpack.c.b16 %v1104, %v1100
    %v1397 = vpack.c.b16 %v1105, %v1101
    %v1398 = vpack.c.b16 %v1106, %v1102
    %v1399 = vpack.c.b16 %v1107, %v1103
    %v1400 = vpack.c.b16 %v1112, %v1108
    %v1401 = vpack.c.b16 %v1113, %v1109
    %v1402 = vpack.c.b16 %v1114, %v1110
    %v1403 = vpack.c.b16 %v1115, %v1111
    %v1404 = vpack.c.b16 %v1120, %v1116
    %v1405 = vpack.c.b16 %v1121, %v1117
    %v1406 = vpack.c.b16 %v1122, %v1118
    %v1407 = vpack.c.b16 %v1123, %v1119
    %v1408 = vpack.c.b16 %v1128, %v1124
    %v1409 = vpack.c.b16 %v1129, %v1125
    %v1410 = vpack.c.b16 %v1130, %v1126
    %v1411 = vpack.c.b16 %v1131, %v1127
    %v1412 = vpack.c.b16 %v1136, %v1132
    %v1413 = vpack.c.b16 %v1137, %v1133
    %v1414 = vpack.c.b16 %v1138, %v1134
    %v1415 = vpack.c.b16 %v1139, %v1135
    %v1416 = vpack.c.b16 %v1144, %v1140
    %v1417 = vpack.c.b16 %v1145, %v1141
    %v1418 = vpack.c.b16 %v1146, %v1142
    %v1419 = vpack.c.b16 %v1147, %v1143
    %v1420 = vpack.c.b16 %v1152, %v1148
    %v1421 = vpack.c.b16 %v1153, %v1149
    %v1422 = vpack.c.b16 %v1154, %v1150
    %v1423 = vpack.c.b16 %v1155, %v1151
    %v1424 = vpack.c.b16 %v1160, %v1156
    %v1425 = vpack.c.b16 %v1161, %v1157
    %v1426 = vpack.c.b16 %v1162, %v1158
    %v1427 = vpack.c.b16 %v1163, %v1159
    %v1428 = vpack.c.b16 %v1168, %v1164
    %v1429 = vpack.c.b16 %v1169, %v1165
    %v1430 = vpack.c.b16 %v1170, %v1166
    %v1431 = vpack.c.b16 %v1171, %v1167
    %v1432 = vpack.c.b16 %v1176, %v1172
    %v1433 = vpack.c.b16 %v1177, %v1173
    %v1434 = vpack.c.b16 %v1178, %v1174
    %v1435 = vpack.c.b16 %v1179, %v1175
    %v1436 = vpack.c.b16 %v1184, %v1180
    %v1437 = vpack.c.b16 %v1185, %v1181
    %v1438 = vpack.c.b16 %v1186, %v1182
    %v1439 = vpack.c.b16 %v1187, %v1183
    %vm1692 = vcmask 916480
    %v1694 = vsel %vm1692, %v157, 0
    %1696 = vmatprep.subr.bf16.mxu0 %v1217
    %1697 = vmatpush1.bf16.msra.mxu0 %v1216
    %1698 = vmatprep.subr.bf16.mxu0 %v1213
    %1699 = vmatpush1.bf16.msra.mxu0 %v1212
    %1700 = vmatprep.subr.bf16.mxu0 %v1209
    %1701 = vmatpush1.bf16.msra.mxu0 %v1208
    %1702 = vmatprep.subr.bf16.mxu0 %v1205
    %1703 = vmatpush1.bf16.msra.mxu0 %v1204
    %1704 = vmatprep.subr.bf16.mxu0 %v1201
    %1705 = vmatpush1.bf16.msra.mxu0 %v1200
    %1706 = vmatprep.subr.bf16.mxu0 %v1197
    %1707 = vmatpush1.bf16.msra.mxu0 %v1196
    %1708 = vmatprep.subr.bf16.mxu0 %v1193
    %1709 = vmatpush1.bf16.msra.mxu0 %v1192
    %1710 = vmatprep.subr.bf16.mxu0 %v1189
    %1711 = vmatpush1.bf16.msra.mxu0 %v1188
    %1712 = vmatprep.subr.bf16.mxu0 %v1249
    %1713 = vmatpush2.bf16.msra.mxu0 %v1248
    %1714 = vmatprep.subr.bf16.mxu0 %v1245
    %1715 = vmatpush2.bf16.msra.mxu0 %v1244
    %1716 = vmatprep.subr.bf16.mxu0 %v1241
    %1717 = vmatpush2.bf16.msra.mxu0 %v1240
    %1718 = vmatprep.subr.bf16.mxu0 %v1237
    %1719 = vmatpush2.bf16.msra.mxu0 %v1236
    %1720 = vmatprep.subr.bf16.mxu0 %v1233
    %1721 = vmatpush2.bf16.msra.mxu0 %v1232
    %1722 = vmatprep.subr.bf16.mxu0 %v1229
    %1723 = vmatpush2.bf16.msra.mxu0 %v1228
    %1724 = vmatprep.subr.bf16.mxu0 %v1225
    %1725 = vmatpush2.bf16.msra.mxu0 %v1224
    %1726 = vmatprep.subr.bf16.mxu0 %v1221
    %1727 = vmatpush2.bf16.msra.mxu0 %v1220
    %1728 = vmatprep.mubr.bf16.mxu0 %v151
    %1729 = vmatmul.mubr.bf16.gmra.mxu0 %v150
    %v1730 = vpop.f32.mrf.mxu0
    %v1731 = vadd.f32 %v415, %v1730
    %v1732 = vpop.f32.mrf.mxu0
    %v1733 = vadd.f32 %v419, %v1732
    %v1734 = vpop.f32.mrf.mxu0
    %v1735 = vadd.f32 %v415, %v1734
    %v1736 = vpop.f32.mrf.mxu0
    %v1737 = vadd.f32 %v419, %v1736
    %1738 = vdwg.mxu0
    %1739 = vmatprep.subr.bf16.mxu0 %v1281
    %1740 = vmatpush1.bf16.msra.mxu0 %v1280
    %1741 = vmatprep.subr.bf16.mxu0 %v1277
    %1742 = vmatpush1.bf16.msra.mxu0 %v1276
    %1743 = vmatprep.subr.bf16.mxu0 %v1273
    %1744 = vmatpush1.bf16.msra.mxu0 %v1272
    %1745 = vmatprep.subr.bf16.mxu0 %v1269
    %1746 = vmatpush1.bf16.msra.mxu0 %v1268
    %1747 = vmatprep.subr.bf16.mxu0 %v1265
    %1748 = vmatpush1.bf16.msra.mxu0 %v1264
    %1749 = vmatprep.subr.bf16.mxu0 %v1261
    %1750 = vmatpush1.bf16.msra.mxu0 %v1260
    %1751 = vmatprep.subr.bf16.mxu0 %v1257
    %1752 = vmatpush1.bf16.msra.mxu0 %v1256
    %1753 = vmatprep.subr.bf16.mxu0 %v1253
    %1754 = vmatpush1.bf16.msra.mxu0 %v1252
    %1755 = vmatprep.subr.bf16.mxu0 %v1313
    %1756 = vmatpush2.bf16.msra.mxu0 %v1312
    %1757 = vmatprep.subr.bf16.mxu0 %v1309
    %1758 = vmatpush2.bf16.msra.mxu0 %v1308
    %1759 = vmatprep.subr.bf16.mxu0 %v1305
    %1760 = vmatpush2.bf16.msra.mxu0 %v1304
    %1761 = vmatprep.subr.bf16.mxu0 %v1301
    %1762 = vmatpush2.bf16.msra.mxu0 %v1300
    %1763 = vmatprep.subr.bf16.mxu0 %v1297
    %1764 = vmatpush2.bf16.msra.mxu0 %v1296
    %1765 = vmatprep.subr.bf16.mxu0 %v1293
    %1766 = vmatpush2.bf16.msra.mxu0 %v1292
    %1767 = vmatprep.subr.bf16.mxu0 %v1289
    %1768 = vmatpush2.bf16.msra.mxu0 %v1288
    %1769 = vmatprep.subr.bf16.mxu0 %v1285
    %1770 = vmatpush2.bf16.msra.mxu0 %v1284
    %1771 = vmatprep.mubr.bf16.mxu0 %v153
    %1772 = vmatmul.mubr.bf16.gmra.mxu0 %v152
    %v1773 = vpop.f32.mrf.mxu0
    %v1774 = vadd.f32 %v1731, %v1773
    %v1775 = vpop.f32.mrf.mxu0
    %v1776 = vadd.f32 %v1733, %v1775
    %v1777 = vpop.f32.mrf.mxu0
    %v1778 = vadd.f32 %v1735, %v1777
    %v1779 = vpop.f32.mrf.mxu0
    %v1780 = vadd.f32 %v1737, %v1779
    %1781 = vdwg.mxu0
    %1782 = vmatprep.subr.bf16.mxu0 %v1345
    %1783 = vmatpush1.bf16.msra.mxu0 %v1344
    %1784 = vmatprep.subr.bf16.mxu0 %v1341
    %1785 = vmatpush1.bf16.msra.mxu0 %v1340
    %1786 = vmatprep.subr.bf16.mxu0 %v1337
    %1787 = vmatpush1.bf16.msra.mxu0 %v1336
    %1788 = vmatprep.subr.bf16.mxu0 %v1333
    %1789 = vmatpush1.bf16.msra.mxu0 %v1332
    %1790 = vmatprep.subr.bf16.mxu0 %v1329
    %1791 = vmatpush1.bf16.msra.mxu0 %v1328
    %1792 = vmatprep.subr.bf16.mxu0 %v1325
    %1793 = vmatpush1.bf16.msra.mxu0 %v1324
    %1794 = vmatprep.subr.bf16.mxu0 %v1321
    %1795 = vmatpush1.bf16.msra.mxu0 %v1320
    %1796 = vmatprep.subr.bf16.mxu0 %v1317
    %1797 = vmatpush1.bf16.msra.mxu0 %v1316
    %1798 = vmatprep.subr.bf16.mxu0 %v1377
    %1799 = vmatpush2.bf16.msra.mxu0 %v1376
    %1800 = vmatprep.subr.bf16.mxu0 %v1373
    %1801 = vmatpush2.bf16.msra.mxu0 %v1372
    %1802 = vmatprep.subr.bf16.mxu0 %v1369
    %1803 = vmatpush2.bf16.msra.mxu0 %v1368
    %1804 = vmatprep.subr.bf16.mxu0 %v1365
    %1805 = vmatpush2.bf16.msra.mxu0 %v1364
    %1806 = vmatprep.subr.bf16.mxu0 %v1361
    %1807 = vmatpush2.bf16.msra.mxu0 %v1360
    %1808 = vmatprep.subr.bf16.mxu0 %v1357
    %1809 = vmatpush2.bf16.msra.mxu0 %v1356
    %1810 = vmatprep.subr.bf16.mxu0 %v1353
    %1811 = vmatpush2.bf16.msra.mxu0 %v1352
    %1812 = vmatprep.subr.bf16.mxu0 %v1349
    %1813 = vmatpush2.bf16.msra.mxu0 %v1348
    %1814 = vmatprep.mubr.bf16.mxu0 %v155
    %1815 = vmatmul.mubr.bf16.gmra.mxu0 %v154
    %v1816 = vpop.f32.mrf.mxu0
    %v1817 = vadd.f32 %v1774, %v1816
    %v1818 = vpop.f32.mrf.mxu0
    %v1819 = vadd.f32 %v1776, %v1818
    %v1820 = vpop.f32.mrf.mxu0
    %v1821 = vadd.f32 %v1778, %v1820
    %v1822 = vpop.f32.mrf.mxu0
    %v1823 = vadd.f32 %v1780, %v1822
    %1824 = vdwg.mxu0
    %1825 = vmatprep.subr.bf16.mxu0 %v1409
    %1826 = vmatpush1.bf16.msra.mxu0 %v1408
    %1827 = vmatprep.subr.bf16.mxu0 %v1405
    %1828 = vmatpush1.bf16.msra.mxu0 %v1404
    %1829 = vmatprep.subr.bf16.mxu0 %v1401
    %1830 = vmatpush1.bf16.msra.mxu0 %v1400
    %1831 = vmatprep.subr.bf16.mxu0 %v1397
    %1832 = vmatpush1.bf16.msra.mxu0 %v1396
    %1833 = vmatprep.subr.bf16.mxu0 %v1393
    %1834 = vmatpush1.bf16.msra.mxu0 %v1392
    %1835 = vmatprep.subr.bf16.mxu0 %v1389
    %1836 = vmatpush1.bf16.msra.mxu0 %v1388
    %1837 = vmatprep.subr.bf16.mxu0 %v1385
    %1838 = vmatpush1.bf16.msra.mxu0 %v1384
    %1839 = vmatprep.subr.bf16.mxu0 %v1381
    %1840 = vmatpush1.bf16.msra.mxu0 %v1380
    %1841 = vmatprep.subr.bf16.mxu0 0
    %1842 = vmatpush2.bf16.msra.mxu0 0
    %1843 = vmatprep.subr.bf16.mxu0 %v1437
    %1844 = vmatpush2.bf16.msra.mxu0 %v1436
    %1845 = vmatprep.subr.bf16.mxu0 %v1433
    %1846 = vmatpush2.bf16.msra.mxu0 %v1432
    %1847 = vmatprep.subr.bf16.mxu0 %v1429
    %1848 = vmatpush2.bf16.msra.mxu0 %v1428
    %1849 = vmatprep.subr.bf16.mxu0 %v1425
    %1850 = vmatpush2.bf16.msra.mxu0 %v1424
    %1851 = vmatprep.subr.bf16.mxu0 %v1421
    %1852 = vmatpush2.bf16.msra.mxu0 %v1420
    %1853 = vmatprep.subr.bf16.mxu0 %v1417
    %1854 = vmatpush2.bf16.msra.mxu0 %v1416
    %1855 = vmatprep.subr.bf16.mxu0 %v1413
    %1856 = vmatpush2.bf16.msra.mxu0 %v1412
    %1857 = vmatprep.mubr.bf16.mxu0 %v1694
    %1858 = vmatmul.mubr.bf16.gmra.mxu0 %v156
    %v1859 = vpop.f32.mrf.mxu0
    %v1860 = vadd.f32 %v1817, %v1859
    %v1861 = vpop.f32.mrf.mxu0
    %v1862 = vadd.f32 %v1819, %v1861
    %v1863 = vpop.f32.mrf.mxu0
    %v1864 = vadd.f32 %v1821, %v1863
    %v1865 = vpop.f32.mrf.mxu0
    %v1866 = vadd.f32 %v1823, %v1865
    %1867 = vdwg.mxu0
    %1868 = vmatprep.subr.bf16.mxu0 %v1219
    %1869 = vmatpush1.bf16.msra.mxu0 %v1218
    %1870 = vmatprep.subr.bf16.mxu0 %v1215
    %1871 = vmatpush1.bf16.msra.mxu0 %v1214
    %1872 = vmatprep.subr.bf16.mxu0 %v1211
    %1873 = vmatpush1.bf16.msra.mxu0 %v1210
    %1874 = vmatprep.subr.bf16.mxu0 %v1207
    %1875 = vmatpush1.bf16.msra.mxu0 %v1206
    %1876 = vmatprep.subr.bf16.mxu0 %v1203
    %1877 = vmatpush1.bf16.msra.mxu0 %v1202
    %1878 = vmatprep.subr.bf16.mxu0 %v1199
    %1879 = vmatpush1.bf16.msra.mxu0 %v1198
    %1880 = vmatprep.subr.bf16.mxu0 %v1195
    %1881 = vmatpush1.bf16.msra.mxu0 %v1194
    %1882 = vmatprep.subr.bf16.mxu0 %v1191
    %1883 = vmatpush1.bf16.msra.mxu0 %v1190
    %1884 = vmatprep.subr.bf16.mxu0 %v1251
    %1885 = vmatpush2.bf16.msra.mxu0 %v1250
    %1886 = vmatprep.subr.bf16.mxu0 %v1247
    %1887 = vmatpush2.bf16.msra.mxu0 %v1246
    %1888 = vmatprep.subr.bf16.mxu0 %v1243
    %1889 = vmatpush2.bf16.msra.mxu0 %v1242
    %1890 = vmatprep.subr.bf16.mxu0 %v1239
    %1891 = vmatpush2.bf16.msra.mxu0 %v1238
    %1892 = vmatprep.subr.bf16.mxu0 %v1235
    %1893 = vmatpush2.bf16.msra.mxu0 %v1234
    %1894 = vmatprep.subr.bf16.mxu0 %v1231
    %1895 = vmatpush2.bf16.msra.mxu0 %v1230
    %1896 = vmatprep.subr.bf16.mxu0 %v1227
    %1897 = vmatpush2.bf16.msra.mxu0 %v1226
    %1898 = vmatprep.subr.bf16.mxu0 %v1223
    %1899 = vmatpush2.bf16.msra.mxu0 %v1222
    %1900 = vmatprep.mubr.bf16.mxu0 %v151
    %1901 = vmatmul.mubr.bf16.gmra.mxu0 %v150
    %v1902 = vpop.f32.mrf.mxu0
    %v1903 = vadd.f32 %v423, %v1902
    %v1904 = vpop.f32.mrf.mxu0
    %v1905 = vadd.f32 %v427, %v1904
    %v1906 = vpop.f32.mrf.mxu0
    %v1907 = vadd.f32 %v423, %v1906
    %v1908 = vpop.f32.mrf.mxu0
    %v1909 = vadd.f32 %v427, %v1908
    %1910 = vdwg.mxu0
    %1911 = vmatprep.subr.bf16.mxu0 %v1283
    %1912 = vmatpush1.bf16.msra.mxu0 %v1282
    %1913 = vmatprep.subr.bf16.mxu0 %v1279
    %1914 = vmatpush1.bf16.msra.mxu0 %v1278
    %1915 = vmatprep.subr.bf16.mxu0 %v1275
    %1916 = vmatpush1.bf16.msra.mxu0 %v1274
    %1917 = vmatprep.subr.bf16.mxu0 %v1271
    %1918 = vmatpush1.bf16.msra.mxu0 %v1270
    %1919 = vmatprep.subr.bf16.mxu0 %v1267
    %1920 = vmatpush1.bf16.msra.mxu0 %v1266
    %1921 = vmatprep.subr.bf16.mxu0 %v1263
    %1922 = vmatpush1.bf16.msra.mxu0 %v1262
    %1923 = vmatprep.subr.bf16.mxu0 %v1259
    %1924 = vmatpush1.bf16.msra.mxu0 %v1258
    %1925 = vmatprep.subr.bf16.mxu0 %v1255
    %1926 = vmatpush1.bf16.msra.mxu0 %v1254
    %1927 = vmatprep.subr.bf16.mxu0 %v1315
    %1928 = vmatpush2.bf16.msra.mxu0 %v1314
    %1929 = vmatprep.subr.bf16.mxu0 %v1311
    %1930 = vmatpush2.bf16.msra.mxu0 %v1310
    %1931 = vmatprep.subr.bf16.mxu0 %v1307
    %1932 = vmatpush2.bf16.msra.mxu0 %v1306
    %1933 = vmatprep.subr.bf16.mxu0 %v1303
    %1934 = vmatpush2.bf16.msra.mxu0 %v1302
    %1935 = vmatprep.subr.bf16.mxu0 %v1299
    %1936 = vmatpush2.bf16.msra.mxu0 %v1298
    %1937 = vmatprep.subr.bf16.mxu0 %v1295
    %1938 = vmatpush2.bf16.msra.mxu0 %v1294
    %1939 = vmatprep.subr.bf16.mxu0 %v1291
    %1940 = vmatpush2.bf16.msra.mxu0 %v1290
    %1941 = vmatprep.subr.bf16.mxu0 %v1287
    %1942 = vmatpush2.bf16.msra.mxu0 %v1286
    %1943 = vmatprep.mubr.bf16.mxu0 %v153
    %1944 = vmatmul.mubr.bf16.gmra.mxu0 %v152
    %v1945 = vpop.f32.mrf.mxu0
    %v1946 = vadd.f32 %v1903, %v1945
    %v1947 = vpop.f32.mrf.mxu0
    %v1948 = vadd.f32 %v1905, %v1947
    %v1949 = vpop.f32.mrf.mxu0
    %v1950 = vadd.f32 %v1907, %v1949
    %v1951 = vpop.f32.mrf.mxu0
    %v1952 = vadd.f32 %v1909, %v1951
    %1953 = vdwg.mxu0
    %1954 = vmatprep.subr.bf16.mxu0 %v1347
    %1955 = vmatpush1.bf16.msra.mxu0 %v1346
    %1956 = vmatprep.subr.bf16.mxu0 %v1343
    %1957 = vmatpush1.bf16.msra.mxu0 %v1342
    %1958 = vmatprep.subr.bf16.mxu0 %v1339
    %1959 = vmatpush1.bf16.msra.mxu0 %v1338
    %1960 = vmatprep.subr.bf16.mxu0 %v1335
    %1961 = vmatpush1.bf16.msra.mxu0 %v1334
    %1962 = vmatprep.subr.bf16.mxu0 %v1331
    %1963 = vmatpush1.bf16.msra.mxu0 %v1330
    %1964 = vmatprep.subr.bf16.mxu0 %v1327
    %1965 = vmatpush1.bf16.msra.mxu0 %v1326
    %1966 = vmatprep.subr.bf16.mxu0 %v1323
    %1967 = vmatpush1.bf16.msra.mxu0 %v1322
    %1968 = vmatprep.subr.bf16.mxu0 %v1319
    %1969 = vmatpush1.bf16.msra.mxu0 %v1318
    %1970 = vmatprep.subr.bf16.mxu0 %v1379
    %1971 = vmatpush2.bf16.msra.mxu0 %v1378
    %1972 = vmatprep.subr.bf16.mxu0 %v1375
    %1973 = vmatpush2.bf16.msra.mxu0 %v1374
    %1974 = vmatprep.subr.bf16.mxu0 %v1371
    %1975 = vmatpush2.bf16.msra.mxu0 %v1370
    %1976 = vmatprep.subr.bf16.mxu0 %v1367
    %1977 = vmatpush2.bf16.msra.mxu0 %v1366
    %1978 = vmatprep.subr.bf16.mxu0 %v1363
    %1979 = vmatpush2.bf16.msra.mxu0 %v1362
    %1980 = vmatprep.subr.bf16.mxu0 %v1359
    %1981 = vmatpush2.bf16.msra.mxu0 %v1358
    %1982 = vmatprep.subr.bf16.mxu0 %v1355
    %1983 = vmatpush2.bf16.msra.mxu0 %v1354
    %1984 = vmatprep.subr.bf16.mxu0 %v1351
    %1985 = vmatpush2.bf16.msra.mxu0 %v1350
    %1986 = vmatprep.mubr.bf16.mxu0 %v155
    %1987 = vmatmul.mubr.bf16.gmra.mxu0 %v154
    %v1988 = vpop.f32.mrf.mxu0
    %v1989 = vadd.f32 %v1946, %v1988
    %v1990 = vpop.f32.mrf.mxu0
    %v1991 = vadd.f32 %v1948, %v1990
    %v1992 = vpop.f32.mrf.mxu0
    %v1993 = vadd.f32 %v1950, %v1992
    %v1994 = vpop.f32.mrf.mxu0
    %v1995 = vadd.f32 %v1952, %v1994
    %1996 = vdwg.mxu0
    %1997 = vmatprep.subr.bf16.mxu0 %v1411
    %1998 = vmatpush1.bf16.msra.mxu0 %v1410
    %1999 = vmatprep.subr.bf16.mxu0 %v1407
    %2000 = vmatpush1.bf16.msra.mxu0 %v1406
    %2001 = vmatprep.subr.bf16.mxu0 %v1403
    %2002 = vmatpush1.bf16.msra.mxu0 %v1402
    %2003 = vmatprep.subr.bf16.mxu0 %v1399
    %2004 = vmatpush1.bf16.msra.mxu0 %v1398
    %2005 = vmatprep.subr.bf16.mxu0 %v1395
    %2006 = vmatpush1.bf16.msra.mxu0 %v1394
    %2007 = vmatprep.subr.bf16.mxu0 %v1391
    %2008 = vmatpush1.bf16.msra.mxu0 %v1390
    %2009 = vmatprep.subr.bf16.mxu0 %v1387
    %2010 = vmatpush1.bf16.msra.mxu0 %v1386
    %2011 = vmatprep.subr.bf16.mxu0 %v1383
    %2012 = vmatpush1.bf16.msra.mxu0 %v1382
    %2013 = vmatprep.subr.bf16.mxu0 0
    %2014 = vmatpush2.bf16.msra.mxu0 0
    %2015 = vmatprep.subr.bf16.mxu0 %v1439
    %2016 = vmatpush2.bf16.msra.mxu0 %v1438
    %2017 = vmatprep.subr.bf16.mxu0 %v1435
    %2018 = vmatpush2.bf16.msra.mxu0 %v1434
    %2019 = vmatprep.subr.bf16.mxu0 %v1431
    %2020 = vmatpush2.bf16.msra.mxu0 %v1430
    %2021 = vmatprep.subr.bf16.mxu0 %v1427
    %2022 = vmatpush2.bf16.msra.mxu0 %v1426
    %2023 = vmatprep.subr.bf16.mxu0 %v1423
    %2024 = vmatpush2.bf16.msra.mxu0 %v1422
    %2025 = vmatprep.subr.bf16.mxu0 %v1419
    %2026 = vmatpush2.bf16.msra.mxu0 %v1418
    %2027 = vmatprep.subr.bf16.mxu0 %v1415
    %2028 = vmatpush2.bf16.msra.mxu0 %v1414
    %2029 = vmatprep.mubr.bf16.mxu0 %v1694
    %2030 = vmatmul.mubr.bf16.gmra.mxu0 %v156
    %v2031 = vpop.f32.mrf.mxu0
    %v2032 = vadd.f32 %v1989, %v2031
    %v2033 = vpop.f32.mrf.mxu0
    %v2034 = vadd.f32 %v1991, %v2033
    %v2035 = vpop.f32.mrf.mxu0
    %v2036 = vadd.f32 %v1993, %v2035
    %v2037 = vpop.f32.mrf.mxu0
    %v2038 = vadd.f32 %v1995, %v2037
    %2039 = vdwg.mxu0
    %v2040 = vld [vmem:[%s3] sm:$0xff]
    %v2041 = vld [vmem:[%s3 + $0x8] sm:$0xff]
    %v2042 = vld [vmem:[%s3 + $0x10] sm:$0xff]
    %v2043 = vld [vmem:[%s3 + $0x18] sm:$0xff]
    %v2044 = vld [vmem:[%s3 + $0x20] sm:$0xff]
    %v2045 = vld [vmem:[%s3 + $0x28] sm:$0xff]
    %v2046 = vld [vmem:[%s3 + $0x30] sm:$0xff]
    %v2047 = vld [vmem:[%s3 + $0x38] sm:$0xff]
    %v2048 = vld [vmem:[%s3 + $0x40] sm:$0xff]
    %v2049 = vld [vmem:[%s3 + $0x48] sm:$0xff]
    %v2050 = vld [vmem:[%s3 + $0x50] sm:$0xff]
    %v2051 = vld [vmem:[%s3 + $0x58] sm:$0xff]
    %v2052 = vld [vmem:[%s3 + $0x60] sm:$0xff]
    %v2053 = vld [vmem:[%s3 + $0x68] sm:$0xff]
    %v2054 = vld [vmem:[%s3 + $0x70] sm:$0xff]
    %v2055 = vld [vmem:[%s3 + $0x78] sm:$0xff]
    %v2056 = vld [vmem:[%s3 + $0x80] sm:$0xff]
    %v2057 = vld [vmem:[%s3 + $0x88] sm:$0xff]
    %v2058 = vld [vmem:[%s3 + $0x90] sm:$0xff]
    %v2059 = vld [vmem:[%s3 + $0x98] sm:$0xff]
    %v2060 = vld [vmem:[%s3 + $0xa0] sm:$0xff]
    %v2061 = vld [vmem:[%s3 + $0xa8] sm:$0xff]
    %v2062 = vld [vmem:[%s3 + $0xb0] sm:$0xff]
    %v2063 = vld [vmem:[%s3 + $0xb8] sm:$0xff]
    %v2064 = vld [vmem:[%s3 + $0xc0] sm:$0xff]
    %v2065 = vld [vmem:[%s3 + $0xc8] sm:$0xff]
    %v2066 = vld [vmem:[%s3 + $0xd0] sm:$0xff]
    %v2067 = vld [vmem:[%s3 + $0xd8] sm:$0xff]
    %v2068 = vld [vmem:[%s3 + $0xe0] sm:$0xff]
    %v2069 = vld [vmem:[%s3 + $0xe8] sm:$0xff]
    %v2070 = vld [vmem:[%s3 + $0xf0] sm:$0xff]
    %v2071 = vld [vmem:[%s3 + $0xf8] sm:$0xff]
    %v2072 = vld [vmem:[%s4] sm:$0xff]
    %v2073 = vld [vmem:[%s4 + $0x8] sm:$0xff]
    %v2074 = vld [vmem:[%s4 + $0x10] sm:$0xff]
    %v2075 = vld [vmem:[%s4 + $0x18] sm:$0xff]
    %v2076 = vld [vmem:[%s4 + $0x20] sm:$0xff]
    %v2077 = vld [vmem:[%s4 + $0x28] sm:$0xff]
    %v2078 = vld [vmem:[%s4 + $0x30] sm:$0xff]
    %v2079 = vld [vmem:[%s4 + $0x38] sm:$0xff]
    %v2080 = vld [vmem:[%s4 + $0x40] sm:$0xff]
    %v2081 = vld [vmem:[%s4 + $0x48] sm:$0xff]
    %v2082 = vld [vmem:[%s4 + $0x50] sm:$0xff]
    %v2083 = vld [vmem:[%s4 + $0x58] sm:$0xff]
    %v2084 = vld [vmem:[%s4 + $0x60] sm:$0xff]
    %v2085 = vld [vmem:[%s4 + $0x68] sm:$0xff]
    %v2086 = vld [vmem:[%s4 + $0x70] sm:$0xff]
    %v2087 = vld [vmem:[%s4 + $0x78] sm:$0xff]
    %v2088 = vld [vmem:[%s4 + $0x80] sm:$0xff]
    %v2089 = vld [vmem:[%s4 + $0x88] sm:$0xff]
    %v2090 = vld [vmem:[%s4 + $0x90] sm:$0xff]
    %v2091 = vld [vmem:[%s4 + $0x98] sm:$0xff]
    %v2092 = vld [vmem:[%s4 + $0xa0] sm:$0xff]
    %v2093 = vld [vmem:[%s4 + $0xa8] sm:$0xff]
    %v2094 = vld [vmem:[%s4 + $0xb0] sm:$0xff]
    %v2095 = vld [vmem:[%s4 + $0xb8] sm:$0xff]
    %v2096 = vld [vmem:[%s4 + $0xc0] sm:$0xff]
    %v2097 = vld [vmem:[%s4 + $0xc8] sm:$0xff]
    %v2098 = vld [vmem:[%s4 + $0xd0] sm:$0xff]
    %v2099 = vld [vmem:[%s4 + $0xd8] sm:$0xff]
    %v2100 = vld [vmem:[%s4 + $0xe0] sm:$0xff]
    %v2101 = vld [vmem:[%s4 + $0xe8] sm:$0xff]
    %v2102 = vld [vmem:[%s4 + $0xf0] sm:$0xff]
    %v2103 = vld [vmem:[%s4 + $0xf8] sm:$0xff]
    %v2104 = vld [vmem:[%s5] sm:$0xf]
    %v2105 = vld [vmem:[#allocation7] sm:$0xff]
    %v2106 = vld [vmem:[#allocation7 + $0x8] sm:$0xff]
    %v2107 = vld [vmem:[#allocation7 + $0x10] sm:$0xff]
    %v2108 = vld [vmem:[#allocation7 + $0x18] sm:$0xff]
    %v2109 = vld [vmem:[#allocation7 + $0x20] sm:$0xff]
    %v2110 = vld [vmem:[#allocation7 + $0x28] sm:$0xff]
    %v2111 = vld [vmem:[#allocation7 + $0x30] sm:$0xff]
    %v2112 = vld [vmem:[#allocation7 + $0x38] sm:$0xff]
    %v2113 = vld [vmem:[#allocation7 + $0x40] sm:$0xff]
    %v2114 = vld [vmem:[#allocation7 + $0x48] sm:$0xff]
    %v2115 = vld [vmem:[#allocation7 + $0x50] sm:$0xff]
    %v2116 = vld [vmem:[#allocation7 + $0x58] sm:$0xff]
    %v2117 = vld [vmem:[#allocation7 + $0x60] sm:$0xff]
    %v2118 = vld [vmem:[#allocation7 + $0x68] sm:$0xff]
    %v2119 = vld [vmem:[#allocation7 + $0x70] sm:$0xff]
    %v2120 = vld [vmem:[#allocation7 + $0x78] sm:$0xff]
    %v2121 = vld [vmem:[#allocation7 + $0x80] sm:$0xff]
    %v2122 = vld [vmem:[#allocation7 + $0x88] sm:$0xff]
    %v2123 = vld [vmem:[#allocation7 + $0x90] sm:$0xff]
    %v2124 = vld [vmem:[#allocation7 + $0x98] sm:$0xff]
    %v2125 = vld [vmem:[#allocation7 + $0xa0] sm:$0xff]
    %v2126 = vld [vmem:[#allocation7 + $0xa8] sm:$0xff]
    %v2127 = vld [vmem:[#allocation7 + $0xb0] sm:$0xff]
    %v2128 = vld [vmem:[#allocation7 + $0xb8] sm:$0xff]
    %v2129 = vld [vmem:[#allocation7 + $0xc0] sm:$0xff]
    %v2130 = vld [vmem:[#allocation7 + $0xc8] sm:$0xff]
    %v2131 = vld [vmem:[#allocation7 + $0xd0] sm:$0xff]
    %v2132 = vld [vmem:[#allocation7 + $0xd8] sm:$0xff]
    %v2133 = vld [vmem:[#allocation7 + $0xe0] sm:$0xff]
    %v2134 = vld [vmem:[#allocation7 + $0xe8] sm:$0xff]
    %v2135 = vld [vmem:[#allocation7 + $0xf0] sm:$0xff]
    %v2136 = vld [vmem:[#allocation7 + $0xf8] sm:$0xff]
    %v2137 = vld [vmem:[#allocation8] sm:$0xff]
    %v2138 = vld [vmem:[#allocation8 + $0x8] sm:$0xff]
    %v2139 = vld [vmem:[#allocation8 + $0x10] sm:$0xff]
    %v2140 = vld [vmem:[#allocation8 + $0x18] sm:$0xff]
    %v2141 = vld [vmem:[#allocation8 + $0x20] sm:$0xff]
    %v2142 = vld [vmem:[#allocation8 + $0x28] sm:$0xff]
    %v2143 = vld [vmem:[#allocation8 + $0x30] sm:$0xff]
    %v2144 = vld [vmem:[#allocation8 + $0x38] sm:$0xff]
    %v2145 = vld [vmem:[#allocation8 + $0x40] sm:$0xff]
    %v2146 = vld [vmem:[#allocation8 + $0x48] sm:$0xff]
    %v2147 = vld [vmem:[#allocation8 + $0x50] sm:$0xff]
    %v2148 = vld [vmem:[#allocation8 + $0x58] sm:$0xff]
    %v2149 = vld [vmem:[#allocation8 + $0x60] sm:$0xff]
    %v2150 = vld [vmem:[#allocation8 + $0x68] sm:$0xff]
    %v2151 = vld [vmem:[#allocation8 + $0x70] sm:$0xff]
    %v2152 = vld [vmem:[#allocation8 + $0x78] sm:$0xff]
    %v2153 = vld [vmem:[#allocation8 + $0x80] sm:$0xff]
    %v2154 = vld [vmem:[#allocation8 + $0x88] sm:$0xff]
    %v2155 = vld [vmem:[#allocation8 + $0x90] sm:$0xff]
    %v2156 = vld [vmem:[#allocation8 + $0x98] sm:$0xff]
    %v2157 = vld [vmem:[#allocation8 + $0xa0] sm:$0xff]
    %v2158 = vld [vmem:[#allocation8 + $0xa8] sm:$0xff]
    %v2159 = vld [vmem:[#allocation8 + $0xb0] sm:$0xff]
    %v2160 = vld [vmem:[#allocation8 + $0xb8] sm:$0xff]
    %v2161 = vld [vmem:[#allocation8 + $0xc0] sm:$0xff]
    %v2162 = vld [vmem:[#allocation8 + $0xc8] sm:$0xff]
    %v2163 = vld [vmem:[#allocation8 + $0xd0] sm:$0xff]
    %v2164 = vld [vmem:[#allocation8 + $0xd8] sm:$0xff]
    %v2165 = vld [vmem:[#allocation8 + $0xe0] sm:$0xff]
    %v2166 = vld [vmem:[#allocation8 + $0xe8] sm:$0xff]
    %v2167 = vld [vmem:[#allocation8 + $0xf0] sm:$0xff]
    %v2168 = vld [vmem:[#allocation8 + $0xf8] sm:$0xff]
    %v2169 = vld [vmem:[#allocation10] sm:$0xf]
    %v2170 = vld [vmem:[#allocation11] sm:$0xff]
    %v2171 = vld [vmem:[#allocation11 + $0x8] sm:$0xff]
    %v2172 = vld [vmem:[#allocation11 + $0x10] sm:$0xff]
    %v2173 = vld [vmem:[#allocation11 + $0x18] sm:$0xff]
    %v2174 = vld [vmem:[#allocation11 + $0x20] sm:$0xff]
    %v2175 = vld [vmem:[#allocation11 + $0x28] sm:$0xff]
    %v2176 = vld [vmem:[#allocation11 + $0x30] sm:$0xff]
    %v2177 = vld [vmem:[#allocation11 + $0x38] sm:$0xff]
    %v2178 = vld [vmem:[#allocation11 + $0x40] sm:$0xff]
    %v2179 = vld [vmem:[#allocation11 + $0x48] sm:$0xff]
    %v2180 = vld [vmem:[#allocation11 + $0x50] sm:$0xff]
    %v2181 = vld [vmem:[#allocation11 + $0x58] sm:$0xff]
    %v2182 = vld [vmem:[#allocation11 + $0x60] sm:$0xff]
    %v2183 = vld [vmem:[#allocation11 + $0x68] sm:$0xff]
    %v2184 = vld [vmem:[#allocation11 + $0x70] sm:$0xff]
    %v2185 = vld [vmem:[#allocation11 + $0x78] sm:$0xff]
    %v2186 = vld [vmem:[#allocation11 + $0x80] sm:$0xff]
    %v2187 = vld [vmem:[#allocation11 + $0x88] sm:$0xff]
    %v2188 = vld [vmem:[#allocation11 + $0x90] sm:$0xff]
    %v2189 = vld [vmem:[#allocation11 + $0x98] sm:$0xff]
    %v2190 = vld [vmem:[#allocation11 + $0xa0] sm:$0xff]
    %v2191 = vld [vmem:[#allocation11 + $0xa8] sm:$0xff]
    %v2192 = vld [vmem:[#allocation11 + $0xb0] sm:$0xff]
    %v2193 = vld [vmem:[#allocation11 + $0xb8] sm:$0xff]
    %v2194 = vld [vmem:[#allocation11 + $0xc0] sm:$0xff]
    %v2195 = vld [vmem:[#allocation11 + $0xc8] sm:$0xff]
    %v2196 = vld [vmem:[#allocation11 + $0xd0] sm:$0xff]
    %v2197 = vld [vmem:[#allocation11 + $0xd8] sm:$0xff]
    %v2198 = vld [vmem:[#allocation11 + $0xe0] sm:$0xff]
    %v2199 = vld [vmem:[#allocation11 + $0xe8] sm:$0xff]
    %v2200 = vld [vmem:[#allocation11 + $0xf0] sm:$0xff]
    %v2201 = vld [vmem:[#allocation11 + $0xf8] sm:$0xff]
    %v2234 = vunpack.c.l.b16 %v2040
    %v2235 = vunpack.c.h.b16 %v2040
    %v2236 = vunpack.c.l.b16 %v2041
    %v2237 = vunpack.c.h.b16 %v2041
    %v2238 = vunpack.c.l.b16 %v2042
    %v2239 = vunpack.c.h.b16 %v2042
    %v2240 = vunpack.c.l.b16 %v2043
    %v2241 = vunpack.c.h.b16 %v2043
    %v2242 = vunpack.c.l.b16 %v2044
    %v2243 = vunpack.c.h.b16 %v2044
    %v2244 = vunpack.c.l.b16 %v2045
    %v2245 = vunpack.c.h.b16 %v2045
    %v2246 = vunpack.c.l.b16 %v2046
    %v2247 = vunpack.c.h.b16 %v2046
    %v2248 = vunpack.c.l.b16 %v2047
    %v2249 = vunpack.c.h.b16 %v2047
    %v2250 = vunpack.c.l.b16 %v2048
    %v2251 = vunpack.c.h.b16 %v2048
    %v2252 = vunpack.c.l.b16 %v2049
    %v2253 = vunpack.c.h.b16 %v2049
    %v2254 = vunpack.c.l.b16 %v2050
    %v2255 = vunpack.c.h.b16 %v2050
    %v2256 = vunpack.c.l.b16 %v2051
    %v2257 = vunpack.c.h.b16 %v2051
    %v2258 = vunpack.c.l.b16 %v2052
    %v2259 = vunpack.c.h.b16 %v2052
    %v2260 = vunpack.c.l.b16 %v2053
    %v2261 = vunpack.c.h.b16 %v2053
    %v2262 = vunpack.c.l.b16 %v2054
    %v2263 = vunpack.c.h.b16 %v2054
    %v2264 = vunpack.c.l.b16 %v2055
    %v2265 = vunpack.c.h.b16 %v2055
    %v2266 = vunpack.c.l.b16 %v2056
    %v2267 = vunpack.c.h.b16 %v2056
    %v2268 = vunpack.c.l.b16 %v2057
    %v2269 = vunpack.c.h.b16 %v2057
    %v2270 = vunpack.c.l.b16 %v2058
    %v2271 = vunpack.c.h.b16 %v2058
    %v2272 = vunpack.c.l.b16 %v2059
    %v2273 = vunpack.c.h.b16 %v2059
    %v2274 = vunpack.c.l.b16 %v2060
    %v2275 = vunpack.c.h.b16 %v2060
    %v2276 = vunpack.c.l.b16 %v2061
    %v2277 = vunpack.c.h.b16 %v2061
    %v2278 = vunpack.c.l.b16 %v2062
    %v2279 = vunpack.c.h.b16 %v2062
    %v2280 = vunpack.c.l.b16 %v2063
    %v2281 = vunpack.c.h.b16 %v2063
    %v2282 = vunpack.c.l.b16 %v2064
    %v2283 = vunpack.c.h.b16 %v2064
    %v2284 = vunpack.c.l.b16 %v2065
    %v2285 = vunpack.c.h.b16 %v2065
    %v2286 = vunpack.c.l.b16 %v2066
    %v2287 = vunpack.c.h.b16 %v2066
    %v2288 = vunpack.c.l.b16 %v2067
    %v2289 = vunpack.c.h.b16 %v2067
    %v2290 = vunpack.c.l.b16 %v2068
    %v2291 = vunpack.c.h.b16 %v2068
    %v2292 = vunpack.c.l.b16 %v2069
    %v2293 = vunpack.c.h.b16 %v2069
    %v2294 = vunpack.c.l.b16 %v2070
    %v2295 = vunpack.c.h.b16 %v2070
    %v2296 = vunpack.c.l.b16 %v2071
    %v2297 = vunpack.c.h.b16 %v2071
    %v2298 = vpack.c.b16 %v2238, %v2234
    %v2299 = vpack.c.b16 %v2239, %v2235
    %v2300 = vpack.c.b16 %v2240, %v2236
    %v2301 = vpack.c.b16 %v2241, %v2237
    %v2302 = vpack.c.b16 %v2246, %v2242
    %v2303 = vpack.c.b16 %v2247, %v2243
    %v2304 = vpack.c.b16 %v2248, %v2244
    %v2305 = vpack.c.b16 %v2249, %v2245
    %v2306 = vpack.c.b16 %v2254, %v2250
    %v2307 = vpack.c.b16 %v2255, %v2251
    %v2308 = vpack.c.b16 %v2256, %v2252
    %v2309 = vpack.c.b16 %v2257, %v2253
    %v2310 = vpack.c.b16 %v2262, %v2258
    %v2311 = vpack.c.b16 %v2263, %v2259
    %v2312 = vpack.c.b16 %v2264, %v2260
    %v2313 = vpack.c.b16 %v2265, %v2261
    %v2314 = vpack.c.b16 %v2270, %v2266
    %v2315 = vpack.c.b16 %v2271, %v2267
    %v2316 = vpack.c.b16 %v2272, %v2268
    %v2317 = vpack.c.b16 %v2273, %v2269
    %v2318 = vpack.c.b16 %v2278, %v2274
    %v2319 = vpack.c.b16 %v2279, %v2275
    %v2320 = vpack.c.b16 %v2280, %v2276
    %v2321 = vpack.c.b16 %v2281, %v2277
    %v2322 = vpack.c.b16 %v2286, %v2282
    %v2323 = vpack.c.b16 %v2287, %v2283
    %v2324 = vpack.c.b16 %v2288, %v2284
    %v2325 = vpack.c.b16 %v2289, %v2285
    %v2326 = vpack.c.b16 %v2294, %v2290
    %v2327 = vpack.c.b16 %v2295, %v2291
    %v2328 = vpack.c.b16 %v2296, %v2292
    %v2329 = vpack.c.b16 %v2297, %v2293
    %2362 = vmatprep.subr.bf16.mxu0 %v2327
    %2363 = vmatpush1.bf16.msra.mxu0 %v2326
    %2364 = vmatprep.subr.bf16.mxu0 %v2323
    %2365 = vmatpush1.bf16.msra.mxu0 %v2322
    %2366 = vmatprep.subr.bf16.mxu0 %v2319
    %2367 = vmatpush1.bf16.msra.mxu0 %v2318
    %2368 = vmatprep.subr.bf16.mxu0 %v2315
    %2369 = vmatpush1.bf16.msra.mxu0 %v2314
    %2370 = vmatprep.subr.bf16.mxu0 %v2311
    %2371 = vmatpush1.bf16.msra.mxu0 %v2310
    %2372 = vmatprep.subr.bf16.mxu0 %v2307
    %2373 = vmatpush1.bf16.msra.mxu0 %v2306
    %2374 = vmatprep.subr.bf16.mxu0 %v2303
    %2375 = vmatpush1.bf16.msra.mxu0 %v2302
    %2376 = vmatprep.subr.bf16.mxu0 %v2299
    %2377 = vmatpush1.bf16.msra.mxu0 %v2298
    %2378 = vmatprep.subr.bf16.mxu0 0
    %2379 = vmatpush2.bf16.msra.mxu0 0
    %2380 = vmatprep.subr.bf16.mxu0 0
    %2381 = vmatpush2.bf16.msra.mxu0 0
    %2382 = vmatprep.subr.bf16.mxu0 0
    %2383 = vmatpush2.bf16.msra.mxu0 0
    %2384 = vmatprep.subr.bf16.mxu0 0
    %2385 = vmatpush2.bf16.msra.mxu0 0
    %2386 = vmatprep.subr.bf16.mxu0 0
    %2387 = vmatpush2.bf16.msra.mxu0 0
    %2388 = vmatprep.subr.bf16.mxu0 0
    %2389 = vmatpush2.bf16.msra.mxu0 0
    %2390 = vmatprep.subr.bf16.mxu0 0
    %2391 = vmatpush2.bf16.msra.mxu0 0
    %2392 = vmatprep.subr.bf16.mxu0 0
    %2393 = vmatpush2.bf16.msra.mxu0 0
    %2394 = vmatprep.mubr.bf16.mxu0 0
    %2395 = vmatmul.mubr.bf16.gmra.mxu0 0
    %v2396 = vpop.f32.mrf.mxu0
    %v2397 = vadd.f32 0.0, %v2396
    %v2398 = vpop.f32.mrf.mxu0
    %v2399 = vadd.f32 0.0, %v2398
    %v2400 = vpop.f32.mrf.mxu0
    %v2401 = vpop.f32.mrf.mxu0
    %2402 = vdwg.mxu0
    %2403 = vmatprep.subr.bf16.mxu0 %v2329
    %2404 = vmatpush1.bf16.msra.mxu0 %v2328
    %2405 = vmatprep.subr.bf16.mxu0 %v2325
    %2406 = vmatpush1.bf16.msra.mxu0 %v2324
    %2407 = vmatprep.subr.bf16.mxu0 %v2321
    %2408 = vmatpush1.bf16.msra.mxu0 %v2320
    %2409 = vmatprep.subr.bf16.mxu0 %v2317
    %2410 = vmatpush1.bf16.msra.mxu0 %v2316
    %2411 = vmatprep.subr.bf16.mxu0 %v2313
    %2412 = vmatpush1.bf16.msra.mxu0 %v2312
    %2413 = vmatprep.subr.bf16.mxu0 %v2309
    %2414 = vmatpush1.bf16.msra.mxu0 %v2308
    %2415 = vmatprep.subr.bf16.mxu0 %v2305
    %2416 = vmatpush1.bf16.msra.mxu0 %v2304
    %2417 = vmatprep.subr.bf16.mxu0 %v2301
    %2418 = vmatpush1.bf16.msra.mxu0 %v2300
    %2419 = vmatprep.subr.bf16.mxu0 0
    %2420 = vmatpush2.bf16.msra.mxu0 0
    %2421 = vmatprep.subr.bf16.mxu0 0
    %2422 = vmatpush2.bf16.msra.mxu0 0
    %2423 = vmatprep.subr.bf16.mxu0 0
    %2424 = vmatpush2.bf16.msra.mxu0 0
    %2425 = vmatprep.subr.bf16.mxu0 0
    %2426 = vmatpush2.bf16.msra.mxu0 0
    %2427 = vmatprep.subr.bf16.mxu0 0
    %2428 = vmatpush2.bf16.msra.mxu0 0
    %2429 = vmatprep.subr.bf16.mxu0 0
    %2430 = vmatpush2.bf16.msra.mxu0 0
    %2431 = vmatprep.subr.bf16.mxu0 0
    %2432 = vmatpush2.bf16.msra.mxu0 0
    %2433 = vmatprep.subr.bf16.mxu0 0
    %2434 = vmatpush2.bf16.msra.mxu0 0
    %2435 = vmatprep.mubr.bf16.mxu0 0
    %2436 = vmatmul.mubr.bf16.gmra.mxu0 0
    %v2437 = vpop.f32.mrf.mxu0
    %v2438 = vadd.f32 0.0, %v2437
    %v2439 = vpop.f32.mrf.mxu0
    %v2440 = vadd.f32 0.0, %v2439
    %v2441 = vpop.f32.mrf.mxu0
    %v2442 = vpop.f32.mrf.mxu0
    %2443 = vdwg.mxu0
    %v2444 = vadd.f32 %v1860, %v2397
    %v2445 = vadd.f32 %v1862, %v2399
    %v2446 = vadd.f32 %v2032, %v2438
    %v2447 = vadd.f32 %v2034, %v2440
    %v2448 = vxor.u32 %v2444, 2147483648
    %v2449 = vxor.u32 %v2445, 2147483648
    %v2450 = vxor.u32 %v2446, 2147483648
    %v2451 = vxor.u32 %v2447, 2147483648
    %v2452 = vmul.f32 %v2448, 1.442695
    %v2453 = vpow.pop %v2452
    %v2454 = vmul.f32 %v2449, 1.442695
    %v2455 = vpow.pop %v2454
    %v2456 = vmul.f32 %v2450, 1.442695
    %v2457 = vpow.pop %v2456
    %v2458 = vmul.f32 %v2451, 1.442695
    %v2459 = vpow.pop %v2458
    %v2460 = vadd.f32 %v2453, 1.0
    %v2461 = vadd.f32 %v2455, 1.0
    %v2462 = vadd.f32 %v2457, 1.0
    %v2463 = vadd.f32 %v2459, 1.0
    %v2464 = vrcp.pop %v2460
    %v2465 = vmul.f32 1.0, %v2464
    %v2466 = vrcp.pop %v2461
    %v2467 = vmul.f32 1.0, %v2466
    %v2468 = vrcp.pop %v2462
    %v2469 = vmul.f32 1.0, %v2468
    %v2470 = vrcp.pop %v2463
    %v2471 = vmul.f32 1.0, %v2470
    %v2472 = vmul.f32 %v2469, 2.0
    %v2473 = vsub.f32 %v2472, 1.0
    %v2474 = vmul.f32 %v2467, 0.0
    %v2475 = vmul.f32 %v2465, %v2473
    %v2476 = vadd.f32 %v2474, %v2475
    %v2477 = vtanh.pop %v2476
    %v2478 = vmul.f32 %v2471, %v2477
    %v2479 = vpack.c.bf16 %v2478, %v2478
    %v2481 = vlaneseq
    %v2482 = vshrl.u32 %v2481, 7
    %v2483 = vsub.s32 0, %v2482
    %v2484 = vrot.slane %v2104, %v2483
    %v2485 = vlaneseq
    %v2486 = vshrl.u32 %v2485, 7
    %v2487 = vsub.s32 1, %v2486
    %v2488 = vrot.slane %v2104, %v2487
    %v2489 = vlaneseq
    %v2490 = vshrl.u32 %v2489, 7
    %v2491 = vsub.s32 2, %v2490
    %v2492 = vrot.slane %v2104, %v2491
    %v2493 = vlaneseq
    %v2494 = vshrl.u32 %v2493, 7
    %v2495 = vsub.s32 3, %v2494
    %v2496 = vrot.slane %v2104, %v2495
    %v2533 = vunpack.c.l.b16 %v2072
    %v2534 = vunpack.c.h.b16 %v2072
    %v2535 = vunpack.c.l.b16 %v2073
    %v2536 = vunpack.c.h.b16 %v2073
    %v2537 = vunpack.c.l.b16 %v2074
    %v2538 = vunpack.c.h.b16 %v2074
    %v2539 = vunpack.c.l.b16 %v2075
    %v2540 = vunpack.c.h.b16 %v2075
    %v2541 = vunpack.c.l.b16 %v2076
    %v2542 = vunpack.c.h.b16 %v2076
    %v2543 = vunpack.c.l.b16 %v2077
    %v2544 = vunpack.c.h.b16 %v2077
    %v2545 = vunpack.c.l.b16 %v2078
    %v2546 = vunpack.c.h.b16 %v2078
    %v2547 = vunpack.c.l.b16 %v2079
    %v2548 = vunpack.c.h.b16 %v2079
    %v2549 = vunpack.c.l.b16 %v2080
    %v2550 = vunpack.c.h.b16 %v2080
    %v2551 = vunpack.c.l.b16 %v2081
    %v2552 = vunpack.c.h.b16 %v2081
    %v2553 = vunpack.c.l.b16 %v2082
    %v2554 = vunpack.c.h.b16 %v2082
    %v2555 = vunpack.c.l.b16 %v2083
    %v2556 = vunpack.c.h.b16 %v2083
    %v2557 = vunpack.c.l.b16 %v2084
    %v2558 = vunpack.c.h.b16 %v2084
    %v2559 = vunpack.c.l.b16 %v2085
    %v2560 = vunpack.c.h.b16 %v2085
    %v2561 = vunpack.c.l.b16 %v2086
    %v2562 = vunpack.c.h.b16 %v2086
    %v2563 = vunpack.c.l.b16 %v2087
    %v2564 = vunpack.c.h.b16 %v2087
    %v2565 = vunpack.c.l.b16 %v2088
    %v2566 = vunpack.c.h.b16 %v2088
    %v2567 = vunpack.c.l.b16 %v2089
    %v2568 = vunpack.c.h.b16 %v2089
    %v2569 = vunpack.c.l.b16 %v2090
    %v2570 = vunpack.c.h.b16 %v2090
    %v2571 = vunpack.c.l.b16 %v2091
    %v2572 = vunpack.c.h.b16 %v2091
    %v2573 = vunpack.c.l.b16 %v2092
    %v2574 = vunpack.c.h.b16 %v2092
    %v2575 = vunpack.c.l.b16 %v2093
    %v2576 = vunpack.c.h.b16 %v2093
    %v2577 = vunpack.c.l.b16 %v2094
    %v2578 = vunpack.c.h.b16 %v2094
    %v2579 = vunpack.c.l.b16 %v2095
    %v2580 = vunpack.c.h.b16 %v2095
    %v2581 = vunpack.c.l.b16 %v2096
    %v2582 = vunpack.c.h.b16 %v2096
    %v2583 = vunpack.c.l.b16 %v2097
    %v2584 = vunpack.c.h.b16 %v2097
    %v2585 = vunpack.c.l.b16 %v2098
    %v2586 = vunpack.c.h.b16 %v2098
    %v2587 = vunpack.c.l.b16 %v2099
    %v2588 = vunpack.c.h.b16 %v2099
    %v2589 = vunpack.c.l.b16 %v2100
    %v2590 = vunpack.c.h.b16 %v2100
    %v2591 = vunpack.c.l.b16 %v2101
    %v2592 = vunpack.c.h.b16 %v2101
    %v2593 = vunpack.c.l.b16 %v2102
    %v2594 = vunpack.c.h.b16 %v2102
    %v2595 = vunpack.c.l.b16 %v2103
    %v2596 = vunpack.c.h.b16 %v2103
    %v2597 = vpack.c.b16 %v2537, %v2533
    %v2598 = vpack.c.b16 %v2538, %v2534
    %v2599 = vpack.c.b16 %v2539, %v2535
    %v2600 = vpack.c.b16 %v2540, %v2536
    %v2601 = vpack.c.b16 %v2545, %v2541
    %v2602 = vpack.c.b16 %v2546, %v2542
    %v2603 = vpack.c.b16 %v2547, %v2543
    %v2604 = vpack.c.b16 %v2548, %v2544
    %v2605 = vpack.c.b16 %v2553, %v2549
    %v2606 = vpack.c.b16 %v2554, %v2550
    %v2607 = vpack.c.b16 %v2555, %v2551
    %v2608 = vpack.c.b16 %v2556, %v2552
    %v2609 = vpack.c.b16 %v2561, %v2557
    %v2610 = vpack.c.b16 %v2562, %v2558
    %v2611 = vpack.c.b16 %v2563, %v2559
    %v2612 = vpack.c.b16 %v2564, %v2560
    %v2613 = vpack.c.b16 %v2569, %v2565
    %v2614 = vpack.c.b16 %v2570, %v2566
    %v2615 = vpack.c.b16 %v2571, %v2567
    %v2616 = vpack.c.b16 %v2572, %v2568
    %v2617 = vpack.c.b16 %v2577, %v2573
    %v2618 = vpack.c.b16 %v2578, %v2574
    %v2619 = vpack.c.b16 %v2579, %v2575
    %v2620 = vpack.c.b16 %v2580, %v2576
    %v2621 = vpack.c.b16 %v2585, %v2581
    %v2622 = vpack.c.b16 %v2586, %v2582
    %v2623 = vpack.c.b16 %v2587, %v2583
    %v2624 = vpack.c.b16 %v2588, %v2584
    %v2625 = vpack.c.b16 %v2593, %v2589
    %v2626 = vpack.c.b16 %v2594, %v2590
    %v2627 = vpack.c.b16 %v2595, %v2591
    %v2628 = vpack.c.b16 %v2596, %v2592
    %2661 = vmatprep.subr.bf16.mxu0 %v2626
    %2662 = vmatpush1.bf16.msra.mxu0 %v2625
    %2663 = vmatprep.subr.bf16.mxu0 %v2622
    %2664 = vmatpush1.bf16.msra.mxu0 %v2621
    %2665 = vmatprep.subr.bf16.mxu0 %v2618
    %2666 = vmatpush1.bf16.msra.mxu0 %v2617
    %2667 = vmatprep.subr.bf16.mxu0 %v2614
    %2668 = vmatpush1.bf16.msra.mxu0 %v2613
    %2669 = vmatprep.subr.bf16.mxu0 %v2610
    %2670 = vmatpush1.bf16.msra.mxu0 %v2609
    %2671 = vmatprep.subr.bf16.mxu0 %v2606
    %2672 = vmatpush1.bf16.msra.mxu0 %v2605
    %2673 = vmatprep.subr.bf16.mxu0 %v2602
    %2674 = vmatpush1.bf16.msra.mxu0 %v2601
    %2675 = vmatprep.subr.bf16.mxu0 %v2598
    %2676 = vmatpush1.bf16.msra.mxu0 %v2597
    %2677 = vmatprep.subr.bf16.mxu0 0
    %2678 = vmatpush2.bf16.msra.mxu0 0
    %2679 = vmatprep.subr.bf16.mxu0 0
    %2680 = vmatpush2.bf16.msra.mxu0 0
    %2681 = vmatprep.subr.bf16.mxu0 0
    %2682 = vmatpush2.bf16.msra.mxu0 0
    %2683 = vmatprep.subr.bf16.mxu0 0
    %2684 = vmatpush2.bf16.msra.mxu0 0
    %2685 = vmatprep.subr.bf16.mxu0 0
    %2686 = vmatpush2.bf16.msra.mxu0 0
    %2687 = vmatprep.subr.bf16.mxu0 0
    %2688 = vmatpush2.bf16.msra.mxu0 0
    %2689 = vmatprep.subr.bf16.mxu0 0
    %2690 = vmatpush2.bf16.msra.mxu0 0
    %2691 = vmatprep.subr.bf16.mxu0 0
    %2692 = vmatpush2.bf16.msra.mxu0 0
    %2693 = vmatprep.mubr.bf16.mxu0 0
    %2694 = vmatmul.mubr.bf16.gmra.mxu0 %v2479
    %v2695 = vpop.f32.mrf.mxu0
    %v2696 = vadd.f32 %v2484, %v2695
    %v2697 = vpop.f32.mrf.mxu0
    %v2698 = vadd.f32 %v2488, %v2697
    %v2699 = vpop.f32.mrf.mxu0
    %v2700 = vpop.f32.mrf.mxu0
    %2701 = vdwg.mxu0
    %2702 = vmatprep.subr.bf16.mxu0 %v2628
    %2703 = vmatpush1.bf16.msra.mxu0 %v2627
    %2704 = vmatprep.subr.bf16.mxu0 %v2624
    %2705 = vmatpush1.bf16.msra.mxu0 %v2623
    %2706 = vmatprep.subr.bf16.mxu0 %v2620
    %2707 = vmatpush1.bf16.msra.mxu0 %v2619
    %2708 = vmatprep.subr.bf16.mxu0 %v2616
    %2709 = vmatpush1.bf16.msra.mxu0 %v2615
    %2710 = vmatprep.subr.bf16.mxu0 %v2612
    %2711 = vmatpush1.bf16.msra.mxu0 %v2611
    %2712 = vmatprep.subr.bf16.mxu0 %v2608
    %2713 = vmatpush1.bf16.msra.mxu0 %v2607
    %2714 = vmatprep.subr.bf16.mxu0 %v2604
    %2715 = vmatpush1.bf16.msra.mxu0 %v2603
    %2716 = vmatprep.subr.bf16.mxu0 %v2600
    %2717 = vmatpush1.bf16.msra.mxu0 %v2599
    %2718 = vmatprep.subr.bf16.mxu0 0
    %2719 = vmatpush2.bf16.msra.mxu0 0
    %2720 = vmatprep.subr.bf16.mxu0 0
    %2721 = vmatpush2.bf16.msra.mxu0 0
    %2722 = vmatprep.subr.bf16.mxu0 0
    %2723 = vmatpush2.bf16.msra.mxu0 0
    %2724 = vmatprep.subr.bf16.mxu0 0
    %2725 = vmatpush2.bf16.msra.mxu0 0
    %2726 = vmatprep.subr.bf16.mxu0 0
    %2727 = vmatpush2.bf16.msra.mxu0 0
    %2728 = vmatprep.subr.bf16.mxu0 0
    %2729 = vmatpush2.bf16.msra.mxu0 0
    %2730 = vmatprep.subr.bf16.mxu0 0
    %2731 = vmatpush2.bf16.msra.mxu0 0
    %2732 = vmatprep.subr.bf16.mxu0 0
    %2733 = vmatpush2.bf16.msra.mxu0 0
    %2734 = vmatprep.mubr.bf16.mxu0 0
    %2735 = vmatmul.mubr.bf16.gmra.mxu0 %v2479
    %v2736 = vpop.f32.mrf.mxu0
    %v2737 = vadd.f32 %v2492, %v2736
    %v2738 = vpop.f32.mrf.mxu0
    %v2739 = vadd.f32 %v2496, %v2738
    %v2740 = vpop.f32.mrf.mxu0
    %v2741 = vpop.f32.mrf.mxu0
    %2742 = vdwg.mxu0
    %v2775 = vunpack.c.l.b16 %v2105
    %v2776 = vunpack.c.h.b16 %v2105
    %v2777 = vunpack.c.l.b16 %v2106
    %v2778 = vunpack.c.h.b16 %v2106
    %v2779 = vunpack.c.l.b16 %v2107
    %v2780 = vunpack.c.h.b16 %v2107
    %v2781 = vunpack.c.l.b16 %v2108
    %v2782 = vunpack.c.h.b16 %v2108
    %v2783 = vunpack.c.l.b16 %v2109
    %v2784 = vunpack.c.h.b16 %v2109
    %v2785 = vunpack.c.l.b16 %v2110
    %v2786 = vunpack.c.h.b16 %v2110
    %v2787 = vunpack.c.l.b16 %v2111
    %v2788 = vunpack.c.h.b16 %v2111
    %v2789 = vunpack.c.l.b16 %v2112
    %v2790 = vunpack.c.h.b16 %v2112
    %v2791 = vunpack.c.l.b16 %v2113
    %v2792 = vunpack.c.h.b16 %v2113
    %v2793 = vunpack.c.l.b16 %v2114
    %v2794 = vunpack.c.h.b16 %v2114
    %v2795 = vunpack.c.l.b16 %v2115
    %v2796 = vunpack.c.h.b16 %v2115
    %v2797 = vunpack.c.l.b16 %v2116
    %v2798 = vunpack.c.h.b16 %v2116
    %v2799 = vunpack.c.l.b16 %v2117
    %v2800 = vunpack.c.h.b16 %v2117
    %v2801 = vunpack.c.l.b16 %v2118
    %v2802 = vunpack.c.h.b16 %v2118
    %v2803 = vunpack.c.l.b16 %v2119
    %v2804 = vunpack.c.h.b16 %v2119
    %v2805 = vunpack.c.l.b16 %v2120
    %v2806 = vunpack.c.h.b16 %v2120
    %v2807 = vunpack.c.l.b16 %v2121
    %v2808 = vunpack.c.h.b16 %v2121
    %v2809 = vunpack.c.l.b16 %v2122
    %v2810 = vunpack.c.h.b16 %v2122
    %v2811 = vunpack.c.l.b16 %v2123
    %v2812 = vunpack.c.h.b16 %v2123
    %v2813 = vunpack.c.l.b16 %v2124
    %v2814 = vunpack.c.h.b16 %v2124
    %v2815 = vunpack.c.l.b16 %v2125
    %v2816 = vunpack.c.h.b16 %v2125
    %v2817 = vunpack.c.l.b16 %v2126
    %v2818 = vunpack.c.h.b16 %v2126
    %v2819 = vunpack.c.l.b16 %v2127
    %v2820 = vunpack.c.h.b16 %v2127
    %v2821 = vunpack.c.l.b16 %v2128
    %v2822 = vunpack.c.h.b16 %v2128
    %v2823 = vunpack.c.l.b16 %v2129
    %v2824 = vunpack.c.h.b16 %v2129
    %v2825 = vunpack.c.l.b16 %v2130
    %v2826 = vunpack.c.h.b16 %v2130
    %v2827 = vunpack.c.l.b16 %v2131
    %v2828 = vunpack.c.h.b16 %v2131
    %v2829 = vunpack.c.l.b16 %v2132
    %v2830 = vunpack.c.h.b16 %v2132
    %v2831 = vunpack.c.l.b16 %v2133
    %v2832 = vunpack.c.h.b16 %v2133
    %v2833 = vunpack.c.l.b16 %v2134
    %v2834 = vunpack.c.h.b16 %v2134
    %v2835 = vunpack.c.l.b16 %v2135
    %v2836 = vunpack.c.h.b16 %v2135
    %v2837 = vunpack.c.l.b16 %v2136
    %v2838 = vunpack.c.h.b16 %v2136
    %v2839 = vpack.c.b16 %v2779, %v2775
    %v2840 = vpack.c.b16 %v2780, %v2776
    %v2841 = vpack.c.b16 %v2781, %v2777
    %v2842 = vpack.c.b16 %v2782, %v2778
    %v2843 = vpack.c.b16 %v2787, %v2783
    %v2844 = vpack.c.b16 %v2788, %v2784
    %v2845 = vpack.c.b16 %v2789, %v2785
    %v2846 = vpack.c.b16 %v2790, %v2786
    %v2847 = vpack.c.b16 %v2795, %v2791
    %v2848 = vpack.c.b16 %v2796, %v2792
    %v2849 = vpack.c.b16 %v2797, %v2793
    %v2850 = vpack.c.b16 %v2798, %v2794
    %v2851 = vpack.c.b16 %v2803, %v2799
    %v2852 = vpack.c.b16 %v2804, %v2800
    %v2853 = vpack.c.b16 %v2805, %v2801
    %v2854 = vpack.c.b16 %v2806, %v2802
    %v2855 = vpack.c.b16 %v2811, %v2807
    %v2856 = vpack.c.b16 %v2812, %v2808
    %v2857 = vpack.c.b16 %v2813, %v2809
    %v2858 = vpack.c.b16 %v2814, %v2810
    %v2859 = vpack.c.b16 %v2819, %v2815
    %v2860 = vpack.c.b16 %v2820, %v2816
    %v2861 = vpack.c.b16 %v2821, %v2817
    %v2862 = vpack.c.b16 %v2822, %v2818
    %v2863 = vpack.c.b16 %v2827, %v2823
    %v2864 = vpack.c.b16 %v2828, %v2824
    %v2865 = vpack.c.b16 %v2829, %v2825
    %v2866 = vpack.c.b16 %v2830, %v2826
    %v2867 = vpack.c.b16 %v2835, %v2831
    %v2868 = vpack.c.b16 %v2836, %v2832
    %v2869 = vpack.c.b16 %v2837, %v2833
    %v2870 = vpack.c.b16 %v2838, %v2834
    %2903 = vmatprep.subr.bf16.mxu0 %v2868
    %2904 = vmatpush1.bf16.msra.mxu0 %v2867
    %2905 = vmatprep.subr.bf16.mxu0 %v2864
    %2906 = vmatpush1.bf16.msra.mxu0 %v2863
    %2907 = vmatprep.subr.bf16.mxu0 %v2860
    %2908 = vmatpush1.bf16.msra.mxu0 %v2859
    %2909 = vmatprep.subr.bf16.mxu0 %v2856
    %2910 = vmatpush1.bf16.msra.mxu0 %v2855
    %2911 = vmatprep.subr.bf16.mxu0 %v2852
    %2912 = vmatpush1.bf16.msra.mxu0 %v2851
    %2913 = vmatprep.subr.bf16.mxu0 %v2848
    %2914 = vmatpush1.bf16.msra.mxu0 %v2847
    %2915 = vmatprep.subr.bf16.mxu0 %v2844
    %2916 = vmatpush1.bf16.msra.mxu0 %v2843
    %2917 = vmatprep.subr.bf16.mxu0 %v2840
    %2918 = vmatpush1.bf16.msra.mxu0 %v2839
    %2919 = vmatprep.subr.bf16.mxu0 0
    %2920 = vmatpush2.bf16.msra.mxu0 0
    %2921 = vmatprep.subr.bf16.mxu0 0
    %2922 = vmatpush2.bf16.msra.mxu0 0
    %2923 = vmatprep.subr.bf16.mxu0 0
    %2924 = vmatpush2.bf16.msra.mxu0 0
    %2925 = vmatprep.subr.bf16.mxu0 0
    %2926 = vmatpush2.bf16.msra.mxu0 0
    %2927 = vmatprep.subr.bf16.mxu0 0
    %2928 = vmatpush2.bf16.msra.mxu0 0
    %2929 = vmatprep.subr.bf16.mxu0 0
    %2930 = vmatpush2.bf16.msra.mxu0 0
    %2931 = vmatprep.subr.bf16.mxu0 0
    %2932 = vmatpush2.bf16.msra.mxu0 0
    %2933 = vmatprep.subr.bf16.mxu0 0
    %2934 = vmatpush2.bf16.msra.mxu0 0
    %2935 = vmatprep.mubr.bf16.mxu0 0
    %2936 = vmatmul.mubr.bf16.gmra.mxu0 0
    %v2937 = vpop.f32.mrf.mxu0
    %v2938 = vadd.f32 0.0, %v2937
    %v2939 = vpop.f32.mrf.mxu0
    %v2940 = vadd.f32 0.0, %v2939
    %v2941 = vpop.f32.mrf.mxu0
    %v2942 = vpop.f32.mrf.mxu0
    %2943 = vdwg.mxu0
    %2944 = vmatprep.subr.bf16.mxu0 %v2870
    %2945 = vmatpush1.bf16.msra.mxu0 %v2869
    %2946 = vmatprep.subr.bf16.mxu0 %v2866
    %2947 = vmatpush1.bf16.msra.mxu0 %v2865
    %2948 = vmatprep.subr.bf16.mxu0 %v2862
    %2949 = vmatpush1.bf16.msra.mxu0 %v2861
    %2950 = vmatprep.subr.bf16.mxu0 %v2858
    %2951 = vmatpush1.bf16.msra.mxu0 %v2857
    %2952 = vmatprep.subr.bf16.mxu0 %v2854
    %2953 = vmatpush1.bf16.msra.mxu0 %v2853
    %2954 = vmatprep.subr.bf16.mxu0 %v2850
    %2955 = vmatpush1.bf16.msra.mxu0 %v2849
    %2956 = vmatprep.subr.bf16.mxu0 %v2846
    %2957 = vmatpush1.bf16.msra.mxu0 %v2845
    %2958 = vmatprep.subr.bf16.mxu0 %v2842
    %2959 = vmatpush1.bf16.msra.mxu0 %v2841
    %2960 = vmatprep.subr.bf16.mxu0 0
    %2961 = vmatpush2.bf16.msra.mxu0 0
    %2962 = vmatprep.subr.bf16.mxu0 0
    %2963 = vmatpush2.bf16.msra.mxu0 0
    %2964 = vmatprep.subr.bf16.mxu0 0
    %2965 = vmatpush2.bf16.msra.mxu0 0
    %2966 = vmatprep.subr.bf16.mxu0 0
    %2967 = vmatpush2.bf16.msra.mxu0 0
    %2968 = vmatprep.subr.bf16.mxu0 0
    %2969 = vmatpush2.bf16.msra.mxu0 0
    %2970 = vmatprep.subr.bf16.mxu0 0
    %2971 = vmatpush2.bf16.msra.mxu0 0
    %2972 = vmatprep.subr.bf16.mxu0 0
    %2973 = vmatpush2.bf16.msra.mxu0 0
    %2974 = vmatprep.subr.bf16.mxu0 0
    %2975 = vmatpush2.bf16.msra.mxu0 0
    %2976 = vmatprep.mubr.bf16.mxu0 0
    %2977 = vmatmul.mubr.bf16.gmra.mxu0 0
    %v2978 = vpop.f32.mrf.mxu0
    %v2979 = vadd.f32 0.0, %v2978
    %v2980 = vpop.f32.mrf.mxu0
    %v2981 = vadd.f32 0.0, %v2980
    %v2982 = vpop.f32.mrf.mxu0
    %v2983 = vpop.f32.mrf.mxu0
    %2984 = vdwg.mxu0
    %v2985 = vadd.f32 %v2696, %v2938
    %v2986 = vadd.f32 %v2698, %v2940
    %v2987 = vadd.f32 %v2737, %v2979
    %v2988 = vadd.f32 %v2739, %v2981
    %v2989 = vxor.u32 %v2985, 2147483648
    %v2990 = vxor.u32 %v2986, 2147483648
    %v2991 = vxor.u32 %v2987, 2147483648
    %v2992 = vxor.u32 %v2988, 2147483648
    %v2993 = vmul.f32 %v2989, 1.442695
    %v2994 = vpow.pop %v2993
    %v2995 = vmul.f32 %v2990, 1.442695
    %v2996 = vpow.pop %v2995
    %v2997 = vmul.f32 %v2991, 1.442695
    %v2998 = vpow.pop %v2997
    %v2999 = vmul.f32 %v2992, 1.442695
    %v3000 = vpow.pop %v2999
    %v3001 = vadd.f32 %v2994, 1.0
    %v3002 = vadd.f32 %v2996, 1.0
    %v3003 = vadd.f32 %v2998, 1.0
    %v3004 = vadd.f32 %v3000, 1.0
    %v3005 = vrcp.pop %v3001
    %v3006 = vmul.f32 1.0, %v3005
    %v3007 = vrcp.pop %v3002
    %v3008 = vmul.f32 1.0, %v3007
    %v3009 = vrcp.pop %v3003
    %v3010 = vmul.f32 1.0, %v3009
    %v3011 = vrcp.pop %v3004
    %v3012 = vmul.f32 1.0, %v3011
    %v3013 = vmul.f32 %v3010, 2.0
    %v3014 = vsub.f32 %v3013, 1.0
    %v3015 = vmul.f32 %v3008, 0.0
    %v3016 = vmul.f32 %v3006, %v3014
    %v3017 = vadd.f32 %v3015, %v3016
    %v3018 = vtanh.pop %v3017
    %v3019 = vmul.f32 %v3012, %v3018
    %v3020 = vpack.c.bf16 %v3019, %v3019
    %v3022 = vlaneseq
    %v3023 = vshrl.u32 %v3022, 7
    %v3024 = vsub.s32 0, %v3023
    %v3025 = vrot.slane %v2169, %v3024
    %v3026 = vlaneseq
    %v3027 = vshrl.u32 %v3026, 7
    %v3028 = vsub.s32 1, %v3027
    %v3029 = vrot.slane %v2169, %v3028
    %v3030 = vlaneseq
    %v3031 = vshrl.u32 %v3030, 7
    %v3032 = vsub.s32 2, %v3031
    %v3033 = vrot.slane %v2169, %v3032
    %v3034 = vlaneseq
    %v3035 = vshrl.u32 %v3034, 7
    %v3036 = vsub.s32 3, %v3035
    %v3037 = vrot.slane %v2169, %v3036
    %v3074 = vunpack.c.l.b16 %v2137
    %v3075 = vunpack.c.h.b16 %v2137
    %v3076 = vunpack.c.l.b16 %v2138
    %v3077 = vunpack.c.h.b16 %v2138
    %v3078 = vunpack.c.l.b16 %v2139
    %v3079 = vunpack.c.h.b16 %v2139
    %v3080 = vunpack.c.l.b16 %v2140
    %v3081 = vunpack.c.h.b16 %v2140
    %v3082 = vunpack.c.l.b16 %v2141
    %v3083 = vunpack.c.h.b16 %v2141
    %v3084 = vunpack.c.l.b16 %v2142
    %v3085 = vunpack.c.h.b16 %v2142
    %v3086 = vunpack.c.l.b16 %v2143
    %v3087 = vunpack.c.h.b16 %v2143
    %v3088 = vunpack.c.l.b16 %v2144
    %v3089 = vunpack.c.h.b16 %v2144
    %v3090 = vunpack.c.l.b16 %v2145
    %v3091 = vunpack.c.h.b16 %v2145
    %v3092 = vunpack.c.l.b16 %v2146
    %v3093 = vunpack.c.h.b16 %v2146
    %v3094 = vunpack.c.l.b16 %v2147
    %v3095 = vunpack.c.h.b16 %v2147
    %v3096 = vunpack.c.l.b16 %v2148
    %v3097 = vunpack.c.h.b16 %v2148
    %v3098 = vunpack.c.l.b16 %v2149
    %v3099 = vunpack.c.h.b16 %v2149
    %v3100 = vunpack.c.l.b16 %v2150
    %v3101 = vunpack.c.h.b16 %v2150
    %v3102 = vunpack.c.l.b16 %v2151
    %v3103 = vunpack.c.h.b16 %v2151
    %v3104 = vunpack.c.l.b16 %v2152
    %v3105 = vunpack.c.h.b16 %v2152
    %v3106 = vunpack.c.l.b16 %v2153
    %v3107 = vunpack.c.h.b16 %v2153
    %v3108 = vunpack.c.l.b16 %v2154
    %v3109 = vunpack.c.h.b16 %v2154
    %v3110 = vunpack.c.l.b16 %v2155
    %v3111 = vunpack.c.h.b16 %v2155
    %v3112 = vunpack.c.l.b16 %v2156
    %v3113 = vunpack.c.h.b16 %v2156
    %v3114 = vunpack.c.l.b16 %v2157
    %v3115 = vunpack.c.h.b16 %v2157
    %v3116 = vunpack.c.l.b16 %v2158
    %v3117 = vunpack.c.h.b16 %v2158
    %v3118 = vunpack.c.l.b16 %v2159
    %v3119 = vunpack.c.h.b16 %v2159
    %v3120 = vunpack.c.l.b16 %v2160
    %v3121 = vunpack.c.h.b16 %v2160
    %v3122 = vunpack.c.l.b16 %v2161
    %v3123 = vunpack.c.h.b16 %v2161
    %v3124 = vunpack.c.l.b16 %v2162
    %v3125 = vunpack.c.h.b16 %v2162
    %v3126 = vunpack.c.l.b16 %v2163
    %v3127 = vunpack.c.h.b16 %v2163
    %v3128 = vunpack.c.l.b16 %v2164
    %v3129 = vunpack.c.h.b16 %v2164
    %v3130 = vunpack.c.l.b16 %v2165
    %v3131 = vunpack.c.h.b16 %v2165
    %v3132 = vunpack.c.l.b16 %v2166
    %v3133 = vunpack.c.h.b16 %v2166
    %v3134 = vunpack.c.l.b16 %v2167
    %v3135 = vunpack.c.h.b16 %v2167
    %v3136 = vunpack.c.l.b16 %v2168
    %v3137 = vunpack.c.h.b16 %v2168
    %v3138 = vpack.c.b16 %v3078, %v3074
    %v3139 = vpack.c.b16 %v3079, %v3075
    %v3140 = vpack.c.b16 %v3080, %v3076
    %v3141 = vpack.c.b16 %v3081, %v3077
    %v3142 = vpack.c.b16 %v3086, %v3082
    %v3143 = vpack.c.b16 %v3087, %v3083
    %v3144 = vpack.c.b16 %v3088, %v3084
    %v3145 = vpack.c.b16 %v3089, %v3085
    %v3146 = vpack.c.b16 %v3094, %v3090
    %v3147 = vpack.c.b16 %v3095, %v3091
    %v3148 = vpack.c.b16 %v3096, %v3092
    %v3149 = vpack.c.b16 %v3097, %v3093
    %v3150 = vpack.c.b16 %v3102, %v3098
    %v3151 = vpack.c.b16 %v3103, %v3099
    %v3152 = vpack.c.b16 %v3104, %v3100
    %v3153 = vpack.c.b16 %v3105, %v3101
    %v3154 = vpack.c.b16 %v3110, %v3106
    %v3155 = vpack.c.b16 %v3111, %v3107
    %v3156 = vpack.c.b16 %v3112, %v3108
    %v3157 = vpack.c.b16 %v3113, %v3109
    %v3158 = vpack.c.b16 %v3118, %v3114
    %v3159 = vpack.c.b16 %v3119, %v3115
    %v3160 = vpack.c.b16 %v3120, %v3116
    %v3161 = vpack.c.b16 %v3121, %v3117
    %v3162 = vpack.c.b16 %v3126, %v3122
    %v3163 = vpack.c.b16 %v3127, %v3123
    %v3164 = vpack.c.b16 %v3128, %v3124
    %v3165 = vpack.c.b16 %v3129, %v3125
    %v3166 = vpack.c.b16 %v3134, %v3130
    %v3167 = vpack.c.b16 %v3135, %v3131
    %v3168 = vpack.c.b16 %v3136, %v3132
    %v3169 = vpack.c.b16 %v3137, %v3133
    %3202 = vmatprep.subr.bf16.mxu0 %v3167
    %3203 = vmatpush1.bf16.msra.mxu0 %v3166
    %3204 = vmatprep.subr.bf16.mxu0 %v3163
    %3205 = vmatpush1.bf16.msra.mxu0 %v3162
    %3206 = vmatprep.subr.bf16.mxu0 %v3159
    %3207 = vmatpush1.bf16.msra.mxu0 %v3158
    %3208 = vmatprep.subr.bf16.mxu0 %v3155
    %3209 = vmatpush1.bf16.msra.mxu0 %v3154
    %3210 = vmatprep.subr.bf16.mxu0 %v3151
    %3211 = vmatpush1.bf16.msra.mxu0 %v3150
    %3212 = vmatprep.subr.bf16.mxu0 %v3147
    %3213 = vmatpush1.bf16.msra.mxu0 %v3146
    %3214 = vmatprep.subr.bf16.mxu0 %v3143
    %3215 = vmatpush1.bf16.msra.mxu0 %v3142
    %3216 = vmatprep.subr.bf16.mxu0 %v3139
    %3217 = vmatpush1.bf16.msra.mxu0 %v3138
    %3218 = vmatprep.subr.bf16.mxu0 0
    %3219 = vmatpush2.bf16.msra.mxu0 0
    %3220 = vmatprep.subr.bf16.mxu0 0
    %3221 = vmatpush2.bf16.msra.mxu0 0
    %3222 = vmatprep.subr.bf16.mxu0 0
    %3223 = vmatpush2.bf16.msra.mxu0 0
    %3224 = vmatprep.subr.bf16.mxu0 0
    %3225 = vmatpush2.bf16.msra.mxu0 0
    %3226 = vmatprep.subr.bf16.mxu0 0
    %3227 = vmatpush2.bf16.msra.mxu0 0
    %3228 = vmatprep.subr.bf16.mxu0 0
    %3229 = vmatpush2.bf16.msra.mxu0 0
    %3230 = vmatprep.subr.bf16.mxu0 0
    %3231 = vmatpush2.bf16.msra.mxu0 0
    %3232 = vmatprep.subr.bf16.mxu0 0
    %3233 = vmatpush2.bf16.msra.mxu0 0
    %3234 = vmatprep.mubr.bf16.mxu0 0
    %3235 = vmatmul.mubr.bf16.gmra.mxu0 %v3020
    %v3236 = vpop.f32.mrf.mxu0
    %v3237 = vadd.f32 %v3025, %v3236
    %v3238 = vpop.f32.mrf.mxu0
    %v3239 = vadd.f32 %v3029, %v3238
    %v3240 = vpop.f32.mrf.mxu0
    %v3241 = vpop.f32.mrf.mxu0
    %3242 = vdwg.mxu0
    %3243 = vmatprep.subr.bf16.mxu0 %v3169
    %3244 = vmatpush1.bf16.msra.mxu0 %v3168
    %3245 = vmatprep.subr.bf16.mxu0 %v3165
    %3246 = vmatpush1.bf16.msra.mxu0 %v3164
    %3247 = vmatprep.subr.bf16.mxu0 %v3161
    %3248 = vmatpush1.bf16.msra.mxu0 %v3160
    %3249 = vmatprep.subr.bf16.mxu0 %v3157
    %3250 = vmatpush1.bf16.msra.mxu0 %v3156
    %3251 = vmatprep.subr.bf16.mxu0 %v3153
    %3252 = vmatpush1.bf16.msra.mxu0 %v3152
    %3253 = vmatprep.subr.bf16.mxu0 %v3149
    %3254 = vmatpush1.bf16.msra.mxu0 %v3148
    %3255 = vmatprep.subr.bf16.mxu0 %v3145
    %3256 = vmatpush1.bf16.msra.mxu0 %v3144
    %3257 = vmatprep.subr.bf16.mxu0 %v3141
    %3258 = vmatpush1.bf16.msra.mxu0 %v3140
    %3259 = vmatprep.subr.bf16.mxu0 0
    %3260 = vmatpush2.bf16.msra.mxu0 0
    %3261 = vmatprep.subr.bf16.mxu0 0
    %3262 = vmatpush2.bf16.msra.mxu0 0
    %3263 = vmatprep.subr.bf16.mxu0 0
    %3264 = vmatpush2.bf16.msra.mxu0 0
    %3265 = vmatprep.subr.bf16.mxu0 0
    %3266 = vmatpush2.bf16.msra.mxu0 0
    %3267 = vmatprep.subr.bf16.mxu0 0
    %3268 = vmatpush2.bf16.msra.mxu0 0
    %3269 = vmatprep.subr.bf16.mxu0 0
    %3270 = vmatpush2.bf16.msra.mxu0 0
    %3271 = vmatprep.subr.bf16.mxu0 0
    %3272 = vmatpush2.bf16.msra.mxu0 0
    %3273 = vmatprep.subr.bf16.mxu0 0
    %3274 = vmatpush2.bf16.msra.mxu0 0
    %3275 = vmatprep.mubr.bf16.mxu0 0
    %3276 = vmatmul.mubr.bf16.gmra.mxu0 %v3020
    %v3277 = vpop.f32.mrf.mxu0
    %v3278 = vadd.f32 %v3033, %v3277
    %v3279 = vpop.f32.mrf.mxu0
    %v3280 = vadd.f32 %v3037, %v3279
    %v3281 = vpop.f32.mrf.mxu0
    %v3282 = vpop.f32.mrf.mxu0
    %3283 = vdwg.mxu0
    %v3316 = vunpack.c.l.b16 %v2170
    %v3317 = vunpack.c.h.b16 %v2170
    %v3318 = vunpack.c.l.b16 %v2171
    %v3319 = vunpack.c.h.b16 %v2171
    %v3320 = vunpack.c.l.b16 %v2172
    %v3321 = vunpack.c.h.b16 %v2172
    %v3322 = vunpack.c.l.b16 %v2173
    %v3323 = vunpack.c.h.b16 %v2173
    %v3324 = vunpack.c.l.b16 %v2174
    %v3325 = vunpack.c.h.b16 %v2174
    %v3326 = vunpack.c.l.b16 %v2175
    %v3327 = vunpack.c.h.b16 %v2175
    %v3328 = vunpack.c.l.b16 %v2176
    %v3329 = vunpack.c.h.b16 %v2176
    %v3330 = vunpack.c.l.b16 %v2177
    %v3331 = vunpack.c.h.b16 %v2177
    %v3332 = vunpack.c.l.b16 %v2178
    %v3333 = vunpack.c.h.b16 %v2178
    %v3334 = vunpack.c.l.b16 %v2179
    %v3335 = vunpack.c.h.b16 %v2179
    %v3336 = vunpack.c.l.b16 %v2180
    %v3337 = vunpack.c.h.b16 %v2180
    %v3338 = vunpack.c.l.b16 %v2181
    %v3339 = vunpack.c.h.b16 %v2181
    %v3340 = vunpack.c.l.b16 %v2182
    %v3341 = vunpack.c.h.b16 %v2182
    %v3342 = vunpack.c.l.b16 %v2183
    %v3343 = vunpack.c.h.b16 %v2183
    %v3344 = vunpack.c.l.b16 %v2184
    %v3345 = vunpack.c.h.b16 %v2184
    %v3346 = vunpack.c.l.b16 %v2185
    %v3347 = vunpack.c.h.b16 %v2185
    %v3348 = vunpack.c.l.b16 %v2186
    %v3349 = vunpack.c.h.b16 %v2186
    %v3350 = vunpack.c.l.b16 %v2187
    %v3351 = vunpack.c.h.b16 %v2187
    %v3352 = vunpack.c.l.b16 %v2188
    %v3353 = vunpack.c.h.b16 %v2188
    %v3354 = vunpack.c.l.b16 %v2189
    %v3355 = vunpack.c.h.b16 %v2189
    %v3356 = vunpack.c.l.b16 %v2190
    %v3357 = vunpack.c.h.b16 %v2190
    %v3358 = vunpack.c.l.b16 %v2191
    %v3359 = vunpack.c.h.b16 %v2191
    %v3360 = vunpack.c.l.b16 %v2192
    %v3361 = vunpack.c.h.b16 %v2192
    %v3362 = vunpack.c.l.b16 %v2193
    %v3363 = vunpack.c.h.b16 %v2193
    %v3364 = vunpack.c.l.b16 %v2194
    %v3365 = vunpack.c.h.b16 %v2194
    %v3366 = vunpack.c.l.b16 %v2195
    %v3367 = vunpack.c.h.b16 %v2195
    %v3368 = vunpack.c.l.b16 %v2196
    %v3369 = vunpack.c.h.b16 %v2196
    %v3370 = vunpack.c.l.b16 %v2197
    %v3371 = vunpack.c.h.b16 %v2197
    %v3372 = vunpack.c.l.b16 %v2198
    %v3373 = vunpack.c.h.b16 %v2198
    %v3374 = vunpack.c.l.b16 %v2199
    %v3375 = vunpack.c.h.b16 %v2199
    %v3376 = vunpack.c.l.b16 %v2200
    %v3377 = vunpack.c.h.b16 %v2200
    %v3378 = vunpack.c.l.b16 %v2201
    %v3379 = vunpack.c.h.b16 %v2201
    %v3380 = vpack.c.b16 %v3320, %v3316
    %v3381 = vpack.c.b16 %v3321, %v3317
    %v3382 = vpack.c.b16 %v3322, %v3318
    %v3383 = vpack.c.b16 %v3323, %v3319
    %v3384 = vpack.c.b16 %v3328, %v3324
    %v3385 = vpack.c.b16 %v3329, %v3325
    %v3386 = vpack.c.b16 %v3330, %v3326
    %v3387 = vpack.c.b16 %v3331, %v3327
    %v3388 = vpack.c.b16 %v3336, %v3332
    %v3389 = vpack.c.b16 %v3337, %v3333
    %v3390 = vpack.c.b16 %v3338, %v3334
    %v3391 = vpack.c.b16 %v3339, %v3335
    %v3392 = vpack.c.b16 %v3344, %v3340
    %v3393 = vpack.c.b16 %v3345, %v3341
    %v3394 = vpack.c.b16 %v3346, %v3342
    %v3395 = vpack.c.b16 %v3347, %v3343
    %v3396 = vpack.c.b16 %v3352, %v3348
    %v3397 = vpack.c.b16 %v3353, %v3349
    %v3398 = vpack.c.b16 %v3354, %v3350
    %v3399 = vpack.c.b16 %v3355, %v3351
    %v3400 = vpack.c.b16 %v3360, %v3356
    %v3401 = vpack.c.b16 %v3361, %v3357
    %v3402 = vpack.c.b16 %v3362, %v3358
    %v3403 = vpack.c.b16 %v3363, %v3359
    %v3404 = vpack.c.b16 %v3368, %v3364
    %v3405 = vpack.c.b16 %v3369, %v3365
    %v3406 = vpack.c.b16 %v3370, %v3366
    %v3407 = vpack.c.b16 %v3371, %v3367
    %v3408 = vpack.c.b16 %v3376, %v3372
    %v3409 = vpack.c.b16 %v3377, %v3373
    %v3410 = vpack.c.b16 %v3378, %v3374
    %v3411 = vpack.c.b16 %v3379, %v3375
    %3444 = vmatprep.subr.bf16.mxu0 %v3409
    %3445 = vmatpush1.bf16.msra.mxu0 %v3408
    %3446 = vmatprep.subr.bf16.mxu0 %v3405
    %3447 = vmatpush1.bf16.msra.mxu0 %v3404
    %3448 = vmatprep.subr.bf16.mxu0 %v3401
    %3449 = vmatpush1.bf16.msra.mxu0 %v3400
    %3450 = vmatprep.subr.bf16.mxu0 %v3397
    %3451 = vmatpush1.bf16.msra.mxu0 %v3396
    %3452 = vmatprep.subr.bf16.mxu0 %v3393
    %3453 = vmatpush1.bf16.msra.mxu0 %v3392
    %3454 = vmatprep.subr.bf16.mxu0 %v3389
    %3455 = vmatpush1.bf16.msra.mxu0 %v3388
    %3456 = vmatprep.subr.bf16.mxu0 %v3385
    %3457 = vmatpush1.bf16.msra.mxu0 %v3384
    %3458 = vmatprep.subr.bf16.mxu0 %v3381
    %3459 = vmatpush1.bf16.msra.mxu0 %v3380
    %3460 = vmatprep.subr.bf16.mxu0 0
    %3461 = vmatpush2.bf16.msra.mxu0 0
    %3462 = vmatprep.subr.bf16.mxu0 0
    %3463 = vmatpush2.bf16.msra.mxu0 0
    %3464 = vmatprep.subr.bf16.mxu0 0
    %3465 = vmatpush2.bf16.msra.mxu0 0
    %3466 = vmatprep.subr.bf16.mxu0 0
    %3467 = vmatpush2.bf16.msra.mxu0 0
    %3468 = vmatprep.subr.bf16.mxu0 0
    %3469 = vmatpush2.bf16.msra.mxu0 0
    %3470 = vmatprep.subr.bf16.mxu0 0
    %3471 = vmatpush2.bf16.msra.mxu0 0
    %3472 = vmatprep.subr.bf16.mxu0 0
    %3473 = vmatpush2.bf16.msra.mxu0 0
    %3474 = vmatprep.subr.bf16.mxu0 0
    %3475 = vmatpush2.bf16.msra.mxu0 0
    %3476 = vmatprep.mubr.bf16.mxu0 0
    %3477 = vmatmul.mubr.bf16.gmra.mxu0 0
    %v3478 = vpop.f32.mrf.mxu0
    %v3479 = vadd.f32 0.0, %v3478
    %v3480 = vpop.f32.mrf.mxu0
    %v3481 = vadd.f32 0.0, %v3480
    %v3482 = vpop.f32.mrf.mxu0
    %v3483 = vpop.f32.mrf.mxu0
    %3484 = vdwg.mxu0
    %3485 = vmatprep.subr.bf16.mxu0 %v3411
    %3486 = vmatpush1.bf16.msra.mxu0 %v3410
    %3487 = vmatprep.subr.bf16.mxu0 %v3407
    %3488 = vmatpush1.bf16.msra.mxu0 %v3406
    %3489 = vmatprep.subr.bf16.mxu0 %v3403
    %3490 = vmatpush1.bf16.msra.mxu0 %v3402
    %3491 = vmatprep.subr.bf16.mxu0 %v3399
    %3492 = vmatpush1.bf16.msra.mxu0 %v3398
    %3493 = vmatprep.subr.bf16.mxu0 %v3395
    %3494 = vmatpush1.bf16.msra.mxu0 %v3394
    %3495 = vmatprep.subr.bf16.mxu0 %v3391
    %3496 = vmatpush1.bf16.msra.mxu0 %v3390
    %3497 = vmatprep.subr.bf16.mxu0 %v3387
    %3498 = vmatpush1.bf16.msra.mxu0 %v3386
    %3499 = vmatprep.subr.bf16.mxu0 %v3383
    %3500 = vmatpush1.bf16.msra.mxu0 %v3382
    %3501 = vmatprep.subr.bf16.mxu0 0
    %3502 = vmatpush2.bf16.msra.mxu0 0
    %3503 = vmatprep.subr.bf16.mxu0 0
    %3504 = vmatpush2.bf16.msra.mxu0 0
    %3505 = vmatprep.subr.bf16.mxu0 0
    %3506 = vmatpush2.bf16.msra.mxu0 0
    %3507 = vmatprep.subr.bf16.mxu0 0
    %3508 = vmatpush2.bf16.msra.mxu0 0
    %3509 = vmatprep.subr.bf16.mxu0 0
    %3510 = vmatpush2.bf16.msra.mxu0 0
    %3511 = vmatprep.subr.bf16.mxu0 0
    %3512 = vmatpush2.bf16.msra.mxu0 0
    %3513 = vmatprep.subr.bf16.mxu0 0
    %3514 = vmatpush2.bf16.msra.mxu0 0
    %3515 = vmatprep.subr.bf16.mxu0 0
    %3516 = vmatpush2.bf16.msra.mxu0 0
    %3517 = vmatprep.mubr.bf16.mxu0 0
    %3518 = vmatmul.mubr.bf16.gmra.mxu0 0
    %v3519 = vpop.f32.mrf.mxu0
    %v3520 = vadd.f32 0.0, %v3519
    %v3521 = vpop.f32.mrf.mxu0
    %v3522 = vadd.f32 0.0, %v3521
    %v3523 = vpop.f32.mrf.mxu0
    %v3524 = vpop.f32.mrf.mxu0
    %3525 = vdwg.mxu0
    %v3526 = vadd.f32 %v3237, %v3479
    %v3527 = vadd.f32 %v3239, %v3481
    %v3528 = vadd.f32 %v3278, %v3520
    %v3529 = vadd.f32 %v3280, %v3522
    %v3530 = vxor.u32 %v3526, 2147483648
    %v3531 = vxor.u32 %v3527, 2147483648
    %v3532 = vxor.u32 %v3528, 2147483648
    %v3533 = vxor.u32 %v3529, 2147483648
    %v3534 = vmul.f32 %v3530, 1.442695
    %v3535 = vpow.pop %v3534
    %v3536 = vmul.f32 %v3531, 1.442695
    %v3537 = vpow.pop %v3536
    %v3538 = vmul.f32 %v3532, 1.442695
    %v3539 = vpow.pop %v3538
    %v3540 = vmul.f32 %v3533, 1.442695
    %v3541 = vpow.pop %v3540
    %v3542 = vadd.f32 %v3535, 1.0
    %v3543 = vadd.f32 %v3537, 1.0
    %v3544 = vadd.f32 %v3539, 1.0
    %v3545 = vadd.f32 %v3541, 1.0
    %v3546 = vrcp.pop %v3542
    %v3547 = vmul.f32 1.0, %v3546
    %v3548 = vrcp.pop %v3543
    %v3549 = vmul.f32 1.0, %v3548
    %v3550 = vrcp.pop %v3544
    %v3551 = vmul.f32 1.0, %v3550
    %v3552 = vrcp.pop %v3545
    %v3553 = vmul.f32 1.0, %v3552
    %v3554 = vmul.f32 %v3551, 2.0
    %v3555 = vsub.f32 %v3554, 1.0
    %v3556 = vmul.f32 %v3549, 0.0
    %v3557 = vmul.f32 %v3547, %v3555
    %v3558 = vadd.f32 %v3556, %v3557
    %v3559 = vtanh.pop %v3558
    %v3560 = vmul.f32 %v3553, %v3559
    %3561 = vmatprep.subr.bf16.mxu0 %v2327
    %3562 = vmatpush1.bf16.msra.mxu0 %v2326
    %3563 = vmatprep.subr.bf16.mxu0 %v2323
    %3564 = vmatpush1.bf16.msra.mxu0 %v2322
    %3565 = vmatprep.subr.bf16.mxu0 %v2319
    %3566 = vmatpush1.bf16.msra.mxu0 %v2318
    %3567 = vmatprep.subr.bf16.mxu0 %v2315
    %3568 = vmatpush1.bf16.msra.mxu0 %v2314
    %3569 = vmatprep.subr.bf16.mxu0 %v2311
    %3570 = vmatpush1.bf16.msra.mxu0 %v2310
    %3571 = vmatprep.subr.bf16.mxu0 %v2307
    %3572 = vmatpush1.bf16.msra.mxu0 %v2306
    %3573 = vmatprep.subr.bf16.mxu0 %v2303
    %3574 = vmatpush1.bf16.msra.mxu0 %v2302
    %3575 = vmatprep.subr.bf16.mxu0 %v2299
    %3576 = vmatpush1.bf16.msra.mxu0 %v2298
    %3577 = vmatprep.subr.bf16.mxu0 0
    %3578 = vmatpush2.bf16.msra.mxu0 0
    %3579 = vmatprep.subr.bf16.mxu0 0
    %3580 = vmatpush2.bf16.msra.mxu0 0
    %3581 = vmatprep.subr.bf16.mxu0 0
    %3582 = vmatpush2.bf16.msra.mxu0 0
    %3583 = vmatprep.subr.bf16.mxu0 0
    %3584 = vmatpush2.bf16.msra.mxu0 0
    %3585 = vmatprep.subr.bf16.mxu0 0
    %3586 = vmatpush2.bf16.msra.mxu0 0
    %3587 = vmatprep.subr.bf16.mxu0 0
    %3588 = vmatpush2.bf16.msra.mxu0 0
    %3589 = vmatprep.subr.bf16.mxu0 0
    %3590 = vmatpush2.bf16.msra.mxu0 0
    %3591 = vmatprep.subr.bf16.mxu0 0
    %3592 = vmatpush2.bf16.msra.mxu0 0
    %3593 = vmatprep.mubr.bf16.mxu0 0
    %3594 = vmatmul.mubr.bf16.gmra.mxu0 %v2479
    %v3595 = vpop.f32.mrf.mxu0
    %v3596 = vadd.f32 0.0, %v3595
    %v3597 = vpop.f32.mrf.mxu0
    %v3598 = vadd.f32 0.0, %v3597
    %v3599 = vpop.f32.mrf.mxu0
    %v3600 = vpop.f32.mrf.mxu0
    %3601 = vdwg.mxu0
    %3602 = vmatprep.subr.bf16.mxu0 %v2329
    %3603 = vmatpush1.bf16.msra.mxu0 %v2328
    %3604 = vmatprep.subr.bf16.mxu0 %v2325
    %3605 = vmatpush1.bf16.msra.mxu0 %v2324
    %3606 = vmatprep.subr.bf16.mxu0 %v2321
    %3607 = vmatpush1.bf16.msra.mxu0 %v2320
    %3608 = vmatprep.subr.bf16.mxu0 %v2317
    %3609 = vmatpush1.bf16.msra.mxu0 %v2316
    %3610 = vmatprep.subr.bf16.mxu0 %v2313
    %3611 = vmatpush1.bf16.msra.mxu0 %v2312
    %3612 = vmatprep.subr.bf16.mxu0 %v2309
    %3613 = vmatpush1.bf16.msra.mxu0 %v2308
    %3614 = vmatprep.subr.bf16.mxu0 %v2305
    %3615 = vmatpush1.bf16.msra.mxu0 %v2304
    %3616 = vmatprep.subr.bf16.mxu0 %v2301
    %3617 = vmatpush1.bf16.msra.mxu0 %v2300
    %3618 = vmatprep.subr.bf16.mxu0 0
    %3619 = vmatpush2.bf16.msra.mxu0 0
    %3620 = vmatprep.subr.bf16.mxu0 0
    %3621 = vmatpush2.bf16.msra.mxu0 0
    %3622 = vmatprep.subr.bf16.mxu0 0
    %3623 = vmatpush2.bf16.msra.mxu0 0
    %3624 = vmatprep.subr.bf16.mxu0 0
    %3625 = vmatpush2.bf16.msra.mxu0 0
    %3626 = vmatprep.subr.bf16.mxu0 0
    %3627 = vmatpush2.bf16.msra.mxu0 0
    %3628 = vmatprep.subr.bf16.mxu0 0
    %3629 = vmatpush2.bf16.msra.mxu0 0
    %3630 = vmatprep.subr.bf16.mxu0 0
    %3631 = vmatpush2.bf16.msra.mxu0 0
    %3632 = vmatprep.subr.bf16.mxu0 0
    %3633 = vmatpush2.bf16.msra.mxu0 0
    %3634 = vmatprep.mubr.bf16.mxu0 0
    %3635 = vmatmul.mubr.bf16.gmra.mxu0 %v2479
    %v3636 = vpop.f32.mrf.mxu0
    %v3637 = vadd.f32 0.0, %v3636
    %v3638 = vpop.f32.mrf.mxu0
    %v3639 = vadd.f32 0.0, %v3638
    %v3640 = vpop.f32.mrf.mxu0
    %v3641 = vpop.f32.mrf.mxu0
    %3642 = vdwg.mxu0
    %v3647 = vrot.slane %v3596, 6
    %v3648 = vrot.slane %v3598, 6
    %v3649 = vrot.slane %v3637, 6
    %v3650 = vrot.slane %v3639, 6
    %v3655 = vadd.f32 %v1860, %v3647
    %v3656 = vadd.f32 %v1862, %v3648
    %v3657 = vadd.f32 %v2032, %v3649
    %v3658 = vadd.f32 %v2034, %v3650
    %v3659 = vxor.u32 %v3655, 2147483648
    %v3660 = vxor.u32 %v3656, 2147483648
    %v3661 = vxor.u32 %v3657, 2147483648
    %v3662 = vxor.u32 %v3658, 2147483648
    %v3663 = vmul.f32 %v3659, 1.442695
    %v3664 = vpow.pop %v3663
    %v3665 = vmul.f32 %v3660, 1.442695
    %v3666 = vpow.pop %v3665
    %v3667 = vmul.f32 %v3661, 1.442695
    %v3668 = vpow.pop %v3667
    %v3669 = vmul.f32 %v3662, 1.442695
    %v3670 = vpow.pop %v3669
    %v3671 = vadd.f32 %v3664, 1.0
    %v3672 = vadd.f32 %v3666, 1.0
    %v3673 = vadd.f32 %v3668, 1.0
    %v3674 = vadd.f32 %v3670, 1.0
    %v3675 = vrcp.pop %v3671
    %v3676 = vmul.f32 1.0, %v3675
    %v3677 = vrcp.pop %v3672
    %v3678 = vmul.f32 1.0, %v3677
    %v3679 = vrcp.pop %v3673
    %v3680 = vmul.f32 1.0, %v3679
    %v3681 = vrcp.pop %v3674
    %v3682 = vmul.f32 1.0, %v3681
    %v3683 = vmul.f32 %v3680, 2.0
    %v3684 = vsub.f32 %v3683, 1.0
    %v3686 = vrot.slane %v2476, 6
    %v3688 = vmul.f32 %v3678, %v3686
    %v3689 = vmul.f32 %v3676, %v3684
    %v3690 = vadd.f32 %v3688, %v3689
    %v3691 = vtanh.pop %v3690
    %v3692 = vmul.f32 %v3682, %v3691
    %v3693 = vpack.c.bf16 %v3692, %v3692
    %v3695 = vrot.slane %v3693, 1
    %3697 = vmatprep.subr.bf16.mxu0 %v2626
    %3698 = vmatpush1.bf16.msra.mxu0 %v2625
    %3699 = vmatprep.subr.bf16.mxu0 %v2622
    %3700 = vmatpush1.bf16.msra.mxu0 %v2621
    %3701 = vmatprep.subr.bf16.mxu0 %v2618
    %3702 = vmatpush1.bf16.msra.mxu0 %v2617
    %3703 = vmatprep.subr.bf16.mxu0 %v2614
    %3704 = vmatpush1.bf16.msra.mxu0 %v2613
    %3705 = vmatprep.subr.bf16.mxu0 %v2610
    %3706 = vmatpush1.bf16.msra.mxu0 %v2609
    %3707 = vmatprep.subr.bf16.mxu0 %v2606
    %3708 = vmatpush1.bf16.msra.mxu0 %v2605
    %3709 = vmatprep.subr.bf16.mxu0 %v2602
    %3710 = vmatpush1.bf16.msra.mxu0 %v2601
    %3711 = vmatprep.subr.bf16.mxu0 %v2598
    %3712 = vmatpush1.bf16.msra.mxu0 %v2597
    %3713 = vmatprep.subr.bf16.mxu0 0
    %3714 = vmatpush2.bf16.msra.mxu0 0
    %3715 = vmatprep.subr.bf16.mxu0 0
    %3716 = vmatpush2.bf16.msra.mxu0 0
    %3717 = vmatprep.subr.bf16.mxu0 0
    %3718 = vmatpush2.bf16.msra.mxu0 0
    %3719 = vmatprep.subr.bf16.mxu0 0
    %3720 = vmatpush2.bf16.msra.mxu0 0
    %3721 = vmatprep.subr.bf16.mxu0 0
    %3722 = vmatpush2.bf16.msra.mxu0 0
    %3723 = vmatprep.subr.bf16.mxu0 0
    %3724 = vmatpush2.bf16.msra.mxu0 0
    %3725 = vmatprep.subr.bf16.mxu0 0
    %3726 = vmatpush2.bf16.msra.mxu0 0
    %3727 = vmatprep.subr.bf16.mxu0 0
    %3728 = vmatpush2.bf16.msra.mxu0 0
    %3729 = vmatprep.mubr.bf16.mxu0 0
    %3730 = vmatmul.mubr.bf16.gmra.mxu0 %v3695
    %v3731 = vpop.f32.mrf.mxu0
    %v3732 = vadd.f32 %v2484, %v3731
    %v3733 = vpop.f32.mrf.mxu0
    %v3734 = vadd.f32 %v2488, %v3733
    %v3735 = vpop.f32.mrf.mxu0
    %v3736 = vpop.f32.mrf.mxu0
    %3737 = vdwg.mxu0
    %3738 = vmatprep.subr.bf16.mxu0 %v2628
    %3739 = vmatpush1.bf16.msra.mxu0 %v2627
    %3740 = vmatprep.subr.bf16.mxu0 %v2624
    %3741 = vmatpush1.bf16.msra.mxu0 %v2623
    %3742 = vmatprep.subr.bf16.mxu0 %v2620
    %3743 = vmatpush1.bf16.msra.mxu0 %v2619
    %3744 = vmatprep.subr.bf16.mxu0 %v2616
    %3745 = vmatpush1.bf16.msra.mxu0 %v2615
    %3746 = vmatprep.subr.bf16.mxu0 %v2612
    %3747 = vmatpush1.bf16.msra.mxu0 %v2611
    %3748 = vmatprep.subr.bf16.mxu0 %v2608
    %3749 = vmatpush1.bf16.msra.mxu0 %v2607
    %3750 = vmatprep.subr.bf16.mxu0 %v2604
    %3751 = vmatpush1.bf16.msra.mxu0 %v2603
    %3752 = vmatprep.subr.bf16.mxu0 %v2600
    %3753 = vmatpush1.bf16.msra.mxu0 %v2599
    %3754 = vmatprep.subr.bf16.mxu0 0
    %3755 = vmatpush2.bf16.msra.mxu0 0
    %3756 = vmatprep.subr.bf16.mxu0 0
    %3757 = vmatpush2.bf16.msra.mxu0 0
    %3758 = vmatprep.subr.bf16.mxu0 0
    %3759 = vmatpush2.bf16.msra.mxu0 0
    %3760 = vmatprep.subr.bf16.mxu0 0
    %3761 = vmatpush2.bf16.msra.mxu0 0
    %3762 = vmatprep.subr.bf16.mxu0 0
    %3763 = vmatpush2.bf16.msra.mxu0 0
    %3764 = vmatprep.subr.bf16.mxu0 0
    %3765 = vmatpush2.bf16.msra.mxu0 0
    %3766 = vmatprep.subr.bf16.mxu0 0
    %3767 = vmatpush2.bf16.msra.mxu0 0
    %3768 = vmatprep.subr.bf16.mxu0 0
    %3769 = vmatpush2.bf16.msra.mxu0 0
    %3770 = vmatprep.mubr.bf16.mxu0 0
    %3771 = vmatmul.mubr.bf16.gmra.mxu0 %v3695
    %v3772 = vpop.f32.mrf.mxu0
    %v3773 = vadd.f32 %v2492, %v3772
    %v3774 = vpop.f32.mrf.mxu0
    %v3775 = vadd.f32 %v2496, %v3774
    %v3776 = vpop.f32.mrf.mxu0
    %v3777 = vpop.f32.mrf.mxu0
    %3778 = vdwg.mxu0
    %3779 = vmatprep.subr.bf16.mxu0 %v2868
    %3780 = vmatpush1.bf16.msra.mxu0 %v2867
    %3781 = vmatprep.subr.bf16.mxu0 %v2864
    %3782 = vmatpush1.bf16.msra.mxu0 %v2863
    %3783 = vmatprep.subr.bf16.mxu0 %v2860
    %3784 = vmatpush1.bf16.msra.mxu0 %v2859
    %3785 = vmatprep.subr.bf16.mxu0 %v2856
    %3786 = vmatpush1.bf16.msra.mxu0 %v2855
    %3787 = vmatprep.subr.bf16.mxu0 %v2852
    %3788 = vmatpush1.bf16.msra.mxu0 %v2851
    %3789 = vmatprep.subr.bf16.mxu0 %v2848
    %3790 = vmatpush1.bf16.msra.mxu0 %v2847
    %3791 = vmatprep.subr.bf16.mxu0 %v2844
    %3792 = vmatpush1.bf16.msra.mxu0 %v2843
    %3793 = vmatprep.subr.bf16.mxu0 %v2840
    %3794 = vmatpush1.bf16.msra.mxu0 %v2839
    %3795 = vmatprep.subr.bf16.mxu0 0
    %3796 = vmatpush2.bf16.msra.mxu0 0
    %3797 = vmatprep.subr.bf16.mxu0 0
    %3798 = vmatpush2.bf16.msra.mxu0 0
    %3799 = vmatprep.subr.bf16.mxu0 0
    %3800 = vmatpush2.bf16.msra.mxu0 0
    %3801 = vmatprep.subr.bf16.mxu0 0
    %3802 = vmatpush2.bf16.msra.mxu0 0
    %3803 = vmatprep.subr.bf16.mxu0 0
    %3804 = vmatpush2.bf16.msra.mxu0 0
    %3805 = vmatprep.subr.bf16.mxu0 0
    %3806 = vmatpush2.bf16.msra.mxu0 0
    %3807 = vmatprep.subr.bf16.mxu0 0
    %3808 = vmatpush2.bf16.msra.mxu0 0
    %3809 = vmatprep.subr.bf16.mxu0 0
    %3810 = vmatpush2.bf16.msra.mxu0 0
    %3811 = vmatprep.mubr.bf16.mxu0 0
    %3812 = vmatmul.mubr.bf16.gmra.mxu0 %v3020
    %v3813 = vpop.f32.mrf.mxu0
    %v3814 = vadd.f32 0.0, %v3813
    %v3815 = vpop.f32.mrf.mxu0
    %v3816 = vadd.f32 0.0, %v3815
    %v3817 = vpop.f32.mrf.mxu0
    %v3818 = vpop.f32.mrf.mxu0
    %3819 = vdwg.mxu0
    %3820 = vmatprep.subr.bf16.mxu0 %v2870
    %3821 = vmatpush1.bf16.msra.mxu0 %v2869
    %3822 = vmatprep.subr.bf16.mxu0 %v2866
    %3823 = vmatpush1.bf16.msra.mxu0 %v2865
    %3824 = vmatprep.subr.bf16.mxu0 %v2862
    %3825 = vmatpush1.bf16.msra.mxu0 %v2861
    %3826 = vmatprep.subr.bf16.mxu0 %v2858
    %3827 = vmatpush1.bf16.msra.mxu0 %v2857
    %3828 = vmatprep.subr.bf16.mxu0 %v2854
    %3829 = vmatpush1.bf16.msra.mxu0 %v2853
    %3830 = vmatprep.subr.bf16.mxu0 %v2850
    %3831 = vmatpush1.bf16.msra.mxu0 %v2849
    %3832 = vmatprep.subr.bf16.mxu0 %v2846
    %3833 = vmatpush1.bf16.msra.mxu0 %v2845
    %3834 = vmatprep.subr.bf16.mxu0 %v2842
    %3835 = vmatpush1.bf16.msra.mxu0 %v2841
    %3836 = vmatprep.subr.bf16.mxu0 0
    %3837 = vmatpush2.bf16.msra.mxu0 0
    %3838 = vmatprep.subr.bf16.mxu0 0
    %3839 = vmatpush2.bf16.msra.mxu0 0
    %3840 = vmatprep.subr.bf16.mxu0 0
    %3841 = vmatpush2.bf16.msra.mxu0 0
    %3842 = vmatprep.subr.bf16.mxu0 0
    %3843 = vmatpush2.bf16.msra.mxu0 0
    %3844 = vmatprep.subr.bf16.mxu0 0
    %3845 = vmatpush2.bf16.msra.mxu0 0
    %3846 = vmatprep.subr.bf16.mxu0 0
    %3847 = vmatpush2.bf16.msra.mxu0 0
    %3848 = vmatprep.subr.bf16.mxu0 0
    %3849 = vmatpush2.bf16.msra.mxu0 0
    %3850 = vmatprep.subr.bf16.mxu0 0
    %3851 = vmatpush2.bf16.msra.mxu0 0
    %3852 = vmatprep.mubr.bf16.mxu0 0
    %3853 = vmatmul.mubr.bf16.gmra.mxu0 %v3020
    %v3854 = vpop.f32.mrf.mxu0
    %v3855 = vadd.f32 0.0, %v3854
    %v3856 = vpop.f32.mrf.mxu0
    %v3857 = vadd.f32 0.0, %v3856
    %v3858 = vpop.f32.mrf.mxu0
    %v3859 = vpop.f32.mrf.mxu0
    %3860 = vdwg.mxu0
    %v3861 = vadd.f32 %v3732, %v3814
    %v3862 = vadd.f32 %v3734, %v3816
    %v3863 = vadd.f32 %v3773, %v3855
    %v3864 = vadd.f32 %v3775, %v3857
    %v3865 = vxor.u32 %v3861, 2147483648
    %v3866 = vxor.u32 %v3862, 2147483648
    %v3867 = vxor.u32 %v3863, 2147483648
    %v3868 = vxor.u32 %v3864, 2147483648
    %v3869 = vmul.f32 %v3865, 1.442695
    %v3870 = vpow.pop %v3869
    %v3871 = vmul.f32 %v3866, 1.442695
    %v3872 = vpow.pop %v3871
    %v3873 = vmul.f32 %v3867, 1.442695
    %v3874 = vpow.pop %v3873
    %v3875 = vmul.f32 %v3868, 1.442695
    %v3876 = vpow.pop %v3875
    %v3877 = vadd.f32 %v3870, 1.0
    %v3878 = vadd.f32 %v3872, 1.0
    %v3879 = vadd.f32 %v3874, 1.0
    %v3880 = vadd.f32 %v3876, 1.0
    %v3881 = vrcp.pop %v3877
    %v3882 = vmul.f32 1.0, %v3881
    %v3883 = vrcp.pop %v3878
    %v3884 = vmul.f32 1.0, %v3883
    %v3885 = vrcp.pop %v3879
    %v3886 = vmul.f32 1.0, %v3885
    %v3887 = vrcp.pop %v3880
    %v3888 = vmul.f32 1.0, %v3887
    %v3889 = vmul.f32 %v3886, 2.0
    %v3890 = vsub.f32 %v3889, 1.0
    %v3891 = vmul.f32 %v3884, %v3017
    %v3892 = vmul.f32 %v3882, %v3890
    %v3893 = vadd.f32 %v3891, %v3892
    %v3894 = vtanh.pop %v3893
    %v3895 = vmul.f32 %v3888, %v3894
    %v3896 = vpack.c.bf16 %v3895, %v3895
    %3897 = vmatprep.subr.bf16.mxu0 %v3167
    %3898 = vmatpush1.bf16.msra.mxu0 %v3166
    %3899 = vmatprep.subr.bf16.mxu0 %v3163
    %3900 = vmatpush1.bf16.msra.mxu0 %v3162
    %3901 = vmatprep.subr.bf16.mxu0 %v3159
    %3902 = vmatpush1.bf16.msra.mxu0 %v3158
    %3903 = vmatprep.subr.bf16.mxu0 %v3155
    %3904 = vmatpush1.bf16.msra.mxu0 %v3154
    %3905 = vmatprep.subr.bf16.mxu0 %v3151
    %3906 = vmatpush1.bf16.msra.mxu0 %v3150
    %3907 = vmatprep.subr.bf16.mxu0 %v3147
    %3908 = vmatpush1.bf16.msra.mxu0 %v3146
    %3909 = vmatprep.subr.bf16.mxu0 %v3143
    %3910 = vmatpush1.bf16.msra.mxu0 %v3142
    %3911 = vmatprep.subr.bf16.mxu0 %v3139
    %3912 = vmatpush1.bf16.msra.mxu0 %v3138
    %3913 = vmatprep.subr.bf16.mxu0 0
    %3914 = vmatpush2.bf16.msra.mxu0 0
    %3915 = vmatprep.subr.bf16.mxu0 0
    %3916 = vmatpush2.bf16.msra.mxu0 0
    %3917 = vmatprep.subr.bf16.mxu0 0
    %3918 = vmatpush2.bf16.msra.mxu0 0
    %3919 = vmatprep.subr.bf16.mxu0 0
    %3920 = vmatpush2.bf16.msra.mxu0 0
    %3921 = vmatprep.subr.bf16.mxu0 0
    %3922 = vmatpush2.bf16.msra.mxu0 0
    %3923 = vmatprep.subr.bf16.mxu0 0
    %3924 = vmatpush2.bf16.msra.mxu0 0
    %3925 = vmatprep.subr.bf16.mxu0 0
    %3926 = vmatpush2.bf16.msra.mxu0 0
    %3927 = vmatprep.subr.bf16.mxu0 0
    %3928 = vmatpush2.bf16.msra.mxu0 0
    %3929 = vmatprep.mubr.bf16.mxu0 0
    %3930 = vmatmul.mubr.bf16.gmra.mxu0 %v3896
    %v3931 = vpop.f32.mrf.mxu0
    %v3932 = vadd.f32 %v3025, %v3931
    %v3933 = vpop.f32.mrf.mxu0
    %v3934 = vadd.f32 %v3029, %v3933
    %v3935 = vpop.f32.mrf.mxu0
    %v3936 = vpop.f32.mrf.mxu0
    %3937 = vdwg.mxu0
    %3938 = vmatprep.subr.bf16.mxu0 %v3169
    %3939 = vmatpush1.bf16.msra.mxu0 %v3168
    %3940 = vmatprep.subr.bf16.mxu0 %v3165
    %3941 = vmatpush1.bf16.msra.mxu0 %v3164
    %3942 = vmatprep.subr.bf16.mxu0 %v3161
    %3943 = vmatpush1.bf16.msra.mxu0 %v3160
    %3944 = vmatprep.subr.bf16.mxu0 %v3157
    %3945 = vmatpush1.bf16.msra.mxu0 %v3156
    %3946 = vmatprep.subr.bf16.mxu0 %v3153
    %3947 = vmatpush1.bf16.msra.mxu0 %v3152
    %3948 = vmatprep.subr.bf16.mxu0 %v3149
    %3949 = vmatpush1.bf16.msra.mxu0 %v3148
    %3950 = vmatprep.subr.bf16.mxu0 %v3145
    %3951 = vmatpush1.bf16.msra.mxu0 %v3144
    %3952 = vmatprep.subr.bf16.mxu0 %v3141
    %3953 = vmatpush1.bf16.msra.mxu0 %v3140
    %3954 = vmatprep.subr.bf16.mxu0 0
    %3955 = vmatpush2.bf16.msra.mxu0 0
    %3956 = vmatprep.subr.bf16.mxu0 0
    %3957 = vmatpush2.bf16.msra.mxu0 0
    %3958 = vmatprep.subr.bf16.mxu0 0
    %3959 = vmatpush2.bf16.msra.mxu0 0
    %3960 = vmatprep.subr.bf16.mxu0 0
    %3961 = vmatpush2.bf16.msra.mxu0 0
    %3962 = vmatprep.subr.bf16.mxu0 0
    %3963 = vmatpush2.bf16.msra.mxu0 0
    %3964 = vmatprep.subr.bf16.mxu0 0
    %3965 = vmatpush2.bf16.msra.mxu0 0
    %3966 = vmatprep.subr.bf16.mxu0 0
    %3967 = vmatpush2.bf16.msra.mxu0 0
    %3968 = vmatprep.subr.bf16.mxu0 0
    %3969 = vmatpush2.bf16.msra.mxu0 0
    %3970 = vmatprep.mubr.bf16.mxu0 0
    %3971 = vmatmul.mubr.bf16.gmra.mxu0 %v3896
    %v3972 = vpop.f32.mrf.mxu0
    %v3973 = vadd.f32 %v3033, %v3972
    %v3974 = vpop.f32.mrf.mxu0
    %v3975 = vadd.f32 %v3037, %v3974
    %v3976 = vpop.f32.mrf.mxu0
    %v3977 = vpop.f32.mrf.mxu0
    %3978 = vdwg.mxu0
    %v3979 = vpack.c.bf16 %v3560, %v3560
    %3980 = vmatprep.subr.bf16.mxu0 %v3409
    %3981 = vmatpush1.bf16.msra.mxu0 %v3408
    %3982 = vmatprep.subr.bf16.mxu0 %v3405
    %3983 = vmatpush1.bf16.msra.mxu0 %v3404
    %3984 = vmatprep.subr.bf16.mxu0 %v3401
    %3985 = vmatpush1.bf16.msra.mxu0 %v3400
    %3986 = vmatprep.subr.bf16.mxu0 %v3397
    %3987 = vmatpush1.bf16.msra.mxu0 %v3396
    %3988 = vmatprep.subr.bf16.mxu0 %v3393
    %3989 = vmatpush1.bf16.msra.mxu0 %v3392
    %3990 = vmatprep.subr.bf16.mxu0 %v3389
    %3991 = vmatpush1.bf16.msra.mxu0 %v3388
    %3992 = vmatprep.subr.bf16.mxu0 %v3385
    %3993 = vmatpush1.bf16.msra.mxu0 %v3384
    %3994 = vmatprep.subr.bf16.mxu0 %v3381
    %3995 = vmatpush1.bf16.msra.mxu0 %v3380
    %3996 = vmatprep.subr.bf16.mxu0 0
    %3997 = vmatpush2.bf16.msra.mxu0 0
    %3998 = vmatprep.subr.bf16.mxu0 0
    %3999 = vmatpush2.bf16.msra.mxu0 0
    %4000 = vmatprep.subr.bf16.mxu0 0
    %4001 = vmatpush2.bf16.msra.mxu0 0
    %4002 = vmatprep.subr.bf16.mxu0 0
    %4003 = vmatpush2.bf16.msra.mxu0 0
    %4004 = vmatprep.subr.bf16.mxu0 0
    %4005 = vmatpush2.bf16.msra.mxu0 0
    %4006 = vmatprep.subr.bf16.mxu0 0
    %4007 = vmatpush2.bf16.msra.mxu0 0
    %4008 = vmatprep.subr.bf16.mxu0 0
    %4009 = vmatpush2.bf16.msra.mxu0 0
    %4010 = vmatprep.subr.bf16.mxu0 0
    %4011 = vmatpush2.bf16.msra.mxu0 0
    %4012 = vmatprep.mubr.bf16.mxu0 0
    %4013 = vmatmul.mubr.bf16.gmra.mxu0 %v3979
    %v4014 = vpop.f32.mrf.mxu0
    %v4015 = vadd.f32 0.0, %v4014
    %v4016 = vpop.f32.mrf.mxu0
    %v4017 = vadd.f32 0.0, %v4016
    %v4018 = vpop.f32.mrf.mxu0
    %v4019 = vpop.f32.mrf.mxu0
    %4020 = vdwg.mxu0
    %4021 = vmatprep.subr.bf16.mxu0 %v3411
    %4022 = vmatpush1.bf16.msra.mxu0 %v3410
    %4023 = vmatprep.subr.bf16.mxu0 %v3407
    %4024 = vmatpush1.bf16.msra.mxu0 %v3406
    %4025 = vmatprep.subr.bf16.mxu0 %v3403
    %4026 = vmatpush1.bf16.msra.mxu0 %v3402
    %4027 = vmatprep.subr.bf16.mxu0 %v3399
    %4028 = vmatpush1.bf16.msra.mxu0 %v3398
    %4029 = vmatprep.subr.bf16.mxu0 %v3395
    %4030 = vmatpush1.bf16.msra.mxu0 %v3394
    %4031 = vmatprep.subr.bf16.mxu0 %v3391
    %4032 = vmatpush1.bf16.msra.mxu0 %v3390
    %4033 = vmatprep.subr.bf16.mxu0 %v3387
    %4034 = vmatpush1.bf16.msra.mxu0 %v3386
    %4035 = vmatprep.subr.bf16.mxu0 %v3383
    %4036 = vmatpush1.bf16.msra.mxu0 %v3382
    %4037 = vmatprep.subr.bf16.mxu0 0
    %4038 = vmatpush2.bf16.msra.mxu0 0
    %4039 = vmatprep.subr.bf16.mxu0 0
    %4040 = vmatpush2.bf16.msra.mxu0 0
    %4041 = vmatprep.subr.bf16.mxu0 0
    %4042 = vmatpush2.bf16.msra.mxu0 0
    %4043 = vmatprep.subr.bf16.mxu0 0
    %4044 = vmatpush2.bf16.msra.mxu0 0
    %4045 = vmatprep.subr.bf16.mxu0 0
    %4046 = vmatpush2.bf16.msra.mxu0 0
    %4047 = vmatprep.subr.bf16.mxu0 0
    %4048 = vmatpush2.bf16.msra.mxu0 0
    %4049 = vmatprep.subr.bf16.mxu0 0
    %4050 = vmatpush2.bf16.msra.mxu0 0
    %4051 = vmatprep.subr.bf16.mxu0 0
    %4052 = vmatpush2.bf16.msra.mxu0 0
    %4053 = vmatprep.mubr.bf16.mxu0 0
    %4054 = vmatmul.mubr.bf16.gmra.mxu0 %v3979
    %v4055 = vpop.f32.mrf.mxu0
    %v4056 = vadd.f32 0.0, %v4055
    %v4057 = vpop.f32.mrf.mxu0
    %v4058 = vadd.f32 0.0, %v4057
    %v4059 = vpop.f32.mrf.mxu0
    %v4060 = vpop.f32.mrf.mxu0
    %4061 = vdwg.mxu0
    %v4062 = vadd.f32 %v3932, %v4015
    %v4063 = vadd.f32 %v3934, %v4017
    %v4064 = vadd.f32 %v3973, %v4056
    %v4065 = vadd.f32 %v3975, %v4058
    %v4066 = vxor.u32 %v4062, 2147483648
    %v4067 = vxor.u32 %v4063, 2147483648
    %v4068 = vxor.u32 %v4064, 2147483648
    %v4069 = vxor.u32 %v4065, 2147483648
    %v4070 = vmul.f32 %v4066, 1.442695
    %v4071 = vpow.pop %v4070
    %v4072 = vmul.f32 %v4067, 1.442695
    %v4073 = vpow.pop %v4072
    %v4074 = vmul.f32 %v4068, 1.442695
    %v4075 = vpow.pop %v4074
    %v4076 = vmul.f32 %v4069, 1.442695
    %v4077 = vpow.pop %v4076
    %v4078 = vadd.f32 %v4071, 1.0
    %v4079 = vadd.f32 %v4073, 1.0
    %v4080 = vadd.f32 %v4075, 1.0
    %v4081 = vadd.f32 %v4077, 1.0
    %v4082 = vrcp.pop %v4078
    %v4083 = vmul.f32 1.0, %v4082
    %v4084 = vrcp.pop %v4079
    %v4085 = vmul.f32 1.0, %v4084
    %v4086 = vrcp.pop %v4080
    %v4087 = vmul.f32 1.0, %v4086
    %v4088 = vrcp.pop %v4081
    %v4089 = vmul.f32 1.0, %v4088
    %v4090 = vmul.f32 %v4087, 2.0
    %v4091 = vsub.f32 %v4090, 1.0
    %v4092 = vmul.f32 %v4085, %v3558
    %v4093 = vmul.f32 %v4083, %v4091
    %v4094 = vadd.f32 %v4092, %v4093
    %v4095 = vtanh.pop %v4094
    %v4096 = vmul.f32 %v4089, %v4095
    %4097 = vmatprep.subr.bf16.mxu0 %v2327
    %4098 = vmatpush1.bf16.msra.mxu0 %v2326
    %4099 = vmatprep.subr.bf16.mxu0 %v2323
    %4100 = vmatpush1.bf16.msra.mxu0 %v2322
    %4101 = vmatprep.subr.bf16.mxu0 %v2319
    %4102 = vmatpush1.bf16.msra.mxu0 %v2318
    %4103 = vmatprep.subr.bf16.mxu0 %v2315
    %4104 = vmatpush1.bf16.msra.mxu0 %v2314
    %4105 = vmatprep.subr.bf16.mxu0 %v2311
    %4106 = vmatpush1.bf16.msra.mxu0 %v2310
    %4107 = vmatprep.subr.bf16.mxu0 %v2307
    %4108 = vmatpush1.bf16.msra.mxu0 %v2306
    %4109 = vmatprep.subr.bf16.mxu0 %v2303
    %4110 = vmatpush1.bf16.msra.mxu0 %v2302
    %4111 = vmatprep.subr.bf16.mxu0 %v2299
    %4112 = vmatpush1.bf16.msra.mxu0 %v2298
    %4113 = vmatprep.subr.bf16.mxu0 0
    %4114 = vmatpush2.bf16.msra.mxu0 0
    %4115 = vmatprep.subr.bf16.mxu0 0
    %4116 = vmatpush2.bf16.msra.mxu0 0
    %4117 = vmatprep.subr.bf16.mxu0 0
    %4118 = vmatpush2.bf16.msra.mxu0 0
    %4119 = vmatprep.subr.bf16.mxu0 0
    %4120 = vmatpush2.bf16.msra.mxu0 0
    %4121 = vmatprep.subr.bf16.mxu0 0
    %4122 = vmatpush2.bf16.msra.mxu0 0
    %4123 = vmatprep.subr.bf16.mxu0 0
    %4124 = vmatpush2.bf16.msra.mxu0 0
    %4125 = vmatprep.subr.bf16.mxu0 0
    %4126 = vmatpush2.bf16.msra.mxu0 0
    %4127 = vmatprep.subr.bf16.mxu0 0
    %4128 = vmatpush2.bf16.msra.mxu0 0
    %4129 = vmatprep.mubr.bf16.mxu0 0
    %4130 = vmatmul.mubr.bf16.gmra.mxu0 %v3695
    %v4131 = vpop.f32.mrf.mxu0
    %v4132 = vadd.f32 0.0, %v4131
    %v4133 = vpop.f32.mrf.mxu0
    %v4134 = vadd.f32 0.0, %v4133
    %v4135 = vpop.f32.mrf.mxu0
    %v4136 = vpop.f32.mrf.mxu0
    %4137 = vdwg.mxu0
    %4138 = vmatprep.subr.bf16.mxu0 %v2329
    %4139 = vmatpush1.bf16.msra.mxu0 %v2328
    %4140 = vmatprep.subr.bf16.mxu0 %v2325
    %4141 = vmatpush1.bf16.msra.mxu0 %v2324
    %4142 = vmatprep.subr.bf16.mxu0 %v2321
    %4143 = vmatpush1.bf16.msra.mxu0 %v2320
    %4144 = vmatprep.subr.bf16.mxu0 %v2317
    %4145 = vmatpush1.bf16.msra.mxu0 %v2316
    %4146 = vmatprep.subr.bf16.mxu0 %v2313
    %4147 = vmatpush1.bf16.msra.mxu0 %v2312
    %4148 = vmatprep.subr.bf16.mxu0 %v2309
    %4149 = vmatpush1.bf16.msra.mxu0 %v2308
    %4150 = vmatprep.subr.bf16.mxu0 %v2305
    %4151 = vmatpush1.bf16.msra.mxu0 %v2304
    %4152 = vmatprep.subr.bf16.mxu0 %v2301
    %4153 = vmatpush1.bf16.msra.mxu0 %v2300
    %4154 = vmatprep.subr.bf16.mxu0 0
    %4155 = vmatpush2.bf16.msra.mxu0 0
    %4156 = vmatprep.subr.bf16.mxu0 0
    %4157 = vmatpush2.bf16.msra.mxu0 0
    %4158 = vmatprep.subr.bf16.mxu0 0
    %4159 = vmatpush2.bf16.msra.mxu0 0
    %4160 = vmatprep.subr.bf16.mxu0 0
    %4161 = vmatpush2.bf16.msra.mxu0 0
    %4162 = vmatprep.subr.bf16.mxu0 0
    %4163 = vmatpush2.bf16.msra.mxu0 0
    %4164 = vmatprep.subr.bf16.mxu0 0
    %4165 = vmatpush2.bf16.msra.mxu0 0
    %4166 = vmatprep.subr.bf16.mxu0 0
    %4167 = vmatpush2.bf16.msra.mxu0 0
    %4168 = vmatprep.subr.bf16.mxu0 0
    %4169 = vmatpush2.bf16.msra.mxu0 0
    %4170 = vmatprep.mubr.bf16.mxu0 0
    %4171 = vmatmul.mubr.bf16.gmra.mxu0 %v3695
    %v4172 = vpop.f32.mrf.mxu0
    %v4173 = vadd.f32 0.0, %v4172
    %v4174 = vpop.f32.mrf.mxu0
    %v4175 = vadd.f32 0.0, %v4174
    %v4176 = vpop.f32.mrf.mxu0
    %v4177 = vpop.f32.mrf.mxu0
    %4178 = vdwg.mxu0
    %v4183 = vrot.slane %v4132, 4
    %v4184 = vrot.slane %v4134, 4
    %v4185 = vrot.slane %v4173, 4
    %v4186 = vrot.slane %v4175, 4
    %v4191 = vadd.f32 %v1860, %v4183
    %v4192 = vadd.f32 %v1862, %v4184
    %v4193 = vadd.f32 %v2032, %v4185
    %v4194 = vadd.f32 %v2034, %v4186
    %v4195 = vxor.u32 %v4191, 2147483648
    %v4196 = vxor.u32 %v4192, 2147483648
    %v4197 = vxor.u32 %v4193, 2147483648
    %v4198 = vxor.u32 %v4194, 2147483648
    %v4199 = vmul.f32 %v4195, 1.442695
    %v4200 = vpow.pop %v4199
    %v4201 = vmul.f32 %v4196, 1.442695
    %v4202 = vpow.pop %v4201
    %v4203 = vmul.f32 %v4197, 1.442695
    %v4204 = vpow.pop %v4203
    %v4205 = vmul.f32 %v4198, 1.442695
    %v4206 = vpow.pop %v4205
    %v4207 = vadd.f32 %v4200, 1.0
    %v4208 = vadd.f32 %v4202, 1.0
    %v4209 = vadd.f32 %v4204, 1.0
    %v4210 = vadd.f32 %v4206, 1.0
    %v4211 = vrcp.pop %v4207
    %v4212 = vmul.f32 1.0, %v4211
    %v4213 = vrcp.pop %v4208
    %v4214 = vmul.f32 1.0, %v4213
    %v4215 = vrcp.pop %v4209
    %v4216 = vmul.f32 1.0, %v4215
    %v4217 = vrcp.pop %v4210
    %v4218 = vmul.f32 1.0, %v4217
    %v4219 = vmul.f32 %v4216, 2.0
    %v4220 = vsub.f32 %v4219, 1.0
    %v4222 = vrot.slane %v3690, 6
    %v4224 = vmul.f32 %v4214, %v4222
    %v4225 = vmul.f32 %v4212, %v4220
    %v4226 = vadd.f32 %v4224, %v4225
    %v4227 = vtanh.pop %v4226
    %v4228 = vmul.f32 %v4218, %v4227
    %v4229 = vpack.c.bf16 %v4228, %v4228
    %v4231 = vrot.slane %v4229, 2
    %4233 = vmatprep.subr.bf16.mxu0 %v2626
    %4234 = vmatpush1.bf16.msra.mxu0 %v2625
    %4235 = vmatprep.subr.bf16.mxu0 %v2622
    %4236 = vmatpush1.bf16.msra.mxu0 %v2621
    %4237 = vmatprep.subr.bf16.mxu0 %v2618
    %4238 = vmatpush1.bf16.msra.mxu0 %v2617
    %4239 = vmatprep.subr.bf16.mxu0 %v2614
    %4240 = vmatpush1.bf16.msra.mxu0 %v2613
    %4241 = vmatprep.subr.bf16.mxu0 %v2610
    %4242 = vmatpush1.bf16.msra.mxu0 %v2609
    %4243 = vmatprep.subr.bf16.mxu0 %v2606
    %4244 = vmatpush1.bf16.msra.mxu0 %v2605
    %4245 = vmatprep.subr.bf16.mxu0 %v2602
    %4246 = vmatpush1.bf16.msra.mxu0 %v2601
    %4247 = vmatprep.subr.bf16.mxu0 %v2598
    %4248 = vmatpush1.bf16.msra.mxu0 %v2597
    %4249 = vmatprep.subr.bf16.mxu0 0
    %4250 = vmatpush2.bf16.msra.mxu0 0
    %4251 = vmatprep.subr.bf16.mxu0 0
    %4252 = vmatpush2.bf16.msra.mxu0 0
    %4253 = vmatprep.subr.bf16.mxu0 0
    %4254 = vmatpush2.bf16.msra.mxu0 0
    %4255 = vmatprep.subr.bf16.mxu0 0
    %4256 = vmatpush2.bf16.msra.mxu0 0
    %4257 = vmatprep.subr.bf16.mxu0 0
    %4258 = vmatpush2.bf16.msra.mxu0 0
    %4259 = vmatprep.subr.bf16.mxu0 0
    %4260 = vmatpush2.bf16.msra.mxu0 0
    %4261 = vmatprep.subr.bf16.mxu0 0
    %4262 = vmatpush2.bf16.msra.mxu0 0
    %4263 = vmatprep.subr.bf16.mxu0 0
    %4264 = vmatpush2.bf16.msra.mxu0 0
    %4265 = vmatprep.mubr.bf16.mxu0 0
    %4266 = vmatmul.mubr.bf16.gmra.mxu0 %v4231
    %v4267 = vpop.f32.mrf.mxu0
    %v4268 = vadd.f32 %v2484, %v4267
    %v4269 = vpop.f32.mrf.mxu0
    %v4270 = vadd.f32 %v2488, %v4269
    %v4271 = vpop.f32.mrf.mxu0
    %v4272 = vpop.f32.mrf.mxu0
    %4273 = vdwg.mxu0
    %4274 = vmatprep.subr.bf16.mxu0 %v2628
    %4275 = vmatpush1.bf16.msra.mxu0 %v2627
    %4276 = vmatprep.subr.bf16.mxu0 %v2624
    %4277 = vmatpush1.bf16.msra.mxu0 %v2623
    %4278 = vmatprep.subr.bf16.mxu0 %v2620
    %4279 = vmatpush1.bf16.msra.mxu0 %v2619
    %4280 = vmatprep.subr.bf16.mxu0 %v2616
    %4281 = vmatpush1.bf16.msra.mxu0 %v2615
    %4282 = vmatprep.subr.bf16.mxu0 %v2612
    %4283 = vmatpush1.bf16.msra.mxu0 %v2611
    %4284 = vmatprep.subr.bf16.mxu0 %v2608
    %4285 = vmatpush1.bf16.msra.mxu0 %v2607
    %4286 = vmatprep.subr.bf16.mxu0 %v2604
    %4287 = vmatpush1.bf16.msra.mxu0 %v2603
    %4288 = vmatprep.subr.bf16.mxu0 %v2600
    %4289 = vmatpush1.bf16.msra.mxu0 %v2599
    %4290 = vmatprep.subr.bf16.mxu0 0
    %4291 = vmatpush2.bf16.msra.mxu0 0
    %4292 = vmatprep.subr.bf16.mxu0 0
    %4293 = vmatpush2.bf16.msra.mxu0 0
    %4294 = vmatprep.subr.bf16.mxu0 0
    %4295 = vmatpush2.bf16.msra.mxu0 0
    %4296 = vmatprep.subr.bf16.mxu0 0
    %4297 = vmatpush2.bf16.msra.mxu0 0
    %4298 = vmatprep.subr.bf16.mxu0 0
    %4299 = vmatpush2.bf16.msra.mxu0 0
    %4300 = vmatprep.subr.bf16.mxu0 0
    %4301 = vmatpush2.bf16.msra.mxu0 0
    %4302 = vmatprep.subr.bf16.mxu0 0
    %4303 = vmatpush2.bf16.msra.mxu0 0
    %4304 = vmatprep.subr.bf16.mxu0 0
    %4305 = vmatpush2.bf16.msra.mxu0 0
    %4306 = vmatprep.mubr.bf16.mxu0 0
    %4307 = vmatmul.mubr.bf16.gmra.mxu0 %v4231
    %v4308 = vpop.f32.mrf.mxu0
    %v4309 = vadd.f32 %v2492, %v4308
    %v4310 = vpop.f32.mrf.mxu0
    %v4311 = vadd.f32 %v2496, %v4310
    %v4312 = vpop.f32.mrf.mxu0
    %v4313 = vpop.f32.mrf.mxu0
    %4314 = vdwg.mxu0
    %4315 = vmatprep.subr.bf16.mxu0 %v2868
    %4316 = vmatpush1.bf16.msra.mxu0 %v2867
    %4317 = vmatprep.subr.bf16.mxu0 %v2864
    %4318 = vmatpush1.bf16.msra.mxu0 %v2863
    %4319 = vmatprep.subr.bf16.mxu0 %v2860
    %4320 = vmatpush1.bf16.msra.mxu0 %v2859
    %4321 = vmatprep.subr.bf16.mxu0 %v2856
    %4322 = vmatpush1.bf16.msra.mxu0 %v2855
    %4323 = vmatprep.subr.bf16.mxu0 %v2852
    %4324 = vmatpush1.bf16.msra.mxu0 %v2851
    %4325 = vmatprep.subr.bf16.mxu0 %v2848
    %4326 = vmatpush1.bf16.msra.mxu0 %v2847
    %4327 = vmatprep.subr.bf16.mxu0 %v2844
    %4328 = vmatpush1.bf16.msra.mxu0 %v2843
    %4329 = vmatprep.subr.bf16.mxu0 %v2840
    %4330 = vmatpush1.bf16.msra.mxu0 %v2839
    %4331 = vmatprep.subr.bf16.mxu0 0
    %4332 = vmatpush2.bf16.msra.mxu0 0
    %4333 = vmatprep.subr.bf16.mxu0 0
    %4334 = vmatpush2.bf16.msra.mxu0 0
    %4335 = vmatprep.subr.bf16.mxu0 0
    %4336 = vmatpush2.bf16.msra.mxu0 0
    %4337 = vmatprep.subr.bf16.mxu0 0
    %4338 = vmatpush2.bf16.msra.mxu0 0
    %4339 = vmatprep.subr.bf16.mxu0 0
    %4340 = vmatpush2.bf16.msra.mxu0 0
    %4341 = vmatprep.subr.bf16.mxu0 0
    %4342 = vmatpush2.bf16.msra.mxu0 0
    %4343 = vmatprep.subr.bf16.mxu0 0
    %4344 = vmatpush2.bf16.msra.mxu0 0
    %4345 = vmatprep.subr.bf16.mxu0 0
    %4346 = vmatpush2.bf16.msra.mxu0 0
    %4347 = vmatprep.mubr.bf16.mxu0 0
    %4348 = vmatmul.mubr.bf16.gmra.mxu0 %v3896
    %v4349 = vpop.f32.mrf.mxu0
    %v4350 = vadd.f32 0.0, %v4349
    %v4351 = vpop.f32.mrf.mxu0
    %v4352 = vadd.f32 0.0, %v4351
    %v4353 = vpop.f32.mrf.mxu0
    %v4354 = vpop.f32.mrf.mxu0
    %4355 = vdwg.mxu0
    %4356 = vmatprep.subr.bf16.mxu0 %v2870
    %4357 = vmatpush1.bf16.msra.mxu0 %v2869
    %4358 = vmatprep.subr.bf16.mxu0 %v2866
    %4359 = vmatpush1.bf16.msra.mxu0 %v2865
    %4360 = vmatprep.subr.bf16.mxu0 %v2862
    %4361 = vmatpush1.bf16.msra.mxu0 %v2861
    %4362 = vmatprep.subr.bf16.mxu0 %v2858
    %4363 = vmatpush1.bf16.msra.mxu0 %v2857
    %4364 = vmatprep.subr.bf16.mxu0 %v2854
    %4365 = vmatpush1.bf16.msra.mxu0 %v2853
    %4366 = vmatprep.subr.bf16.mxu0 %v2850
    %4367 = vmatpush1.bf16.msra.mxu0 %v2849
    %4368 = vmatprep.subr.bf16.mxu0 %v2846
    %4369 = vmatpush1.bf16.msra.mxu0 %v2845
    %4370 = vmatprep.subr.bf16.mxu0 %v2842
    %4371 = vmatpush1.bf16.msra.mxu0 %v2841
    %4372 = vmatprep.subr.bf16.mxu0 0
    %4373 = vmatpush2.bf16.msra.mxu0 0
    %4374 = vmatprep.subr.bf16.mxu0 0
    %4375 = vmatpush2.bf16.msra.mxu0 0
    %4376 = vmatprep.subr.bf16.mxu0 0
    %4377 = vmatpush2.bf16.msra.mxu0 0
    %4378 = vmatprep.subr.bf16.mxu0 0
    %4379 = vmatpush2.bf16.msra.mxu0 0
    %4380 = vmatprep.subr.bf16.mxu0 0
    %4381 = vmatpush2.bf16.msra.mxu0 0
    %4382 = vmatprep.subr.bf16.mxu0 0
    %4383 = vmatpush2.bf16.msra.mxu0 0
    %4384 = vmatprep.subr.bf16.mxu0 0
    %4385 = vmatpush2.bf16.msra.mxu0 0
    %4386 = vmatprep.subr.bf16.mxu0 0
    %4387 = vmatpush2.bf16.msra.mxu0 0
    %4388 = vmatprep.mubr.bf16.mxu0 0
    %4389 = vmatmul.mubr.bf16.gmra.mxu0 %v3896
    %v4390 = vpop.f32.mrf.mxu0
    %v4391 = vadd.f32 0.0, %v4390
    %v4392 = vpop.f32.mrf.mxu0
    %v4393 = vadd.f32 0.0, %v4392
    %v4394 = vpop.f32.mrf.mxu0
    %v4395 = vpop.f32.mrf.mxu0
    %4396 = vdwg.mxu0
    %v4397 = vadd.f32 %v4268, %v4350
    %v4398 = vadd.f32 %v4270, %v4352
    %v4399 = vadd.f32 %v4309, %v4391
    %v4400 = vadd.f32 %v4311, %v4393
    %v4401 = vxor.u32 %v4397, 2147483648
    %v4402 = vxor.u32 %v4398, 2147483648
    %v4403 = vxor.u32 %v4399, 2147483648
    %v4404 = vxor.u32 %v4400, 2147483648
    %v4405 = vmul.f32 %v4401, 1.442695
    %v4406 = vpow.pop %v4405
    %v4407 = vmul.f32 %v4402, 1.442695
    %v4408 = vpow.pop %v4407
    %v4409 = vmul.f32 %v4403, 1.442695
    %v4410 = vpow.pop %v4409
    %v4411 = vmul.f32 %v4404, 1.442695
    %v4412 = vpow.pop %v4411
    %v4413 = vadd.f32 %v4406, 1.0
    %v4414 = vadd.f32 %v4408, 1.0
    %v4415 = vadd.f32 %v4410, 1.0
    %v4416 = vadd.f32 %v4412, 1.0
    %v4417 = vrcp.pop %v4413
    %v4418 = vmul.f32 1.0, %v4417
    %v4419 = vrcp.pop %v4414
    %v4420 = vmul.f32 1.0, %v4419
    %v4421 = vrcp.pop %v4415
    %v4422 = vmul.f32 1.0, %v4421
    %v4423 = vrcp.pop %v4416
    %v4424 = vmul.f32 1.0, %v4423
    %v4425 = vmul.f32 %v4422, 2.0
    %v4426 = vsub.f32 %v4425, 1.0
    %v4427 = vmul.f32 %v4420, %v3893
    %v4428 = vmul.f32 %v4418, %v4426
    %v4429 = vadd.f32 %v4427, %v4428
    %v4430 = vtanh.pop %v4429
    %v4431 = vmul.f32 %v4424, %v4430
    %v4432 = vpack.c.bf16 %v4431, %v4431
    %4433 = vmatprep.subr.bf16.mxu0 %v3167
    %4434 = vmatpush1.bf16.msra.mxu0 %v3166
    %4435 = vmatprep.subr.bf16.mxu0 %v3163
    %4436 = vmatpush1.bf16.msra.mxu0 %v3162
    %4437 = vmatprep.subr.bf16.mxu0 %v3159
    %4438 = vmatpush1.bf16.msra.mxu0 %v3158
    %4439 = vmatprep.subr.bf16.mxu0 %v3155
    %4440 = vmatpush1.bf16.msra.mxu0 %v3154
    %4441 = vmatprep.subr.bf16.mxu0 %v3151
    %4442 = vmatpush1.bf16.msra.mxu0 %v3150
    %4443 = vmatprep.subr.bf16.mxu0 %v3147
    %4444 = vmatpush1.bf16.msra.mxu0 %v3146
    %4445 = vmatprep.subr.bf16.mxu0 %v3143
    %4446 = vmatpush1.bf16.msra.mxu0 %v3142
    %4447 = vmatprep.subr.bf16.mxu0 %v3139
    %4448 = vmatpush1.bf16.msra.mxu0 %v3138
    %4449 = vmatprep.subr.bf16.mxu0 0
    %4450 = vmatpush2.bf16.msra.mxu0 0
    %4451 = vmatprep.subr.bf16.mxu0 0
    %4452 = vmatpush2.bf16.msra.mxu0 0
    %4453 = vmatprep.subr.bf16.mxu0 0
    %4454 = vmatpush2.bf16.msra.mxu0 0
    %4455 = vmatprep.subr.bf16.mxu0 0
    %4456 = vmatpush2.bf16.msra.mxu0 0
    %4457 = vmatprep.subr.bf16.mxu0 0
    %4458 = vmatpush2.bf16.msra.mxu0 0
    %4459 = vmatprep.subr.bf16.mxu0 0
    %4460 = vmatpush2.bf16.msra.mxu0 0
    %4461 = vmatprep.subr.bf16.mxu0 0
    %4462 = vmatpush2.bf16.msra.mxu0 0
    %4463 = vmatprep.subr.bf16.mxu0 0
    %4464 = vmatpush2.bf16.msra.mxu0 0
    %4465 = vmatprep.mubr.bf16.mxu0 0
    %4466 = vmatmul.mubr.bf16.gmra.mxu0 %v4432
    %v4467 = vpop.f32.mrf.mxu0
    %v4468 = vadd.f32 %v3025, %v4467
    %v4469 = vpop.f32.mrf.mxu0
    %v4470 = vadd.f32 %v3029, %v4469
    %v4471 = vpop.f32.mrf.mxu0
    %v4472 = vpop.f32.mrf.mxu0
    %4473 = vdwg.mxu0
    %4474 = vmatprep.subr.bf16.mxu0 %v3169
    %4475 = vmatpush1.bf16.msra.mxu0 %v3168
    %4476 = vmatprep.subr.bf16.mxu0 %v3165
    %4477 = vmatpush1.bf16.msra.mxu0 %v3164
    %4478 = vmatprep.subr.bf16.mxu0 %v3161
    %4479 = vmatpush1.bf16.msra.mxu0 %v3160
    %4480 = vmatprep.subr.bf16.mxu0 %v3157
    %4481 = vmatpush1.bf16.msra.mxu0 %v3156
    %4482 = vmatprep.subr.bf16.mxu0 %v3153
    %4483 = vmatpush1.bf16.msra.mxu0 %v3152
    %4484 = vmatprep.subr.bf16.mxu0 %v3149
    %4485 = vmatpush1.bf16.msra.mxu0 %v3148
    %4486 = vmatprep.subr.bf16.mxu0 %v3145
    %4487 = vmatpush1.bf16.msra.mxu0 %v3144
    %4488 = vmatprep.subr.bf16.mxu0 %v3141
    %4489 = vmatpush1.bf16.msra.mxu0 %v3140
    %4490 = vmatprep.subr.bf16.mxu0 0
    %4491 = vmatpush2.bf16.msra.mxu0 0
    %4492 = vmatprep.subr.bf16.mxu0 0
    %4493 = vmatpush2.bf16.msra.mxu0 0
    %4494 = vmatprep.subr.bf16.mxu0 0
    %4495 = vmatpush2.bf16.msra.mxu0 0
    %4496 = vmatprep.subr.bf16.mxu0 0
    %4497 = vmatpush2.bf16.msra.mxu0 0
    %4498 = vmatprep.subr.bf16.mxu0 0
    %4499 = vmatpush2.bf16.msra.mxu0 0
    %4500 = vmatprep.subr.bf16.mxu0 0
    %4501 = vmatpush2.bf16.msra.mxu0 0
    %4502 = vmatprep.subr.bf16.mxu0 0
    %4503 = vmatpush2.bf16.msra.mxu0 0
    %4504 = vmatprep.subr.bf16.mxu0 0
    %4505 = vmatpush2.bf16.msra.mxu0 0
    %4506 = vmatprep.mubr.bf16.mxu0 0
    %4507 = vmatmul.mubr.bf16.gmra.mxu0 %v4432
    %v4508 = vpop.f32.mrf.mxu0
    %v4509 = vadd.f32 %v3033, %v4508
    %v4510 = vpop.f32.mrf.mxu0
    %v4511 = vadd.f32 %v3037, %v4510
    %v4512 = vpop.f32.mrf.mxu0
    %v4513 = vpop.f32.mrf.mxu0
    %4514 = vdwg.mxu0
    %v4515 = vpack.c.bf16 %v4096, %v4096
    %4516 = vmatprep.subr.bf16.mxu0 %v3409
    %4517 = vmatpush1.bf16.msra.mxu0 %v3408
    %4518 = vmatprep.subr.bf16.mxu0 %v3405
    %4519 = vmatpush1.bf16.msra.mxu0 %v3404
    %4520 = vmatprep.subr.bf16.mxu0 %v3401
    %4521 = vmatpush1.bf16.msra.mxu0 %v3400
    %4522 = vmatprep.subr.bf16.mxu0 %v3397
    %4523 = vmatpush1.bf16.msra.mxu0 %v3396
    %4524 = vmatprep.subr.bf16.mxu0 %v3393
    %4525 = vmatpush1.bf16.msra.mxu0 %v3392
    %4526 = vmatprep.subr.bf16.mxu0 %v3389
    %4527 = vmatpush1.bf16.msra.mxu0 %v3388
    %4528 = vmatprep.subr.bf16.mxu0 %v3385
    %4529 = vmatpush1.bf16.msra.mxu0 %v3384
    %4530 = vmatprep.subr.bf16.mxu0 %v3381
    %4531 = vmatpush1.bf16.msra.mxu0 %v3380
    %4532 = vmatprep.subr.bf16.mxu0 0
    %4533 = vmatpush2.bf16.msra.mxu0 0
    %4534 = vmatprep.subr.bf16.mxu0 0
    %4535 = vmatpush2.bf16.msra.mxu0 0
    %4536 = vmatprep.subr.bf16.mxu0 0
    %4537 = vmatpush2.bf16.msra.mxu0 0
    %4538 = vmatprep.subr.bf16.mxu0 0
    %4539 = vmatpush2.bf16.msra.mxu0 0
    %4540 = vmatprep.subr.bf16.mxu0 0
    %4541 = vmatpush2.bf16.msra.mxu0 0
    %4542 = vmatprep.subr.bf16.mxu0 0
    %4543 = vmatpush2.bf16.msra.mxu0 0
    %4544 = vmatprep.subr.bf16.mxu0 0
    %4545 = vmatpush2.bf16.msra.mxu0 0
    %4546 = vmatprep.subr.bf16.mxu0 0
    %4547 = vmatpush2.bf16.msra.mxu0 0
    %4548 = vmatprep.mubr.bf16.mxu0 0
    %4549 = vmatmul.mubr.bf16.gmra.mxu0 %v4515
    %v4550 = vpop.f32.mrf.mxu0
    %v4551 = vadd.f32 0.0, %v4550
    %v4552 = vpop.f32.mrf.mxu0
    %v4553 = vadd.f32 0.0, %v4552
    %v4554 = vpop.f32.mrf.mxu0
    %v4555 = vpop.f32.mrf.mxu0
    %4556 = vdwg.mxu0
    %4557 = vmatprep.subr.bf16.mxu0 %v3411
    %4558 = vmatpush1.bf16.msra.mxu0 %v3410
    %4559 = vmatprep.subr.bf16.mxu0 %v3407
    %4560 = vmatpush1.bf16.msra.mxu0 %v3406
    %4561 = vmatprep.subr.bf16.mxu0 %v3403
    %4562 = vmatpush1.bf16.msra.mxu0 %v3402
    %4563 = vmatprep.subr.bf16.mxu0 %v3399
    %4564 = vmatpush1.bf16.msra.mxu0 %v3398
    %4565 = vmatprep.subr.bf16.mxu0 %v3395
    %4566 = vmatpush1.bf16.msra.mxu0 %v3394
    %4567 = vmatprep.subr.bf16.mxu0 %v3391
    %4568 = vmatpush1.bf16.msra.mxu0 %v3390
    %4569 = vmatprep.subr.bf16.mxu0 %v3387
    %4570 = vmatpush1.bf16.msra.mxu0 %v3386
    %4571 = vmatprep.subr.bf16.mxu0 %v3383
    %4572 = vmatpush1.bf16.msra.mxu0 %v3382
    %4573 = vmatprep.subr.bf16.mxu0 0
    %4574 = vmatpush2.bf16.msra.mxu0 0
    %4575 = vmatprep.subr.bf16.mxu0 0
    %4576 = vmatpush2.bf16.msra.mxu0 0
    %4577 = vmatprep.subr.bf16.mxu0 0
    %4578 = vmatpush2.bf16.msra.mxu0 0
    %4579 = vmatprep.subr.bf16.mxu0 0
    %4580 = vmatpush2.bf16.msra.mxu0 0
    %4581 = vmatprep.subr.bf16.mxu0 0
    %4582 = vmatpush2.bf16.msra.mxu0 0
    %4583 = vmatprep.subr.bf16.mxu0 0
    %4584 = vmatpush2.bf16.msra.mxu0 0
    %4585 = vmatprep.subr.bf16.mxu0 0
    %4586 = vmatpush2.bf16.msra.mxu0 0
    %4587 = vmatprep.subr.bf16.mxu0 0
    %4588 = vmatpush2.bf16.msra.mxu0 0
    %4589 = vmatprep.mubr.bf16.mxu0 0
    %4590 = vmatmul.mubr.bf16.gmra.mxu0 %v4515
    %v4591 = vpop.f32.mrf.mxu0
    %v4592 = vadd.f32 0.0, %v4591
    %v4593 = vpop.f32.mrf.mxu0
    %v4594 = vadd.f32 0.0, %v4593
    %v4595 = vpop.f32.mrf.mxu0
    %v4596 = vpop.f32.mrf.mxu0
    %4597 = vdwg.mxu0
    %v4598 = vadd.f32 %v4468, %v4551
    %v4599 = vadd.f32 %v4470, %v4553
    %v4600 = vadd.f32 %v4509, %v4592
    %v4601 = vadd.f32 %v4511, %v4594
    %v4602 = vxor.u32 %v4598, 2147483648
    %v4603 = vxor.u32 %v4599, 2147483648
    %v4604 = vxor.u32 %v4600, 2147483648
    %v4605 = vxor.u32 %v4601, 2147483648
    %v4606 = vmul.f32 %v4602, 1.442695
    %v4607 = vpow.pop %v4606
    %v4608 = vmul.f32 %v4603, 1.442695
    %v4609 = vpow.pop %v4608
    %v4610 = vmul.f32 %v4604, 1.442695
    %v4611 = vpow.pop %v4610
    %v4612 = vmul.f32 %v4605, 1.442695
    %v4613 = vpow.pop %v4612
    %v4614 = vadd.f32 %v4607, 1.0
    %v4615 = vadd.f32 %v4609, 1.0
    %v4616 = vadd.f32 %v4611, 1.0
    %v4617 = vadd.f32 %v4613, 1.0
    %v4618 = vrcp.pop %v4614
    %v4619 = vmul.f32 1.0, %v4618
    %v4620 = vrcp.pop %v4615
    %v4621 = vmul.f32 1.0, %v4620
    %v4622 = vrcp.pop %v4616
    %v4623 = vmul.f32 1.0, %v4622
    %v4624 = vrcp.pop %v4617
    %v4625 = vmul.f32 1.0, %v4624
    %v4626 = vmul.f32 %v4623, 2.0
    %v4627 = vsub.f32 %v4626, 1.0
    %v4628 = vmul.f32 %v4621, %v4094
    %v4629 = vmul.f32 %v4619, %v4627
    %v4630 = vadd.f32 %v4628, %v4629
    %v4631 = vtanh.pop %v4630
    %v4632 = vmul.f32 %v4625, %v4631
    %4633 = vmatprep.subr.bf16.mxu0 %v2327
    %4634 = vmatpush1.bf16.msra.mxu0 %v2326
    %4635 = vmatprep.subr.bf16.mxu0 %v2323
    %4636 = vmatpush1.bf16.msra.mxu0 %v2322
    %4637 = vmatprep.subr.bf16.mxu0 %v2319
    %4638 = vmatpush1.bf16.msra.mxu0 %v2318
    %4639 = vmatprep.subr.bf16.mxu0 %v2315
    %4640 = vmatpush1.bf16.msra.mxu0 %v2314
    %4641 = vmatprep.subr.bf16.mxu0 %v2311
    %4642 = vmatpush1.bf16.msra.mxu0 %v2310
    %4643 = vmatprep.subr.bf16.mxu0 %v2307
    %4644 = vmatpush1.bf16.msra.mxu0 %v2306
    %4645 = vmatprep.subr.bf16.mxu0 %v2303
    %4646 = vmatpush1.bf16.msra.mxu0 %v2302
    %4647 = vmatprep.subr.bf16.mxu0 %v2299
    %4648 = vmatpush1.bf16.msra.mxu0 %v2298
    %4649 = vmatprep.subr.bf16.mxu0 0
    %4650 = vmatpush2.bf16.msra.mxu0 0
    %4651 = vmatprep.subr.bf16.mxu0 0
    %4652 = vmatpush2.bf16.msra.mxu0 0
    %4653 = vmatprep.subr.bf16.mxu0 0
    %4654 = vmatpush2.bf16.msra.mxu0 0
    %4655 = vmatprep.subr.bf16.mxu0 0
    %4656 = vmatpush2.bf16.msra.mxu0 0
    %4657 = vmatprep.subr.bf16.mxu0 0
    %4658 = vmatpush2.bf16.msra.mxu0 0
    %4659 = vmatprep.subr.bf16.mxu0 0
    %4660 = vmatpush2.bf16.msra.mxu0 0
    %4661 = vmatprep.subr.bf16.mxu0 0
    %4662 = vmatpush2.bf16.msra.mxu0 0
    %4663 = vmatprep.subr.bf16.mxu0 0
    %4664 = vmatpush2.bf16.msra.mxu0 0
    %4665 = vmatprep.mubr.bf16.mxu0 0
    %4666 = vmatmul.mubr.bf16.gmra.mxu0 %v4231
    %v4667 = vpop.f32.mrf.mxu0
    %v4668 = vadd.f32 0.0, %v4667
    %v4669 = vpop.f32.mrf.mxu0
    %v4670 = vadd.f32 0.0, %v4669
    %v4671 = vpop.f32.mrf.mxu0
    %v4672 = vpop.f32.mrf.mxu0
    %4673 = vdwg.mxu0
    %4674 = vmatprep.subr.bf16.mxu0 %v2329
    %4675 = vmatpush1.bf16.msra.mxu0 %v2328
    %4676 = vmatprep.subr.bf16.mxu0 %v2325
    %4677 = vmatpush1.bf16.msra.mxu0 %v2324
    %4678 = vmatprep.subr.bf16.mxu0 %v2321
    %4679 = vmatpush1.bf16.msra.mxu0 %v2320
    %4680 = vmatprep.subr.bf16.mxu0 %v2317
    %4681 = vmatpush1.bf16.msra.mxu0 %v2316
    %4682 = vmatprep.subr.bf16.mxu0 %v2313
    %4683 = vmatpush1.bf16.msra.mxu0 %v2312
    %4684 = vmatprep.subr.bf16.mxu0 %v2309
    %4685 = vmatpush1.bf16.msra.mxu0 %v2308
    %4686 = vmatprep.subr.bf16.mxu0 %v2305
    %4687 = vmatpush1.bf16.msra.mxu0 %v2304
    %4688 = vmatprep.subr.bf16.mxu0 %v2301
    %4689 = vmatpush1.bf16.msra.mxu0 %v2300
    %4690 = vmatprep.subr.bf16.mxu0 0
    %4691 = vmatpush2.bf16.msra.mxu0 0
    %4692 = vmatprep.subr.bf16.mxu0 0
    %4693 = vmatpush2.bf16.msra.mxu0 0
    %4694 = vmatprep.subr.bf16.mxu0 0
    %4695 = vmatpush2.bf16.msra.mxu0 0
    %4696 = vmatprep.subr.bf16.mxu0 0
    %4697 = vmatpush2.bf16.msra.mxu0 0
    %4698 = vmatprep.subr.bf16.mxu0 0
    %4699 = vmatpush2.bf16.msra.mxu0 0
    %4700 = vmatprep.subr.bf16.mxu0 0
    %4701 = vmatpush2.bf16.msra.mxu0 0
    %4702 = vmatprep.subr.bf16.mxu0 0
    %4703 = vmatpush2.bf16.msra.mxu0 0
    %4704 = vmatprep.subr.bf16.mxu0 0
    %4705 = vmatpush2.bf16.msra.mxu0 0
    %4706 = vmatprep.mubr.bf16.mxu0 0
    %4707 = vmatmul.mubr.bf16.gmra.mxu0 %v4231
    %v4708 = vpop.f32.mrf.mxu0
    %v4709 = vadd.f32 0.0, %v4708
    %v4710 = vpop.f32.mrf.mxu0
    %v4711 = vadd.f32 0.0, %v4710
    %v4712 = vpop.f32.mrf.mxu0
    %v4713 = vpop.f32.mrf.mxu0
    %4714 = vdwg.mxu0
    %v4719 = vrot.slane %v4668, 2
    %v4720 = vrot.slane %v4670, 2
    %v4721 = vrot.slane %v4709, 2
    %v4722 = vrot.slane %v4711, 2
    %v4727 = vadd.f32 %v1860, %v4719
    %v4728 = vadd.f32 %v1862, %v4720
    %v4729 = vadd.f32 %v2032, %v4721
    %v4730 = vadd.f32 %v2034, %v4722
    %v4731 = vxor.u32 %v4727, 2147483648
    %v4732 = vxor.u32 %v4728, 2147483648
    %v4733 = vxor.u32 %v4729, 2147483648
    %v4734 = vxor.u32 %v4730, 2147483648
    %v4735 = vmul.f32 %v4731, 1.442695
    %v4736 = vpow.pop %v4735
    %v4737 = vmul.f32 %v4732, 1.442695
    %v4738 = vpow.pop %v4737
    %v4739 = vmul.f32 %v4733, 1.442695
    %v4740 = vpow.pop %v4739
    %v4741 = vmul.f32 %v4734, 1.442695
    %v4742 = vpow.pop %v4741
    %v4743 = vadd.f32 %v4736, 1.0
    %v4744 = vadd.f32 %v4738, 1.0
    %v4745 = vadd.f32 %v4740, 1.0
    %v4746 = vadd.f32 %v4742, 1.0
    %v4747 = vrcp.pop %v4743
    %v4748 = vmul.f32 1.0, %v4747
    %v4749 = vrcp.pop %v4744
    %v4750 = vmul.f32 1.0, %v4749
    %v4751 = vrcp.pop %v4745
    %v4752 = vmul.f32 1.0, %v4751
    %v4753 = vrcp.pop %v4746
    %v4754 = vmul.f32 1.0, %v4753
    %v4755 = vmul.f32 %v4752, 2.0
    %v4756 = vsub.f32 %v4755, 1.0
    %v4758 = vrot.slane %v4226, 6
    %v4760 = vmul.f32 %v4750, %v4758
    %v4761 = vmul.f32 %v4748, %v4756
    %v4762 = vadd.f32 %v4760, %v4761
    %v4763 = vtanh.pop %v4762
    %v4764 = vmul.f32 %v4754, %v4763
    %v4765 = vpack.c.bf16 %v4764, %v4764
    %v4767 = vrot.slane %v4765, 3
    %4769 = vmatprep.subr.bf16.mxu0 %v2626
    %4770 = vmatpush1.bf16.msra.mxu0 %v2625
    %4771 = vmatprep.subr.bf16.mxu0 %v2622
    %4772 = vmatpush1.bf16.msra.mxu0 %v2621
    %4773 = vmatprep.subr.bf16.mxu0 %v2618
    %4774 = vmatpush1.bf16.msra.mxu0 %v2617
    %4775 = vmatprep.subr.bf16.mxu0 %v2614
    %4776 = vmatpush1.bf16.msra.mxu0 %v2613
    %4777 = vmatprep.subr.bf16.mxu0 %v2610
    %4778 = vmatpush1.bf16.msra.mxu0 %v2609
    %4779 = vmatprep.subr.bf16.mxu0 %v2606
    %4780 = vmatpush1.bf16.msra.mxu0 %v2605
    %4781 = vmatprep.subr.bf16.mxu0 %v2602
    %4782 = vmatpush1.bf16.msra.mxu0 %v2601
    %4783 = vmatprep.subr.bf16.mxu0 %v2598
    %4784 = vmatpush1.bf16.msra.mxu0 %v2597
    %4785 = vmatprep.subr.bf16.mxu0 0
    %4786 = vmatpush2.bf16.msra.mxu0 0
    %4787 = vmatprep.subr.bf16.mxu0 0
    %4788 = vmatpush2.bf16.msra.mxu0 0
    %4789 = vmatprep.subr.bf16.mxu0 0
    %4790 = vmatpush2.bf16.msra.mxu0 0
    %4791 = vmatprep.subr.bf16.mxu0 0
    %4792 = vmatpush2.bf16.msra.mxu0 0
    %4793 = vmatprep.subr.bf16.mxu0 0
    %4794 = vmatpush2.bf16.msra.mxu0 0
    %4795 = vmatprep.subr.bf16.mxu0 0
    %4796 = vmatpush2.bf16.msra.mxu0 0
    %4797 = vmatprep.subr.bf16.mxu0 0
    %4798 = vmatpush2.bf16.msra.mxu0 0
    %4799 = vmatprep.subr.bf16.mxu0 0
    %4800 = vmatpush2.bf16.msra.mxu0 0
    %4801 = vmatprep.mubr.bf16.mxu0 0
    %4802 = vmatmul.mubr.bf16.gmra.mxu0 %v4767
    %v4803 = vpop.f32.mrf.mxu0
    %v4804 = vadd.f32 %v2484, %v4803
    %v4805 = vpop.f32.mrf.mxu0
    %v4806 = vadd.f32 %v2488, %v4805
    %v4807 = vpop.f32.mrf.mxu0
    %v4808 = vpop.f32.mrf.mxu0
    %4809 = vdwg.mxu0
    %4810 = vmatprep.subr.bf16.mxu0 %v2628
    %4811 = vmatpush1.bf16.msra.mxu0 %v2627
    %4812 = vmatprep.subr.bf16.mxu0 %v2624
    %4813 = vmatpush1.bf16.msra.mxu0 %v2623
    %4814 = vmatprep.subr.bf16.mxu0 %v2620
    %4815 = vmatpush1.bf16.msra.mxu0 %v2619
    %4816 = vmatprep.subr.bf16.mxu0 %v2616
    %4817 = vmatpush1.bf16.msra.mxu0 %v2615
    %4818 = vmatprep.subr.bf16.mxu0 %v2612
    %4819 = vmatpush1.bf16.msra.mxu0 %v2611
    %4820 = vmatprep.subr.bf16.mxu0 %v2608
    %4821 = vmatpush1.bf16.msra.mxu0 %v2607
    %4822 = vmatprep.subr.bf16.mxu0 %v2604
    %4823 = vmatpush1.bf16.msra.mxu0 %v2603
    %4824 = vmatprep.subr.bf16.mxu0 %v2600
    %4825 = vmatpush1.bf16.msra.mxu0 %v2599
    %4826 = vmatprep.subr.bf16.mxu0 0
    %4827 = vmatpush2.bf16.msra.mxu0 0
    %4828 = vmatprep.subr.bf16.mxu0 0
    %4829 = vmatpush2.bf16.msra.mxu0 0
    %4830 = vmatprep.subr.bf16.mxu0 0
    %4831 = vmatpush2.bf16.msra.mxu0 0
    %4832 = vmatprep.subr.bf16.mxu0 0
    %4833 = vmatpush2.bf16.msra.mxu0 0
    %4834 = vmatprep.subr.bf16.mxu0 0
    %4835 = vmatpush2.bf16.msra.mxu0 0
    %4836 = vmatprep.subr.bf16.mxu0 0
    %4837 = vmatpush2.bf16.msra.mxu0 0
    %4838 = vmatprep.subr.bf16.mxu0 0
    %4839 = vmatpush2.bf16.msra.mxu0 0
    %4840 = vmatprep.subr.bf16.mxu0 0
    %4841 = vmatpush2.bf16.msra.mxu0 0
    %4842 = vmatprep.mubr.bf16.mxu0 0
    %4843 = vmatmul.mubr.bf16.gmra.mxu0 %v4767
    %v4844 = vpop.f32.mrf.mxu0
    %v4845 = vadd.f32 %v2492, %v4844
    %v4846 = vpop.f32.mrf.mxu0
    %v4847 = vadd.f32 %v2496, %v4846
    %v4848 = vpop.f32.mrf.mxu0
    %v4849 = vpop.f32.mrf.mxu0
    %4850 = vdwg.mxu0
    %4851 = vmatprep.subr.bf16.mxu0 %v2868
    %4852 = vmatpush1.bf16.msra.mxu0 %v2867
    %4853 = vmatprep.subr.bf16.mxu0 %v2864
    %4854 = vmatpush1.bf16.msra.mxu0 %v2863
    %4855 = vmatprep.subr.bf16.mxu0 %v2860
    %4856 = vmatpush1.bf16.msra.mxu0 %v2859
    %4857 = vmatprep.subr.bf16.mxu0 %v2856
    %4858 = vmatpush1.bf16.msra.mxu0 %v2855
    %4859 = vmatprep.subr.bf16.mxu0 %v2852
    %4860 = vmatpush1.bf16.msra.mxu0 %v2851
    %4861 = vmatprep.subr.bf16.mxu0 %v2848
    %4862 = vmatpush1.bf16.msra.mxu0 %v2847
    %4863 = vmatprep.subr.bf16.mxu0 %v2844
    %4864 = vmatpush1.bf16.msra.mxu0 %v2843
    %4865 = vmatprep.subr.bf16.mxu0 %v2840
    %4866 = vmatpush1.bf16.msra.mxu0 %v2839
    %4867 = vmatprep.subr.bf16.mxu0 0
    %4868 = vmatpush2.bf16.msra.mxu0 0
    %4869 = vmatprep.subr.bf16.mxu0 0
    %4870 = vmatpush2.bf16.msra.mxu0 0
    %4871 = vmatprep.subr.bf16.mxu0 0
    %4872 = vmatpush2.bf16.msra.mxu0 0
    %4873 = vmatprep.subr.bf16.mxu0 0
    %4874 = vmatpush2.bf16.msra.mxu0 0
    %4875 = vmatprep.subr.bf16.mxu0 0
    %4876 = vmatpush2.bf16.msra.mxu0 0
    %4877 = vmatprep.subr.bf16.mxu0 0
    %4878 = vmatpush2.bf16.msra.mxu0 0
    %4879 = vmatprep.subr.bf16.mxu0 0
    %4880 = vmatpush2.bf16.msra.mxu0 0
    %4881 = vmatprep.subr.bf16.mxu0 0
    %4882 = vmatpush2.bf16.msra.mxu0 0
    %4883 = vmatprep.mubr.bf16.mxu0 0
    %4884 = vmatmul.mubr.bf16.gmra.mxu0 %v4432
    %v4885 = vpop.f32.mrf.mxu0
    %v4886 = vadd.f32 0.0, %v4885
    %v4887 = vpop.f32.mrf.mxu0
    %v4888 = vadd.f32 0.0, %v4887
    %v4889 = vpop.f32.mrf.mxu0
    %v4890 = vpop.f32.mrf.mxu0
    %4891 = vdwg.mxu0
    %4892 = vmatprep.subr.bf16.mxu0 %v2870
    %4893 = vmatpush1.bf16.msra.mxu0 %v2869
    %4894 = vmatprep.subr.bf16.mxu0 %v2866
    %4895 = vmatpush1.bf16.msra.mxu0 %v2865
    %4896 = vmatprep.subr.bf16.mxu0 %v2862
    %4897 = vmatpush1.bf16.msra.mxu0 %v2861
    %4898 = vmatprep.subr.bf16.mxu0 %v2858
    %4899 = vmatpush1.bf16.msra.mxu0 %v2857
    %4900 = vmatprep.subr.bf16.mxu0 %v2854
    %4901 = vmatpush1.bf16.msra.mxu0 %v2853
    %4902 = vmatprep.subr.bf16.mxu0 %v2850
    %4903 = vmatpush1.bf16.msra.mxu0 %v2849
    %4904 = vmatprep.subr.bf16.mxu0 %v2846
    %4905 = vmatpush1.bf16.msra.mxu0 %v2845
    %4906 = vmatprep.subr.bf16.mxu0 %v2842
    %4907 = vmatpush1.bf16.msra.mxu0 %v2841
    %4908 = vmatprep.subr.bf16.mxu0 0
    %4909 = vmatpush2.bf16.msra.mxu0 0
    %4910 = vmatprep.subr.bf16.mxu0 0
    %4911 = vmatpush2.bf16.msra.mxu0 0
    %4912 = vmatprep.subr.bf16.mxu0 0
    %4913 = vmatpush2.bf16.msra.mxu0 0
    %4914 = vmatprep.subr.bf16.mxu0 0
    %4915 = vmatpush2.bf16.msra.mxu0 0
    %4916 = vmatprep.subr.bf16.mxu0 0
    %4917 = vmatpush2.bf16.msra.mxu0 0
    %4918 = vmatprep.subr.bf16.mxu0 0
    %4919 = vmatpush2.bf16.msra.mxu0 0
    %4920 = vmatprep.subr.bf16.mxu0 0
    %4921 = vmatpush2.bf16.msra.mxu0 0
    %4922 = vmatprep.subr.bf16.mxu0 0
    %4923 = vmatpush2.bf16.msra.mxu0 0
    %4924 = vmatprep.mubr.bf16.mxu0 0
    %4925 = vmatmul.mubr.bf16.gmra.mxu0 %v4432
    %v4926 = vpop.f32.mrf.mxu0
    %v4927 = vadd.f32 0.0, %v4926
    %v4928 = vpop.f32.mrf.mxu0
    %v4929 = vadd.f32 0.0, %v4928
    %v4930 = vpop.f32.mrf.mxu0
    %v4931 = vpop.f32.mrf.mxu0
    %4932 = vdwg.mxu0
    %v4933 = vadd.f32 %v4804, %v4886
    %v4934 = vadd.f32 %v4806, %v4888
    %v4935 = vadd.f32 %v4845, %v4927
    %v4936 = vadd.f32 %v4847, %v4929
    %v4937 = vxor.u32 %v4933, 2147483648
    %v4938 = vxor.u32 %v4934, 2147483648
    %v4939 = vxor.u32 %v4935, 2147483648
    %v4940 = vxor.u32 %v4936, 2147483648
    %v4941 = vmul.f32 %v4937, 1.442695
    %v4942 = vpow.pop %v4941
    %v4943 = vmul.f32 %v4938, 1.442695
    %v4944 = vpow.pop %v4943
    %v4945 = vmul.f32 %v4939, 1.442695
    %v4946 = vpow.pop %v4945
    %v4947 = vmul.f32 %v4940, 1.442695
    %v4948 = vpow.pop %v4947
    %v4949 = vadd.f32 %v4942, 1.0
    %v4950 = vadd.f32 %v4944, 1.0
    %v4951 = vadd.f32 %v4946, 1.0
    %v4952 = vadd.f32 %v4948, 1.0
    %v4953 = vrcp.pop %v4949
    %v4954 = vmul.f32 1.0, %v4953
    %v4955 = vrcp.pop %v4950
    %v4956 = vmul.f32 1.0, %v4955
    %v4957 = vrcp.pop %v4951
    %v4958 = vmul.f32 1.0, %v4957
    %v4959 = vrcp.pop %v4952
    %v4960 = vmul.f32 1.0, %v4959
    %v4961 = vmul.f32 %v4958, 2.0
    %v4962 = vsub.f32 %v4961, 1.0
    %v4963 = vmul.f32 %v4956, %v4429
    %v4964 = vmul.f32 %v4954, %v4962
    %v4965 = vadd.f32 %v4963, %v4964
    %v4966 = vtanh.pop %v4965
    %v4967 = vmul.f32 %v4960, %v4966
    %v4968 = vpack.c.bf16 %v4967, %v4967
    %4969 = vmatprep.subr.bf16.mxu0 %v3167
    %4970 = vmatpush1.bf16.msra.mxu0 %v3166
    %4971 = vmatprep.subr.bf16.mxu0 %v3163
    %4972 = vmatpush1.bf16.msra.mxu0 %v3162
    %4973 = vmatprep.subr.bf16.mxu0 %v3159
    %4974 = vmatpush1.bf16.msra.mxu0 %v3158
    %4975 = vmatprep.subr.bf16.mxu0 %v3155
    %4976 = vmatpush1.bf16.msra.mxu0 %v3154
    %4977 = vmatprep.subr.bf16.mxu0 %v3151
    %4978 = vmatpush1.bf16.msra.mxu0 %v3150
    %4979 = vmatprep.subr.bf16.mxu0 %v3147
    %4980 = vmatpush1.bf16.msra.mxu0 %v3146
    %4981 = vmatprep.subr.bf16.mxu0 %v3143
    %4982 = vmatpush1.bf16.msra.mxu0 %v3142
    %4983 = vmatprep.subr.bf16.mxu0 %v3139
    %4984 = vmatpush1.bf16.msra.mxu0 %v3138
    %4985 = vmatprep.subr.bf16.mxu0 0
    %4986 = vmatpush2.bf16.msra.mxu0 0
    %4987 = vmatprep.subr.bf16.mxu0 0
    %4988 = vmatpush2.bf16.msra.mxu0 0
    %4989 = vmatprep.subr.bf16.mxu0 0
    %4990 = vmatpush2.bf16.msra.mxu0 0
    %4991 = vmatprep.subr.bf16.mxu0 0
    %4992 = vmatpush2.bf16.msra.mxu0 0
    %4993 = vmatprep.subr.bf16.mxu0 0
    %4994 = vmatpush2.bf16.msra.mxu0 0
    %4995 = vmatprep.subr.bf16.mxu0 0
    %4996 = vmatpush2.bf16.msra.mxu0 0
    %4997 = vmatprep.subr.bf16.mxu0 0
    %4998 = vmatpush2.bf16.msra.mxu0 0
    %4999 = vmatprep.subr.bf16.mxu0 0
    %5000 = vmatpush2.bf16.msra.mxu0 0
    %5001 = vmatprep.mubr.bf16.mxu0 0
    %5002 = vmatmul.mubr.bf16.gmra.mxu0 %v4968
    %v5003 = vpop.f32.mrf.mxu0
    %v5004 = vadd.f32 %v3025, %v5003
    %v5005 = vpop.f32.mrf.mxu0
    %v5006 = vadd.f32 %v3029, %v5005
    %v5007 = vpop.f32.mrf.mxu0
    %v5008 = vpop.f32.mrf.mxu0
    %5009 = vdwg.mxu0
    %5010 = vmatprep.subr.bf16.mxu0 %v3169
    %5011 = vmatpush1.bf16.msra.mxu0 %v3168
    %5012 = vmatprep.subr.bf16.mxu0 %v3165
    %5013 = vmatpush1.bf16.msra.mxu0 %v3164
    %5014 = vmatprep.subr.bf16.mxu0 %v3161
    %5015 = vmatpush1.bf16.msra.mxu0 %v3160
    %5016 = vmatprep.subr.bf16.mxu0 %v3157
    %5017 = vmatpush1.bf16.msra.mxu0 %v3156
    %5018 = vmatprep.subr.bf16.mxu0 %v3153
    %5019 = vmatpush1.bf16.msra.mxu0 %v3152
    %5020 = vmatprep.subr.bf16.mxu0 %v3149
    %5021 = vmatpush1.bf16.msra.mxu0 %v3148
    %5022 = vmatprep.subr.bf16.mxu0 %v3145
    %5023 = vmatpush1.bf16.msra.mxu0 %v3144
    %5024 = vmatprep.subr.bf16.mxu0 %v3141
    %5025 = vmatpush1.bf16.msra.mxu0 %v3140
    %5026 = vmatprep.subr.bf16.mxu0 0
    %5027 = vmatpush2.bf16.msra.mxu0 0
    %5028 = vmatprep.subr.bf16.mxu0 0
    %5029 = vmatpush2.bf16.msra.mxu0 0
    %5030 = vmatprep.subr.bf16.mxu0 0
    %5031 = vmatpush2.bf16.msra.mxu0 0
    %5032 = vmatprep.subr.bf16.mxu0 0
    %5033 = vmatpush2.bf16.msra.mxu0 0
    %5034 = vmatprep.subr.bf16.mxu0 0
    %5035 = vmatpush2.bf16.msra.mxu0 0
    %5036 = vmatprep.subr.bf16.mxu0 0
    %5037 = vmatpush2.bf16.msra.mxu0 0
    %5038 = vmatprep.subr.bf16.mxu0 0
    %5039 = vmatpush2.bf16.msra.mxu0 0
    %5040 = vmatprep.subr.bf16.mxu0 0
    %5041 = vmatpush2.bf16.msra.mxu0 0
    %5042 = vmatprep.mubr.bf16.mxu0 0
    %5043 = vmatmul.mubr.bf16.gmra.mxu0 %v4968
    %v5044 = vpop.f32.mrf.mxu0
    %v5045 = vadd.f32 %v3033, %v5044
    %v5046 = vpop.f32.mrf.mxu0
    %v5047 = vadd.f32 %v3037, %v5046
    %v5048 = vpop.f32.mrf.mxu0
    %v5049 = vpop.f32.mrf.mxu0
    %5050 = vdwg.mxu0
    %v5051 = vpack.c.bf16 %v4632, %v4632
    %5052 = vmatprep.subr.bf16.mxu0 %v3409
    %5053 = vmatpush1.bf16.msra.mxu0 %v3408
    %5054 = vmatprep.subr.bf16.mxu0 %v3405
    %5055 = vmatpush1.bf16.msra.mxu0 %v3404
    %5056 = vmatprep.subr.bf16.mxu0 %v3401
    %5057 = vmatpush1.bf16.msra.mxu0 %v3400
    %5058 = vmatprep.subr.bf16.mxu0 %v3397
    %5059 = vmatpush1.bf16.msra.mxu0 %v3396
    %5060 = vmatprep.subr.bf16.mxu0 %v3393
    %5061 = vmatpush1.bf16.msra.mxu0 %v3392
    %5062 = vmatprep.subr.bf16.mxu0 %v3389
    %5063 = vmatpush1.bf16.msra.mxu0 %v3388
    %5064 = vmatprep.subr.bf16.mxu0 %v3385
    %5065 = vmatpush1.bf16.msra.mxu0 %v3384
    %5066 = vmatprep.subr.bf16.mxu0 %v3381
    %5067 = vmatpush1.bf16.msra.mxu0 %v3380
    %5068 = vmatprep.subr.bf16.mxu0 0
    %5069 = vmatpush2.bf16.msra.mxu0 0
    %5070 = vmatprep.subr.bf16.mxu0 0
    %5071 = vmatpush2.bf16.msra.mxu0 0
    %5072 = vmatprep.subr.bf16.mxu0 0
    %5073 = vmatpush2.bf16.msra.mxu0 0
    %5074 = vmatprep.subr.bf16.mxu0 0
    %5075 = vmatpush2.bf16.msra.mxu0 0
    %5076 = vmatprep.subr.bf16.mxu0 0
    %5077 = vmatpush2.bf16.msra.mxu0 0
    %5078 = vmatprep.subr.bf16.mxu0 0
    %5079 = vmatpush2.bf16.msra.mxu0 0
    %5080 = vmatprep.subr.bf16.mxu0 0
    %5081 = vmatpush2.bf16.msra.mxu0 0
    %5082 = vmatprep.subr.bf16.mxu0 0
    %5083 = vmatpush2.bf16.msra.mxu0 0
    %5084 = vmatprep.mubr.bf16.mxu0 0
    %5085 = vmatmul.mubr.bf16.gmra.mxu0 %v5051
    %v5086 = vpop.f32.mrf.mxu0
    %v5087 = vadd.f32 0.0, %v5086
    %v5088 = vpop.f32.mrf.mxu0
    %v5089 = vadd.f32 0.0, %v5088
    %v5090 = vpop.f32.mrf.mxu0
    %v5091 = vpop.f32.mrf.mxu0
    %5092 = vdwg.mxu0
    %5093 = vmatprep.subr.bf16.mxu0 %v3411
    %5094 = vmatpush1.bf16.msra.mxu0 %v3410
    %5095 = vmatprep.subr.bf16.mxu0 %v3407
    %5096 = vmatpush1.bf16.msra.mxu0 %v3406
    %5097 = vmatprep.subr.bf16.mxu0 %v3403
    %5098 = vmatpush1.bf16.msra.mxu0 %v3402
    %5099 = vmatprep.subr.bf16.mxu0 %v3399
    %5100 = vmatpush1.bf16.msra.mxu0 %v3398
    %5101 = vmatprep.subr.bf16.mxu0 %v3395
    %5102 = vmatpush1.bf16.msra.mxu0 %v3394
    %5103 = vmatprep.subr.bf16.mxu0 %v3391
    %5104 = vmatpush1.bf16.msra.mxu0 %v3390
    %5105 = vmatprep.subr.bf16.mxu0 %v3387
    %5106 = vmatpush1.bf16.msra.mxu0 %v3386
    %5107 = vmatprep.subr.bf16.mxu0 %v3383
    %5108 = vmatpush1.bf16.msra.mxu0 %v3382
    %5109 = vmatprep.subr.bf16.mxu0 0
    %5110 = vmatpush2.bf16.msra.mxu0 0
    %5111 = vmatprep.subr.bf16.mxu0 0
    %5112 = vmatpush2.bf16.msra.mxu0 0
    %5113 = vmatprep.subr.bf16.mxu0 0
    %5114 = vmatpush2.bf16.msra.mxu0 0
    %5115 = vmatprep.subr.bf16.mxu0 0
    %5116 = vmatpush2.bf16.msra.mxu0 0
    %5117 = vmatprep.subr.bf16.mxu0 0
    %5118 = vmatpush2.bf16.msra.mxu0 0
    %5119 = vmatprep.subr.bf16.mxu0 0
    %5120 = vmatpush2.bf16.msra.mxu0 0
    %5121 = vmatprep.subr.bf16.mxu0 0
    %5122 = vmatpush2.bf16.msra.mxu0 0
    %5123 = vmatprep.subr.bf16.mxu0 0
    %5124 = vmatpush2.bf16.msra.mxu0 0
    %5125 = vmatprep.mubr.bf16.mxu0 0
    %5126 = vmatmul.mubr.bf16.gmra.mxu0 %v5051
    %v5127 = vpop.f32.mrf.mxu0
    %v5128 = vadd.f32 0.0, %v5127
    %v5129 = vpop.f32.mrf.mxu0
    %v5130 = vadd.f32 0.0, %v5129
    %v5131 = vpop.f32.mrf.mxu0
    %v5132 = vpop.f32.mrf.mxu0
    %5133 = vdwg.mxu0
    %v5134 = vadd.f32 %v5004, %v5087
    %v5135 = vadd.f32 %v5006, %v5089
    %v5136 = vadd.f32 %v5045, %v5128
    %v5137 = vadd.f32 %v5047, %v5130
    %v5138 = vxor.u32 %v5134, 2147483648
    %v5139 = vxor.u32 %v5135, 2147483648
    %v5140 = vxor.u32 %v5136, 2147483648
    %v5141 = vxor.u32 %v5137, 2147483648
    %v5142 = vmul.f32 %v5138, 1.442695
    %v5143 = vpow.pop %v5142
    %v5144 = vmul.f32 %v5139, 1.442695
    %v5145 = vpow.pop %v5144
    %v5146 = vmul.f32 %v5140, 1.442695
    %v5147 = vpow.pop %v5146
    %v5148 = vmul.f32 %v5141, 1.442695
    %v5149 = vpow.pop %v5148
    %v5150 = vadd.f32 %v5143, 1.0
    %v5151 = vadd.f32 %v5145, 1.0
    %v5152 = vadd.f32 %v5147, 1.0
    %v5153 = vadd.f32 %v5149, 1.0
    %v5154 = vrcp.pop %v5150
    %v5155 = vmul.f32 1.0, %v5154
    %v5156 = vrcp.pop %v5151
    %v5157 = vmul.f32 1.0, %v5156
    %v5158 = vrcp.pop %v5152
    %v5159 = vmul.f32 1.0, %v5158
    %v5160 = vrcp.pop %v5153
    %v5161 = vmul.f32 1.0, %v5160
    %v5162 = vmul.f32 %v5159, 2.0
    %v5163 = vsub.f32 %v5162, 1.0
    %v5164 = vmul.f32 %v5157, %v4630
    %v5165 = vmul.f32 %v5155, %v5163
    %v5166 = vadd.f32 %v5164, %v5165
    %v5167 = vtanh.pop %v5166
    %v5168 = vmul.f32 %v5161, %v5167
    %5169 = vmatprep.subr.bf16.mxu0 %v2327
    %5170 = vmatpush1.bf16.msra.mxu0 %v2326
    %5171 = vmatprep.subr.bf16.mxu0 %v2323
    %5172 = vmatpush1.bf16.msra.mxu0 %v2322
    %5173 = vmatprep.subr.bf16.mxu0 %v2319
    %5174 = vmatpush1.bf16.msra.mxu0 %v2318
    %5175 = vmatprep.subr.bf16.mxu0 %v2315
    %5176 = vmatpush1.bf16.msra.mxu0 %v2314
    %5177 = vmatprep.subr.bf16.mxu0 %v2311
    %5178 = vmatpush1.bf16.msra.mxu0 %v2310
    %5179 = vmatprep.subr.bf16.mxu0 %v2307
    %5180 = vmatpush1.bf16.msra.mxu0 %v2306
    %5181 = vmatprep.subr.bf16.mxu0 %v2303
    %5182 = vmatpush1.bf16.msra.mxu0 %v2302
    %5183 = vmatprep.subr.bf16.mxu0 %v2299
    %5184 = vmatpush1.bf16.msra.mxu0 %v2298
    %5185 = vmatprep.subr.bf16.mxu0 0
    %5186 = vmatpush2.bf16.msra.mxu0 0
    %5187 = vmatprep.subr.bf16.mxu0 0
    %5188 = vmatpush2.bf16.msra.mxu0 0
    %5189 = vmatprep.subr.bf16.mxu0 0
    %5190 = vmatpush2.bf16.msra.mxu0 0
    %5191 = vmatprep.subr.bf16.mxu0 0
    %5192 = vmatpush2.bf16.msra.mxu0 0
    %5193 = vmatprep.subr.bf16.mxu0 0
    %5194 = vmatpush2.bf16.msra.mxu0 0
    %5195 = vmatprep.subr.bf16.mxu0 0
    %5196 = vmatpush2.bf16.msra.mxu0 0
    %5197 = vmatprep.subr.bf16.mxu0 0
    %5198 = vmatpush2.bf16.msra.mxu0 0
    %5199 = vmatprep.subr.bf16.mxu0 0
    %5200 = vmatpush2.bf16.msra.mxu0 0
    %5201 = vmatprep.mubr.bf16.mxu0 0
    %5202 = vmatmul.mubr.bf16.gmra.mxu0 %v4767
    %v5203 = vpop.f32.mrf.mxu0
    %v5204 = vadd.f32 0.0, %v5203
    %v5205 = vpop.f32.mrf.mxu0
    %v5206 = vadd.f32 0.0, %v5205
    %v5207 = vpop.f32.mrf.mxu0
    %v5208 = vpop.f32.mrf.mxu0
    %5209 = vdwg.mxu0
    %5210 = vmatprep.subr.bf16.mxu0 %v2329
    %5211 = vmatpush1.bf16.msra.mxu0 %v2328
    %5212 = vmatprep.subr.bf16.mxu0 %v2325
    %5213 = vmatpush1.bf16.msra.mxu0 %v2324
    %5214 = vmatprep.subr.bf16.mxu0 %v2321
    %5215 = vmatpush1.bf16.msra.mxu0 %v2320
    %5216 = vmatprep.subr.bf16.mxu0 %v2317
    %5217 = vmatpush1.bf16.msra.mxu0 %v2316
    %5218 = vmatprep.subr.bf16.mxu0 %v2313
    %5219 = vmatpush1.bf16.msra.mxu0 %v2312
    %5220 = vmatprep.subr.bf16.mxu0 %v2309
    %5221 = vmatpush1.bf16.msra.mxu0 %v2308
    %5222 = vmatprep.subr.bf16.mxu0 %v2305
    %5223 = vmatpush1.bf16.msra.mxu0 %v2304
    %5224 = vmatprep.subr.bf16.mxu0 %v2301
    %5225 = vmatpush1.bf16.msra.mxu0 %v2300
    %5226 = vmatprep.subr.bf16.mxu0 0
    %5227 = vmatpush2.bf16.msra.mxu0 0
    %5228 = vmatprep.subr.bf16.mxu0 0
    %5229 = vmatpush2.bf16.msra.mxu0 0
    %5230 = vmatprep.subr.bf16.mxu0 0
    %5231 = vmatpush2.bf16.msra.mxu0 0
    %5232 = vmatprep.subr.bf16.mxu0 0
    %5233 = vmatpush2.bf16.msra.mxu0 0
    %5234 = vmatprep.subr.bf16.mxu0 0
    %5235 = vmatpush2.bf16.msra.mxu0 0
    %5236 = vmatprep.subr.bf16.mxu0 0
    %5237 = vmatpush2.bf16.msra.mxu0 0
    %5238 = vmatprep.subr.bf16.mxu0 0
    %5239 = vmatpush2.bf16.msra.mxu0 0
    %5240 = vmatprep.subr.bf16.mxu0 0
    %5241 = vmatpush2.bf16.msra.mxu0 0
    %5242 = vmatprep.mubr.bf16.mxu0 0
    %5243 = vmatmul.mubr.bf16.gmra.mxu0 %v4767
    %v5244 = vpop.f32.mrf.mxu0
    %v5245 = vadd.f32 0.0, %v5244
    %v5246 = vpop.f32.mrf.mxu0
    %v5247 = vadd.f32 0.0, %v5246
    %v5248 = vpop.f32.mrf.mxu0
    %v5249 = vpop.f32.mrf.mxu0
    %5250 = vdwg.mxu0
    %v5251 = vadd.f32 %v1864, %v5204
    %v5252 = vadd.f32 %v1866, %v5206
    %v5253 = vadd.f32 %v2036, %v5245
    %v5254 = vadd.f32 %v2038, %v5247
    %v5255 = vxor.u32 %v5251, 2147483648
    %v5256 = vxor.u32 %v5252, 2147483648
    %v5257 = vxor.u32 %v5253, 2147483648
    %v5258 = vxor.u32 %v5254, 2147483648
    %v5259 = vmul.f32 %v5255, 1.442695
    %v5260 = vpow.pop %v5259
    %v5261 = vmul.f32 %v5256, 1.442695
    %v5262 = vpow.pop %v5261
    %v5263 = vmul.f32 %v5257, 1.442695
    %v5264 = vpow.pop %v5263
    %v5265 = vmul.f32 %v5258, 1.442695
    %v5266 = vpow.pop %v5265
    %v5267 = vadd.f32 %v5260, 1.0
    %v5268 = vadd.f32 %v5262, 1.0
    %v5269 = vadd.f32 %v5264, 1.0
    %v5270 = vadd.f32 %v5266, 1.0
    %v5271 = vrcp.pop %v5267
    %v5272 = vmul.f32 1.0, %v5271
    %v5273 = vrcp.pop %v5268
    %v5274 = vmul.f32 1.0, %v5273
    %v5275 = vrcp.pop %v5269
    %v5276 = vmul.f32 1.0, %v5275
    %v5277 = vrcp.pop %v5270
    %v5278 = vmul.f32 1.0, %v5277
    %v5279 = vmul.f32 %v5276, 2.0
    %v5280 = vsub.f32 %v5279, 1.0
    %v5282 = vrot.slane %v4762, 6
    %v5284 = vmul.f32 %v5274, %v5282
    %v5285 = vmul.f32 %v5272, %v5280
    %v5286 = vadd.f32 %v5284, %v5285
    %v5287 = vtanh.pop %v5286
    %v5288 = vmul.f32 %v5278, %v5287
    %v5289 = vpack.c.bf16 %v5288, %v5288
    %5290 = vmatprep.subr.bf16.mxu0 %v2626
    %5291 = vmatpush1.bf16.msra.mxu0 %v2625
    %5292 = vmatprep.subr.bf16.mxu0 %v2622
    %5293 = vmatpush1.bf16.msra.mxu0 %v2621
    %5294 = vmatprep.subr.bf16.mxu0 %v2618
    %5295 = vmatpush1.bf16.msra.mxu0 %v2617
    %5296 = vmatprep.subr.bf16.mxu0 %v2614
    %5297 = vmatpush1.bf16.msra.mxu0 %v2613
    %5298 = vmatprep.subr.bf16.mxu0 %v2610
    %5299 = vmatpush1.bf16.msra.mxu0 %v2609
    %5300 = vmatprep.subr.bf16.mxu0 %v2606
    %5301 = vmatpush1.bf16.msra.mxu0 %v2605
    %5302 = vmatprep.subr.bf16.mxu0 %v2602
    %5303 = vmatpush1.bf16.msra.mxu0 %v2601
    %5304 = vmatprep.subr.bf16.mxu0 %v2598
    %5305 = vmatpush1.bf16.msra.mxu0 %v2597
    %5306 = vmatprep.subr.bf16.mxu0 0
    %5307 = vmatpush2.bf16.msra.mxu0 0
    %5308 = vmatprep.subr.bf16.mxu0 0
    %5309 = vmatpush2.bf16.msra.mxu0 0
    %5310 = vmatprep.subr.bf16.mxu0 0
    %5311 = vmatpush2.bf16.msra.mxu0 0
    %5312 = vmatprep.subr.bf16.mxu0 0
    %5313 = vmatpush2.bf16.msra.mxu0 0
    %5314 = vmatprep.subr.bf16.mxu0 0
    %5315 = vmatpush2.bf16.msra.mxu0 0
    %5316 = vmatprep.subr.bf16.mxu0 0
    %5317 = vmatpush2.bf16.msra.mxu0 0
    %5318 = vmatprep.subr.bf16.mxu0 0
    %5319 = vmatpush2.bf16.msra.mxu0 0
    %5320 = vmatprep.subr.bf16.mxu0 0
    %5321 = vmatpush2.bf16.msra.mxu0 0
    %5322 = vmatprep.mubr.bf16.mxu0 0
    %5323 = vmatmul.mubr.bf16.gmra.mxu0 %v5289
    %v5324 = vpop.f32.mrf.mxu0
    %v5325 = vadd.f32 %v2484, %v5324
    %v5326 = vpop.f32.mrf.mxu0
    %v5327 = vadd.f32 %v2488, %v5326
    %v5328 = vpop.f32.mrf.mxu0
    %v5329 = vpop.f32.mrf.mxu0
    %5330 = vdwg.mxu0
    %5331 = vmatprep.subr.bf16.mxu0 %v2628
    %5332 = vmatpush1.bf16.msra.mxu0 %v2627
    %5333 = vmatprep.subr.bf16.mxu0 %v2624
    %5334 = vmatpush1.bf16.msra.mxu0 %v2623
    %5335 = vmatprep.subr.bf16.mxu0 %v2620
    %5336 = vmatpush1.bf16.msra.mxu0 %v2619
    %5337 = vmatprep.subr.bf16.mxu0 %v2616
    %5338 = vmatpush1.bf16.msra.mxu0 %v2615
    %5339 = vmatprep.subr.bf16.mxu0 %v2612
    %5340 = vmatpush1.bf16.msra.mxu0 %v2611
    %5341 = vmatprep.subr.bf16.mxu0 %v2608
    %5342 = vmatpush1.bf16.msra.mxu0 %v2607
    %5343 = vmatprep.subr.bf16.mxu0 %v2604
    %5344 = vmatpush1.bf16.msra.mxu0 %v2603
    %5345 = vmatprep.subr.bf16.mxu0 %v2600
    %5346 = vmatpush1.bf16.msra.mxu0 %v2599
    %5347 = vmatprep.subr.bf16.mxu0 0
    %5348 = vmatpush2.bf16.msra.mxu0 0
    %5349 = vmatprep.subr.bf16.mxu0 0
    %5350 = vmatpush2.bf16.msra.mxu0 0
    %5351 = vmatprep.subr.bf16.mxu0 0
    %5352 = vmatpush2.bf16.msra.mxu0 0
    %5353 = vmatprep.subr.bf16.mxu0 0
    %5354 = vmatpush2.bf16.msra.mxu0 0
    %5355 = vmatprep.subr.bf16.mxu0 0
    %5356 = vmatpush2.bf16.msra.mxu0 0
    %5357 = vmatprep.subr.bf16.mxu0 0
    %5358 = vmatpush2.bf16.msra.mxu0 0
    %5359 = vmatprep.subr.bf16.mxu0 0
    %5360 = vmatpush2.bf16.msra.mxu0 0
    %5361 = vmatprep.subr.bf16.mxu0 0
    %5362 = vmatpush2.bf16.msra.mxu0 0
    %5363 = vmatprep.mubr.bf16.mxu0 0
    %5364 = vmatmul.mubr.bf16.gmra.mxu0 %v5289
    %v5365 = vpop.f32.mrf.mxu0
    %v5366 = vadd.f32 %v2492, %v5365
    %v5367 = vpop.f32.mrf.mxu0
    %v5368 = vadd.f32 %v2496, %v5367
    %v5369 = vpop.f32.mrf.mxu0
    %v5370 = vpop.f32.mrf.mxu0
    %5371 = vdwg.mxu0
    %5372 = vmatprep.subr.bf16.mxu0 %v2868
    %5373 = vmatpush1.bf16.msra.mxu0 %v2867
    %5374 = vmatprep.subr.bf16.mxu0 %v2864
    %5375 = vmatpush1.bf16.msra.mxu0 %v2863
    %5376 = vmatprep.subr.bf16.mxu0 %v2860
    %5377 = vmatpush1.bf16.msra.mxu0 %v2859
    %5378 = vmatprep.subr.bf16.mxu0 %v2856
    %5379 = vmatpush1.bf16.msra.mxu0 %v2855
    %5380 = vmatprep.subr.bf16.mxu0 %v2852
    %5381 = vmatpush1.bf16.msra.mxu0 %v2851
    %5382 = vmatprep.subr.bf16.mxu0 %v2848
    %5383 = vmatpush1.bf16.msra.mxu0 %v2847
    %5384 = vmatprep.subr.bf16.mxu0 %v2844
    %5385 = vmatpush1.bf16.msra.mxu0 %v2843
    %5386 = vmatprep.subr.bf16.mxu0 %v2840
    %5387 = vmatpush1.bf16.msra.mxu0 %v2839
    %5388 = vmatprep.subr.bf16.mxu0 0
    %5389 = vmatpush2.bf16.msra.mxu0 0
    %5390 = vmatprep.subr.bf16.mxu0 0
    %5391 = vmatpush2.bf16.msra.mxu0 0
    %5392 = vmatprep.subr.bf16.mxu0 0
    %5393 = vmatpush2.bf16.msra.mxu0 0
    %5394 = vmatprep.subr.bf16.mxu0 0
    %5395 = vmatpush2.bf16.msra.mxu0 0
    %5396 = vmatprep.subr.bf16.mxu0 0
    %5397 = vmatpush2.bf16.msra.mxu0 0
    %5398 = vmatprep.subr.bf16.mxu0 0
    %5399 = vmatpush2.bf16.msra.mxu0 0
    %5400 = vmatprep.subr.bf16.mxu0 0
    %5401 = vmatpush2.bf16.msra.mxu0 0
    %5402 = vmatprep.subr.bf16.mxu0 0
    %5403 = vmatpush2.bf16.msra.mxu0 0
    %5404 = vmatprep.mubr.bf16.mxu0 0
    %5405 = vmatmul.mubr.bf16.gmra.mxu0 %v4968
    %v5406 = vpop.f32.mrf.mxu0
    %v5407 = vadd.f32 0.0, %v5406
    %v5408 = vpop.f32.mrf.mxu0
    %v5409 = vadd.f32 0.0, %v5408
    %v5410 = vpop.f32.mrf.mxu0
    %v5411 = vpop.f32.mrf.mxu0
    %5412 = vdwg.mxu0
    %5413 = vmatprep.subr.bf16.mxu0 %v2870
    %5414 = vmatpush1.bf16.msra.mxu0 %v2869
    %5415 = vmatprep.subr.bf16.mxu0 %v2866
    %5416 = vmatpush1.bf16.msra.mxu0 %v2865
    %5417 = vmatprep.subr.bf16.mxu0 %v2862
    %5418 = vmatpush1.bf16.msra.mxu0 %v2861
    %5419 = vmatprep.subr.bf16.mxu0 %v2858
    %5420 = vmatpush1.bf16.msra.mxu0 %v2857
    %5421 = vmatprep.subr.bf16.mxu0 %v2854
    %5422 = vmatpush1.bf16.msra.mxu0 %v2853
    %5423 = vmatprep.subr.bf16.mxu0 %v2850
    %5424 = vmatpush1.bf16.msra.mxu0 %v2849
    %5425 = vmatprep.subr.bf16.mxu0 %v2846
    %5426 = vmatpush1.bf16.msra.mxu0 %v2845
    %5427 = vmatprep.subr.bf16.mxu0 %v2842
    %5428 = vmatpush1.bf16.msra.mxu0 %v2841
    %5429 = vmatprep.subr.bf16.mxu0 0
    %5430 = vmatpush2.bf16.msra.mxu0 0
    %5431 = vmatprep.subr.bf16.mxu0 0
    %5432 = vmatpush2.bf16.msra.mxu0 0
    %5433 = vmatprep.subr.bf16.mxu0 0
    %5434 = vmatpush2.bf16.msra.mxu0 0
    %5435 = vmatprep.subr.bf16.mxu0 0
    %5436 = vmatpush2.bf16.msra.mxu0 0
    %5437 = vmatprep.subr.bf16.mxu0 0
    %5438 = vmatpush2.bf16.msra.mxu0 0
    %5439 = vmatprep.subr.bf16.mxu0 0
    %5440 = vmatpush2.bf16.msra.mxu0 0
    %5441 = vmatprep.subr.bf16.mxu0 0
    %5442 = vmatpush2.bf16.msra.mxu0 0
    %5443 = vmatprep.subr.bf16.mxu0 0
    %5444 = vmatpush2.bf16.msra.mxu0 0
    %5445 = vmatprep.mubr.bf16.mxu0 0
    %5446 = vmatmul.mubr.bf16.gmra.mxu0 %v4968
    %v5447 = vpop.f32.mrf.mxu0
    %v5448 = vadd.f32 0.0, %v5447
    %v5449 = vpop.f32.mrf.mxu0
    %v5450 = vadd.f32 0.0, %v5449
    %v5451 = vpop.f32.mrf.mxu0
    %v5452 = vpop.f32.mrf.mxu0
    %5453 = vdwg.mxu0
    %v5454 = vadd.f32 %v5325, %v5407
    %v5455 = vadd.f32 %v5327, %v5409
    %v5456 = vadd.f32 %v5366, %v5448
    %v5457 = vadd.f32 %v5368, %v5450
    %v5458 = vxor.u32 %v5454, 2147483648
    %v5459 = vxor.u32 %v5455, 2147483648
    %v5460 = vxor.u32 %v5456, 2147483648
    %v5461 = vxor.u32 %v5457, 2147483648
    %v5462 = vmul.f32 %v5458, 1.442695
    %v5463 = vpow.pop %v5462
    %v5464 = vmul.f32 %v5459, 1.442695
    %v5465 = vpow.pop %v5464
    %v5466 = vmul.f32 %v5460, 1.442695
    %v5467 = vpow.pop %v5466
    %v5468 = vmul.f32 %v5461, 1.442695
    %v5469 = vpow.pop %v5468
    %v5470 = vadd.f32 %v5463, 1.0
    %v5471 = vadd.f32 %v5465, 1.0
    %v5472 = vadd.f32 %v5467, 1.0
    %v5473 = vadd.f32 %v5469, 1.0
    %v5474 = vrcp.pop %v5470
    %v5475 = vmul.f32 1.0, %v5474
    %v5476 = vrcp.pop %v5471
    %v5477 = vmul.f32 1.0, %v5476
    %v5478 = vrcp.pop %v5472
    %v5479 = vmul.f32 1.0, %v5478
    %v5480 = vrcp.pop %v5473
    %v5481 = vmul.f32 1.0, %v5480
    %v5482 = vmul.f32 %v5479, 2.0
    %v5483 = vsub.f32 %v5482, 1.0
    %v5484 = vmul.f32 %v5477, %v4965
    %v5485 = vmul.f32 %v5475, %v5483
    %v5486 = vadd.f32 %v5484, %v5485
    %v5487 = vtanh.pop %v5486
    %v5488 = vmul.f32 %v5481, %v5487
    %v5489 = vpack.c.bf16 %v5488, %v5488
    %5490 = vmatprep.subr.bf16.mxu0 %v3167
    %5491 = vmatpush1.bf16.msra.mxu0 %v3166
    %5492 = vmatprep.subr.bf16.mxu0 %v3163
    %5493 = vmatpush1.bf16.msra.mxu0 %v3162
    %5494 = vmatprep.subr.bf16.mxu0 %v3159
    %5495 = vmatpush1.bf16.msra.mxu0 %v3158
    %5496 = vmatprep.subr.bf16.mxu0 %v3155
    %5497 = vmatpush1.bf16.msra.mxu0 %v3154
    %5498 = vmatprep.subr.bf16.mxu0 %v3151
    %5499 = vmatpush1.bf16.msra.mxu0 %v3150
    %5500 = vmatprep.subr.bf16.mxu0 %v3147
    %5501 = vmatpush1.bf16.msra.mxu0 %v3146
    %5502 = vmatprep.subr.bf16.mxu0 %v3143
    %5503 = vmatpush1.bf16.msra.mxu0 %v3142
    %5504 = vmatprep.subr.bf16.mxu0 %v3139
    %5505 = vmatpush1.bf16.msra.mxu0 %v3138
    %5506 = vmatprep.subr.bf16.mxu0 0
    %5507 = vmatpush2.bf16.msra.mxu0 0
    %5508 = vmatprep.subr.bf16.mxu0 0
    %5509 = vmatpush2.bf16.msra.mxu0 0
    %5510 = vmatprep.subr.bf16.mxu0 0
    %5511 = vmatpush2.bf16.msra.mxu0 0
    %5512 = vmatprep.subr.bf16.mxu0 0
    %5513 = vmatpush2.bf16.msra.mxu0 0
    %5514 = vmatprep.subr.bf16.mxu0 0
    %5515 = vmatpush2.bf16.msra.mxu0 0
    %5516 = vmatprep.subr.bf16.mxu0 0
    %5517 = vmatpush2.bf16.msra.mxu0 0
    %5518 = vmatprep.subr.bf16.mxu0 0
    %5519 = vmatpush2.bf16.msra.mxu0 0
    %5520 = vmatprep.subr.bf16.mxu0 0
    %5521 = vmatpush2.bf16.msra.mxu0 0
    %5522 = vmatprep.mubr.bf16.mxu0 0
    %5523 = vmatmul.mubr.bf16.gmra.mxu0 %v5489
    %v5524 = vpop.f32.mrf.mxu0
    %v5525 = vadd.f32 %v3025, %v5524
    %v5526 = vpop.f32.mrf.mxu0
    %v5527 = vadd.f32 %v3029, %v5526
    %v5528 = vpop.f32.mrf.mxu0
    %v5529 = vpop.f32.mrf.mxu0
    %5530 = vdwg.mxu0
    %5531 = vmatprep.subr.bf16.mxu0 %v3169
    %5532 = vmatpush1.bf16.msra.mxu0 %v3168
    %5533 = vmatprep.subr.bf16.mxu0 %v3165
    %5534 = vmatpush1.bf16.msra.mxu0 %v3164
    %5535 = vmatprep.subr.bf16.mxu0 %v3161
    %5536 = vmatpush1.bf16.msra.mxu0 %v3160
    %5537 = vmatprep.subr.bf16.mxu0 %v3157
    %5538 = vmatpush1.bf16.msra.mxu0 %v3156
    %5539 = vmatprep.subr.bf16.mxu0 %v3153
    %5540 = vmatpush1.bf16.msra.mxu0 %v3152
    %5541 = vmatprep.subr.bf16.mxu0 %v3149
    %5542 = vmatpush1.bf16.msra.mxu0 %v3148
    %5543 = vmatprep.subr.bf16.mxu0 %v3145
    %5544 = vmatpush1.bf16.msra.mxu0 %v3144
    %5545 = vmatprep.subr.bf16.mxu0 %v3141
    %5546 = vmatpush1.bf16.msra.mxu0 %v3140
    %5547 = vmatprep.subr.bf16.mxu0 0
    %5548 = vmatpush2.bf16.msra.mxu0 0
    %5549 = vmatprep.subr.bf16.mxu0 0
    %5550 = vmatpush2.bf16.msra.mxu0 0
    %5551 = vmatprep.subr.bf16.mxu0 0
    %5552 = vmatpush2.bf16.msra.mxu0 0
    %5553 = vmatprep.subr.bf16.mxu0 0
    %5554 = vmatpush2.bf16.msra.mxu0 0
    %5555 = vmatprep.subr.bf16.mxu0 0
    %5556 = vmatpush2.bf16.msra.mxu0 0
    %5557 = vmatprep.subr.bf16.mxu0 0
    %5558 = vmatpush2.bf16.msra.mxu0 0
    %5559 = vmatprep.subr.bf16.mxu0 0
    %5560 = vmatpush2.bf16.msra.mxu0 0
    %5561 = vmatprep.subr.bf16.mxu0 0
    %5562 = vmatpush2.bf16.msra.mxu0 0
    %5563 = vmatprep.mubr.bf16.mxu0 0
    %5564 = vmatmul.mubr.bf16.gmra.mxu0 %v5489
    %v5565 = vpop.f32.mrf.mxu0
    %v5566 = vadd.f32 %v3033, %v5565
    %v5567 = vpop.f32.mrf.mxu0
    %v5568 = vadd.f32 %v3037, %v5567
    %v5569 = vpop.f32.mrf.mxu0
    %v5570 = vpop.f32.mrf.mxu0
    %5571 = vdwg.mxu0
    %v5572 = vpack.c.bf16 %v5168, %v5168
    %5573 = vmatprep.subr.bf16.mxu0 %v3409
    %5574 = vmatpush1.bf16.msra.mxu0 %v3408
    %5575 = vmatprep.subr.bf16.mxu0 %v3405
    %5576 = vmatpush1.bf16.msra.mxu0 %v3404
    %5577 = vmatprep.subr.bf16.mxu0 %v3401
    %5578 = vmatpush1.bf16.msra.mxu0 %v3400
    %5579 = vmatprep.subr.bf16.mxu0 %v3397
    %5580 = vmatpush1.bf16.msra.mxu0 %v3396
    %5581 = vmatprep.subr.bf16.mxu0 %v3393
    %5582 = vmatpush1.bf16.msra.mxu0 %v3392
    %5583 = vmatprep.subr.bf16.mxu0 %v3389
    %5584 = vmatpush1.bf16.msra.mxu0 %v3388
    %5585 = vmatprep.subr.bf16.mxu0 %v3385
    %5586 = vmatpush1.bf16.msra.mxu0 %v3384
    %5587 = vmatprep.subr.bf16.mxu0 %v3381
    %5588 = vmatpush1.bf16.msra.mxu0 %v3380
    %5589 = vmatprep.subr.bf16.mxu0 0
    %5590 = vmatpush2.bf16.msra.mxu0 0
    %5591 = vmatprep.subr.bf16.mxu0 0
    %5592 = vmatpush2.bf16.msra.mxu0 0
    %5593 = vmatprep.subr.bf16.mxu0 0
    %5594 = vmatpush2.bf16.msra.mxu0 0
    %5595 = vmatprep.subr.bf16.mxu0 0
    %5596 = vmatpush2.bf16.msra.mxu0 0
    %5597 = vmatprep.subr.bf16.mxu0 0
    %5598 = vmatpush2.bf16.msra.mxu0 0
    %5599 = vmatprep.subr.bf16.mxu0 0
    %5600 = vmatpush2.bf16.msra.mxu0 0
    %5601 = vmatprep.subr.bf16.mxu0 0
    %5602 = vmatpush2.bf16.msra.mxu0 0
    %5603 = vmatprep.subr.bf16.mxu0 0
    %5604 = vmatpush2.bf16.msra.mxu0 0
    %5605 = vmatprep.mubr.bf16.mxu0 0
    %5606 = vmatmul.mubr.bf16.gmra.mxu0 %v5572
    %v5607 = vpop.f32.mrf.mxu0
    %v5608 = vadd.f32 0.0, %v5607
    %v5609 = vpop.f32.mrf.mxu0
    %v5610 = vadd.f32 0.0, %v5609
    %v5611 = vpop.f32.mrf.mxu0
    %v5612 = vpop.f32.mrf.mxu0
    %5613 = vdwg.mxu0
    %5614 = vmatprep.subr.bf16.mxu0 %v3411
    %5615 = vmatpush1.bf16.msra.mxu0 %v3410
    %5616 = vmatprep.subr.bf16.mxu0 %v3407
    %5617 = vmatpush1.bf16.msra.mxu0 %v3406
    %5618 = vmatprep.subr.bf16.mxu0 %v3403
    %5619 = vmatpush1.bf16.msra.mxu0 %v3402
    %5620 = vmatprep.subr.bf16.mxu0 %v3399
    %5621 = vmatpush1.bf16.msra.mxu0 %v3398
    %5622 = vmatprep.subr.bf16.mxu0 %v3395
    %5623 = vmatpush1.bf16.msra.mxu0 %v3394
    %5624 = vmatprep.subr.bf16.mxu0 %v3391
    %5625 = vmatpush1.bf16.msra.mxu0 %v3390
    %5626 = vmatprep.subr.bf16.mxu0 %v3387
    %5627 = vmatpush1.bf16.msra.mxu0 %v3386
    %5628 = vmatprep.subr.bf16.mxu0 %v3383
    %5629 = vmatpush1.bf16.msra.mxu0 %v3382
    %5630 = vmatprep.subr.bf16.mxu0 0
    %5631 = vmatpush2.bf16.msra.mxu0 0
    %5632 = vmatprep.subr.bf16.mxu0 0
    %5633 = vmatpush2.bf16.msra.mxu0 0
    %5634 = vmatprep.subr.bf16.mxu0 0
    %5635 = vmatpush2.bf16.msra.mxu0 0
    %5636 = vmatprep.subr.bf16.mxu0 0
    %5637 = vmatpush2.bf16.msra.mxu0 0
    %5638 = vmatprep.subr.bf16.mxu0 0
    %5639 = vmatpush2.bf16.msra.mxu0 0
    %5640 = vmatprep.subr.bf16.mxu0 0
    %5641 = vmatpush2.bf16.msra.mxu0 0
    %5642 = vmatprep.subr.bf16.mxu0 0
    %5643 = vmatpush2.bf16.msra.mxu0 0
    %5644 = vmatprep.subr.bf16.mxu0 0
    %5645 = vmatpush2.bf16.msra.mxu0 0
    %5646 = vmatprep.mubr.bf16.mxu0 0
    %5647 = vmatmul.mubr.bf16.gmra.mxu0 %v5572
    %v5648 = vpop.f32.mrf.mxu0
    %v5649 = vadd.f32 0.0, %v5648
    %v5650 = vpop.f32.mrf.mxu0
    %v5651 = vadd.f32 0.0, %v5650
    %v5652 = vpop.f32.mrf.mxu0
    %v5653 = vpop.f32.mrf.mxu0
    %5654 = vdwg.mxu0
    %v5655 = vadd.f32 %v5525, %v5608
    %v5656 = vadd.f32 %v5527, %v5610
    %v5657 = vadd.f32 %v5566, %v5649
    %v5658 = vadd.f32 %v5568, %v5651
    %v5659 = vxor.u32 %v5655, 2147483648
    %v5660 = vxor.u32 %v5656, 2147483648
    %v5661 = vxor.u32 %v5657, 2147483648
    %v5662 = vxor.u32 %v5658, 2147483648
    %v5663 = vmul.f32 %v5659, 1.442695
    %v5664 = vpow.pop %v5663
    %v5665 = vmul.f32 %v5660, 1.442695
    %v5666 = vpow.pop %v5665
    %v5667 = vmul.f32 %v5661, 1.442695
    %v5668 = vpow.pop %v5667
    %v5669 = vmul.f32 %v5662, 1.442695
    %v5670 = vpow.pop %v5669
    %v5671 = vadd.f32 %v5664, 1.0
    %v5672 = vadd.f32 %v5666, 1.0
    %v5673 = vadd.f32 %v5668, 1.0
    %v5674 = vadd.f32 %v5670, 1.0
    %v5675 = vrcp.pop %v5671
    %v5676 = vmul.f32 1.0, %v5675
    %v5677 = vrcp.pop %v5672
    %v5678 = vmul.f32 1.0, %v5677
    %v5679 = vrcp.pop %v5673
    %v5680 = vmul.f32 1.0, %v5679
    %v5681 = vrcp.pop %v5674
    %v5682 = vmul.f32 1.0, %v5681
    %v5683 = vmul.f32 %v5680, 2.0
    %v5684 = vsub.f32 %v5683, 1.0
    %v5685 = vmul.f32 %v5678, %v5166
    %v5686 = vmul.f32 %v5676, %v5684
    %v5687 = vadd.f32 %v5685, %v5686
    %v5688 = vtanh.pop %v5687
    %v5689 = vmul.f32 %v5682, %v5688
    %5690 = vmatprep.subr.bf16.mxu0 %v2327
    %5691 = vmatpush1.bf16.msra.mxu0 %v2326
    %5692 = vmatprep.subr.bf16.mxu0 %v2323
    %5693 = vmatpush1.bf16.msra.mxu0 %v2322
    %5694 = vmatprep.subr.bf16.mxu0 %v2319
    %5695 = vmatpush1.bf16.msra.mxu0 %v2318
    %5696 = vmatprep.subr.bf16.mxu0 %v2315
    %5697 = vmatpush1.bf16.msra.mxu0 %v2314
    %5698 = vmatprep.subr.bf16.mxu0 %v2311
    %5699 = vmatpush1.bf16.msra.mxu0 %v2310
    %5700 = vmatprep.subr.bf16.mxu0 %v2307
    %5701 = vmatpush1.bf16.msra.mxu0 %v2306
    %5702 = vmatprep.subr.bf16.mxu0 %v2303
    %5703 = vmatpush1.bf16.msra.mxu0 %v2302
    %5704 = vmatprep.subr.bf16.mxu0 %v2299
    %5705 = vmatpush1.bf16.msra.mxu0 %v2298
    %5706 = vmatprep.subr.bf16.mxu0 0
    %5707 = vmatpush2.bf16.msra.mxu0 0
    %5708 = vmatprep.subr.bf16.mxu0 0
    %5709 = vmatpush2.bf16.msra.mxu0 0
    %5710 = vmatprep.subr.bf16.mxu0 0
    %5711 = vmatpush2.bf16.msra.mxu0 0
    %5712 = vmatprep.subr.bf16.mxu0 0
    %5713 = vmatpush2.bf16.msra.mxu0 0
    %5714 = vmatprep.subr.bf16.mxu0 0
    %5715 = vmatpush2.bf16.msra.mxu0 0
    %5716 = vmatprep.subr.bf16.mxu0 0
    %5717 = vmatpush2.bf16.msra.mxu0 0
    %5718 = vmatprep.subr.bf16.mxu0 0
    %5719 = vmatpush2.bf16.msra.mxu0 0
    %5720 = vmatprep.subr.bf16.mxu0 0
    %5721 = vmatpush2.bf16.msra.mxu0 0
    %5722 = vmatprep.mubr.bf16.mxu0 0
    %5723 = vmatmul.mubr.bf16.gmra.mxu0 %v5289
    %v5724 = vpop.f32.mrf.mxu0
    %v5725 = vadd.f32 0.0, %v5724
    %v5726 = vpop.f32.mrf.mxu0
    %v5727 = vadd.f32 0.0, %v5726
    %v5728 = vpop.f32.mrf.mxu0
    %v5729 = vpop.f32.mrf.mxu0
    %5730 = vdwg.mxu0
    %5731 = vmatprep.subr.bf16.mxu0 %v2329
    %5732 = vmatpush1.bf16.msra.mxu0 %v2328
    %5733 = vmatprep.subr.bf16.mxu0 %v2325
    %5734 = vmatpush1.bf16.msra.mxu0 %v2324
    %5735 = vmatprep.subr.bf16.mxu0 %v2321
    %5736 = vmatpush1.bf16.msra.mxu0 %v2320
    %5737 = vmatprep.subr.bf16.mxu0 %v2317
    %5738 = vmatpush1.bf16.msra.mxu0 %v2316
    %5739 = vmatprep.subr.bf16.mxu0 %v2313
    %5740 = vmatpush1.bf16.msra.mxu0 %v2312
    %5741 = vmatprep.subr.bf16.mxu0 %v2309
    %5742 = vmatpush1.bf16.msra.mxu0 %v2308
    %5743 = vmatprep.subr.bf16.mxu0 %v2305
    %5744 = vmatpush1.bf16.msra.mxu0 %v2304
    %5745 = vmatprep.subr.bf16.mxu0 %v2301
    %5746 = vmatpush1.bf16.msra.mxu0 %v2300
    %5747 = vmatprep.subr.bf16.mxu0 0
    %5748 = vmatpush2.bf16.msra.mxu0 0
    %5749 = vmatprep.subr.bf16.mxu0 0
    %5750 = vmatpush2.bf16.msra.mxu0 0
    %5751 = vmatprep.subr.bf16.mxu0 0
    %5752 = vmatpush2.bf16.msra.mxu0 0
    %5753 = vmatprep.subr.bf16.mxu0 0
    %5754 = vmatpush2.bf16.msra.mxu0 0
    %5755 = vmatprep.subr.bf16.mxu0 0
    %5756 = vmatpush2.bf16.msra.mxu0 0
    %5757 = vmatprep.subr.bf16.mxu0 0
    %5758 = vmatpush2.bf16.msra.mxu0 0
    %5759 = vmatprep.subr.bf16.mxu0 0
    %5760 = vmatpush2.bf16.msra.mxu0 0
    %5761 = vmatprep.subr.bf16.mxu0 0
    %5762 = vmatpush2.bf16.msra.mxu0 0
    %5763 = vmatprep.mubr.bf16.mxu0 0
    %5764 = vmatmul.mubr.bf16.gmra.mxu0 %v5289
    %v5765 = vpop.f32.mrf.mxu0
    %v5766 = vadd.f32 0.0, %v5765
    %v5767 = vpop.f32.mrf.mxu0
    %v5768 = vadd.f32 0.0, %v5767
    %v5769 = vpop.f32.mrf.mxu0
    %v5770 = vpop.f32.mrf.mxu0
    %5771 = vdwg.mxu0
    %v5776 = vrot.slane %v5725, 6
    %v5777 = vrot.slane %v5727, 6
    %v5778 = vrot.slane %v5766, 6
    %v5779 = vrot.slane %v5768, 6
    %v5784 = vadd.f32 %v1864, %v5776
    %v5785 = vadd.f32 %v1866, %v5777
    %v5786 = vadd.f32 %v2036, %v5778
    %v5787 = vadd.f32 %v2038, %v5779
    %v5788 = vxor.u32 %v5784, 2147483648
    %v5789 = vxor.u32 %v5785, 2147483648
    %v5790 = vxor.u32 %v5786, 2147483648
    %v5791 = vxor.u32 %v5787, 2147483648
    %v5792 = vmul.f32 %v5788, 1.442695
    %v5793 = vpow.pop %v5792
    %v5794 = vmul.f32 %v5789, 1.442695
    %v5795 = vpow.pop %v5794
    %v5796 = vmul.f32 %v5790, 1.442695
    %v5797 = vpow.pop %v5796
    %v5798 = vmul.f32 %v5791, 1.442695
    %v5799 = vpow.pop %v5798
    %v5800 = vadd.f32 %v5793, 1.0
    %v5801 = vadd.f32 %v5795, 1.0
    %v5802 = vadd.f32 %v5797, 1.0
    %v5803 = vadd.f32 %v5799, 1.0
    %v5804 = vrcp.pop %v5800
    %v5805 = vmul.f32 1.0, %v5804
    %v5806 = vrcp.pop %v5801
    %v5807 = vmul.f32 1.0, %v5806
    %v5808 = vrcp.pop %v5802
    %v5809 = vmul.f32 1.0, %v5808
    %v5810 = vrcp.pop %v5803
    %v5811 = vmul.f32 1.0, %v5810
    %v5812 = vmul.f32 %v5809, 2.0
    %v5813 = vsub.f32 %v5812, 1.0
    %v5815 = vrot.slane %v5286, 6
    %v5817 = vmul.f32 %v5807, %v5815
    %v5818 = vmul.f32 %v5805, %v5813
    %v5819 = vadd.f32 %v5817, %v5818
    %v5820 = vtanh.pop %v5819
    %v5821 = vmul.f32 %v5811, %v5820
    %v5822 = vpack.c.bf16 %v5821, %v5821
    %v5824 = vrot.slane %v5822, 1
    %5826 = vmatprep.subr.bf16.mxu0 %v2626
    %5827 = vmatpush1.bf16.msra.mxu0 %v2625
    %5828 = vmatprep.subr.bf16.mxu0 %v2622
    %5829 = vmatpush1.bf16.msra.mxu0 %v2621
    %5830 = vmatprep.subr.bf16.mxu0 %v2618
    %5831 = vmatpush1.bf16.msra.mxu0 %v2617
    %5832 = vmatprep.subr.bf16.mxu0 %v2614
    %5833 = vmatpush1.bf16.msra.mxu0 %v2613
    %5834 = vmatprep.subr.bf16.mxu0 %v2610
    %5835 = vmatpush1.bf16.msra.mxu0 %v2609
    %5836 = vmatprep.subr.bf16.mxu0 %v2606
    %5837 = vmatpush1.bf16.msra.mxu0 %v2605
    %5838 = vmatprep.subr.bf16.mxu0 %v2602
    %5839 = vmatpush1.bf16.msra.mxu0 %v2601
    %5840 = vmatprep.subr.bf16.mxu0 %v2598
    %5841 = vmatpush1.bf16.msra.mxu0 %v2597
    %5842 = vmatprep.subr.bf16.mxu0 0
    %5843 = vmatpush2.bf16.msra.mxu0 0
    %5844 = vmatprep.subr.bf16.mxu0 0
    %5845 = vmatpush2.bf16.msra.mxu0 0
    %5846 = vmatprep.subr.bf16.mxu0 0
    %5847 = vmatpush2.bf16.msra.mxu0 0
    %5848 = vmatprep.subr.bf16.mxu0 0
    %5849 = vmatpush2.bf16.msra.mxu0 0
    %5850 = vmatprep.subr.bf16.mxu0 0
    %5851 = vmatpush2.bf16.msra.mxu0 0
    %5852 = vmatprep.subr.bf16.mxu0 0
    %5853 = vmatpush2.bf16.msra.mxu0 0
    %5854 = vmatprep.subr.bf16.mxu0 0
    %5855 = vmatpush2.bf16.msra.mxu0 0
    %5856 = vmatprep.subr.bf16.mxu0 0
    %5857 = vmatpush2.bf16.msra.mxu0 0
    %5858 = vmatprep.mubr.bf16.mxu0 0
    %5859 = vmatmul.mubr.bf16.gmra.mxu0 %v5824
    %v5860 = vpop.f32.mrf.mxu0
    %v5861 = vadd.f32 %v2484, %v5860
    %v5862 = vpop.f32.mrf.mxu0
    %v5863 = vadd.f32 %v2488, %v5862
    %v5864 = vpop.f32.mrf.mxu0
    %v5865 = vpop.f32.mrf.mxu0
    %5866 = vdwg.mxu0
    %5867 = vmatprep.subr.bf16.mxu0 %v2628
    %5868 = vmatpush1.bf16.msra.mxu0 %v2627
    %5869 = vmatprep.subr.bf16.mxu0 %v2624
    %5870 = vmatpush1.bf16.msra.mxu0 %v2623
    %5871 = vmatprep.subr.bf16.mxu0 %v2620
    %5872 = vmatpush1.bf16.msra.mxu0 %v2619
    %5873 = vmatprep.subr.bf16.mxu0 %v2616
    %5874 = vmatpush1.bf16.msra.mxu0 %v2615
    %5875 = vmatprep.subr.bf16.mxu0 %v2612
    %5876 = vmatpush1.bf16.msra.mxu0 %v2611
    %5877 = vmatprep.subr.bf16.mxu0 %v2608
    %5878 = vmatpush1.bf16.msra.mxu0 %v2607
    %5879 = vmatprep.subr.bf16.mxu0 %v2604
    %5880 = vmatpush1.bf16.msra.mxu0 %v2603
    %5881 = vmatprep.subr.bf16.mxu0 %v2600
    %5882 = vmatpush1.bf16.msra.mxu0 %v2599
    %5883 = vmatprep.subr.bf16.mxu0 0
    %5884 = vmatpush2.bf16.msra.mxu0 0
    %5885 = vmatprep.subr.bf16.mxu0 0
    %5886 = vmatpush2.bf16.msra.mxu0 0
    %5887 = vmatprep.subr.bf16.mxu0 0
    %5888 = vmatpush2.bf16.msra.mxu0 0
    %5889 = vmatprep.subr.bf16.mxu0 0
    %5890 = vmatpush2.bf16.msra.mxu0 0
    %5891 = vmatprep.subr.bf16.mxu0 0
    %5892 = vmatpush2.bf16.msra.mxu0 0
    %5893 = vmatprep.subr.bf16.mxu0 0
    %5894 = vmatpush2.bf16.msra.mxu0 0
    %5895 = vmatprep.subr.bf16.mxu0 0
    %5896 = vmatpush2.bf16.msra.mxu0 0
    %5897 = vmatprep.subr.bf16.mxu0 0
    %5898 = vmatpush2.bf16.msra.mxu0 0
    %5899 = vmatprep.mubr.bf16.mxu0 0
    %5900 = vmatmul.mubr.bf16.gmra.mxu0 %v5824
    %v5901 = vpop.f32.mrf.mxu0
    %v5902 = vadd.f32 %v2492, %v5901
    %v5903 = vpop.f32.mrf.mxu0
    %v5904 = vadd.f32 %v2496, %v5903
    %v5905 = vpop.f32.mrf.mxu0
    %v5906 = vpop.f32.mrf.mxu0
    %5907 = vdwg.mxu0
    %5908 = vmatprep.subr.bf16.mxu0 %v2868
    %5909 = vmatpush1.bf16.msra.mxu0 %v2867
    %5910 = vmatprep.subr.bf16.mxu0 %v2864
    %5911 = vmatpush1.bf16.msra.mxu0 %v2863
    %5912 = vmatprep.subr.bf16.mxu0 %v2860
    %5913 = vmatpush1.bf16.msra.mxu0 %v2859
    %5914 = vmatprep.subr.bf16.mxu0 %v2856
    %5915 = vmatpush1.bf16.msra.mxu0 %v2855
    %5916 = vmatprep.subr.bf16.mxu0 %v2852
    %5917 = vmatpush1.bf16.msra.mxu0 %v2851
    %5918 = vmatprep.subr.bf16.mxu0 %v2848
    %5919 = vmatpush1.bf16.msra.mxu0 %v2847
    %5920 = vmatprep.subr.bf16.mxu0 %v2844
    %5921 = vmatpush1.bf16.msra.mxu0 %v2843
    %5922 = vmatprep.subr.bf16.mxu0 %v2840
    %5923 = vmatpush1.bf16.msra.mxu0 %v2839
    %5924 = vmatprep.subr.bf16.mxu0 0
    %5925 = vmatpush2.bf16.msra.mxu0 0
    %5926 = vmatprep.subr.bf16.mxu0 0
    %5927 = vmatpush2.bf16.msra.mxu0 0
    %5928 = vmatprep.subr.bf16.mxu0 0
    %5929 = vmatpush2.bf16.msra.mxu0 0
    %5930 = vmatprep.subr.bf16.mxu0 0
    %5931 = vmatpush2.bf16.msra.mxu0 0
    %5932 = vmatprep.subr.bf16.mxu0 0
    %5933 = vmatpush2.bf16.msra.mxu0 0
    %5934 = vmatprep.subr.bf16.mxu0 0
    %5935 = vmatpush2.bf16.msra.mxu0 0
    %5936 = vmatprep.subr.bf16.mxu0 0
    %5937 = vmatpush2.bf16.msra.mxu0 0
    %5938 = vmatprep.subr.bf16.mxu0 0
    %5939 = vmatpush2.bf16.msra.mxu0 0
    %5940 = vmatprep.mubr.bf16.mxu0 0
    %5941 = vmatmul.mubr.bf16.gmra.mxu0 %v5489
    %v5942 = vpop.f32.mrf.mxu0
    %v5943 = vadd.f32 0.0, %v5942
    %v5944 = vpop.f32.mrf.mxu0
    %v5945 = vadd.f32 0.0, %v5944
    %v5946 = vpop.f32.mrf.mxu0
    %v5947 = vpop.f32.mrf.mxu0
    %5948 = vdwg.mxu0
    %5949 = vmatprep.subr.bf16.mxu0 %v2870
    %5950 = vmatpush1.bf16.msra.mxu0 %v2869
    %5951 = vmatprep.subr.bf16.mxu0 %v2866
    %5952 = vmatpush1.bf16.msra.mxu0 %v2865
    %5953 = vmatprep.subr.bf16.mxu0 %v2862
    %5954 = vmatpush1.bf16.msra.mxu0 %v2861
    %5955 = vmatprep.subr.bf16.mxu0 %v2858
    %5956 = vmatpush1.bf16.msra.mxu0 %v2857
    %5957 = vmatprep.subr.bf16.mxu0 %v2854
    %5958 = vmatpush1.bf16.msra.mxu0 %v2853
    %5959 = vmatprep.subr.bf16.mxu0 %v2850
    %5960 = vmatpush1.bf16.msra.mxu0 %v2849
    %5961 = vmatprep.subr.bf16.mxu0 %v2846
    %5962 = vmatpush1.bf16.msra.mxu0 %v2845
    %5963 = vmatprep.subr.bf16.mxu0 %v2842
    %5964 = vmatpush1.bf16.msra.mxu0 %v2841
    %5965 = vmatprep.subr.bf16.mxu0 0
    %5966 = vmatpush2.bf16.msra.mxu0 0
    %5967 = vmatprep.subr.bf16.mxu0 0
    %5968 = vmatpush2.bf16.msra.mxu0 0
    %5969 = vmatprep.subr.bf16.mxu0 0
    %5970 = vmatpush2.bf16.msra.mxu0 0
    %5971 = vmatprep.subr.bf16.mxu0 0
    %5972 = vmatpush2.bf16.msra.mxu0 0
    %5973 = vmatprep.subr.bf16.mxu0 0
    %5974 = vmatpush2.bf16.msra.mxu0 0
    %5975 = vmatprep.subr.bf16.mxu0 0
    %5976 = vmatpush2.bf16.msra.mxu0 0
    %5977 = vmatprep.subr.bf16.mxu0 0
    %5978 = vmatpush2.bf16.msra.mxu0 0
    %5979 = vmatprep.subr.bf16.mxu0 0
    %5980 = vmatpush2.bf16.msra.mxu0 0
    %5981 = vmatprep.mubr.bf16.mxu0 0
    %5982 = vmatmul.mubr.bf16.gmra.mxu0 %v5489
    %v5983 = vpop.f32.mrf.mxu0
    %v5984 = vadd.f32 0.0, %v5983
    %v5985 = vpop.f32.mrf.mxu0
    %v5986 = vadd.f32 0.0, %v5985
    %v5987 = vpop.f32.mrf.mxu0
    %v5988 = vpop.f32.mrf.mxu0
    %5989 = vdwg.mxu0
    %v5990 = vadd.f32 %v5861, %v5943
    %v5991 = vadd.f32 %v5863, %v5945
    %v5992 = vadd.f32 %v5902, %v5984
    %v5993 = vadd.f32 %v5904, %v5986
    %v5994 = vxor.u32 %v5990, 2147483648
    %v5995 = vxor.u32 %v5991, 2147483648
    %v5996 = vxor.u32 %v5992, 2147483648
    %v5997 = vxor.u32 %v5993, 2147483648
    %v5998 = vmul.f32 %v5994, 1.442695
    %v5999 = vpow.pop %v5998
    %v6000 = vmul.f32 %v5995, 1.442695
    %v6001 = vpow.pop %v6000
    %v6002 = vmul.f32 %v5996, 1.442695
    %v6003 = vpow.pop %v6002
    %v6004 = vmul.f32 %v5997, 1.442695
    %v6005 = vpow.pop %v6004
    %v6006 = vadd.f32 %v5999, 1.0
    %v6007 = vadd.f32 %v6001, 1.0
    %v6008 = vadd.f32 %v6003, 1.0
    %v6009 = vadd.f32 %v6005, 1.0
    %v6010 = vrcp.pop %v6006
    %v6011 = vmul.f32 1.0, %v6010
    %v6012 = vrcp.pop %v6007
    %v6013 = vmul.f32 1.0, %v6012
    %v6014 = vrcp.pop %v6008
    %v6015 = vmul.f32 1.0, %v6014
    %v6016 = vrcp.pop %v6009
    %v6017 = vmul.f32 1.0, %v6016
    %v6018 = vmul.f32 %v6015, 2.0
    %v6019 = vsub.f32 %v6018, 1.0
    %v6020 = vmul.f32 %v6013, %v5486
    %v6021 = vmul.f32 %v6011, %v6019
    %v6022 = vadd.f32 %v6020, %v6021
    %v6023 = vtanh.pop %v6022
    %v6024 = vmul.f32 %v6017, %v6023
    %v6025 = vpack.c.bf16 %v6024, %v6024
    %6026 = vmatprep.subr.bf16.mxu0 %v3167
    %6027 = vmatpush1.bf16.msra.mxu0 %v3166
    %6028 = vmatprep.subr.bf16.mxu0 %v3163
    %6029 = vmatpush1.bf16.msra.mxu0 %v3162
    %6030 = vmatprep.subr.bf16.mxu0 %v3159
    %6031 = vmatpush1.bf16.msra.mxu0 %v3158
    %6032 = vmatprep.subr.bf16.mxu0 %v3155
    %6033 = vmatpush1.bf16.msra.mxu0 %v3154
    %6034 = vmatprep.subr.bf16.mxu0 %v3151
    %6035 = vmatpush1.bf16.msra.mxu0 %v3150
    %6036 = vmatprep.subr.bf16.mxu0 %v3147
    %6037 = vmatpush1.bf16.msra.mxu0 %v3146
    %6038 = vmatprep.subr.bf16.mxu0 %v3143
    %6039 = vmatpush1.bf16.msra.mxu0 %v3142
    %6040 = vmatprep.subr.bf16.mxu0 %v3139
    %6041 = vmatpush1.bf16.msra.mxu0 %v3138
    %6042 = vmatprep.subr.bf16.mxu0 0
    %6043 = vmatpush2.bf16.msra.mxu0 0
    %6044 = vmatprep.subr.bf16.mxu0 0
    %6045 = vmatpush2.bf16.msra.mxu0 0
    %6046 = vmatprep.subr.bf16.mxu0 0
    %6047 = vmatpush2.bf16.msra.mxu0 0
    %6048 = vmatprep.subr.bf16.mxu0 0
    %6049 = vmatpush2.bf16.msra.mxu0 0
    %6050 = vmatprep.subr.bf16.mxu0 0
    %6051 = vmatpush2.bf16.msra.mxu0 0
    %6052 = vmatprep.subr.bf16.mxu0 0
    %6053 = vmatpush2.bf16.msra.mxu0 0
    %6054 = vmatprep.subr.bf16.mxu0 0
    %6055 = vmatpush2.bf16.msra.mxu0 0
    %6056 = vmatprep.subr.bf16.mxu0 0
    %6057 = vmatpush2.bf16.msra.mxu0 0
    %6058 = vmatprep.mubr.bf16.mxu0 0
    %6059 = vmatmul.mubr.bf16.gmra.mxu0 %v6025
    %v6060 = vpop.f32.mrf.mxu0
    %v6061 = vadd.f32 %v3025, %v6060
    %v6062 = vpop.f32.mrf.mxu0
    %v6063 = vadd.f32 %v3029, %v6062
    %v6064 = vpop.f32.mrf.mxu0
    %v6065 = vpop.f32.mrf.mxu0
    %6066 = vdwg.mxu0
    %6067 = vmatprep.subr.bf16.mxu0 %v3169
    %6068 = vmatpush1.bf16.msra.mxu0 %v3168
    %6069 = vmatprep.subr.bf16.mxu0 %v3165
    %6070 = vmatpush1.bf16.msra.mxu0 %v3164
    %6071 = vmatprep.subr.bf16.mxu0 %v3161
    %6072 = vmatpush1.bf16.msra.mxu0 %v3160
    %6073 = vmatprep.subr.bf16.mxu0 %v3157
    %6074 = vmatpush1.bf16.msra.mxu0 %v3156
    %6075 = vmatprep.subr.bf16.mxu0 %v3153
    %6076 = vmatpush1.bf16.msra.mxu0 %v3152
    %6077 = vmatprep.subr.bf16.mxu0 %v3149
    %6078 = vmatpush1.bf16.msra.mxu0 %v3148
    %6079 = vmatprep.subr.bf16.mxu0 %v3145
    %6080 = vmatpush1.bf16.msra.mxu0 %v3144
    %6081 = vmatprep.subr.bf16.mxu0 %v3141
    %6082 = vmatpush1.bf16.msra.mxu0 %v3140
    %6083 = vmatprep.subr.bf16.mxu0 0
    %6084 = vmatpush2.bf16.msra.mxu0 0
    %6085 = vmatprep.subr.bf16.mxu0 0
    %6086 = vmatpush2.bf16.msra.mxu0 0
    %6087 = vmatprep.subr.bf16.mxu0 0
    %6088 = vmatpush2.bf16.msra.mxu0 0
    %6089 = vmatprep.subr.bf16.mxu0 0
    %6090 = vmatpush2.bf16.msra.mxu0 0
    %6091 = vmatprep.subr.bf16.mxu0 0
    %6092 = vmatpush2.bf16.msra.mxu0 0
    %6093 = vmatprep.subr.bf16.mxu0 0
    %6094 = vmatpush2.bf16.msra.mxu0 0
    %6095 = vmatprep.subr.bf16.mxu0 0
    %6096 = vmatpush2.bf16.msra.mxu0 0
    %6097 = vmatprep.subr.bf16.mxu0 0
    %6098 = vmatpush2.bf16.msra.mxu0 0
    %6099 = vmatprep.mubr.bf16.mxu0 0
    %6100 = vmatmul.mubr.bf16.gmra.mxu0 %v6025
    %v6101 = vpop.f32.mrf.mxu0
    %v6102 = vadd.f32 %v3033, %v6101
    %v6103 = vpop.f32.mrf.mxu0
    %v6104 = vadd.f32 %v3037, %v6103
    %v6105 = vpop.f32.mrf.mxu0
    %v6106 = vpop.f32.mrf.mxu0
    %6107 = vdwg.mxu0
    %v6108 = vpack.c.bf16 %v5689, %v5689
    %6109 = vmatprep.subr.bf16.mxu0 %v3409
    %6110 = vmatpush1.bf16.msra.mxu0 %v3408
    %6111 = vmatprep.subr.bf16.mxu0 %v3405
    %6112 = vmatpush1.bf16.msra.mxu0 %v3404
    %6113 = vmatprep.subr.bf16.mxu0 %v3401
    %6114 = vmatpush1.bf16.msra.mxu0 %v3400
    %6115 = vmatprep.subr.bf16.mxu0 %v3397
    %6116 = vmatpush1.bf16.msra.mxu0 %v3396
    %6117 = vmatprep.subr.bf16.mxu0 %v3393
    %6118 = vmatpush1.bf16.msra.mxu0 %v3392
    %6119 = vmatprep.subr.bf16.mxu0 %v3389
    %6120 = vmatpush1.bf16.msra.mxu0 %v3388
    %6121 = vmatprep.subr.bf16.mxu0 %v3385
    %6122 = vmatpush1.bf16.msra.mxu0 %v3384
    %6123 = vmatprep.subr.bf16.mxu0 %v3381
    %6124 = vmatpush1.bf16.msra.mxu0 %v3380
    %6125 = vmatprep.subr.bf16.mxu0 0
    %6126 = vmatpush2.bf16.msra.mxu0 0
    %6127 = vmatprep.subr.bf16.mxu0 0
    %6128 = vmatpush2.bf16.msra.mxu0 0
    %6129 = vmatprep.subr.bf16.mxu0 0
    %6130 = vmatpush2.bf16.msra.mxu0 0
    %6131 = vmatprep.subr.bf16.mxu0 0
    %6132 = vmatpush2.bf16.msra.mxu0 0
    %6133 = vmatprep.subr.bf16.mxu0 0
    %6134 = vmatpush2.bf16.msra.mxu0 0
    %6135 = vmatprep.subr.bf16.mxu0 0
    %6136 = vmatpush2.bf16.msra.mxu0 0
    %6137 = vmatprep.subr.bf16.mxu0 0
    %6138 = vmatpush2.bf16.msra.mxu0 0
    %6139 = vmatprep.subr.bf16.mxu0 0
    %6140 = vmatpush2.bf16.msra.mxu0 0
    %6141 = vmatprep.mubr.bf16.mxu0 0
    %6142 = vmatmul.mubr.bf16.gmra.mxu0 %v6108
    %v6143 = vpop.f32.mrf.mxu0
    %v6144 = vadd.f32 0.0, %v6143
    %v6145 = vpop.f32.mrf.mxu0
    %v6146 = vadd.f32 0.0, %v6145
    %v6147 = vpop.f32.mrf.mxu0
    %v6148 = vpop.f32.mrf.mxu0
    %6149 = vdwg.mxu0
    %6150 = vmatprep.subr.bf16.mxu0 %v3411
    %6151 = vmatpush1.bf16.msra.mxu0 %v3410
    %6152 = vmatprep.subr.bf16.mxu0 %v3407
    %6153 = vmatpush1.bf16.msra.mxu0 %v3406
    %6154 = vmatprep.subr.bf16.mxu0 %v3403
    %6155 = vmatpush1.bf16.msra.mxu0 %v3402
    %6156 = vmatprep.subr.bf16.mxu0 %v3399
    %6157 = vmatpush1.bf16.msra.mxu0 %v3398
    %6158 = vmatprep.subr.bf16.mxu0 %v3395
    %6159 = vmatpush1.bf16.msra.mxu0 %v3394
    %6160 = vmatprep.subr.bf16.mxu0 %v3391
    %6161 = vmatpush1.bf16.msra.mxu0 %v3390
    %6162 = vmatprep.subr.bf16.mxu0 %v3387
    %6163 = vmatpush1.bf16.msra.mxu0 %v3386
    %6164 = vmatprep.subr.bf16.mxu0 %v3383
    %6165 = vmatpush1.bf16.msra.mxu0 %v3382
    %6166 = vmatprep.subr.bf16.mxu0 0
    %6167 = vmatpush2.bf16.msra.mxu0 0
    %6168 = vmatprep.subr.bf16.mxu0 0
    %6169 = vmatpush2.bf16.msra.mxu0 0
    %6170 = vmatprep.subr.bf16.mxu0 0
    %6171 = vmatpush2.bf16.msra.mxu0 0
    %6172 = vmatprep.subr.bf16.mxu0 0
    %6173 = vmatpush2.bf16.msra.mxu0 0
    %6174 = vmatprep.subr.bf16.mxu0 0
    %6175 = vmatpush2.bf16.msra.mxu0 0
    %6176 = vmatprep.subr.bf16.mxu0 0
    %6177 = vmatpush2.bf16.msra.mxu0 0
    %6178 = vmatprep.subr.bf16.mxu0 0
    %6179 = vmatpush2.bf16.msra.mxu0 0
    %6180 = vmatprep.subr.bf16.mxu0 0
    %6181 = vmatpush2.bf16.msra.mxu0 0
    %6182 = vmatprep.mubr.bf16.mxu0 0
    %6183 = vmatmul.mubr.bf16.gmra.mxu0 %v6108
    %v6184 = vpop.f32.mrf.mxu0
    %v6185 = vadd.f32 0.0, %v6184
    %v6186 = vpop.f32.mrf.mxu0
    %v6187 = vadd.f32 0.0, %v6186
    %v6188 = vpop.f32.mrf.mxu0
    %v6189 = vpop.f32.mrf.mxu0
    %6190 = vdwg.mxu0
    %v6191 = vadd.f32 %v6061, %v6144
    %v6192 = vadd.f32 %v6063, %v6146
    %v6193 = vadd.f32 %v6102, %v6185
    %v6194 = vadd.f32 %v6104, %v6187
    %v6195 = vxor.u32 %v6191, 2147483648
    %v6196 = vxor.u32 %v6192, 2147483648
    %v6197 = vxor.u32 %v6193, 2147483648
    %v6198 = vxor.u32 %v6194, 2147483648
    %v6199 = vmul.f32 %v6195, 1.442695
    %v6200 = vpow.pop %v6199
    %v6201 = vmul.f32 %v6196, 1.442695
    %v6202 = vpow.pop %v6201
    %v6203 = vmul.f32 %v6197, 1.442695
    %v6204 = vpow.pop %v6203
    %v6205 = vmul.f32 %v6198, 1.442695
    %v6206 = vpow.pop %v6205
    %v6207 = vadd.f32 %v6200, 1.0
    %v6208 = vadd.f32 %v6202, 1.0
    %v6209 = vadd.f32 %v6204, 1.0
    %v6210 = vadd.f32 %v6206, 1.0
    %v6211 = vrcp.pop %v6207
    %v6212 = vmul.f32 1.0, %v6211
    %v6213 = vrcp.pop %v6208
    %v6214 = vmul.f32 1.0, %v6213
    %v6215 = vrcp.pop %v6209
    %v6216 = vmul.f32 1.0, %v6215
    %v6217 = vrcp.pop %v6210
    %v6218 = vmul.f32 1.0, %v6217
    %v6219 = vmul.f32 %v6216, 2.0
    %v6220 = vsub.f32 %v6219, 1.0
    %v6221 = vmul.f32 %v6214, %v5687
    %v6222 = vmul.f32 %v6212, %v6220
    %v6223 = vadd.f32 %v6221, %v6222
    %v6224 = vtanh.pop %v6223
    %v6225 = vmul.f32 %v6218, %v6224
    %6226 = vmatprep.subr.bf16.mxu0 %v2327
    %6227 = vmatpush1.bf16.msra.mxu0 %v2326
    %6228 = vmatprep.subr.bf16.mxu0 %v2323
    %6229 = vmatpush1.bf16.msra.mxu0 %v2322
    %6230 = vmatprep.subr.bf16.mxu0 %v2319
    %6231 = vmatpush1.bf16.msra.mxu0 %v2318
    %6232 = vmatprep.subr.bf16.mxu0 %v2315
    %6233 = vmatpush1.bf16.msra.mxu0 %v2314
    %6234 = vmatprep.subr.bf16.mxu0 %v2311
    %6235 = vmatpush1.bf16.msra.mxu0 %v2310
    %6236 = vmatprep.subr.bf16.mxu0 %v2307
    %6237 = vmatpush1.bf16.msra.mxu0 %v2306
    %6238 = vmatprep.subr.bf16.mxu0 %v2303
    %6239 = vmatpush1.bf16.msra.mxu0 %v2302
    %6240 = vmatprep.subr.bf16.mxu0 %v2299
    %6241 = vmatpush1.bf16.msra.mxu0 %v2298
    %6242 = vmatprep.subr.bf16.mxu0 0
    %6243 = vmatpush2.bf16.msra.mxu0 0
    %6244 = vmatprep.subr.bf16.mxu0 0
    %6245 = vmatpush2.bf16.msra.mxu0 0
    %6246 = vmatprep.subr.bf16.mxu0 0
    %6247 = vmatpush2.bf16.msra.mxu0 0
    %6248 = vmatprep.subr.bf16.mxu0 0
    %6249 = vmatpush2.bf16.msra.mxu0 0
    %6250 = vmatprep.subr.bf16.mxu0 0
    %6251 = vmatpush2.bf16.msra.mxu0 0
    %6252 = vmatprep.subr.bf16.mxu0 0
    %6253 = vmatpush2.bf16.msra.mxu0 0
    %6254 = vmatprep.subr.bf16.mxu0 0
    %6255 = vmatpush2.bf16.msra.mxu0 0
    %6256 = vmatprep.subr.bf16.mxu0 0
    %6257 = vmatpush2.bf16.msra.mxu0 0
    %6258 = vmatprep.mubr.bf16.mxu0 0
    %6259 = vmatmul.mubr.bf16.gmra.mxu0 %v5824
    %v6260 = vpop.f32.mrf.mxu0
    %v6261 = vadd.f32 0.0, %v6260
    %v6262 = vpop.f32.mrf.mxu0
    %v6263 = vadd.f32 0.0, %v6262
    %v6264 = vpop.f32.mrf.mxu0
    %v6265 = vpop.f32.mrf.mxu0
    %6266 = vdwg.mxu0
    %6267 = vmatprep.subr.bf16.mxu0 %v2329
    %6268 = vmatpush1.bf16.msra.mxu0 %v2328
    %6269 = vmatprep.subr.bf16.mxu0 %v2325
    %6270 = vmatpush1.bf16.msra.mxu0 %v2324
    %6271 = vmatprep.subr.bf16.mxu0 %v2321
    %6272 = vmatpush1.bf16.msra.mxu0 %v2320
    %6273 = vmatprep.subr.bf16.mxu0 %v2317
    %6274 = vmatpush1.bf16.msra.mxu0 %v2316
    %6275 = vmatprep.subr.bf16.mxu0 %v2313
    %6276 = vmatpush1.bf16.msra.mxu0 %v2312
    %6277 = vmatprep.subr.bf16.mxu0 %v2309
    %6278 = vmatpush1.bf16.msra.mxu0 %v2308
    %6279 = vmatprep.subr.bf16.mxu0 %v2305
    %6280 = vmatpush1.bf16.msra.mxu0 %v2304
    %6281 = vmatprep.subr.bf16.mxu0 %v2301
    %6282 = vmatpush1.bf16.msra.mxu0 %v2300
    %6283 = vmatprep.subr.bf16.mxu0 0
    %6284 = vmatpush2.bf16.msra.mxu0 0
    %6285 = vmatprep.subr.bf16.mxu0 0
    %6286 = vmatpush2.bf16.msra.mxu0 0
    %6287 = vmatprep.subr.bf16.mxu0 0
    %6288 = vmatpush2.bf16.msra.mxu0 0
    %6289 = vmatprep.subr.bf16.mxu0 0
    %6290 = vmatpush2.bf16.msra.mxu0 0
    %6291 = vmatprep.subr.bf16.mxu0 0
    %6292 = vmatpush2.bf16.msra.mxu0 0
    %6293 = vmatprep.subr.bf16.mxu0 0
    %6294 = vmatpush2.bf16.msra.mxu0 0
    %6295 = vmatprep.subr.bf16.mxu0 0
    %6296 = vmatpush2.bf16.msra.mxu0 0
    %6297 = vmatprep.subr.bf16.mxu0 0
    %6298 = vmatpush2.bf16.msra.mxu0 0
    %6299 = vmatprep.mubr.bf16.mxu0 0
    %6300 = vmatmul.mubr.bf16.gmra.mxu0 %v5824
    %v6301 = vpop.f32.mrf.mxu0
    %v6302 = vadd.f32 0.0, %v6301
    %v6303 = vpop.f32.mrf.mxu0
    %v6304 = vadd.f32 0.0, %v6303
    %v6305 = vpop.f32.mrf.mxu0
    %v6306 = vpop.f32.mrf.mxu0
    %6307 = vdwg.mxu0
    %v6312 = vrot.slane %v6261, 4
    %v6313 = vrot.slane %v6263, 4
    %v6314 = vrot.slane %v6302, 4
    %v6315 = vrot.slane %v6304, 4
    %v6320 = vadd.f32 %v1864, %v6312
    %v6321 = vadd.f32 %v1866, %v6313
    %v6322 = vadd.f32 %v2036, %v6314
    %v6323 = vadd.f32 %v2038, %v6315
    %v6324 = vxor.u32 %v6320, 2147483648
    %v6325 = vxor.u32 %v6321, 2147483648
    %v6326 = vxor.u32 %v6322, 2147483648
    %v6327 = vxor.u32 %v6323, 2147483648
    %v6328 = vmul.f32 %v6324, 1.442695
    %v6329 = vpow.pop %v6328
    %v6330 = vmul.f32 %v6325, 1.442695
    %v6331 = vpow.pop %v6330
    %v6332 = vmul.f32 %v6326, 1.442695
    %v6333 = vpow.pop %v6332
    %v6334 = vmul.f32 %v6327, 1.442695
    %v6335 = vpow.pop %v6334
    %v6336 = vadd.f32 %v6329, 1.0
    %v6337 = vadd.f32 %v6331, 1.0
    %v6338 = vadd.f32 %v6333, 1.0
    %v6339 = vadd.f32 %v6335, 1.0
    %v6340 = vrcp.pop %v6336
    %v6341 = vmul.f32 1.0, %v6340
    %v6342 = vrcp.pop %v6337
    %v6343 = vmul.f32 1.0, %v6342
    %v6344 = vrcp.pop %v6338
    %v6345 = vmul.f32 1.0, %v6344
    %v6346 = vrcp.pop %v6339
    %v6347 = vmul.f32 1.0, %v6346
    %v6348 = vmul.f32 %v6345, 2.0
    %v6349 = vsub.f32 %v6348, 1.0
    %v6351 = vrot.slane %v5819, 6
    %v6353 = vmul.f32 %v6343, %v6351
    %v6354 = vmul.f32 %v6341, %v6349
    %v6355 = vadd.f32 %v6353, %v6354
    %v6356 = vtanh.pop %v6355
    %v6357 = vmul.f32 %v6347, %v6356
    %v6358 = vpack.c.bf16 %v6357, %v6357
    %v6360 = vrot.slane %v6358, 2
    %6362 = vmatprep.subr.bf16.mxu0 %v2626
    %6363 = vmatpush1.bf16.msra.mxu0 %v2625
    %6364 = vmatprep.subr.bf16.mxu0 %v2622
    %6365 = vmatpush1.bf16.msra.mxu0 %v2621
    %6366 = vmatprep.subr.bf16.mxu0 %v2618
    %6367 = vmatpush1.bf16.msra.mxu0 %v2617
    %6368 = vmatprep.subr.bf16.mxu0 %v2614
    %6369 = vmatpush1.bf16.msra.mxu0 %v2613
    %6370 = vmatprep.subr.bf16.mxu0 %v2610
    %6371 = vmatpush1.bf16.msra.mxu0 %v2609
    %6372 = vmatprep.subr.bf16.mxu0 %v2606
    %6373 = vmatpush1.bf16.msra.mxu0 %v2605
    %6374 = vmatprep.subr.bf16.mxu0 %v2602
    %6375 = vmatpush1.bf16.msra.mxu0 %v2601
    %6376 = vmatprep.subr.bf16.mxu0 %v2598
    %6377 = vmatpush1.bf16.msra.mxu0 %v2597
    %6378 = vmatprep.subr.bf16.mxu0 0
    %6379 = vmatpush2.bf16.msra.mxu0 0
    %6380 = vmatprep.subr.bf16.mxu0 0
    %6381 = vmatpush2.bf16.msra.mxu0 0
    %6382 = vmatprep.subr.bf16.mxu0 0
    %6383 = vmatpush2.bf16.msra.mxu0 0
    %6384 = vmatprep.subr.bf16.mxu0 0
    %6385 = vmatpush2.bf16.msra.mxu0 0
    %6386 = vmatprep.subr.bf16.mxu0 0
    %6387 = vmatpush2.bf16.msra.mxu0 0
    %6388 = vmatprep.subr.bf16.mxu0 0
    %6389 = vmatpush2.bf16.msra.mxu0 0
    %6390 = vmatprep.subr.bf16.mxu0 0
    %6391 = vmatpush2.bf16.msra.mxu0 0
    %6392 = vmatprep.subr.bf16.mxu0 0
    %6393 = vmatpush2.bf16.msra.mxu0 0
    %6394 = vmatprep.mubr.bf16.mxu0 0
    %6395 = vmatmul.mubr.bf16.gmra.mxu0 %v6360
    %v6396 = vpop.f32.mrf.mxu0
    %v6397 = vadd.f32 %v2484, %v6396
    %v6398 = vpop.f32.mrf.mxu0
    %v6399 = vadd.f32 %v2488, %v6398
    %v6400 = vpop.f32.mrf.mxu0
    %v6401 = vpop.f32.mrf.mxu0
    %6402 = vdwg.mxu0
    %6403 = vmatprep.subr.bf16.mxu0 %v2628
    %6404 = vmatpush1.bf16.msra.mxu0 %v2627
    %6405 = vmatprep.subr.bf16.mxu0 %v2624
    %6406 = vmatpush1.bf16.msra.mxu0 %v2623
    %6407 = vmatprep.subr.bf16.mxu0 %v2620
    %6408 = vmatpush1.bf16.msra.mxu0 %v2619
    %6409 = vmatprep.subr.bf16.mxu0 %v2616
    %6410 = vmatpush1.bf16.msra.mxu0 %v2615
    %6411 = vmatprep.subr.bf16.mxu0 %v2612
    %6412 = vmatpush1.bf16.msra.mxu0 %v2611
    %6413 = vmatprep.subr.bf16.mxu0 %v2608
    %6414 = vmatpush1.bf16.msra.mxu0 %v2607
    %6415 = vmatprep.subr.bf16.mxu0 %v2604
    %6416 = vmatpush1.bf16.msra.mxu0 %v2603
    %6417 = vmatprep.subr.bf16.mxu0 %v2600
    %6418 = vmatpush1.bf16.msra.mxu0 %v2599
    %6419 = vmatprep.subr.bf16.mxu0 0
    %6420 = vmatpush2.bf16.msra.mxu0 0
    %6421 = vmatprep.subr.bf16.mxu0 0
    %6422 = vmatpush2.bf16.msra.mxu0 0
    %6423 = vmatprep.subr.bf16.mxu0 0
    %6424 = vmatpush2.bf16.msra.mxu0 0
    %6425 = vmatprep.subr.bf16.mxu0 0
    %6426 = vmatpush2.bf16.msra.mxu0 0
    %6427 = vmatprep.subr.bf16.mxu0 0
    %6428 = vmatpush2.bf16.msra.mxu0 0
    %6429 = vmatprep.subr.bf16.mxu0 0
    %6430 = vmatpush2.bf16.msra.mxu0 0
    %6431 = vmatprep.subr.bf16.mxu0 0
    %6432 = vmatpush2.bf16.msra.mxu0 0
    %6433 = vmatprep.subr.bf16.mxu0 0
    %6434 = vmatpush2.bf16.msra.mxu0 0
    %6435 = vmatprep.mubr.bf16.mxu0 0
    %6436 = vmatmul.mubr.bf16.gmra.mxu0 %v6360
    %v6437 = vpop.f32.mrf.mxu0
    %v6438 = vadd.f32 %v2492, %v6437
    %v6439 = vpop.f32.mrf.mxu0
    %v6440 = vadd.f32 %v2496, %v6439
    %v6441 = vpop.f32.mrf.mxu0
    %v6442 = vpop.f32.mrf.mxu0
    %6443 = vdwg.mxu0
    %6444 = vmatprep.subr.bf16.mxu0 %v2868
    %6445 = vmatpush1.bf16.msra.mxu0 %v2867
    %6446 = vmatprep.subr.bf16.mxu0 %v2864
    %6447 = vmatpush1.bf16.msra.mxu0 %v2863
    %6448 = vmatprep.subr.bf16.mxu0 %v2860
    %6449 = vmatpush1.bf16.msra.mxu0 %v2859
    %6450 = vmatprep.subr.bf16.mxu0 %v2856
    %6451 = vmatpush1.bf16.msra.mxu0 %v2855
    %6452 = vmatprep.subr.bf16.mxu0 %v2852
    %6453 = vmatpush1.bf16.msra.mxu0 %v2851
    %6454 = vmatprep.subr.bf16.mxu0 %v2848
    %6455 = vmatpush1.bf16.msra.mxu0 %v2847
    %6456 = vmatprep.subr.bf16.mxu0 %v2844
    %6457 = vmatpush1.bf16.msra.mxu0 %v2843
    %6458 = vmatprep.subr.bf16.mxu0 %v2840
    %6459 = vmatpush1.bf16.msra.mxu0 %v2839
    %6460 = vmatprep.subr.bf16.mxu0 0
    %6461 = vmatpush2.bf16.msra.mxu0 0
    %6462 = vmatprep.subr.bf16.mxu0 0
    %6463 = vmatpush2.bf16.msra.mxu0 0
    %6464 = vmatprep.subr.bf16.mxu0 0
    %6465 = vmatpush2.bf16.msra.mxu0 0
    %6466 = vmatprep.subr.bf16.mxu0 0
    %6467 = vmatpush2.bf16.msra.mxu0 0
    %6468 = vmatprep.subr.bf16.mxu0 0
    %6469 = vmatpush2.bf16.msra.mxu0 0
    %6470 = vmatprep.subr.bf16.mxu0 0
    %6471 = vmatpush2.bf16.msra.mxu0 0
    %6472 = vmatprep.subr.bf16.mxu0 0
    %6473 = vmatpush2.bf16.msra.mxu0 0
    %6474 = vmatprep.subr.bf16.mxu0 0
    %6475 = vmatpush2.bf16.msra.mxu0 0
    %6476 = vmatprep.mubr.bf16.mxu0 0
    %6477 = vmatmul.mubr.bf16.gmra.mxu0 %v6025
    %v6478 = vpop.f32.mrf.mxu0
    %v6479 = vadd.f32 0.0, %v6478
    %v6480 = vpop.f32.mrf.mxu0
    %v6481 = vadd.f32 0.0, %v6480
    %v6482 = vpop.f32.mrf.mxu0
    %v6483 = vpop.f32.mrf.mxu0
    %6484 = vdwg.mxu0
    %6485 = vmatprep.subr.bf16.mxu0 %v2870
    %6486 = vmatpush1.bf16.msra.mxu0 %v2869
    %6487 = vmatprep.subr.bf16.mxu0 %v2866
    %6488 = vmatpush1.bf16.msra.mxu0 %v2865
    %6489 = vmatprep.subr.bf16.mxu0 %v2862
    %6490 = vmatpush1.bf16.msra.mxu0 %v2861
    %6491 = vmatprep.subr.bf16.mxu0 %v2858
    %6492 = vmatpush1.bf16.msra.mxu0 %v2857
    %6493 = vmatprep.subr.bf16.mxu0 %v2854
    %6494 = vmatpush1.bf16.msra.mxu0 %v2853
    %6495 = vmatprep.subr.bf16.mxu0 %v2850
    %6496 = vmatpush1.bf16.msra.mxu0 %v2849
    %6497 = vmatprep.subr.bf16.mxu0 %v2846
    %6498 = vmatpush1.bf16.msra.mxu0 %v2845
    %6499 = vmatprep.subr.bf16.mxu0 %v2842
    %6500 = vmatpush1.bf16.msra.mxu0 %v2841
    %6501 = vmatprep.subr.bf16.mxu0 0
    %6502 = vmatpush2.bf16.msra.mxu0 0
    %6503 = vmatprep.subr.bf16.mxu0 0
    %6504 = vmatpush2.bf16.msra.mxu0 0
    %6505 = vmatprep.subr.bf16.mxu0 0
    %6506 = vmatpush2.bf16.msra.mxu0 0
    %6507 = vmatprep.subr.bf16.mxu0 0
    %6508 = vmatpush2.bf16.msra.mxu0 0
    %6509 = vmatprep.subr.bf16.mxu0 0
    %6510 = vmatpush2.bf16.msra.mxu0 0
    %6511 = vmatprep.subr.bf16.mxu0 0
    %6512 = vmatpush2.bf16.msra.mxu0 0
    %6513 = vmatprep.subr.bf16.mxu0 0
    %6514 = vmatpush2.bf16.msra.mxu0 0
    %6515 = vmatprep.subr.bf16.mxu0 0
    %6516 = vmatpush2.bf16.msra.mxu0 0
    %6517 = vmatprep.mubr.bf16.mxu0 0
    %6518 = vmatmul.mubr.bf16.gmra.mxu0 %v6025
    %v6519 = vpop.f32.mrf.mxu0
    %v6520 = vadd.f32 0.0, %v6519
    %v6521 = vpop.f32.mrf.mxu0
    %v6522 = vadd.f32 0.0, %v6521
    %v6523 = vpop.f32.mrf.mxu0
    %v6524 = vpop.f32.mrf.mxu0
    %6525 = vdwg.mxu0
    %v6526 = vadd.f32 %v6397, %v6479
    %v6527 = vadd.f32 %v6399, %v6481
    %v6528 = vadd.f32 %v6438, %v6520
    %v6529 = vadd.f32 %v6440, %v6522
    %v6530 = vxor.u32 %v6526, 2147483648
    %v6531 = vxor.u32 %v6527, 2147483648
    %v6532 = vxor.u32 %v6528, 2147483648
    %v6533 = vxor.u32 %v6529, 2147483648
    %v6534 = vmul.f32 %v6530, 1.442695
    %v6535 = vpow.pop %v6534
    %v6536 = vmul.f32 %v6531, 1.442695
    %v6537 = vpow.pop %v6536
    %v6538 = vmul.f32 %v6532, 1.442695
    %v6539 = vpow.pop %v6538
    %v6540 = vmul.f32 %v6533, 1.442695
    %v6541 = vpow.pop %v6540
    %v6542 = vadd.f32 %v6535, 1.0
    %v6543 = vadd.f32 %v6537, 1.0
    %v6544 = vadd.f32 %v6539, 1.0
    %v6545 = vadd.f32 %v6541, 1.0
    %v6546 = vrcp.pop %v6542
    %v6547 = vmul.f32 1.0, %v6546
    %v6548 = vrcp.pop %v6543
    %v6549 = vmul.f32 1.0, %v6548
    %v6550 = vrcp.pop %v6544
    %v6551 = vmul.f32 1.0, %v6550
    %v6552 = vrcp.pop %v6545
    %v6553 = vmul.f32 1.0, %v6552
    %v6554 = vmul.f32 %v6551, 2.0
    %v6555 = vsub.f32 %v6554, 1.0
    %v6556 = vmul.f32 %v6549, %v6022
    %v6557 = vmul.f32 %v6547, %v6555
    %v6558 = vadd.f32 %v6556, %v6557
    %v6559 = vtanh.pop %v6558
    %v6560 = vmul.f32 %v6553, %v6559
    %v6561 = vpack.c.bf16 %v6560, %v6560
    %6562 = vmatprep.subr.bf16.mxu0 %v3167
    %6563 = vmatpush1.bf16.msra.mxu0 %v3166
    %6564 = vmatprep.subr.bf16.mxu0 %v3163
    %6565 = vmatpush1.bf16.msra.mxu0 %v3162
    %6566 = vmatprep.subr.bf16.mxu0 %v3159
    %6567 = vmatpush1.bf16.msra.mxu0 %v3158
    %6568 = vmatprep.subr.bf16.mxu0 %v3155
    %6569 = vmatpush1.bf16.msra.mxu0 %v3154
    %6570 = vmatprep.subr.bf16.mxu0 %v3151
    %6571 = vmatpush1.bf16.msra.mxu0 %v3150
    %6572 = vmatprep.subr.bf16.mxu0 %v3147
    %6573 = vmatpush1.bf16.msra.mxu0 %v3146
    %6574 = vmatprep.subr.bf16.mxu0 %v3143
    %6575 = vmatpush1.bf16.msra.mxu0 %v3142
    %6576 = vmatprep.subr.bf16.mxu0 %v3139
    %6577 = vmatpush1.bf16.msra.mxu0 %v3138
    %6578 = vmatprep.subr.bf16.mxu0 0
    %6579 = vmatpush2.bf16.msra.mxu0 0
    %6580 = vmatprep.subr.bf16.mxu0 0
    %6581 = vmatpush2.bf16.msra.mxu0 0
    %6582 = vmatprep.subr.bf16.mxu0 0
    %6583 = vmatpush2.bf16.msra.mxu0 0
    %6584 = vmatprep.subr.bf16.mxu0 0
    %6585 = vmatpush2.bf16.msra.mxu0 0
    %6586 = vmatprep.subr.bf16.mxu0 0
    %6587 = vmatpush2.bf16.msra.mxu0 0
    %6588 = vmatprep.subr.bf16.mxu0 0
    %6589 = vmatpush2.bf16.msra.mxu0 0
    %6590 = vmatprep.subr.bf16.mxu0 0
    %6591 = vmatpush2.bf16.msra.mxu0 0
    %6592 = vmatprep.subr.bf16.mxu0 0
    %6593 = vmatpush2.bf16.msra.mxu0 0
    %6594 = vmatprep.mubr.bf16.mxu0 0
    %6595 = vmatmul.mubr.bf16.gmra.mxu0 %v6561
    %v6596 = vpop.f32.mrf.mxu0
    %v6597 = vadd.f32 %v3025, %v6596
    %v6598 = vpop.f32.mrf.mxu0
    %v6599 = vadd.f32 %v3029, %v6598
    %v6600 = vpop.f32.mrf.mxu0
    %v6601 = vpop.f32.mrf.mxu0
    %6602 = vdwg.mxu0
    %6603 = vmatprep.subr.bf16.mxu0 %v3169
    %6604 = vmatpush1.bf16.msra.mxu0 %v3168
    %6605 = vmatprep.subr.bf16.mxu0 %v3165
    %6606 = vmatpush1.bf16.msra.mxu0 %v3164
    %6607 = vmatprep.subr.bf16.mxu0 %v3161
    %6608 = vmatpush1.bf16.msra.mxu0 %v3160
    %6609 = vmatprep.subr.bf16.mxu0 %v3157
    %6610 = vmatpush1.bf16.msra.mxu0 %v3156
    %6611 = vmatprep.subr.bf16.mxu0 %v3153
    %6612 = vmatpush1.bf16.msra.mxu0 %v3152
    %6613 = vmatprep.subr.bf16.mxu0 %v3149
    %6614 = vmatpush1.bf16.msra.mxu0 %v3148
    %6615 = vmatprep.subr.bf16.mxu0 %v3145
    %6616 = vmatpush1.bf16.msra.mxu0 %v3144
    %6617 = vmatprep.subr.bf16.mxu0 %v3141
    %6618 = vmatpush1.bf16.msra.mxu0 %v3140
    %6619 = vmatprep.subr.bf16.mxu0 0
    %6620 = vmatpush2.bf16.msra.mxu0 0
    %6621 = vmatprep.subr.bf16.mxu0 0
    %6622 = vmatpush2.bf16.msra.mxu0 0
    %6623 = vmatprep.subr.bf16.mxu0 0
    %6624 = vmatpush2.bf16.msra.mxu0 0
    %6625 = vmatprep.subr.bf16.mxu0 0
    %6626 = vmatpush2.bf16.msra.mxu0 0
    %6627 = vmatprep.subr.bf16.mxu0 0
    %6628 = vmatpush2.bf16.msra.mxu0 0
    %6629 = vmatprep.subr.bf16.mxu0 0
    %6630 = vmatpush2.bf16.msra.mxu0 0
    %6631 = vmatprep.subr.bf16.mxu0 0
    %6632 = vmatpush2.bf16.msra.mxu0 0
    %6633 = vmatprep.subr.bf16.mxu0 0
    %6634 = vmatpush2.bf16.msra.mxu0 0
    %6635 = vmatprep.mubr.bf16.mxu0 0
    %6636 = vmatmul.mubr.bf16.gmra.mxu0 %v6561
    %v6637 = vpop.f32.mrf.mxu0
    %v6638 = vadd.f32 %v3033, %v6637
    %v6639 = vpop.f32.mrf.mxu0
    %v6640 = vadd.f32 %v3037, %v6639
    %v6641 = vpop.f32.mrf.mxu0
    %v6642 = vpop.f32.mrf.mxu0
    %6643 = vdwg.mxu0
    %v6644 = vpack.c.bf16 %v6225, %v6225
    %6645 = vmatprep.subr.bf16.mxu0 %v3409
    %6646 = vmatpush1.bf16.msra.mxu0 %v3408
    %6647 = vmatprep.subr.bf16.mxu0 %v3405
    %6648 = vmatpush1.bf16.msra.mxu0 %v3404
    %6649 = vmatprep.subr.bf16.mxu0 %v3401
    %6650 = vmatpush1.bf16.msra.mxu0 %v3400
    %6651 = vmatprep.subr.bf16.mxu0 %v3397
    %6652 = vmatpush1.bf16.msra.mxu0 %v3396
    %6653 = vmatprep.subr.bf16.mxu0 %v3393
    %6654 = vmatpush1.bf16.msra.mxu0 %v3392
    %6655 = vmatprep.subr.bf16.mxu0 %v3389
    %6656 = vmatpush1.bf16.msra.mxu0 %v3388
    %6657 = vmatprep.subr.bf16.mxu0 %v3385
    %6658 = vmatpush1.bf16.msra.mxu0 %v3384
    %6659 = vmatprep.subr.bf16.mxu0 %v3381
    %6660 = vmatpush1.bf16.msra.mxu0 %v3380
    %6661 = vmatprep.subr.bf16.mxu0 0
    %6662 = vmatpush2.bf16.msra.mxu0 0
    %6663 = vmatprep.subr.bf16.mxu0 0
    %6664 = vmatpush2.bf16.msra.mxu0 0
    %6665 = vmatprep.subr.bf16.mxu0 0
    %6666 = vmatpush2.bf16.msra.mxu0 0
    %6667 = vmatprep.subr.bf16.mxu0 0
    %6668 = vmatpush2.bf16.msra.mxu0 0
    %6669 = vmatprep.subr.bf16.mxu0 0
    %6670 = vmatpush2.bf16.msra.mxu0 0
    %6671 = vmatprep.subr.bf16.mxu0 0
    %6672 = vmatpush2.bf16.msra.mxu0 0
    %6673 = vmatprep.subr.bf16.mxu0 0
    %6674 = vmatpush2.bf16.msra.mxu0 0
    %6675 = vmatprep.subr.bf16.mxu0 0
    %6676 = vmatpush2.bf16.msra.mxu0 0
    %6677 = vmatprep.mubr.bf16.mxu0 0
    %6678 = vmatmul.mubr.bf16.gmra.mxu0 %v6644
    %v6679 = vpop.f32.mrf.mxu0
    %v6680 = vadd.f32 0.0, %v6679
    %v6681 = vpop.f32.mrf.mxu0
    %v6682 = vadd.f32 0.0, %v6681
    %v6683 = vpop.f32.mrf.mxu0
    %v6684 = vpop.f32.mrf.mxu0
    %6685 = vdwg.mxu0
    %6686 = vmatprep.subr.bf16.mxu0 %v3411
    %6687 = vmatpush1.bf16.msra.mxu0 %v3410
    %6688 = vmatprep.subr.bf16.mxu0 %v3407
    %6689 = vmatpush1.bf16.msra.mxu0 %v3406
    %6690 = vmatprep.subr.bf16.mxu0 %v3403
    %6691 = vmatpush1.bf16.msra.mxu0 %v3402
    %6692 = vmatprep.subr.bf16.mxu0 %v3399
    %6693 = vmatpush1.bf16.msra.mxu0 %v3398
    %6694 = vmatprep.subr.bf16.mxu0 %v3395
    %6695 = vmatpush1.bf16.msra.mxu0 %v3394
    %6696 = vmatprep.subr.bf16.mxu0 %v3391
    %6697 = vmatpush1.bf16.msra.mxu0 %v3390
    %6698 = vmatprep.subr.bf16.mxu0 %v3387
    %6699 = vmatpush1.bf16.msra.mxu0 %v3386
    %6700 = vmatprep.subr.bf16.mxu0 %v3383
    %6701 = vmatpush1.bf16.msra.mxu0 %v3382
    %6702 = vmatprep.subr.bf16.mxu0 0
    %6703 = vmatpush2.bf16.msra.mxu0 0
    %6704 = vmatprep.subr.bf16.mxu0 0
    %6705 = vmatpush2.bf16.msra.mxu0 0
    %6706 = vmatprep.subr.bf16.mxu0 0
    %6707 = vmatpush2.bf16.msra.mxu0 0
    %6708 = vmatprep.subr.bf16.mxu0 0
    %6709 = vmatpush2.bf16.msra.mxu0 0
    %6710 = vmatprep.subr.bf16.mxu0 0
    %6711 = vmatpush2.bf16.msra.mxu0 0
    %6712 = vmatprep.subr.bf16.mxu0 0
    %6713 = vmatpush2.bf16.msra.mxu0 0
    %6714 = vmatprep.subr.bf16.mxu0 0
    %6715 = vmatpush2.bf16.msra.mxu0 0
    %6716 = vmatprep.subr.bf16.mxu0 0
    %6717 = vmatpush2.bf16.msra.mxu0 0
    %6718 = vmatprep.mubr.bf16.mxu0 0
    %6719 = vmatmul.mubr.bf16.gmra.mxu0 %v6644
    %v6720 = vpop.f32.mrf.mxu0
    %v6721 = vadd.f32 0.0, %v6720
    %v6722 = vpop.f32.mrf.mxu0
    %v6723 = vadd.f32 0.0, %v6722
    %v6724 = vpop.f32.mrf.mxu0
    %v6725 = vpop.f32.mrf.mxu0
    %6726 = vdwg.mxu0
    %v6727 = vadd.f32 %v6597, %v6680
    %v6728 = vadd.f32 %v6599, %v6682
    %v6729 = vadd.f32 %v6638, %v6721
    %v6730 = vadd.f32 %v6640, %v6723
    %v6731 = vxor.u32 %v6727, 2147483648
    %v6732 = vxor.u32 %v6728, 2147483648
    %v6733 = vxor.u32 %v6729, 2147483648
    %v6734 = vxor.u32 %v6730, 2147483648
    %v6735 = vmul.f32 %v6731, 1.442695
    %v6736 = vpow.pop %v6735
    %v6737 = vmul.f32 %v6732, 1.442695
    %v6738 = vpow.pop %v6737
    %v6739 = vmul.f32 %v6733, 1.442695
    %v6740 = vpow.pop %v6739
    %v6741 = vmul.f32 %v6734, 1.442695
    %v6742 = vpow.pop %v6741
    %v6743 = vadd.f32 %v6736, 1.0
    %v6744 = vadd.f32 %v6738, 1.0
    %v6745 = vadd.f32 %v6740, 1.0
    %v6746 = vadd.f32 %v6742, 1.0
    %v6747 = vrcp.pop %v6743
    %v6748 = vmul.f32 1.0, %v6747
    %v6749 = vrcp.pop %v6744
    %v6750 = vmul.f32 1.0, %v6749
    %v6751 = vrcp.pop %v6745
    %v6752 = vmul.f32 1.0, %v6751
    %v6753 = vrcp.pop %v6746
    %v6754 = vmul.f32 1.0, %v6753
    %v6755 = vmul.f32 %v6752, 2.0
    %v6756 = vsub.f32 %v6755, 1.0
    %v6757 = vmul.f32 %v6750, %v6223
    %v6758 = vmul.f32 %v6748, %v6756
    %v6759 = vadd.f32 %v6757, %v6758
    %v6760 = vtanh.pop %v6759
    %v6761 = vmul.f32 %v6754, %v6760
    %6762 = vmatprep.subr.bf16.mxu0 %v2327
    %6763 = vmatpush1.bf16.msra.mxu0 %v2326
    %6764 = vmatprep.subr.bf16.mxu0 %v2323
    %6765 = vmatpush1.bf16.msra.mxu0 %v2322
    %6766 = vmatprep.subr.bf16.mxu0 %v2319
    %6767 = vmatpush1.bf16.msra.mxu0 %v2318
    %6768 = vmatprep.subr.bf16.mxu0 %v2315
    %6769 = vmatpush1.bf16.msra.mxu0 %v2314
    %6770 = vmatprep.subr.bf16.mxu0 %v2311
    %6771 = vmatpush1.bf16.msra.mxu0 %v2310
    %6772 = vmatprep.subr.bf16.mxu0 %v2307
    %6773 = vmatpush1.bf16.msra.mxu0 %v2306
    %6774 = vmatprep.subr.bf16.mxu0 %v2303
    %6775 = vmatpush1.bf16.msra.mxu0 %v2302
    %6776 = vmatprep.subr.bf16.mxu0 %v2299
    %6777 = vmatpush1.bf16.msra.mxu0 %v2298
    %6778 = vmatprep.subr.bf16.mxu0 0
    %6779 = vmatpush2.bf16.msra.mxu0 0
    %6780 = vmatprep.subr.bf16.mxu0 0
    %6781 = vmatpush2.bf16.msra.mxu0 0
    %6782 = vmatprep.subr.bf16.mxu0 0
    %6783 = vmatpush2.bf16.msra.mxu0 0
    %6784 = vmatprep.subr.bf16.mxu0 0
    %6785 = vmatpush2.bf16.msra.mxu0 0
    %6786 = vmatprep.subr.bf16.mxu0 0
    %6787 = vmatpush2.bf16.msra.mxu0 0
    %6788 = vmatprep.subr.bf16.mxu0 0
    %6789 = vmatpush2.bf16.msra.mxu0 0
    %6790 = vmatprep.subr.bf16.mxu0 0
    %6791 = vmatpush2.bf16.msra.mxu0 0
    %6792 = vmatprep.subr.bf16.mxu0 0
    %6793 = vmatpush2.bf16.msra.mxu0 0
    %6794 = vmatprep.mubr.bf16.mxu0 0
    %6795 = vmatmul.mubr.bf16.gmra.mxu0 %v6360
    %v6796 = vpop.f32.mrf.mxu0
    %v6797 = vadd.f32 0.0, %v6796
    %v6798 = vpop.f32.mrf.mxu0
    %v6799 = vadd.f32 0.0, %v6798
    %v6800 = vpop.f32.mrf.mxu0
    %v6801 = vpop.f32.mrf.mxu0
    %6802 = vdwg.mxu0
    %6803 = vmatprep.subr.bf16.mxu0 %v2329
    %6804 = vmatpush1.bf16.msra.mxu0 %v2328
    %6805 = vmatprep.subr.bf16.mxu0 %v2325
    %6806 = vmatpush1.bf16.msra.mxu0 %v2324
    %6807 = vmatprep.subr.bf16.mxu0 %v2321
    %6808 = vmatpush1.bf16.msra.mxu0 %v2320
    %6809 = vmatprep.subr.bf16.mxu0 %v2317
    %6810 = vmatpush1.bf16.msra.mxu0 %v2316
    %6811 = vmatprep.subr.bf16.mxu0 %v2313
    %6812 = vmatpush1.bf16.msra.mxu0 %v2312
    %6813 = vmatprep.subr.bf16.mxu0 %v2309
    %6814 = vmatpush1.bf16.msra.mxu0 %v2308
    %6815 = vmatprep.subr.bf16.mxu0 %v2305
    %6816 = vmatpush1.bf16.msra.mxu0 %v2304
    %6817 = vmatprep.subr.bf16.mxu0 %v2301
    %6818 = vmatpush1.bf16.msra.mxu0 %v2300
    %6819 = vmatprep.subr.bf16.mxu0 0
    %6820 = vmatpush2.bf16.msra.mxu0 0
    %6821 = vmatprep.subr.bf16.mxu0 0
    %6822 = vmatpush2.bf16.msra.mxu0 0
    %6823 = vmatprep.subr.bf16.mxu0 0
    %6824 = vmatpush2.bf16.msra.mxu0 0
    %6825 = vmatprep.subr.bf16.mxu0 0
    %6826 = vmatpush2.bf16.msra.mxu0 0
    %6827 = vmatprep.subr.bf16.mxu0 0
    %6828 = vmatpush2.bf16.msra.mxu0 0
    %6829 = vmatprep.subr.bf16.mxu0 0
    %6830 = vmatpush2.bf16.msra.mxu0 0
    %6831 = vmatprep.subr.bf16.mxu0 0
    %6832 = vmatpush2.bf16.msra.mxu0 0
    %6833 = vmatprep.subr.bf16.mxu0 0
    %6834 = vmatpush2.bf16.msra.mxu0 0
    %6835 = vmatprep.mubr.bf16.mxu0 0
    %6836 = vmatmul.mubr.bf16.gmra.mxu0 %v6360
    %v6837 = vpop.f32.mrf.mxu0
    %v6838 = vadd.f32 0.0, %v6837
    %v6839 = vpop.f32.mrf.mxu0
    %v6840 = vadd.f32 0.0, %v6839
    %v6841 = vpop.f32.mrf.mxu0
    %v6842 = vpop.f32.mrf.mxu0
    %6843 = vdwg.mxu0
    %v6848 = vrot.slane %v6797, 2
    %v6849 = vrot.slane %v6799, 2
    %v6850 = vrot.slane %v6838, 2
    %v6851 = vrot.slane %v6840, 2
    %v6856 = vadd.f32 %v1864, %v6848
    %v6857 = vadd.f32 %v1866, %v6849
    %v6858 = vadd.f32 %v2036, %v6850
    %v6859 = vadd.f32 %v2038, %v6851
    %v6860 = vxor.u32 %v6856, 2147483648
    %v6861 = vxor.u32 %v6857, 2147483648
    %v6862 = vxor.u32 %v6858, 2147483648
    %v6863 = vxor.u32 %v6859, 2147483648
    %v6864 = vmul.f32 %v6860, 1.442695
    %v6865 = vpow.pop %v6864
    %v6866 = vmul.f32 %v6861, 1.442695
    %v6867 = vpow.pop %v6866
    %v6868 = vmul.f32 %v6862, 1.442695
    %v6869 = vpow.pop %v6868
    %v6870 = vmul.f32 %v6863, 1.442695
    %v6871 = vpow.pop %v6870
    %v6872 = vadd.f32 %v6865, 1.0
    %v6873 = vadd.f32 %v6867, 1.0
    %v6874 = vadd.f32 %v6869, 1.0
    %v6875 = vadd.f32 %v6871, 1.0
    %v6876 = vrcp.pop %v6872
    %v6877 = vmul.f32 1.0, %v6876
    %v6878 = vrcp.pop %v6873
    %v6879 = vmul.f32 1.0, %v6878
    %v6880 = vrcp.pop %v6874
    %v6881 = vmul.f32 1.0, %v6880
    %v6882 = vrcp.pop %v6875
    %v6883 = vmul.f32 1.0, %v6882
    %v6884 = vmul.f32 %v6881, 2.0
    %v6885 = vsub.f32 %v6884, 1.0
    %v6887 = vrot.slane %v6355, 6
    %v6889 = vmul.f32 %v6879, %v6887
    %v6890 = vmul.f32 %v6877, %v6885
    %v6891 = vadd.f32 %v6889, %v6890
    %v6892 = vtanh.pop %v6891
    %v6893 = vmul.f32 %v6883, %v6892
    %v6894 = vpack.c.bf16 %v6893, %v6893
    %v6896 = vrot.slane %v6894, 3
    %6898 = vmatprep.subr.bf16.mxu0 %v2626
    %6899 = vmatpush1.bf16.msra.mxu0 %v2625
    %6900 = vmatprep.subr.bf16.mxu0 %v2622
    %6901 = vmatpush1.bf16.msra.mxu0 %v2621
    %6902 = vmatprep.subr.bf16.mxu0 %v2618
    %6903 = vmatpush1.bf16.msra.mxu0 %v2617
    %6904 = vmatprep.subr.bf16.mxu0 %v2614
    %6905 = vmatpush1.bf16.msra.mxu0 %v2613
    %6906 = vmatprep.subr.bf16.mxu0 %v2610
    %6907 = vmatpush1.bf16.msra.mxu0 %v2609
    %6908 = vmatprep.subr.bf16.mxu0 %v2606
    %6909 = vmatpush1.bf16.msra.mxu0 %v2605
    %6910 = vmatprep.subr.bf16.mxu0 %v2602
    %6911 = vmatpush1.bf16.msra.mxu0 %v2601
    %6912 = vmatprep.subr.bf16.mxu0 %v2598
    %6913 = vmatpush1.bf16.msra.mxu0 %v2597
    %6914 = vmatprep.subr.bf16.mxu0 0
    %6915 = vmatpush2.bf16.msra.mxu0 0
    %6916 = vmatprep.subr.bf16.mxu0 0
    %6917 = vmatpush2.bf16.msra.mxu0 0
    %6918 = vmatprep.subr.bf16.mxu0 0
    %6919 = vmatpush2.bf16.msra.mxu0 0
    %6920 = vmatprep.subr.bf16.mxu0 0
    %6921 = vmatpush2.bf16.msra.mxu0 0
    %6922 = vmatprep.subr.bf16.mxu0 0
    %6923 = vmatpush2.bf16.msra.mxu0 0
    %6924 = vmatprep.subr.bf16.mxu0 0
    %6925 = vmatpush2.bf16.msra.mxu0 0
    %6926 = vmatprep.subr.bf16.mxu0 0
    %6927 = vmatpush2.bf16.msra.mxu0 0
    %6928 = vmatprep.subr.bf16.mxu0 0
    %6929 = vmatpush2.bf16.msra.mxu0 0
    %6930 = vmatprep.mubr.bf16.mxu0 0
    %6931 = vmatmul.mubr.bf16.gmra.mxu0 %v6896
    %v6932 = vpop.f32.mrf.mxu0
    %v6933 = vadd.f32 %v2484, %v6932
    %v6934 = vpop.f32.mrf.mxu0
    %v6935 = vadd.f32 %v2488, %v6934
    %v6936 = vpop.f32.mrf.mxu0
    %v6937 = vpop.f32.mrf.mxu0
    %6938 = vdwg.mxu0
    %6939 = vmatprep.subr.bf16.mxu0 %v2628
    %6940 = vmatpush1.bf16.msra.mxu0 %v2627
    %6941 = vmatprep.subr.bf16.mxu0 %v2624
    %6942 = vmatpush1.bf16.msra.mxu0 %v2623
    %6943 = vmatprep.subr.bf16.mxu0 %v2620
    %6944 = vmatpush1.bf16.msra.mxu0 %v2619
    %6945 = vmatprep.subr.bf16.mxu0 %v2616
    %6946 = vmatpush1.bf16.msra.mxu0 %v2615
    %6947 = vmatprep.subr.bf16.mxu0 %v2612
    %6948 = vmatpush1.bf16.msra.mxu0 %v2611
    %6949 = vmatprep.subr.bf16.mxu0 %v2608
    %6950 = vmatpush1.bf16.msra.mxu0 %v2607
    %6951 = vmatprep.subr.bf16.mxu0 %v2604
    %6952 = vmatpush1.bf16.msra.mxu0 %v2603
    %6953 = vmatprep.subr.bf16.mxu0 %v2600
    %6954 = vmatpush1.bf16.msra.mxu0 %v2599
    %6955 = vmatprep.subr.bf16.mxu0 0
    %6956 = vmatpush2.bf16.msra.mxu0 0
    %6957 = vmatprep.subr.bf16.mxu0 0
    %6958 = vmatpush2.bf16.msra.mxu0 0
    %6959 = vmatprep.subr.bf16.mxu0 0
    %6960 = vmatpush2.bf16.msra.mxu0 0
    %6961 = vmatprep.subr.bf16.mxu0 0
    %6962 = vmatpush2.bf16.msra.mxu0 0
    %6963 = vmatprep.subr.bf16.mxu0 0
    %6964 = vmatpush2.bf16.msra.mxu0 0
    %6965 = vmatprep.subr.bf16.mxu0 0
    %6966 = vmatpush2.bf16.msra.mxu0 0
    %6967 = vmatprep.subr.bf16.mxu0 0
    %6968 = vmatpush2.bf16.msra.mxu0 0
    %6969 = vmatprep.subr.bf16.mxu0 0
    %6970 = vmatpush2.bf16.msra.mxu0 0
    %6971 = vmatprep.mubr.bf16.mxu0 0
    %6972 = vmatmul.mubr.bf16.gmra.mxu0 %v6896
    %v6973 = vpop.f32.mrf.mxu0
    %v6974 = vadd.f32 %v2492, %v6973
    %v6975 = vpop.f32.mrf.mxu0
    %v6976 = vadd.f32 %v2496, %v6975
    %v6977 = vpop.f32.mrf.mxu0
    %v6978 = vpop.f32.mrf.mxu0
    %6979 = vdwg.mxu0
    %6980 = vmatprep.subr.bf16.mxu0 %v2868
    %6981 = vmatpush1.bf16.msra.mxu0 %v2867
    %6982 = vmatprep.subr.bf16.mxu0 %v2864
    %6983 = vmatpush1.bf16.msra.mxu0 %v2863
    %6984 = vmatprep.subr.bf16.mxu0 %v2860
    %6985 = vmatpush1.bf16.msra.mxu0 %v2859
    %6986 = vmatprep.subr.bf16.mxu0 %v2856
    %6987 = vmatpush1.bf16.msra.mxu0 %v2855
    %6988 = vmatprep.subr.bf16.mxu0 %v2852
    %6989 = vmatpush1.bf16.msra.mxu0 %v2851
    %6990 = vmatprep.subr.bf16.mxu0 %v2848
    %6991 = vmatpush1.bf16.msra.mxu0 %v2847
    %6992 = vmatprep.subr.bf16.mxu0 %v2844
    %6993 = vmatpush1.bf16.msra.mxu0 %v2843
    %6994 = vmatprep.subr.bf16.mxu0 %v2840
    %6995 = vmatpush1.bf16.msra.mxu0 %v2839
    %6996 = vmatprep.subr.bf16.mxu0 0
    %6997 = vmatpush2.bf16.msra.mxu0 0
    %6998 = vmatprep.subr.bf16.mxu0 0
    %6999 = vmatpush2.bf16.msra.mxu0 0
    %7000 = vmatprep.subr.bf16.mxu0 0
    %7001 = vmatpush2.bf16.msra.mxu0 0
    %7002 = vmatprep.subr.bf16.mxu0 0
    %7003 = vmatpush2.bf16.msra.mxu0 0
    %7004 = vmatprep.subr.bf16.mxu0 0
    %7005 = vmatpush2.bf16.msra.mxu0 0
    %7006 = vmatprep.subr.bf16.mxu0 0
    %7007 = vmatpush2.bf16.msra.mxu0 0
    %7008 = vmatprep.subr.bf16.mxu0 0
    %7009 = vmatpush2.bf16.msra.mxu0 0
    %7010 = vmatprep.subr.bf16.mxu0 0
    %7011 = vmatpush2.bf16.msra.mxu0 0
    %7012 = vmatprep.mubr.bf16.mxu0 0
    %7013 = vmatmul.mubr.bf16.gmra.mxu0 %v6561
    %v7014 = vpop.f32.mrf.mxu0
    %v7015 = vadd.f32 0.0, %v7014
    %v7016 = vpop.f32.mrf.mxu0
    %v7017 = vadd.f32 0.0, %v7016
    %v7018 = vpop.f32.mrf.mxu0
    %v7019 = vpop.f32.mrf.mxu0
    %7020 = vdwg.mxu0
    %7021 = vmatprep.subr.bf16.mxu0 %v2870
    %7022 = vmatpush1.bf16.msra.mxu0 %v2869
    %7023 = vmatprep.subr.bf16.mxu0 %v2866
    %7024 = vmatpush1.bf16.msra.mxu0 %v2865
    %7025 = vmatprep.subr.bf16.mxu0 %v2862
    %7026 = vmatpush1.bf16.msra.mxu0 %v2861
    %7027 = vmatprep.subr.bf16.mxu0 %v2858
    %7028 = vmatpush1.bf16.msra.mxu0 %v2857
    %7029 = vmatprep.subr.bf16.mxu0 %v2854
    %7030 = vmatpush1.bf16.msra.mxu0 %v2853
    %7031 = vmatprep.subr.bf16.mxu0 %v2850
    %7032 = vmatpush1.bf16.msra.mxu0 %v2849
    %7033 = vmatprep.subr.bf16.mxu0 %v2846
    %7034 = vmatpush1.bf16.msra.mxu0 %v2845
    %7035 = vmatprep.subr.bf16.mxu0 %v2842
    %7036 = vmatpush1.bf16.msra.mxu0 %v2841
    %7037 = vmatprep.subr.bf16.mxu0 0
    %7038 = vmatpush2.bf16.msra.mxu0 0
    %7039 = vmatprep.subr.bf16.mxu0 0
    %7040 = vmatpush2.bf16.msra.mxu0 0
    %7041 = vmatprep.subr.bf16.mxu0 0
    %7042 = vmatpush2.bf16.msra.mxu0 0
    %7043 = vmatprep.subr.bf16.mxu0 0
    %7044 = vmatpush2.bf16.msra.mxu0 0
    %7045 = vmatprep.subr.bf16.mxu0 0
    %7046 = vmatpush2.bf16.msra.mxu0 0
    %7047 = vmatprep.subr.bf16.mxu0 0
    %7048 = vmatpush2.bf16.msra.mxu0 0
    %7049 = vmatprep.subr.bf16.mxu0 0
    %7050 = vmatpush2.bf16.msra.mxu0 0
    %7051 = vmatprep.subr.bf16.mxu0 0
    %7052 = vmatpush2.bf16.msra.mxu0 0
    %7053 = vmatprep.mubr.bf16.mxu0 0
    %7054 = vmatmul.mubr.bf16.gmra.mxu0 %v6561
    %v7055 = vpop.f32.mrf.mxu0
    %v7056 = vadd.f32 0.0, %v7055
    %v7057 = vpop.f32.mrf.mxu0
    %v7058 = vadd.f32 0.0, %v7057
    %v7059 = vpop.f32.mrf.mxu0
    %v7060 = vpop.f32.mrf.mxu0
    %7061 = vdwg.mxu0
    %v7062 = vadd.f32 %v6933, %v7015
    %v7063 = vadd.f32 %v6935, %v7017
    %v7064 = vadd.f32 %v6974, %v7056
    %v7065 = vadd.f32 %v6976, %v7058
    %v7066 = vxor.u32 %v7062, 2147483648
    %v7067 = vxor.u32 %v7063, 2147483648
    %v7068 = vxor.u32 %v7064, 2147483648
    %v7069 = vxor.u32 %v7065, 2147483648
    %v7070 = vmul.f32 %v7066, 1.442695
    %v7071 = vpow.pop %v7070
    %v7072 = vmul.f32 %v7067, 1.442695
    %v7073 = vpow.pop %v7072
    %v7074 = vmul.f32 %v7068, 1.442695
    %v7075 = vpow.pop %v7074
    %v7076 = vmul.f32 %v7069, 1.442695
    %v7077 = vpow.pop %v7076
    %v7078 = vadd.f32 %v7071, 1.0
    %v7079 = vadd.f32 %v7073, 1.0
    %v7080 = vadd.f32 %v7075, 1.0
    %v7081 = vadd.f32 %v7077, 1.0
    %v7082 = vrcp.pop %v7078
    %v7083 = vmul.f32 1.0, %v7082
    %v7084 = vrcp.pop %v7079
    %v7085 = vmul.f32 1.0, %v7084
    %v7086 = vrcp.pop %v7080
    %v7087 = vmul.f32 1.0, %v7086
    %v7088 = vrcp.pop %v7081
    %v7089 = vmul.f32 1.0, %v7088
    %v7090 = vmul.f32 %v7087, 2.0
    %v7091 = vsub.f32 %v7090, 1.0
    %v7092 = vmul.f32 %v7085, %v6558
    %v7093 = vmul.f32 %v7083, %v7091
    %v7094 = vadd.f32 %v7092, %v7093
    %v7095 = vtanh.pop %v7094
    %v7096 = vmul.f32 %v7089, %v7095
    %v7097 = vpack.c.bf16 %v7096, %v7096
    %7098 = vmatprep.subr.bf16.mxu0 %v3167
    %7099 = vmatpush1.bf16.msra.mxu0 %v3166
    %7100 = vmatprep.subr.bf16.mxu0 %v3163
    %7101 = vmatpush1.bf16.msra.mxu0 %v3162
    %7102 = vmatprep.subr.bf16.mxu0 %v3159
    %7103 = vmatpush1.bf16.msra.mxu0 %v3158
    %7104 = vmatprep.subr.bf16.mxu0 %v3155
    %7105 = vmatpush1.bf16.msra.mxu0 %v3154
    %7106 = vmatprep.subr.bf16.mxu0 %v3151
    %7107 = vmatpush1.bf16.msra.mxu0 %v3150
    %7108 = vmatprep.subr.bf16.mxu0 %v3147
    %7109 = vmatpush1.bf16.msra.mxu0 %v3146
    %7110 = vmatprep.subr.bf16.mxu0 %v3143
    %7111 = vmatpush1.bf16.msra.mxu0 %v3142
    %7112 = vmatprep.subr.bf16.mxu0 %v3139
    %7113 = vmatpush1.bf16.msra.mxu0 %v3138
    %7114 = vmatprep.subr.bf16.mxu0 0
    %7115 = vmatpush2.bf16.msra.mxu0 0
    %7116 = vmatprep.subr.bf16.mxu0 0
    %7117 = vmatpush2.bf16.msra.mxu0 0
    %7118 = vmatprep.subr.bf16.mxu0 0
    %7119 = vmatpush2.bf16.msra.mxu0 0
    %7120 = vmatprep.subr.bf16.mxu0 0
    %7121 = vmatpush2.bf16.msra.mxu0 0
    %7122 = vmatprep.subr.bf16.mxu0 0
    %7123 = vmatpush2.bf16.msra.mxu0 0
    %7124 = vmatprep.subr.bf16.mxu0 0
    %7125 = vmatpush2.bf16.msra.mxu0 0
    %7126 = vmatprep.subr.bf16.mxu0 0
    %7127 = vmatpush2.bf16.msra.mxu0 0
    %7128 = vmatprep.subr.bf16.mxu0 0
    %7129 = vmatpush2.bf16.msra.mxu0 0
    %7130 = vmatprep.mubr.bf16.mxu0 0
    %7131 = vmatmul.mubr.bf16.gmra.mxu0 %v7097
    %v7132 = vpop.f32.mrf.mxu0
    %v7133 = vadd.f32 %v3025, %v7132
    %v7134 = vpop.f32.mrf.mxu0
    %v7135 = vadd.f32 %v3029, %v7134
    %v7136 = vpop.f32.mrf.mxu0
    %v7137 = vpop.f32.mrf.mxu0
    %7138 = vdwg.mxu0
    %7139 = vmatprep.subr.bf16.mxu0 %v3169
    %7140 = vmatpush1.bf16.msra.mxu0 %v3168
    %7141 = vmatprep.subr.bf16.mxu0 %v3165
    %7142 = vmatpush1.bf16.msra.mxu0 %v3164
    %7143 = vmatprep.subr.bf16.mxu0 %v3161
    %7144 = vmatpush1.bf16.msra.mxu0 %v3160
    %7145 = vmatprep.subr.bf16.mxu0 %v3157
    %7146 = vmatpush1.bf16.msra.mxu0 %v3156
    %7147 = vmatprep.subr.bf16.mxu0 %v3153
    %7148 = vmatpush1.bf16.msra.mxu0 %v3152
    %7149 = vmatprep.subr.bf16.mxu0 %v3149
    %7150 = vmatpush1.bf16.msra.mxu0 %v3148
    %7151 = vmatprep.subr.bf16.mxu0 %v3145
    %7152 = vmatpush1.bf16.msra.mxu0 %v3144
    %7153 = vmatprep.subr.bf16.mxu0 %v3141
    %7154 = vmatpush1.bf16.msra.mxu0 %v3140
    %7155 = vmatprep.subr.bf16.mxu0 0
    %7156 = vmatpush2.bf16.msra.mxu0 0
    %7157 = vmatprep.subr.bf16.mxu0 0
    %7158 = vmatpush2.bf16.msra.mxu0 0
    %7159 = vmatprep.subr.bf16.mxu0 0
    %7160 = vmatpush2.bf16.msra.mxu0 0
    %7161 = vmatprep.subr.bf16.mxu0 0
    %7162 = vmatpush2.bf16.msra.mxu0 0
    %7163 = vmatprep.subr.bf16.mxu0 0
    %7164 = vmatpush2.bf16.msra.mxu0 0
    %7165 = vmatprep.subr.bf16.mxu0 0
    %7166 = vmatpush2.bf16.msra.mxu0 0
    %7167 = vmatprep.subr.bf16.mxu0 0
    %7168 = vmatpush2.bf16.msra.mxu0 0
    %7169 = vmatprep.subr.bf16.mxu0 0
    %7170 = vmatpush2.bf16.msra.mxu0 0
    %7171 = vmatprep.mubr.bf16.mxu0 0
    %7172 = vmatmul.mubr.bf16.gmra.mxu0 %v7097
    %v7173 = vpop.f32.mrf.mxu0
    %v7174 = vadd.f32 %v3033, %v7173
    %v7175 = vpop.f32.mrf.mxu0
    %v7176 = vadd.f32 %v3037, %v7175
    %v7177 = vpop.f32.mrf.mxu0
    %v7178 = vpop.f32.mrf.mxu0
    %7179 = vdwg.mxu0
    %v7180 = vpack.c.bf16 %v6761, %v6761
    %7181 = vmatprep.subr.bf16.mxu0 %v3409
    %7182 = vmatpush1.bf16.msra.mxu0 %v3408
    %7183 = vmatprep.subr.bf16.mxu0 %v3405
    %7184 = vmatpush1.bf16.msra.mxu0 %v3404
    %7185 = vmatprep.subr.bf16.mxu0 %v3401
    %7186 = vmatpush1.bf16.msra.mxu0 %v3400
    %7187 = vmatprep.subr.bf16.mxu0 %v3397
    %7188 = vmatpush1.bf16.msra.mxu0 %v3396
    %7189 = vmatprep.subr.bf16.mxu0 %v3393
    %7190 = vmatpush1.bf16.msra.mxu0 %v3392
    %7191 = vmatprep.subr.bf16.mxu0 %v3389
    %7192 = vmatpush1.bf16.msra.mxu0 %v3388
    %7193 = vmatprep.subr.bf16.mxu0 %v3385
    %7194 = vmatpush1.bf16.msra.mxu0 %v3384
    %7195 = vmatprep.subr.bf16.mxu0 %v3381
    %7196 = vmatpush1.bf16.msra.mxu0 %v3380
    %7197 = vmatprep.subr.bf16.mxu0 0
    %7198 = vmatpush2.bf16.msra.mxu0 0
    %7199 = vmatprep.subr.bf16.mxu0 0
    %7200 = vmatpush2.bf16.msra.mxu0 0
    %7201 = vmatprep.subr.bf16.mxu0 0
    %7202 = vmatpush2.bf16.msra.mxu0 0
    %7203 = vmatprep.subr.bf16.mxu0 0
    %7204 = vmatpush2.bf16.msra.mxu0 0
    %7205 = vmatprep.subr.bf16.mxu0 0
    %7206 = vmatpush2.bf16.msra.mxu0 0
    %7207 = vmatprep.subr.bf16.mxu0 0
    %7208 = vmatpush2.bf16.msra.mxu0 0
    %7209 = vmatprep.subr.bf16.mxu0 0
    %7210 = vmatpush2.bf16.msra.mxu0 0
    %7211 = vmatprep.subr.bf16.mxu0 0
    %7212 = vmatpush2.bf16.msra.mxu0 0
    %7213 = vmatprep.mubr.bf16.mxu0 0
    %7214 = vmatmul.mubr.bf16.gmra.mxu0 %v7180
    %v7215 = vpop.f32.mrf.mxu0
    %v7216 = vadd.f32 0.0, %v7215
    %v7217 = vpop.f32.mrf.mxu0
    %v7218 = vadd.f32 0.0, %v7217
    %v7219 = vpop.f32.mrf.mxu0
    %v7220 = vpop.f32.mrf.mxu0
    %7221 = vdwg.mxu0
    %7222 = vmatprep.subr.bf16.mxu0 %v3411
    %7223 = vmatpush1.bf16.msra.mxu0 %v3410
    %7224 = vmatprep.subr.bf16.mxu0 %v3407
    %7225 = vmatpush1.bf16.msra.mxu0 %v3406
    %7226 = vmatprep.subr.bf16.mxu0 %v3403
    %7227 = vmatpush1.bf16.msra.mxu0 %v3402
    %7228 = vmatprep.subr.bf16.mxu0 %v3399
    %7229 = vmatpush1.bf16.msra.mxu0 %v3398
    %7230 = vmatprep.subr.bf16.mxu0 %v3395
    %7231 = vmatpush1.bf16.msra.mxu0 %v3394
    %7232 = vmatprep.subr.bf16.mxu0 %v3391
    %7233 = vmatpush1.bf16.msra.mxu0 %v3390
    %7234 = vmatprep.subr.bf16.mxu0 %v3387
    %7235 = vmatpush1.bf16.msra.mxu0 %v3386
    %7236 = vmatprep.subr.bf16.mxu0 %v3383
    %7237 = vmatpush1.bf16.msra.mxu0 %v3382
    %7238 = vmatprep.subr.bf16.mxu0 0
    %7239 = vmatpush2.bf16.msra.mxu0 0
    %7240 = vmatprep.subr.bf16.mxu0 0
    %7241 = vmatpush2.bf16.msra.mxu0 0
    %7242 = vmatprep.subr.bf16.mxu0 0
    %7243 = vmatpush2.bf16.msra.mxu0 0
    %7244 = vmatprep.subr.bf16.mxu0 0
    %7245 = vmatpush2.bf16.msra.mxu0 0
    %7246 = vmatprep.subr.bf16.mxu0 0
    %7247 = vmatpush2.bf16.msra.mxu0 0
    %7248 = vmatprep.subr.bf16.mxu0 0
    %7249 = vmatpush2.bf16.msra.mxu0 0
    %7250 = vmatprep.subr.bf16.mxu0 0
    %7251 = vmatpush2.bf16.msra.mxu0 0
    %7252 = vmatprep.subr.bf16.mxu0 0
    %7253 = vmatpush2.bf16.msra.mxu0 0
    %7254 = vmatprep.mubr.bf16.mxu0 0
    %7255 = vmatmul.mubr.bf16.gmra.mxu0 %v7180
    %v7256 = vpop.f32.mrf.mxu0
    %v7257 = vadd.f32 0.0, %v7256
    %v7258 = vpop.f32.mrf.mxu0
    %v7259 = vadd.f32 0.0, %v7258
    %v7260 = vpop.f32.mrf.mxu0
    %v7261 = vpop.f32.mrf.mxu0
    %7262 = vdwg.mxu0
    %v7263 = vadd.f32 %v7133, %v7216
    %v7264 = vadd.f32 %v7135, %v7218
    %v7265 = vadd.f32 %v7174, %v7257
    %v7266 = vadd.f32 %v7176, %v7259
    %v7267 = vxor.u32 %v7263, 2147483648
    %v7268 = vxor.u32 %v7264, 2147483648
    %v7269 = vxor.u32 %v7265, 2147483648
    %v7270 = vxor.u32 %v7266, 2147483648
    %v7271 = vmul.f32 %v7267, 1.442695
    %v7272 = vpow.pop %v7271
    %v7273 = vmul.f32 %v7268, 1.442695
    %v7274 = vpow.pop %v7273
    %v7275 = vmul.f32 %v7269, 1.442695
    %v7276 = vpow.pop %v7275
    %v7277 = vmul.f32 %v7270, 1.442695
    %v7278 = vpow.pop %v7277
    %v7279 = vadd.f32 %v7272, 1.0
    %v7280 = vadd.f32 %v7274, 1.0
    %v7281 = vadd.f32 %v7276, 1.0
    %v7282 = vadd.f32 %v7278, 1.0
    %v7283 = vrcp.pop %v7279
    %v7284 = vmul.f32 1.0, %v7283
    %v7285 = vrcp.pop %v7280
    %v7286 = vmul.f32 1.0, %v7285
    %v7287 = vrcp.pop %v7281
    %v7288 = vmul.f32 1.0, %v7287
    %v7289 = vrcp.pop %v7282
    %v7290 = vmul.f32 1.0, %v7289
    %v7291 = vmul.f32 %v7288, 2.0
    %v7292 = vsub.f32 %v7291, 1.0
    %v7293 = vmul.f32 %v7286, %v6759
    %v7294 = vmul.f32 %v7284, %v7292
    %v7295 = vadd.f32 %v7293, %v7294
    %v7296 = vtanh.pop %v7295
    %v7297 = vmul.f32 %v7290, %v7296
    %v7298 = vpack.c.bf16 %v7297, %v7297
    %v7299 = vld [vmem:[#allocation13] sm:$0xf]
    %v7300 = vld [vmem:[#allocation13 + $0x4] sm:$0xf]
    %v7301 = vld [vmem:[#allocation13 + $0x8] sm:$0xf]
    %v7302 = vld [vmem:[#allocation13 + $0xc] sm:$0xf]
    %v7303 = vld [vmem:[#allocation13 + $0x10] sm:$0xf]
    %v7304 = vld [vmem:[#allocation13 + $0x14] sm:$0xf]
    %v7305 = vld [vmem:[#allocation13 + $0x18] sm:$0xf]
    %v7306 = vld [vmem:[#allocation13 + $0x1c] sm:$0xf]
    %v7307 = vld [vmem:[#allocation13 + $0x20] sm:$0xf]
    %v7308 = vld [vmem:[#allocation13 + $0x24] sm:$0xf]
    %v7309 = vld [vmem:[#allocation13 + $0x28] sm:$0xf]
    %v7310 = vld [vmem:[#allocation13 + $0x2c] sm:$0xf]
    %v7311 = vld [vmem:[#allocation13 + $0x30] sm:$0xf]
    %v7312 = vld [vmem:[#allocation13 + $0x34] sm:$0xf]
    %v7313 = vld [vmem:[#allocation13 + $0x38] sm:$0xf]
    %v7314 = vld [vmem:[#allocation13 + $0x3c] sm:$0xf]
    %v7315 = vld [vmem:[%s11] sm:$0x1]
    %v7317 = vlaneseq
    %v7318 = vshrl.u32 %v7317, 7
    %v7319 = vsub.s32 0, %v7318
    %v7320 = vrot.slane %v7315, %v7319
    %v7338 = vunpack.c.l.b16 %v7299
    %v7339 = vunpack.c.l.b16 %v7300
    %v7340 = vunpack.c.l.b16 %v7301
    %v7341 = vunpack.c.l.b16 %v7302
    %v7342 = vunpack.c.l.b16 %v7303
    %v7343 = vunpack.c.l.b16 %v7304
    %v7344 = vunpack.c.l.b16 %v7305
    %v7345 = vunpack.c.l.b16 %v7306
    %v7346 = vunpack.c.l.b16 %v7307
    %v7347 = vunpack.c.l.b16 %v7308
    %v7348 = vunpack.c.l.b16 %v7309
    %v7349 = vunpack.c.l.b16 %v7310
    %v7350 = vunpack.c.l.b16 %v7311
    %v7351 = vunpack.c.l.b16 %v7312
    %v7352 = vunpack.c.l.b16 %v7313
    %v7353 = vunpack.c.l.b16 %v7314
    %v7354 = vpack.c.b16 %v7339, %v7338
    %v7355 = vpack.c.b16 %v7341, %v7340
    %v7356 = vpack.c.b16 %v7343, %v7342
    %v7357 = vpack.c.b16 %v7345, %v7344
    %v7358 = vpack.c.b16 %v7347, %v7346
    %v7359 = vpack.c.b16 %v7349, %v7348
    %v7360 = vpack.c.b16 %v7351, %v7350
    %v7361 = vpack.c.b16 %v7353, %v7352
    %7370 = vmatprep.subr.bf16.mxu0 0
    %7371 = vmatpush1.bf16.msra.mxu0 %v7361
    %7372 = vmatprep.subr.bf16.mxu0 0
    %7373 = vmatpush1.bf16.msra.mxu0 %v7360
    %7374 = vmatprep.subr.bf16.mxu0 0
    %7375 = vmatpush1.bf16.msra.mxu0 %v7359
    %7376 = vmatprep.subr.bf16.mxu0 0
    %7377 = vmatpush1.bf16.msra.mxu0 %v7358
    %7378 = vmatprep.subr.bf16.mxu0 0
    %7379 = vmatpush1.bf16.msra.mxu0 %v7357
    %7380 = vmatprep.subr.bf16.mxu0 0
    %7381 = vmatpush1.bf16.msra.mxu0 %v7356
    %7382 = vmatprep.subr.bf16.mxu0 0
    %7383 = vmatpush1.bf16.msra.mxu0 %v7355
    %7384 = vmatprep.subr.bf16.mxu0 0
    %7385 = vmatpush1.bf16.msra.mxu0 %v7354
    %7386 = vmatprep.subr.bf16.mxu0 0
    %7387 = vmatpush2.bf16.msra.mxu0 0
    %7388 = vmatprep.subr.bf16.mxu0 0
    %7389 = vmatpush2.bf16.msra.mxu0 0
    %7390 = vmatprep.subr.bf16.mxu0 0
    %7391 = vmatpush2.bf16.msra.mxu0 0
    %7392 = vmatprep.subr.bf16.mxu0 0
    %7393 = vmatpush2.bf16.msra.mxu0 0
    %7394 = vmatprep.subr.bf16.mxu0 0
    %7395 = vmatpush2.bf16.msra.mxu0 0
    %7396 = vmatprep.subr.bf16.mxu0 0
    %7397 = vmatpush2.bf16.msra.mxu0 0
    %7398 = vmatprep.subr.bf16.mxu0 0
    %7399 = vmatpush2.bf16.msra.mxu0 0
    %7400 = vmatprep.subr.bf16.mxu0 0
    %7401 = vmatpush2.bf16.msra.mxu0 0
    %7402 = vmatprep.mubr.bf16.mxu0 0
    %7403 = vmatmul.mubr.bf16.gmra.mxu0 %v7298
    %v7404 = vpop.f32.mrf.mxu0
    %v7405 = vadd.f32 %v7320, %v7404
    %v7406 = vpop.f32.mrf.mxu0
    %v7407 = vpop.f32.mrf.mxu0
    %v7408 = vpop.f32.mrf.mxu0
    %7409 = vdwg.mxu0
    %7410 = vst [vmem:[#allocation14] sm:$0x3] %v7405
    // Predicated region
    $region78: #{stacked_rnn_forward.1} parent=1 // pred_check
      _
    $region79: #{stacked_rnn_forward.1} parent=1 // pred_check_branch
      %7412 = sbr.rel (0) target = $region81
    $region80: #{stacked_rnn_forward.1} parent=1 // pred_region
      %s7414 = ssub.s32 32, 32
      %7415 = vsyncadd [#allocation4], %s7414
      %s7417 = sshll.u32 [#allocation14], 4
      %s7418 = int_to_ptr.vmem [resolvable:$true] %s7417
      %7420 = dma.vmem_to_hbm [thread:$0]  %s7418, 32, %s12, [#allocation4]
    $region81: #{stacked_rnn_forward.1} parent=1 // pred_fallthru
      _
    // Predicated region
    $region82: #{stacked_rnn_forward.1} parent=1 // pred_check
      _
    $region83: #{stacked_rnn_forward.1} parent=1 // pred_check_branch
      %7422 = sbr.rel (0) target = $region85
    $region84: #{stacked_rnn_forward.1} parent=1 // pred_region
      %7423 = dma.done [#allocation4], 32
    $region85: #{stacked_rnn_forward.1} parent=1 // pred_fallthru
      _
    %7424 = vsyncpa [#allocation3], 1
    %7425 = vsyncpa [#allocation6], 1
    %7426 = vsyncpa [#allocation9], 1
    %7427 = vsyncpa [#allocation12], 1
    %7428 = vsyncpa [#allocation4], 1

</llo_original>
